<compile_context>
chip_gen: v7x
topology: tpu7x:2x2x1
jax: 0.10.0
libtpu: 0.0.40
codegen_flags: <defaults>
</compile_context>

<pallas_src>
import jax
import jax.numpy as jnp
from jax import lax
from jax.experimental import pallas as pl
from jax.experimental.pallas import tpu as pltpu


def _vmem():
    return pl.BlockSpec(memory_space=pltpu.MemorySpace.VMEM)


def _tpu_params(**kw):
    # Only attach Mosaic compiler params when we are really on TPU (keeps the
    # kernel runnable under CPU interpret mode as well).
    if jax.default_backend() == "tpu":
        return pltpu.CompilerParams(**kw)
    return None


# ----------------------------------------------------------------------------
# Encoder kernel: fused bidirectional GRU with length masking
# ----------------------------------------------------------------------------
def encoder_kernel(x_ref, len_ref,
                   wihT_fb_ref, bih_fb_ref,
                   whhT_f_ref, bhh_f_ref,
                   whhT_b_ref, bhh_b_ref,
                   out_ref, hfin_ref,
                   hf_sc, hb_sc, gi_sc):
    T, B, Es = x_ref.shape
    H = hf_sc.shape[1]
    G = 3 * H

    # Hoisted input-to-hidden matmul for BOTH directions at once:
    # one (T*B, Es) @ (Es, 6H) MXU pass, biases folded in.
    x_flat = x_ref[...].reshape(T * B, Es)
    gi_all = jnp.dot(x_flat, wihT_fb_ref[...],
                     preferred_element_type=jnp.float32) + bih_fb_ref[...]
    gi_sc[...] = gi_all.reshape(T, B, 2 * G)

    hf_sc[...] = jnp.zeros_like(hf_sc)
    hb_sc[...] = jnp.zeros_like(hb_sc)
    lens = len_ref[...]                       # (B, 1) int32

    whhT_f = whhT_f_ref[...]
    bhh_f = bhh_f_ref[...]
    whhT_b = whhT_b_ref[...]
    bhh_b = bhh_b_ref[...]

    def gates(gi, gh, h):
        # PyTorch GRU gate order: r, z, n  (f32 elementwise math)
        r = jax.nn.sigmoid(gi[:, :H] + gh[:, :H])
        z = jax.nn.sigmoid(gi[:, H:2 * H] + gh[:, H:2 * H])
        n = jnp.tanh(gi[:, 2 * H:] + r * gh[:, 2 * H:])
        return (1.0 - z) * n + z * h

    # Fused recurrence: one loop of length T does the forward step at t and the
    # backward step at T-1-t (pack_padded_sequence semantics via masking).
    def body(t, carry):
        tb = T - 1 - t
        gi_t = gi_sc[t]                       # (B, 6H)
        gi_tb = gi_sc[tb]

        # forward direction
        hf = hf_sc[...]
        ghf = jnp.dot(hf.astype(jnp.bfloat16), whhT_f,
                      preferred_element_type=jnp.float32) + bhh_f
        hf_new = gates(gi_t[:, :G], ghf, hf)
        mf = t < lens                         # (B, 1)
        hf_upd = jnp.where(mf, hf_new, hf)
        hf_sc[...] = hf_upd
        out_ref[t, :, :H] = jnp.where(mf, hf_upd, 0.0).astype(out_ref.dtype)

        # backward direction
        hb = hb_sc[...]
        ghb = jnp.dot(hb.astype(jnp.bfloat16), whhT_b,
                      preferred_element_type=jnp.float32) + bhh_b
        hb_new = gates(gi_tb[:, G:], ghb, hb)
        mb = tb < lens
        hb_upd = jnp.where(mb, hb_new, hb)
        hb_sc[...] = hb_upd
        out_ref[tb, :, H:] = jnp.where(mb, hb_upd, 0.0).astype(out_ref.dtype)
        return carry

    lax.fori_loop(0, T, body, 0, unroll=True)

    # final hidden states, already laid out as [h_fwd | h_bwd] for the decoder
    hfin_ref[:, :H] = hf_sc[...]
    hfin_ref[:, H:] = hb_sc[...]


def run_encoder(x_emb_tbf, lengths_b1, p):
    T, B, _ = x_emb_tbf.shape
    H = p["enc_whhT_f"].shape[0]
    out_shape = (
        jax.ShapeDtypeStruct((T, B, 2 * H), jnp.bfloat16),   # [fwd | bwd] outputs
        jax.ShapeDtypeStruct((B, 2 * H), jnp.float32),       # [fwd | bwd] final hidden
    )
    return pl.pallas_call(
        encoder_kernel,
        out_shape=out_shape,
        in_specs=[_vmem() for _ in range(8)],
        out_specs=(_vmem(), _vmem()),
        scratch_shapes=[pltpu.VMEM((B, H), jnp.float32),
                        pltpu.VMEM((B, H), jnp.float32),
                        pltpu.VMEM((T, B, 6 * H), jnp.float32)],
        compiler_params=_tpu_params(vmem_limit_bytes=64 * 1024 * 1024),
    )(x_emb_tbf, lengths_b1,
      p["enc_wihT_fb"], p["enc_bih_fb"],
      p["enc_whhT_f"], p["enc_bhh_f"],
      p["enc_whhT_b"], p["enc_bhh_b"])


# ----------------------------------------------------------------------------
# Decoder recurrence kernel: hidden_map + per-step (GRUCell -> attention),
# teacher forcing (sample_probability = 0.0). Emits the dropped prediction
# halves (ctx, h) per step; the classifier matmul is hoisted to a second kernel.
# ----------------------------------------------------------------------------
def decoder_rnn_kernel(y_ref, enc_ref, h0_ref,
                       wmapT_ref, bmap_ref,
                       wihT_y_ref, wihT_c_ref, whhT_ref, bih_ref, bhh_ref,
                       mctx_ref, mh_ref,
                       ctxd_ref, hd_ref,
                       h_sc, ctx_sc, giy_sc):
    Tout, B, Et = y_ref.shape
    Hd = h_sc.shape[1]

    # Hoisted input-to-hidden matmul for the embedding half of the GRUCell input
    # (the context half stays in the loop because it is recurrent); bih folded in.
    y_flat = y_ref[...].reshape(Tout * B, Et)
    giy = jnp.dot(y_flat, wihT_y_ref[...],
                  preferred_element_type=jnp.float32) + bih_ref[...]
    giy_sc[...] = giy.reshape(Tout, B, 3 * Hd)

    # h_0 = hidden_map(final encoder hidden)
    h_sc[...] = (jnp.dot(h0_ref[...].astype(jnp.bfloat16), wmapT_ref[...],
                         preferred_element_type=jnp.float32) + bmap_ref[...])
    ctx_sc[...] = jnp.zeros_like(ctx_sc)

    # Encoder state transposed once to (B, Tsrc, Hd) so the per-step attention
    # is a plain batched MXU matmul (no per-iteration relayout).
    enc_bt = jnp.transpose(enc_ref[...], (1, 0, 2))          # bf16 (B, Tsrc, Hd)

    wihT_c = wihT_c_ref[...]
    whhT = whhT_ref[...]
    bhh = bhh_ref[...]

    def body(i, carry):
        h = h_sc[...]                                        # (B, Hd) f32
        ctx = ctx_sc[...]                                    # (B, Hd) f32

        # GRUCell on rnn_input = cat([y_t, ctx]) -- concat folded into split matmuls
        gi = giy_sc[i] + jnp.dot(ctx.astype(jnp.bfloat16), wihT_c,
                                 preferred_element_type=jnp.float32)
        gh = jnp.dot(h.astype(jnp.bfloat16), whhT,
                     preferred_element_type=jnp.float32) + bhh
        r = jax.nn.sigmoid(gi[:, :Hd] + gh[:, :Hd])
        z = jax.nn.sigmoid(gi[:, Hd:2 * Hd] + gh[:, Hd:2 * Hd])
        n = jnp.tanh(gi[:, 2 * Hd:] + r * gh[:, 2 * Hd:])
        h_new = (1.0 - z) * n + z * h
        h_sc[...] = h_new

        # verbose_attention (MXU form, softmax in f32)
        hq = h_new.astype(jnp.bfloat16)[:, None, :]          # (B, 1, Hd)
        s = jnp.einsum("bqd,btd->bqt", hq, enc_bt,
                       preferred_element_type=jnp.float32)   # (B, 1, Tsrc)
        m = jnp.max(s, axis=-1, keepdims=True)
        e = jnp.exp(s - m)
        p_attn = e / jnp.sum(e, axis=-1, keepdims=True)
        ctx_new = jnp.einsum("bqt,btd->bqd", p_attn.astype(jnp.bfloat16), enc_bt,
                             preferred_element_type=jnp.float32)[:, 0, :]
        ctx_sc[...] = ctx_new

        # F.dropout(prediction_vector, 0.3): masks precomputed in the wrapper
        # (values 0 or 1/keep). The raw ctx (not dropped) feeds the next step,
        # exactly like the PyTorch reference.
        ctxd_ref[i] = (ctx_new * mctx_ref[i]).astype(ctxd_ref.dtype)
        hd_ref[i] = (h_new * mh_ref[i]).astype(hd_ref.dtype)
        return carry

    lax.fori_loop(0, Tout, body, 0, unroll=True)


def run_decoder_rnn(y_emb_tbf, enc_out, final_hidden, mctx, mh, p):
    Tout, B, _ = y_emb_tbf.shape
    Hd = p["dec_whhT"].shape[0]
    out_shape = (jax.ShapeDtypeStruct((Tout, B, Hd), jnp.bfloat16),
                 jax.ShapeDtypeStruct((Tout, B, Hd), jnp.bfloat16))
    return pl.pallas_call(
        decoder_rnn_kernel,
        out_shape=out_shape,
        in_specs=[_vmem() for _ in range(12)],
        out_specs=(_vmem(), _vmem()),
        scratch_shapes=[pltpu.VMEM((B, Hd), jnp.float32),
                        pltpu.VMEM((B, Hd), jnp.float32),
                        pltpu.VMEM((Tout, B, 3 * Hd), jnp.float32)],
        compiler_params=_tpu_params(vmem_limit_bytes=64 * 1024 * 1024),
    )(y_emb_tbf, enc_out, final_hidden,
      p["map_wT"], p["map_b"],
      p["dec_wihT_y"], p["dec_wihT_c"], p["dec_whhT"], p["dec_bih"], p["dec_bhh"],
      mctx, mh)


# ----------------------------------------------------------------------------
# Classifier kernel: hoisted out of the recurrence; gridded over time blocks so
# the (Tout, B, Vpad) logits stream to HBM; Vpad is 128-lane aligned.
# ----------------------------------------------------------------------------
def classifier_kernel(ctxd_ref, hd_ref, wc_ref, wh_ref, b_ref, out_ref):
    tt, B, Hd = ctxd_ref.shape
    Vp = out_ref.shape[-1]
    ctx_flat = ctxd_ref[...].reshape(tt * B, Hd)
    h_flat = hd_ref[...].reshape(tt * B, Hd)
    logits = (jnp.dot(ctx_flat, wc_ref[...], preferred_element_type=jnp.float32)
              + jnp.dot(h_flat, wh_ref[...], preferred_element_type=jnp.float32)
              + b_ref[...])
    out_ref[...] = logits.reshape(tt, B, Vp)


def run_classifier(ctxd, hd, p, time_block=4):
    Tout, B, Hd = ctxd.shape
    Vp = p["cls_wT_ctx"].shape[1]
    tt = max(1, min(time_block, Tout))
    while Tout % tt:
        tt -= 1
    grid = (Tout // tt,)
    return pl.pallas_call(
        classifier_kernel,
        out_shape=jax.ShapeDtypeStruct((Tout, B, Vp), jnp.float32),
        grid=grid,
        in_specs=[
            pl.BlockSpec((tt, B, Hd), lambda i: (i, 0, 0)),
            pl.BlockSpec((tt, B, Hd), lambda i: (i, 0, 0)),
            pl.BlockSpec((Hd, Vp), lambda i: (0, 0)),
            pl.BlockSpec((Hd, Vp), lambda i: (0, 0)),
            pl.BlockSpec((1, Vp), lambda i: (0, 0)),
        ],
        out_specs=pl.BlockSpec((tt, B, Vp), lambda i: (i, 0, 0)),
        compiler_params=_tpu_params(dimension_semantics=("parallel",),
                                    vmem_limit_bytes=64 * 1024 * 1024),
    )(ctxd, hd, p["cls_wT_ctx"], p["cls_wT_h"], p["cls_bias"])


# ----------------------------------------------------------------------------
# Full NMTModel forward (sample_probability = 0.0 -> pure teacher forcing)
# ----------------------------------------------------------------------------
def nmt_forward(params, x_source, x_lengths, target_sequence, dropout_seed=0):
    p = params
    Hd = p["dec_whhT"].shape[0]
    Vt = p["tgt_emb"].shape[0]

    # encoder embedding (glue) -> time-major bf16
    x_emb = jnp.take(p["src_emb"], x_source, axis=0)                  # (B, Ts, Es)
    x_emb_tbf = jnp.transpose(x_emb, (1, 0, 2)).astype(jnp.bfloat16)  # (Ts, B, Es)
    lengths_b1 = x_lengths.astype(jnp.int32).reshape(-1, 1)

    enc_out, final_hidden = run_encoder(x_emb_tbf, lengths_b1, p)
    # enc_out: (Ts, B, 2H) bf16 already laid out as the decoder consumes it
    # final_hidden: (B, 2H) f32

    # decoder embedding (teacher forcing: inputs are the target tokens themselves)
    y_emb = jnp.take(p["tgt_emb"], target_sequence, axis=0)           # (B, To, Et)
    y_emb_tbf = jnp.transpose(y_emb, (1, 0, 2)).astype(jnp.bfloat16)  # (To, B, Et)
    To, B, _ = y_emb_tbf.shape

    # dropout masks for F.dropout(prediction_vector, 0.3) (training=True default)
    keep = 0.7
    kc, kh = jax.random.split(jax.random.PRNGKey(dropout_seed))
    mctx = (jax.random.uniform(kc, (To, B, Hd)) < keep).astype(jnp.float32) / keep
    mh = (jax.random.uniform(kh, (To, B, Hd)) < keep).astype(jnp.float32) / keep

    ctxd, hd = run_decoder_rnn(y_emb_tbf, enc_out, final_hidden, mctx, mh, p)
    logits_pad = run_classifier(ctxd, hd, p)                          # (To, B, Vpad)
    return jnp.transpose(logits_pad, (1, 0, 2))[:, :, :Vt]            # (B, To, Vt)


# TODO(synk): scheduled-sampling branch (np.random + torch.multinomial when
# sample_probability > 0) and the CPU-side numpy caches (_cached_ht /
# cached_p_attn / _cached_decoder_state) are not implemented; with
# sample_probability=0.0 they do not affect the returned tensor.


# ----------------------------------------------------------------------------
# Deterministic parameter construction (matches nn.Module __init__ shapes)
# ----------------------------------------------------------------------------
def init_params(src_vocab, src_emb_sz, tgt_vocab, tgt_emb_sz, enc_sz):
    dec_sz = 2 * enc_sz
    key = jax.random.PRNGKey(42)
    ks = iter(jax.random.split(key, 32))
    r = lambda shape: (0.1 * jax.random.normal(next(ks), shape)).astype(jnp.float32)

    # embeddings (padding_idx=0 row is zero, as in nn.Embedding)
    src_emb = r((src_vocab, src_emb_sz)).at[0].set(0.0)
    tgt_emb = r((tgt_vocab, tgt_emb_sz)).at[0].set(0.0)
    p = {"src_emb": src_emb, "tgt_emb": tgt_emb}

    # bidirectional encoder GRU (gate order r,z,n); input weights of both
    # directions pre-transposed and concatenated along the output axis: (Es, 6H)
    wih_f = r((3 * enc_sz, src_emb_sz))
    wih_b = r((3 * enc_sz, src_emb_sz))
    p["enc_wihT_fb"] = jnp.concatenate([wih_f.T, wih_b.T], axis=1).astype(jnp.bfloat16)
    p["enc_bih_fb"] = jnp.concatenate(
        [r((3 * enc_sz,)), r((3 * enc_sz,))]).reshape(1, -1)
    p["enc_whhT_f"] = r((3 * enc_sz, enc_sz)).T.astype(jnp.bfloat16)   # (H, 3H)
    p["enc_whhT_b"] = r((3 * enc_sz, enc_sz)).T.astype(jnp.bfloat16)
    p["enc_bhh_f"] = r((3 * enc_sz,)).reshape(1, -1)
    p["enc_bhh_b"] = r((3 * enc_sz,)).reshape(1, -1)

    # decoder hidden_map: Linear(dec_sz, dec_sz)
    p["map_wT"] = r((dec_sz, dec_sz)).T.astype(jnp.bfloat16)
    p["map_b"] = r((dec_sz,)).reshape(1, -1)

    # decoder GRUCell: input = cat([y_emb(Et), context(dec_sz)])
    w_ih = r((3 * dec_sz, tgt_emb_sz + dec_sz))
    p["dec_wihT_y"] = w_ih[:, :tgt_emb_sz].T.astype(jnp.bfloat16)      # (Et, 3Hd)
    p["dec_wihT_c"] = w_ih[:, tgt_emb_sz:].T.astype(jnp.bfloat16)      # (Hd, 3Hd)
    p["dec_whhT"] = r((3 * dec_sz, dec_sz)).T.astype(jnp.bfloat16)     # (Hd, 3Hd)
    p["dec_bih"] = r((3 * dec_sz,)).reshape(1, -1)
    p["dec_bhh"] = r((3 * dec_sz,)).reshape(1, -1)

    # classifier: Linear(2*dec_sz, tgt_vocab); vocab padded to 128 lanes,
    # input concat folded into split matmuls
    vpad = ((tgt_vocab + 127) // 128) * 128
    w_cls = r((tgt_vocab, 2 * dec_sz))
    wc = jnp.zeros((dec_sz, vpad), jnp.float32).at[:, :tgt_vocab].set(w_cls[:, :dec_sz].T)
    wh = jnp.zeros((dec_sz, vpad), jnp.float32).at[:, :tgt_vocab].set(w_cls[:, dec_sz:].T)
    p["cls_wT_ctx"] = wc.astype(jnp.bfloat16)
    p["cls_wT_h"] = wh.astype(jnp.bfloat16)
    p["cls_bias"] = jnp.zeros((1, vpad), jnp.float32).at[0, :tgt_vocab].set(
        r((tgt_vocab,)))
    return p


if __name__ == "__main__":
    # small sizes consistent with the module
    SRC_VOCAB, SRC_EMB = 32, 16
    TGT_VOCAB, TGT_EMB = 24, 16
    ENC_SZ = 32                       # decoding_size = 64
    B, T_SRC, T_TGT = 2, 8, 8
    BOS_INDEX = 1                     # unused on the teacher-forcing path

    params = init_params(SRC_VOCAB, SRC_EMB, TGT_VOCAB, TGT_EMB, ENC_SZ)

    key = jax.random.PRNGKey(0)
    k1, k2 = jax.random.split(key)
    x_lengths = jnp.array([8, 6], dtype=jnp.int32)   # sorted desc (pack_padded_sequence)
    x_source = jax.random.randint(k1, (B, T_SRC), 1, SRC_VOCAB, dtype=jnp.int32)
    # zero-out (pad) positions beyond each sequence's length
    pos = jnp.arange(T_SRC)[None, :]
    x_source = jnp.where(pos < x_lengths[:, None], x_source, 0)
    target_sequence = jax.random.randint(k2, (B, T_TGT), 1, TGT_VOCAB, dtype=jnp.int32)
    target_sequence = target_sequence.at[:, 0].set(BOS_INDEX)

    out = jax.jit(nmt_forward, static_argnames=("dropout_seed",))(
        params, x_source, x_lengths, target_sequence, dropout_seed=0)
    out = jax.block_until_ready(out)
    assert out.shape == (B, T_TGT, TGT_VOCAB)
    assert bool(jnp.all(jnp.isfinite(out)))
    print("KERNEL_OK")
</pallas_src>

<mosaic_0001>
module attributes {stable_mosaic.version = 11 : i64} {
  func.func @encoder_kernel(%arg0: memref<8x2x16xbf16, #tpu.memory_space<vmem>>, %arg1: memref<2x1xi32, #tpu.memory_space<vmem>>, %arg2: memref<16x192xbf16, #tpu.memory_space<vmem>>, %arg3: memref<1x192xf32, #tpu.memory_space<vmem>>, %arg4: memref<32x96xbf16, #tpu.memory_space<vmem>>, %arg5: memref<1x96xf32, #tpu.memory_space<vmem>>, %arg6: memref<32x96xbf16, #tpu.memory_space<vmem>>, %arg7: memref<1x96xf32, #tpu.memory_space<vmem>>, %arg8: memref<8x2x64xbf16, #tpu.memory_space<vmem>>, %arg9: memref<2x64xf32, #tpu.memory_space<vmem>>, %arg10: memref<2x32xf32, #tpu.memory_space<vmem>>, %arg11: memref<2x32xf32, #tpu.memory_space<vmem>>, %arg12: memref<8x2x192xf32, #tpu.memory_space<vmem>>) attributes {dimension_semantics = [], scalar_prefetch = 0 : i64, scratch_operands = 3 : i64, tpu.core_type = #tpu.core_type<tc>} {
    %c0 = arith.constant 0 : index
    %c0_0 = arith.constant 0 : index
    %c0_1 = arith.constant 0 : index
    %0 = vector.load %arg0[%c0, %c0_0, %c0_1] : memref<8x2x16xbf16, #tpu.memory_space<vmem>>, vector<8x2x16xbf16>
    %1 = vector.shape_cast %0 : vector<8x2x16xbf16> to vector<16x16xbf16>
    %c0_2 = arith.constant 0 : index
    %c0_3 = arith.constant 0 : index
    %2 = vector.load %arg2[%c0_2, %c0_3] : memref<16x192xbf16, #tpu.memory_space<vmem>>, vector<16x192xbf16>
    %cst = arith.constant dense<0.000000e+00> : vector<16x192xf32>
    %3 = tpu.matmul %1, %2, %cst {dimension_numbers = #tpu.dot_dimension_numbers<[1], [0], [0], [1], [0, 0, 1, 1], [], []>} : vector<16x16xbf16>, vector<16x192xbf16>, vector<16x192xf32> -> vector<16x192xf32>
    %c0_4 = arith.constant 0 : index
    %c0_5 = arith.constant 0 : index
    %4 = vector.load %arg3[%c0_4, %c0_5] : memref<1x192xf32, #tpu.memory_space<vmem>>, vector<1x192xf32>
    %5 = vector.broadcast %4 : vector<1x192xf32> to vector<16x192xf32>
    %6 = arith.addf %3, %5 : vector<16x192xf32>
    %7 = vector.shape_cast %6 : vector<16x192xf32> to vector<8x2x192xf32>
    %c0_6 = arith.constant 0 : index
    %c0_7 = arith.constant 0 : index
    %c0_8 = arith.constant 0 : index
    %8 = vector.load %arg12[%c0_6, %c0_7, %c0_8] : memref<8x2x192xf32, #tpu.memory_space<vmem>>, vector<8x2x192xf32>
    tpu.vector_store %arg12[%c0_6, %c0_7, %c0_8], %7 {strides = array<i32>} : memref<8x2x192xf32, #tpu.memory_space<vmem>>, vector<8x2x192xf32>,
    %cst_9 = arith.constant 0.000000e+00 : f32
    %9 = vector.broadcast %cst_9 : f32 to vector<2x32xf32>
    %c0_10 = arith.constant 0 : index
    %c0_11 = arith.constant 0 : index
    %10 = vector.load %arg10[%c0_10, %c0_11] : memref<2x32xf32, #tpu.memory_space<vmem>>, vector<2x32xf32>
    tpu.vector_store %arg10[%c0_10, %c0_11], %9 {strides = array<i32>} : memref<2x32xf32, #tpu.memory_space<vmem>>, vector<2x32xf32>,
    %cst_12 = arith.constant 0.000000e+00 : f32
    %11 = vector.broadcast %cst_12 : f32 to vector<2x32xf32>
    %c0_13 = arith.constant 0 : index
    %c0_14 = arith.constant 0 : index
    %12 = vector.load %arg11[%c0_13, %c0_14] : memref<2x32xf32, #tpu.memory_space<vmem>>, vector<2x32xf32>
    tpu.vector_store %arg11[%c0_13, %c0_14], %11 {strides = array<i32>} : memref<2x32xf32, #tpu.memory_space<vmem>>, vector<2x32xf32>,
    %c0_15 = arith.constant 0 : index
    %c0_16 = arith.constant 0 : index
    %13 = vector.load %arg1[%c0_15, %c0_16] : memref<2x1xi32, #tpu.memory_space<vmem>>, vector<2x1xi32>
    %c0_17 = arith.constant 0 : index
    %c0_18 = arith.constant 0 : index
    %14 = vector.load %arg4[%c0_17, %c0_18] : memref<32x96xbf16, #tpu.memory_space<vmem>>, vector<32x96xbf16>
    %c0_19 = arith.constant 0 : index
    %c0_20 = arith.constant 0 : index
    %15 = vector.load %arg5[%c0_19, %c0_20] : memref<1x96xf32, #tpu.memory_space<vmem>>, vector<1x96xf32>
    %c0_21 = arith.constant 0 : index
    %c0_22 = arith.constant 0 : index
    %16 = vector.load %arg6[%c0_21, %c0_22] : memref<32x96xbf16, #tpu.memory_space<vmem>>, vector<32x96xbf16>
    %c0_23 = arith.constant 0 : index
    %c0_24 = arith.constant 0 : index
    %17 = vector.load %arg7[%c0_23, %c0_24] : memref<1x96xf32, #tpu.memory_space<vmem>>, vector<1x96xf32>
    %c0_i32 = arith.constant 0 : i32
    %c7_i32 = arith.constant 7 : i32
    %18 = arith.subi %c7_i32, %c0_i32 : i32
    %19 = arith.index_cast %c0_i32 : i32 to index
    %c0_25 = arith.constant 0 : index
    %c0_26 = arith.constant 0 : index
    %20 = vector.load %arg12[%19, %c0_25, %c0_26] : memref<8x2x192xf32, #tpu.memory_space<vmem>>, vector<1x2x192xf32>
    %21 = vector.shape_cast %20 : vector<1x2x192xf32> to vector<2x192xf32>
    %22 = arith.index_cast %18 : i32 to index
    %c0_27 = arith.constant 0 : index
    %c0_28 = arith.constant 0 : index
    %23 = vector.load %arg12[%22, %c0_27, %c0_28] : memref<8x2x192xf32, #tpu.memory_space<vmem>>, vector<1x2x192xf32>
    %24 = vector.shape_cast %23 : vector<1x2x192xf32> to vector<2x192xf32>
    %c0_29 = arith.constant 0 : index
    %c0_30 = arith.constant 0 : index
    %25 = vector.load %arg10[%c0_29, %c0_30] : memref<2x32xf32, #tpu.memory_space<vmem>>, vector<2x32xf32>
    %26 = arith.truncf %25 : vector<2x32xf32> to vector<2x32xbf16>
    %cst_31 = arith.constant dense<0.000000e+00> : vector<2x96xf32>
    %27 = tpu.matmul %26, %14, %cst_31 {dimension_numbers = #tpu.dot_dimension_numbers<[1], [0], [0], [1], [0, 0, 1, 1], [], []>} : vector<2x32xbf16>, vector<32x96xbf16>, vector<2x96xf32> -> vector<2x96xf32>
    %28 = vector.broadcast %15 : vector<1x96xf32> to vector<2x96xf32>
    %29 = arith.addf %27, %28 : vector<2x96xf32>
    %30 = vector.extract_strided_slice %21 {offsets = [0, 0], sizes = [2, 96], strides = [1, 1]} : vector<2x192xf32> to vector<2x96xf32>
    %31 = vector.extract_strided_slice %30 {offsets = [0, 0], sizes = [2, 32], strides = [1, 1]} : vector<2x96xf32> to vector<2x32xf32>
    %32 = vector.extract_strided_slice %29 {offsets = [0, 0], sizes = [2, 32], strides = [1, 1]} : vector<2x96xf32> to vector<2x32xf32>
    %33 = arith.addf %31, %32 : vector<2x32xf32>
    %34 = arith.negf %33 : vector<2x32xf32>
    %35 = math.exp %34 : vector<2x32xf32>
    %cst_32 = arith.constant 1.000000e+00 : f32
    %36 = vector.broadcast %cst_32 : f32 to vector<2x32xf32>
    %37 = arith.addf %36, %35 : vector<2x32xf32>
    %38 = arith.divf %36, %37 : vector<2x32xf32>
    %39 = vector.extract_strided_slice %30 {offsets = [0, 32], sizes = [2, 32], strides = [1, 1]} : vector<2x96xf32> to vector<2x32xf32>
    %40 = vector.extract_strided_slice %29 {offsets = [0, 32], sizes = [2, 32], strides = [1, 1]} : vector<2x96xf32> to vector<2x32xf32>
    %41 = arith.addf %39, %40 : vector<2x32xf32>
    %42 = arith.negf %41 : vector<2x32xf32>
    %43 = math.exp %42 : vector<2x32xf32>
    %cst_33 = arith.constant 1.000000e+00 : f32
    %44 = vector.broadcast %cst_33 : f32 to vector<2x32xf32>
    %45 = arith.addf %44, %43 : vector<2x32xf32>
    %46 = arith.divf %44, %45 : vector<2x32xf32>
    %47 = vector.extract_strided_slice %30 {offsets = [0, 64], sizes = [2, 32], strides = [1, 1]} : vector<2x96xf32> to vector<2x32xf32>
    %48 = vector.extract_strided_slice %29 {offsets = [0, 64], sizes = [2, 32], strides = [1, 1]} : vector<2x96xf32> to vector<2x32xf32>
    %49 = arith.mulf %38, %48 : vector<2x32xf32>
    %50 = arith.addf %47, %49 : vector<2x32xf32>
    %51 = math.tanh %50 : vector<2x32xf32>
    %cst_34 = arith.constant 1.000000e+00 : f32
    %52 = vector.broadcast %cst_34 : f32 to vector<2x32xf32>
    %53 = arith.subf %52, %46 : vector<2x32xf32>
    %54 = arith.mulf %53, %51 : vector<2x32xf32>
    %55 = arith.mulf %46, %25 : vector<2x32xf32>
    %56 = arith.addf %54, %55 : vector<2x32xf32>
    %57 = vector.broadcast %c0_i32 : i32 to vector<2x1xi32>
    %58 = arith.cmpi slt, %57, %13 : vector<2x1xi32>
    %59 = vector.shape_cast %58 : vector<2x1xi1> to vector<2x1xi1>
    %60 = vector.broadcast %59 : vector<2x1xi1> to vector<2x32xi1>
    %61 = arith.select %60, %56, %25 : vector<2x32xi1>, vector<2x32xf32>
    %c0_35 = arith.constant 0 : index
    %c0_36 = arith.constant 0 : index
    %62 = vector.load %arg10[%c0_35, %c0_36] : memref<2x32xf32, #tpu.memory_space<vmem>>, vector<2x32xf32>
    tpu.vector_store %arg10[%c0_35, %c0_36], %61 {strides = array<i32>} : memref<2x32xf32, #tpu.memory_space<vmem>>, vector<2x32xf32>,
    %cst_37 = arith.constant 0.000000e+00 : f32
    %63 = vector.shape_cast %58 : vector<2x1xi1> to vector<2x1xi1>
    %64 = vector.broadcast %63 : vector<2x1xi1> to vector<2x32xi1>
    %65 = vector.broadcast %cst_37 : f32 to vector<2x32xf32>
    %66 = arith.select %64, %61, %65 : vector<2x32xi1>, vector<2x32xf32>
    %67 = arith.truncf %66 : vector<2x32xf32> to vector<2x32xbf16>
    %68 = arith.index_cast %c0_i32 : i32 to index
    %c0_38 = arith.constant 0 : index
    %c0_39 = arith.constant 0 : index
    %69 = vector.load %arg8[%68, %c0_38, %c0_39] : memref<8x2x64xbf16, #tpu.memory_space<vmem>>, vector<1x2x32xbf16>
    %70 = vector.shape_cast %69 : vector<1x2x32xbf16> to vector<2x32xbf16>
    %71 = vector.shape_cast %67 : vector<2x32xbf16> to vector<1x2x32xbf16>
    tpu.vector_store %arg8[%68, %c0_38, %c0_39], %71 {strides = array<i32>} : memref<8x2x64xbf16, #tpu.memory_space<vmem>>, vector<1x2x32xbf16>,
    %c0_40 = arith.constant 0 : index
    %c0_41 = arith.constant 0 : index
    %72 = vector.load %arg11[%c0_40, %c0_41] : memref<2x32xf32, #tpu.memory_space<vmem>>, vector<2x32xf32>
    %73 = arith.truncf %72 : vector<2x32xf32> to vector<2x32xbf16>
    %cst_42 = arith.constant dense<0.000000e+00> : vector<2x96xf32>
    %74 = tpu.matmul %73, %16, %cst_42 {dimension_numbers = #tpu.dot_dimension_numbers<[1], [0], [0], [1], [0, 0, 1, 1], [], []>} : vector<2x32xbf16>, vector<32x96xbf16>, vector<2x96xf32> -> vector<2x96xf32>
    %75 = vector.broadcast %17 : vector<1x96xf32> to vector<2x96xf32>
    %76 = arith.addf %74, %75 : vector<2x96xf32>
    %77 = vector.extract_strided_slice %24 {offsets = [0, 96], sizes = [2, 96], strides = [1, 1]} : vector<2x192xf32> to vector<2x96xf32>
    %78 = vector.extract_strided_slice %77 {offsets = [0, 0], sizes = [2, 32], strides = [1, 1]} : vector<2x96xf32> to vector<2x32xf32>
    %79 = vector.extract_strided_slice %76 {offsets = [0, 0], sizes = [2, 32], strides = [1, 1]} : vector<2x96xf32> to vector<2x32xf32>
    %80 = arith.addf %78, %79 : vector<2x32xf32>
    %81 = arith.negf %80 : vector<2x32xf32>
    %82 = math.exp %81 : vector<2x32xf32>
    %cst_43 = arith.constant 1.000000e+00 : f32
    %83 = vector.broadcast %cst_43 : f32 to vector<2x32xf32>
    %84 = arith.addf %83, %82 : vector<2x32xf32>
    %85 = arith.divf %83, %84 : vector<2x32xf32>
    %86 = vector.extract_strided_slice %77 {offsets = [0, 32], sizes = [2, 32], strides = [1, 1]} : vector<2x96xf32> to vector<2x32xf32>
    %87 = vector.extract_strided_slice %76 {offsets = [0, 32], sizes = [2, 32], strides = [1, 1]} : vector<2x96xf32> to vector<2x32xf32>
    %88 = arith.addf %86, %87 : vector<2x32xf32>
    %89 = arith.negf %88 : vector<2x32xf32>
    %90 = math.exp %89 : vector<2x32xf32>
    %cst_44 = arith.constant 1.000000e+00 : f32
    %91 = vector.broadcast %cst_44 : f32 to vector<2x32xf32>
    %92 = arith.addf %91, %90 : vector<2x32xf32>
    %93 = arith.divf %91, %92 : vector<2x32xf32>
    %94 = vector.extract_strided_slice %77 {offsets = [0, 64], sizes = [2, 32], strides = [1, 1]} : vector<2x96xf32> to vector<2x32xf32>
    %95 = vector.extract_strided_slice %76 {offsets = [0, 64], sizes = [2, 32], strides = [1, 1]} : vector<2x96xf32> to vector<2x32xf32>
    %96 = arith.mulf %85, %95 : vector<2x32xf32>
    %97 = arith.addf %94, %96 : vector<2x32xf32>
    %98 = math.tanh %97 : vector<2x32xf32>
    %cst_45 = arith.constant 1.000000e+00 : f32
    %99 = vector.broadcast %cst_45 : f32 to vector<2x32xf32>
    %100 = arith.subf %99, %93 : vector<2x32xf32>
    %101 = arith.mulf %100, %98 : vector<2x32xf32>
    %102 = arith.mulf %93, %72 : vector<2x32xf32>
    %103 = arith.addf %101, %102 : vector<2x32xf32>
    %104 = vector.broadcast %18 : i32 to vector<2x1xi32>
    %105 = arith.cmpi slt, %104, %13 : vector<2x1xi32>
    %106 = vector.shape_cast %105 : vector<2x1xi1> to vector<2x1xi1>
    %107 = vector.broadcast %106 : vector<2x1xi1> to vector<2x32xi1>
    %108 = arith.select %107, %103, %72 : vector<2x32xi1>, vector<2x32xf32>
    %c0_46 = arith.constant 0 : index
    %c0_47 = arith.constant 0 : index
    %109 = vector.load %arg11[%c0_46, %c0_47] : memref<2x32xf32, #tpu.memory_space<vmem>>, vector<2x32xf32>
    tpu.vector_store %arg11[%c0_46, %c0_47], %108 {strides = array<i32>} : memref<2x32xf32, #tpu.memory_space<vmem>>, vector<2x32xf32>,
    %cst_48 = arith.constant 0.000000e+00 : f32
    %110 = vector.shape_cast %105 : vector<2x1xi1> to vector<2x1xi1>
    %111 = vector.broadcast %110 : vector<2x1xi1> to vector<2x32xi1>
    %112 = vector.broadcast %cst_48 : f32 to vector<2x32xf32>
    %113 = arith.select %111, %108, %112 : vector<2x32xi1>, vector<2x32xf32>
    %114 = arith.truncf %113 : vector<2x32xf32> to vector<2x32xbf16>
    %115 = arith.index_cast %18 : i32 to index
    %c0_49 = arith.constant 0 : index
    %c32 = arith.constant 32 : index
    %116 = vector.load %arg8[%115, %c0_49, %c32] : memref<8x2x64xbf16, #tpu.memory_space<vmem>>, vector<1x2x32xbf16>
    %117 = vector.shape_cast %116 : vector<1x2x32xbf16> to vector<2x32xbf16>
    %118 = vector.shape_cast %114 : vector<2x32xbf16> to vector<1x2x32xbf16>
    tpu.vector_store %arg8[%115, %c0_49, %c32], %118 {strides = array<i32>} : memref<8x2x64xbf16, #tpu.memory_space<vmem>>, vector<1x2x32xbf16>,
    %c1_i32 = arith.constant 1 : i32
    %c7_i32_50 = arith.constant 7 : i32
    %119 = arith.subi %c7_i32_50, %c1_i32 : i32
    %120 = arith.index_cast %c1_i32 : i32 to index
    %c0_51 = arith.constant 0 : index
    %c0_52 = arith.constant 0 : index
    %121 = vector.load %arg12[%120, %c0_51, %c0_52] : memref<8x2x192xf32, #tpu.memory_space<vmem>>, vector<1x2x192xf32>
    %122 = vector.shape_cast %121 : vector<1x2x192xf32> to vector<2x192xf32>
    %123 = arith.index_cast %119 : i32 to index
    %c0_53 = arith.constant 0 : index
    %c0_54 = arith.constant 0 : index
    %124 = vector.load %arg12[%123, %c0_53, %c0_54] : memref<8x2x192xf32, #tpu.memory_space<vmem>>, vector<1x2x192xf32>
    %125 = vector.shape_cast %124 : vector<1x2x192xf32> to vector<2x192xf32>
    %c0_55 = arith.constant 0 : index
    %c0_56 = arith.constant 0 : index
    %126 = vector.load %arg10[%c0_55, %c0_56] : memref<2x32xf32, #tpu.memory_space<vmem>>, vector<2x32xf32>
    %127 = arith.truncf %126 : vector<2x32xf32> to vector<2x32xbf16>
    %cst_57 = arith.constant dense<0.000000e+00> : vector<2x96xf32>
    %128 = tpu.matmul %127, %14, %cst_57 {dimension_numbers = #tpu.dot_dimension_numbers<[1], [0], [0], [1], [0, 0, 1, 1], [], []>} : vector<2x32xbf16>, vector<32x96xbf16>, vector<2x96xf32> -> vector<2x96xf32>
    %129 = vector.broadcast %15 : vector<1x96xf32> to vector<2x96xf32>
    %130 = arith.addf %128, %129 : vector<2x96xf32>
    %131 = vector.extract_strided_slice %122 {offsets = [0, 0], sizes = [2, 96], strides = [1, 1]} : vector<2x192xf32> to vector<2x96xf32>
    %132 = vector.extract_strided_slice %131 {offsets = [0, 0], sizes = [2, 32], strides = [1, 1]} : vector<2x96xf32> to vector<2x32xf32>
    %133 = vector.extract_strided_slice %130 {offsets = [0, 0], sizes = [2, 32], strides = [1, 1]} : vector<2x96xf32> to vector<2x32xf32>
    %134 = arith.addf %132, %133 : vector<2x32xf32>
    %135 = arith.negf %134 : vector<2x32xf32>
    %136 = math.exp %135 : vector<2x32xf32>
    %cst_58 = arith.constant 1.000000e+00 : f32
    %137 = vector.broadcast %cst_58 : f32 to vector<2x32xf32>
    %138 = arith.addf %137, %136 : vector<2x32xf32>
    %139 = arith.divf %137, %138 : vector<2x32xf32>
    %140 = vector.extract_strided_slice %131 {offsets = [0, 32], sizes = [2, 32], strides = [1, 1]} : vector<2x96xf32> to vector<2x32xf32>
    %141 = vector.extract_strided_slice %130 {offsets = [0, 32], sizes = [2, 32], strides = [1, 1]} : vector<2x96xf32> to vector<2x32xf32>
    %142 = arith.addf %140, %141 : vector<2x32xf32>
    %143 = arith.negf %142 : vector<2x32xf32>
    %144 = math.exp %143 : vector<2x32xf32>
    %cst_59 = arith.constant 1.000000e+00 : f32
    %145 = vector.broadcast %cst_59 : f32 to vector<2x32xf32>
    %146 = arith.addf %145, %144 : vector<2x32xf32>
    %147 = arith.divf %145, %146 : vector<2x32xf32>
    %148 = vector.extract_strided_slice %131 {offsets = [0, 64], sizes = [2, 32], strides = [1, 1]} : vector<2x96xf32> to vector<2x32xf32>
    %149 = vector.extract_strided_slice %130 {offsets = [0, 64], sizes = [2, 32], strides = [1, 1]} : vector<2x96xf32> to vector<2x32xf32>
    %150 = arith.mulf %139, %149 : vector<2x32xf32>
    %151 = arith.addf %148, %150 : vector<2x32xf32>
    %152 = math.tanh %151 : vector<2x32xf32>
    %cst_60 = arith.constant 1.000000e+00 : f32
    %153 = vector.broadcast %cst_60 : f32 to vector<2x32xf32>
    %154 = arith.subf %153, %147 : vector<2x32xf32>
    %155 = arith.mulf %154, %152 : vector<2x32xf32>
    %156 = arith.mulf %147, %126 : vector<2x32xf32>
    %157 = arith.addf %155, %156 : vector<2x32xf32>
    %158 = vector.broadcast %c1_i32 : i32 to vector<2x1xi32>
    %159 = arith.cmpi slt, %158, %13 : vector<2x1xi32>
    %160 = vector.shape_cast %159 : vector<2x1xi1> to vector<2x1xi1>
    %161 = vector.broadcast %160 : vector<2x1xi1> to vector<2x32xi1>
    %162 = arith.select %161, %157, %126 : vector<2x32xi1>, vector<2x32xf32>
    %c0_61 = arith.constant 0 : index
    %c0_62 = arith.constant 0 : index
    %163 = vector.load %arg10[%c0_61, %c0_62] : memref<2x32xf32, #tpu.memory_space<vmem>>, vector<2x32xf32>
    tpu.vector_store %arg10[%c0_61, %c0_62], %162 {strides = array<i32>} : memref<2x32xf32, #tpu.memory_space<vmem>>, vector<2x32xf32>,
    %cst_63 = arith.constant 0.000000e+00 : f32
    %164 = vector.shape_cast %159 : vector<2x1xi1> to vector<2x1xi1>
    %165 = vector.broadcast %164 : vector<2x1xi1> to vector<2x32xi1>
    %166 = vector.broadcast %cst_63 : f32 to vector<2x32xf32>
    %167 = arith.select %165, %162, %166 : vector<2x32xi1>, vector<2x32xf32>
    %168 = arith.truncf %167 : vector<2x32xf32> to vector<2x32xbf16>
    %169 = arith.index_cast %c1_i32 : i32 to index
    %c0_64 = arith.constant 0 : index
    %c0_65 = arith.constant 0 : index
    %170 = vector.load %arg8[%169, %c0_64, %c0_65] : memref<8x2x64xbf16, #tpu.memory_space<vmem>>, vector<1x2x32xbf16>
    %171 = vector.shape_cast %170 : vector<1x2x32xbf16> to vector<2x32xbf16>
    %172 = vector.shape_cast %168 : vector<2x32xbf16> to vector<1x2x32xbf16>
    tpu.vector_store %arg8[%169, %c0_64, %c0_65], %172 {strides = array<i32>} : memref<8x2x64xbf16, #tpu.memory_space<vmem>>, vector<1x2x32xbf16>,
    %c0_66 = arith.constant 0 : index
    %c0_67 = arith.constant 0 : index
    %173 = vector.load %arg11[%c0_66, %c0_67] : memref<2x32xf32, #tpu.memory_space<vmem>>, vector<2x32xf32>
    %174 = arith.truncf %173 : vector<2x32xf32> to vector<2x32xbf16>
    %cst_68 = arith.constant dense<0.000000e+00> : vector<2x96xf32>
    %175 = tpu.matmul %174, %16, %cst_68 {dimension_numbers = #tpu.dot_dimension_numbers<[1], [0], [0], [1], [0, 0, 1, 1], [], []>} : vector<2x32xbf16>, vector<32x96xbf16>, vector<2x96xf32> -> vector<2x96xf32>
    %176 = vector.broadcast %17 : vector<1x96xf32> to vector<2x96xf32>
    %177 = arith.addf %175, %176 : vector<2x96xf32>
    %178 = vector.extract_strided_slice %125 {offsets = [0, 96], sizes = [2, 96], strides = [1, 1]} : vector<2x192xf32> to vector<2x96xf32>
    %179 = vector.extract_strided_slice %178 {offsets = [0, 0], sizes = [2, 32], strides = [1, 1]} : vector<2x96xf32> to vector<2x32xf32>
    %180 = vector.extract_strided_slice %177 {offsets = [0, 0], sizes = [2, 32], strides = [1, 1]} : vector<2x96xf32> to vector<2x32xf32>
    %181 = arith.addf %179, %180 : vector<2x32xf32>
    %182 = arith.negf %181 : vector<2x32xf32>
    %183 = math.exp %182 : vector<2x32xf32>
    %cst_69 = arith.constant 1.000000e+00 : f32
    %184 = vector.broadcast %cst_69 : f32 to vector<2x32xf32>
    %185 = arith.addf %184, %183 : vector<2x32xf32>
    %186 = arith.divf %184, %185 : vector<2x32xf32>
    %187 = vector.extract_strided_slice %178 {offsets = [0, 32], sizes = [2, 32], strides = [1, 1]} : vector<2x96xf32> to vector<2x32xf32>
    %188 = vector.extract_strided_slice %177 {offsets = [0, 32], sizes = [2, 32], strides = [1, 1]} : vector<2x96xf32> to vector<2x32xf32>
    %189 = arith.addf %187, %188 : vector<2x32xf32>
    %190 = arith.negf %189 : vector<2x32xf32>
    %191 = math.exp %190 : vector<2x32xf32>
    %cst_70 = arith.constant 1.000000e+00 : f32
    %192 = vector.broadcast %cst_70 : f32 to vector<2x32xf32>
    %193 = arith.addf %192, %191 : vector<2x32xf32>
    %194 = arith.divf %192, %193 : vector<2x32xf32>
    %195 = vector.extract_strided_slice %178 {offsets = [0, 64], sizes = [2, 32], strides = [1, 1]} : vector<2x96xf32> to vector<2x32xf32>
    %196 = vector.extract_strided_slice %177 {offsets = [0, 64], sizes = [2, 32], strides = [1, 1]} : vector<2x96xf32> to vector<2x32xf32>
    %197 = arith.mulf %186, %196 : vector<2x32xf32>
    %198 = arith.addf %195, %197 : vector<2x32xf32>
    %199 = math.tanh %198 : vector<2x32xf32>
    %cst_71 = arith.constant 1.000000e+00 : f32
    %200 = vector.broadcast %cst_71 : f32 to vector<2x32xf32>
    %201 = arith.subf %200, %194 : vector<2x32xf32>
    %202 = arith.mulf %201, %199 : vector<2x32xf32>
    %203 = arith.mulf %194, %173 : vector<2x32xf32>
    %204 = arith.addf %202, %203 : vector<2x32xf32>
    %205 = vector.broadcast %119 : i32 to vector<2x1xi32>
    %206 = arith.cmpi slt, %205, %13 : vector<2x1xi32>
    %207 = vector.shape_cast %206 : vector<2x1xi1> to vector<2x1xi1>
    %208 = vector.broadcast %207 : vector<2x1xi1> to vector<2x32xi1>
    %209 = arith.select %208, %204, %173 : vector<2x32xi1>, vector<2x32xf32>
    %c0_72 = arith.constant 0 : index
    %c0_73 = arith.constant 0 : index
    %210 = vector.load %arg11[%c0_72, %c0_73] : memref<2x32xf32, #tpu.memory_space<vmem>>, vector<2x32xf32>
    tpu.vector_store %arg11[%c0_72, %c0_73], %209 {strides = array<i32>} : memref<2x32xf32, #tpu.memory_space<vmem>>, vector<2x32xf32>,
    %cst_74 = arith.constant 0.000000e+00 : f32
    %211 = vector.shape_cast %206 : vector<2x1xi1> to vector<2x1xi1>
    %212 = vector.broadcast %211 : vector<2x1xi1> to vector<2x32xi1>
    %213 = vector.broadcast %cst_74 : f32 to vector<2x32xf32>
    %214 = arith.select %212, %209, %213 : vector<2x32xi1>, vector<2x32xf32>
    %215 = arith.truncf %214 : vector<2x32xf32> to vector<2x32xbf16>
    %216 = arith.index_cast %119 : i32 to index
    %c0_75 = arith.constant 0 : index
    %c32_76 = arith.constant 32 : index
    %217 = vector.load %arg8[%216, %c0_75, %c32_76] : memref<8x2x64xbf16, #tpu.memory_space<vmem>>, vector<1x2x32xbf16>
    %218 = vector.shape_cast %217 : vector<1x2x32xbf16> to vector<2x32xbf16>
    %219 = vector.shape_cast %215 : vector<2x32xbf16> to vector<1x2x32xbf16>
    tpu.vector_store %arg8[%216, %c0_75, %c32_76], %219 {strides = array<i32>} : memref<8x2x64xbf16, #tpu.memory_space<vmem>>, vector<1x2x32xbf16>,
    %c2_i32 = arith.constant 2 : i32
    %c7_i32_77 = arith.constant 7 : i32
    %220 = arith.subi %c7_i32_77, %c2_i32 : i32
    %221 = arith.index_cast %c2_i32 : i32 to index
    %c0_78 = arith.constant 0 : index
    %c0_79 = arith.constant 0 : index
    %222 = vector.load %arg12[%221, %c0_78, %c0_79] : memref<8x2x192xf32, #tpu.memory_space<vmem>>, vector<1x2x192xf32>
    %223 = vector.shape_cast %222 : vector<1x2x192xf32> to vector<2x192xf32>
    %224 = arith.index_cast %220 : i32 to index
    %c0_80 = arith.constant 0 : index
    %c0_81 = arith.constant 0 : index
    %225 = vector.load %arg12[%224, %c0_80, %c0_81] : memref<8x2x192xf32, #tpu.memory_space<vmem>>, vector<1x2x192xf32>
    %226 = vector.shape_cast %225 : vector<1x2x192xf32> to vector<2x192xf32>
    %c0_82 = arith.constant 0 : index
    %c0_83 = arith.constant 0 : index
    %227 = vector.load %arg10[%c0_82, %c0_83] : memref<2x32xf32, #tpu.memory_space<vmem>>, vector<2x32xf32>
    %228 = arith.truncf %227 : vector<2x32xf32> to vector<2x32xbf16>
    %cst_84 = arith.constant dense<0.000000e+00> : vector<2x96xf32>
    %229 = tpu.matmul %228, %14, %cst_84 {dimension_numbers = #tpu.dot_dimension_numbers<[1], [0], [0], [1], [0, 0, 1, 1], [], []>} : vector<2x32xbf16>, vector<32x96xbf16>, vector<2x96xf32> -> vector<2x96xf32>
    %230 = vector.broadcast %15 : vector<1x96xf32> to vector<2x96xf32>
    %231 = arith.addf %229, %230 : vector<2x96xf32>
    %232 = vector.extract_strided_slice %223 {offsets = [0, 0], sizes = [2, 96], strides = [1, 1]} : vector<2x192xf32> to vector<2x96xf32>
    %233 = vector.extract_strided_slice %232 {offsets = [0, 0], sizes = [2, 32], strides = [1, 1]} : vector<2x96xf32> to vector<2x32xf32>
    %234 = vector.extract_strided_slice %231 {offsets = [0, 0], sizes = [2, 32], strides = [1, 1]} : vector<2x96xf32> to vector<2x32xf32>
    %235 = arith.addf %233, %234 : vector<2x32xf32>
    %236 = arith.negf %235 : vector<2x32xf32>
    %237 = math.exp %236 : vector<2x32xf32>
    %cst_85 = arith.constant 1.000000e+00 : f32
    %238 = vector.broadcast %cst_85 : f32 to vector<2x32xf32>
    %239 = arith.addf %238, %237 : vector<2x32xf32>
    %240 = arith.divf %238, %239 : vector<2x32xf32>
    %241 = vector.extract_strided_slice %232 {offsets = [0, 32], sizes = [2, 32], strides = [1, 1]} : vector<2x96xf32> to vector<2x32xf32>
    %242 = vector.extract_strided_slice %231 {offsets = [0, 32], sizes = [2, 32], strides = [1, 1]} : vector<2x96xf32> to vector<2x32xf32>
    %243 = arith.addf %241, %242 : vector<2x32xf32>
    %244 = arith.negf %243 : vector<2x32xf32>
    %245 = math.exp %244 : vector<2x32xf32>
    %cst_86 = arith.constant 1.000000e+00 : f32
    %246 = vector.broadcast %cst_86 : f32 to vector<2x32xf32>
    %247 = arith.addf %246, %245 : vector<2x32xf32>
    %248 = arith.divf %246, %247 : vector<2x32xf32>
    %249 = vector.extract_strided_slice %232 {offsets = [0, 64], sizes = [2, 32], strides = [1, 1]} : vector<2x96xf32> to vector<2x32xf32>
    %250 = vector.extract_strided_slice %231 {offsets = [0, 64], sizes = [2, 32], strides = [1, 1]} : vector<2x96xf32> to vector<2x32xf32>
    %251 = arith.mulf %240, %250 : vector<2x32xf32>
    %252 = arith.addf %249, %251 : vector<2x32xf32>
    %253 = math.tanh %252 : vector<2x32xf32>
    %cst_87 = arith.constant 1.000000e+00 : f32
    %254 = vector.broadcast %cst_87 : f32 to vector<2x32xf32>
    %255 = arith.subf %254, %248 : vector<2x32xf32>
    %256 = arith.mulf %255, %253 : vector<2x32xf32>
    %257 = arith.mulf %248, %227 : vector<2x32xf32>
    %258 = arith.addf %256, %257 : vector<2x32xf32>
    %259 = vector.broadcast %c2_i32 : i32 to vector<2x1xi32>
    %260 = arith.cmpi slt, %259, %13 : vector<2x1xi32>
    %261 = vector.shape_cast %260 : vector<2x1xi1> to vector<2x1xi1>
    %262 = vector.broadcast %261 : vector<2x1xi1> to vector<2x32xi1>
    %263 = arith.select %262, %258, %227 : vector<2x32xi1>, vector<2x32xf32>
    %c0_88 = arith.constant 0 : index
    %c0_89 = arith.constant 0 : index
    %264 = vector.load %arg10[%c0_88, %c0_89] : memref<2x32xf32, #tpu.memory_space<vmem>>, vector<2x32xf32>
    tpu.vector_store %arg10[%c0_88, %c0_89], %263 {strides = array<i32>} : memref<2x32xf32, #tpu.memory_space<vmem>>, vector<2x32xf32>,
    %cst_90 = arith.constant 0.000000e+00 : f32
    %265 = vector.shape_cast %260 : vector<2x1xi1> to vector<2x1xi1>
    %266 = vector.broadcast %265 : vector<2x1xi1> to vector<2x32xi1>
    %267 = vector.broadcast %cst_90 : f32 to vector<2x32xf32>
    %268 = arith.select %266, %263, %267 : vector<2x32xi1>, vector<2x32xf32>
    %269 = arith.truncf %268 : vector<2x32xf32> to vector<2x32xbf16>
    %270 = arith.index_cast %c2_i32 : i32 to index
    %c0_91 = arith.constant 0 : index
    %c0_92 = arith.constant 0 : index
    %271 = vector.load %arg8[%270, %c0_91, %c0_92] : memref<8x2x64xbf16, #tpu.memory_space<vmem>>, vector<1x2x32xbf16>
    %272 = vector.shape_cast %271 : vector<1x2x32xbf16> to vector<2x32xbf16>
    %273 = vector.shape_cast %269 : vector<2x32xbf16> to vector<1x2x32xbf16>
    tpu.vector_store %arg8[%270, %c0_91, %c0_92], %273 {strides = array<i32>} : memref<8x2x64xbf16, #tpu.memory_space<vmem>>, vector<1x2x32xbf16>,
    %c0_93 = arith.constant 0 : index
    %c0_94 = arith.constant 0 : index
    %274 = vector.load %arg11[%c0_93, %c0_94] : memref<2x32xf32, #tpu.memory_space<vmem>>, vector<2x32xf32>
    %275 = arith.truncf %274 : vector<2x32xf32> to vector<2x32xbf16>
    %cst_95 = arith.constant dense<0.000000e+00> : vector<2x96xf32>
    %276 = tpu.matmul %275, %16, %cst_95 {dimension_numbers = #tpu.dot_dimension_numbers<[1], [0], [0], [1], [0, 0, 1, 1], [], []>} : vector<2x32xbf16>, vector<32x96xbf16>, vector<2x96xf32> -> vector<2x96xf32>
    %277 = vector.broadcast %17 : vector<1x96xf32> to vector<2x96xf32>
    %278 = arith.addf %276, %277 : vector<2x96xf32>
    %279 = vector.extract_strided_slice %226 {offsets = [0, 96], sizes = [2, 96], strides = [1, 1]} : vector<2x192xf32> to vector<2x96xf32>
    %280 = vector.extract_strided_slice %279 {offsets = [0, 0], sizes = [2, 32], strides = [1, 1]} : vector<2x96xf32> to vector<2x32xf32>
    %281 = vector.extract_strided_slice %278 {offsets = [0, 0], sizes = [2, 32], strides = [1, 1]} : vector<2x96xf32> to vector<2x32xf32>
    %282 = arith.addf %280, %281 : vector<2x32xf32>
    %283 = arith.negf %282 : vector<2x32xf32>
    %284 = math.exp %283 : vector<2x32xf32>
    %cst_96 = arith.constant 1.000000e+00 : f32
    %285 = vector.broadcast %cst_96 : f32 to vector<2x32xf32>
    %286 = arith.addf %285, %284 : vector<2x32xf32>
    %287 = arith.divf %285, %286 : vector<2x32xf32>
    %288 = vector.extract_strided_slice %279 {offsets = [0, 32], sizes = [2, 32], strides = [1, 1]} : vector<2x96xf32> to vector<2x32xf32>
    %289 = vector.extract_strided_slice %278 {offsets = [0, 32], sizes = [2, 32], strides = [1, 1]} : vector<2x96xf32> to vector<2x32xf32>
    %290 = arith.addf %288, %289 : vector<2x32xf32>
    %291 = arith.negf %290 : vector<2x32xf32>
    %292 = math.exp %291 : vector<2x32xf32>
    %cst_97 = arith.constant 1.000000e+00 : f32
    %293 = vector.broadcast %cst_97 : f32 to vector<2x32xf32>
    %294 = arith.addf %293, %292 : vector<2x32xf32>
    %295 = arith.divf %293, %294 : vector<2x32xf32>
    %296 = vector.extract_strided_slice %279 {offsets = [0, 64], sizes = [2, 32], strides = [1, 1]} : vector<2x96xf32> to vector<2x32xf32>
    %297 = vector.extract_strided_slice %278 {offsets = [0, 64], sizes = [2, 32], strides = [1, 1]} : vector<2x96xf32> to vector<2x32xf32>
    %298 = arith.mulf %287, %297 : vector<2x32xf32>
    %299 = arith.addf %296, %298 : vector<2x32xf32>
    %300 = math.tanh %299 : vector<2x32xf32>
    %cst_98 = arith.constant 1.000000e+00 : f32
    %301 = vector.broadcast %cst_98 : f32 to vector<2x32xf32>
    %302 = arith.subf %301, %295 : vector<2x32xf32>
    %303 = arith.mulf %302, %300 : vector<2x32xf32>
    %304 = arith.mulf %295, %274 : vector<2x32xf32>
    %305 = arith.addf %303, %304 : vector<2x32xf32>
    %306 = vector.broadcast %220 : i32 to vector<2x1xi32>
    %307 = arith.cmpi slt, %306, %13 : vector<2x1xi32>
    %308 = vector.shape_cast %307 : vector<2x1xi1> to vector<2x1xi1>
    %309 = vector.broadcast %308 : vector<2x1xi1> to vector<2x32xi1>
    %310 = arith.select %309, %305, %274 : vector<2x32xi1>, vector<2x32xf32>
    %c0_99 = arith.constant 0 : index
    %c0_100 = arith.constant 0 : index
    %311 = vector.load %arg11[%c0_99, %c0_100] : memref<2x32xf32, #tpu.memory_space<vmem>>, vector<2x32xf32>
    tpu.vector_store %arg11[%c0_99, %c0_100], %310 {strides = array<i32>} : memref<2x32xf32, #tpu.memory_space<vmem>>, vector<2x32xf32>,
    %cst_101 = arith.constant 0.000000e+00 : f32
    %312 = vector.shape_cast %307 : vector<2x1xi1> to vector<2x1xi1>
    %313 = vector.broadcast %312 : vector<2x1xi1> to vector<2x32xi1>
    %314 = vector.broadcast %cst_101 : f32 to vector<2x32xf32>
    %315 = arith.select %313, %310, %314 : vector<2x32xi1>, vector<2x32xf32>
    %316 = arith.truncf %315 : vector<2x32xf32> to vector<2x32xbf16>
    %317 = arith.index_cast %220 : i32 to index
    %c0_102 = arith.constant 0 : index
    %c32_103 = arith.constant 32 : index
    %318 = vector.load %arg8[%317, %c0_102, %c32_103] : memref<8x2x64xbf16, #tpu.memory_space<vmem>>, vector<1x2x32xbf16>
    %319 = vector.shape_cast %318 : vector<1x2x32xbf16> to vector<2x32xbf16>
    %320 = vector.shape_cast %316 : vector<2x32xbf16> to vector<1x2x32xbf16>
    tpu.vector_store %arg8[%317, %c0_102, %c32_103], %320 {strides = array<i32>} : memref<8x2x64xbf16, #tpu.memory_space<vmem>>, vector<1x2x32xbf16>,
    %c3_i32 = arith.constant 3 : i32
    %c7_i32_104 = arith.constant 7 : i32
    %321 = arith.subi %c7_i32_104, %c3_i32 : i32
    %322 = arith.index_cast %c3_i32 : i32 to index
    %c0_105 = arith.constant 0 : index
    %c0_106 = arith.constant 0 : index
    %323 = vector.load %arg12[%322, %c0_105, %c0_106] : memref<8x2x192xf32, #tpu.memory_space<vmem>>, vector<1x2x192xf32>
    %324 = vector.shape_cast %323 : vector<1x2x192xf32> to vector<2x192xf32>
    %325 = arith.index_cast %321 : i32 to index
    %c0_107 = arith.constant 0 : index
    %c0_108 = arith.constant 0 : index
    %326 = vector.load %arg12[%325, %c0_107, %c0_108] : memref<8x2x192xf32, #tpu.memory_space<vmem>>, vector<1x2x192xf32>
    %327 = vector.shape_cast %326 : vector<1x2x192xf32> to vector<2x192xf32>
    %c0_109 = arith.constant 0 : index
    %c0_110 = arith.constant 0 : index
    %328 = vector.load %arg10[%c0_109, %c0_110] : memref<2x32xf32, #tpu.memory_space<vmem>>, vector<2x32xf32>
    %329 = arith.truncf %328 : vector<2x32xf32> to vector<2x32xbf16>
    %cst_111 = arith.constant dense<0.000000e+00> : vector<2x96xf32>
    %330 = tpu.matmul %329, %14, %cst_111 {dimension_numbers = #tpu.dot_dimension_numbers<[1], [0], [0], [1], [0, 0, 1, 1], [], []>} : vector<2x32xbf16>, vector<32x96xbf16>, vector<2x96xf32> -> vector<2x96xf32>
    %331 = vector.broadcast %15 : vector<1x96xf32> to vector<2x96xf32>
    %332 = arith.addf %330, %331 : vector<2x96xf32>
    %333 = vector.extract_strided_slice %324 {offsets = [0, 0], sizes = [2, 96], strides = [1, 1]} : vector<2x192xf32> to vector<2x96xf32>
    %334 = vector.extract_strided_slice %333 {offsets = [0, 0], sizes = [2, 32], strides = [1, 1]} : vector<2x96xf32> to vector<2x32xf32>
    %335 = vector.extract_strided_slice %332 {offsets = [0, 0], sizes = [2, 32], strides = [1, 1]} : vector<2x96xf32> to vector<2x32xf32>
    %336 = arith.addf %334, %335 : vector<2x32xf32>
    %337 = arith.negf %336 : vector<2x32xf32>
    %338 = math.exp %337 : vector<2x32xf32>
    %cst_112 = arith.constant 1.000000e+00 : f32
    %339 = vector.broadcast %cst_112 : f32 to vector<2x32xf32>
    %340 = arith.addf %339, %338 : vector<2x32xf32>
    %341 = arith.divf %339, %340 : vector<2x32xf32>
    %342 = vector.extract_strided_slice %333 {offsets = [0, 32], sizes = [2, 32], strides = [1, 1]} : vector<2x96xf32> to vector<2x32xf32>
    %343 = vector.extract_strided_slice %332 {offsets = [0, 32], sizes = [2, 32], strides = [1, 1]} : vector<2x96xf32> to vector<2x32xf32>
    %344 = arith.addf %342, %343 : vector<2x32xf32>
    %345 = arith.negf %344 : vector<2x32xf32>
    %346 = math.exp %345 : vector<2x32xf32>
    %cst_113 = arith.constant 1.000000e+00 : f32
    %347 = vector.broadcast %cst_113 : f32 to vector<2x32xf32>
    %348 = arith.addf %347, %346 : vector<2x32xf32>
    %349 = arith.divf %347, %348 : vector<2x32xf32>
    %350 = vector.extract_strided_slice %333 {offsets = [0, 64], sizes = [2, 32], strides = [1, 1]} : vector<2x96xf32> to vector<2x32xf32>
    %351 = vector.extract_strided_slice %332 {offsets = [0, 64], sizes = [2, 32], strides = [1, 1]} : vector<2x96xf32> to vector<2x32xf32>
    %352 = arith.mulf %341, %351 : vector<2x32xf32>
    %353 = arith.addf %350, %352 : vector<2x32xf32>
    %354 = math.tanh %353 : vector<2x32xf32>
    %cst_114 = arith.constant 1.000000e+00 : f32
    %355 = vector.broadcast %cst_114 : f32 to vector<2x32xf32>
    %356 = arith.subf %355, %349 : vector<2x32xf32>
    %357 = arith.mulf %356, %354 : vector<2x32xf32>
    %358 = arith.mulf %349, %328 : vector<2x32xf32>
    %359 = arith.addf %357, %358 : vector<2x32xf32>
    %360 = vector.broadcast %c3_i32 : i32 to vector<2x1xi32>
    %361 = arith.cmpi slt, %360, %13 : vector<2x1xi32>
    %362 = vector.shape_cast %361 : vector<2x1xi1> to vector<2x1xi1>
    %363 = vector.broadcast %362 : vector<2x1xi1> to vector<2x32xi1>
    %364 = arith.select %363, %359, %328 : vector<2x32xi1>, vector<2x32xf32>
    %c0_115 = arith.constant 0 : index
    %c0_116 = arith.constant 0 : index
    %365 = vector.load %arg10[%c0_115, %c0_116] : memref<2x32xf32, #tpu.memory_space<vmem>>, vector<2x32xf32>
    tpu.vector_store %arg10[%c0_115, %c0_116], %364 {strides = array<i32>} : memref<2x32xf32, #tpu.memory_space<vmem>>, vector<2x32xf32>,
    %cst_117 = arith.constant 0.000000e+00 : f32
    %366 = vector.shape_cast %361 : vector<2x1xi1> to vector<2x1xi1>
    %367 = vector.broadcast %366 : vector<2x1xi1> to vector<2x32xi1>
    %368 = vector.broadcast %cst_117 : f32 to vector<2x32xf32>
    %369 = arith.select %367, %364, %368 : vector<2x32xi1>, vector<2x32xf32>
    %370 = arith.truncf %369 : vector<2x32xf32> to vector<2x32xbf16>
    %371 = arith.index_cast %c3_i32 : i32 to index
    %c0_118 = arith.constant 0 : index
    %c0_119 = arith.constant 0 : index
    %372 = vector.load %arg8[%371, %c0_118, %c0_119] : memref<8x2x64xbf16, #tpu.memory_space<vmem>>, vector<1x2x32xbf16>
    %373 = vector.shape_cast %372 : vector<1x2x32xbf16> to vector<2x32xbf16>
    %374 = vector.shape_cast %370 : vector<2x32xbf16> to vector<1x2x32xbf16>
    tpu.vector_store %arg8[%371, %c0_118, %c0_119], %374 {strides = array<i32>} : memref<8x2x64xbf16, #tpu.memory_space<vmem>>, vector<1x2x32xbf16>,
    %c0_120 = arith.constant 0 : index
    %c0_121 = arith.constant 0 : index
    %375 = vector.load %arg11[%c0_120, %c0_121] : memref<2x32xf32, #tpu.memory_space<vmem>>, vector<2x32xf32>
    %376 = arith.truncf %375 : vector<2x32xf32> to vector<2x32xbf16>
    %cst_122 = arith.constant dense<0.000000e+00> : vector<2x96xf32>
    %377 = tpu.matmul %376, %16, %cst_122 {dimension_numbers = #tpu.dot_dimension_numbers<[1], [0], [0], [1], [0, 0, 1, 1], [], []>} : vector<2x32xbf16>, vector<32x96xbf16>, vector<2x96xf32> -> vector<2x96xf32>
    %378 = vector.broadcast %17 : vector<1x96xf32> to vector<2x96xf32>
    %379 = arith.addf %377, %378 : vector<2x96xf32>
    %380 = vector.extract_strided_slice %327 {offsets = [0, 96], sizes = [2, 96], strides = [1, 1]} : vector<2x192xf32> to vector<2x96xf32>
    %381 = vector.extract_strided_slice %380 {offsets = [0, 0], sizes = [2, 32], strides = [1, 1]} : vector<2x96xf32> to vector<2x32xf32>
    %382 = vector.extract_strided_slice %379 {offsets = [0, 0], sizes = [2, 32], strides = [1, 1]} : vector<2x96xf32> to vector<2x32xf32>
    %383 = arith.addf %381, %382 : vector<2x32xf32>
    %384 = arith.negf %383 : vector<2x32xf32>
    %385 = math.exp %384 : vector<2x32xf32>
    %cst_123 = arith.constant 1.000000e+00 : f32
    %386 = vector.broadcast %cst_123 : f32 to vector<2x32xf32>
    %387 = arith.addf %386, %385 : vector<2x32xf32>
    %388 = arith.divf %386, %387 : vector<2x32xf32>
    %389 = vector.extract_strided_slice %380 {offsets = [0, 32], sizes = [2, 32], strides = [1, 1]} : vector<2x96xf32> to vector<2x32xf32>
    %390 = vector.extract_strided_slice %379 {offsets = [0, 32], sizes = [2, 32], strides = [1, 1]} : vector<2x96xf32> to vector<2x32xf32>
    %391 = arith.addf %389, %390 : vector<2x32xf32>
    %392 = arith.negf %391 : vector<2x32xf32>
    %393 = math.exp %392 : vector<2x32xf32>
    %cst_124 = arith.constant 1.000000e+00 : f32
    %394 = vector.broadcast %cst_124 : f32 to vector<2x32xf32>
    %395 = arith.addf %394, %393 : vector<2x32xf32>
    %396 = arith.divf %394, %395 : vector<2x32xf32>
    %397 = vector.extract_strided_slice %380 {offsets = [0, 64], sizes = [2, 32], strides = [1, 1]} : vector<2x96xf32> to vector<2x32xf32>
    %398 = vector.extract_strided_slice %379 {offsets = [0, 64], sizes = [2, 32], strides = [1, 1]} : vector<2x96xf32> to vector<2x32xf32>
    %399 = arith.mulf %388, %398 : vector<2x32xf32>
    %400 = arith.addf %397, %399 : vector<2x32xf32>
    %401 = math.tanh %400 : vector<2x32xf32>
    %cst_125 = arith.constant 1.000000e+00 : f32
    %402 = vector.broadcast %cst_125 : f32 to vector<2x32xf32>
    %403 = arith.subf %402, %396 : vector<2x32xf32>
    %404 = arith.mulf %403, %401 : vector<2x32xf32>
    %405 = arith.mulf %396, %375 : vector<2x32xf32>
    %406 = arith.addf %404, %405 : vector<2x32xf32>
    %407 = vector.broadcast %321 : i32 to vector<2x1xi32>
    %408 = arith.cmpi slt, %407, %13 : vector<2x1xi32>
    %409 = vector.shape_cast %408 : vector<2x1xi1> to vector<2x1xi1>
    %410 = vector.broadcast %409 : vector<2x1xi1> to vector<2x32xi1>
    %411 = arith.select %410, %406, %375 : vector<2x32xi1>, vector<2x32xf32>
    %c0_126 = arith.constant 0 : index
    %c0_127 = arith.constant 0 : index
    %412 = vector.load %arg11[%c0_126, %c0_127] : memref<2x32xf32, #tpu.memory_space<vmem>>, vector<2x32xf32>
    tpu.vector_store %arg11[%c0_126, %c0_127], %411 {strides = array<i32>} : memref<2x32xf32, #tpu.memory_space<vmem>>, vector<2x32xf32>,
    %cst_128 = arith.constant 0.000000e+00 : f32
    %413 = vector.shape_cast %408 : vector<2x1xi1> to vector<2x1xi1>
    %414 = vector.broadcast %413 : vector<2x1xi1> to vector<2x32xi1>
    %415 = vector.broadcast %cst_128 : f32 to vector<2x32xf32>
    %416 = arith.select %414, %411, %415 : vector<2x32xi1>, vector<2x32xf32>
    %417 = arith.truncf %416 : vector<2x32xf32> to vector<2x32xbf16>
    %418 = arith.index_cast %321 : i32 to index
    %c0_129 = arith.constant 0 : index
    %c32_130 = arith.constant 32 : index
    %419 = vector.load %arg8[%418, %c0_129, %c32_130] : memref<8x2x64xbf16, #tpu.memory_space<vmem>>, vector<1x2x32xbf16>
    %420 = vector.shape_cast %419 : vector<1x2x32xbf16> to vector<2x32xbf16>
    %421 = vector.shape_cast %417 : vector<2x32xbf16> to vector<1x2x32xbf16>
    tpu.vector_store %arg8[%418, %c0_129, %c32_130], %421 {strides = array<i32>} : memref<8x2x64xbf16, #tpu.memory_space<vmem>>, vector<1x2x32xbf16>,
    %c4_i32 = arith.constant 4 : i32
    %c7_i32_131 = arith.constant 7 : i32
    %422 = arith.subi %c7_i32_131, %c4_i32 : i32
    %423 = arith.index_cast %c4_i32 : i32 to index
    %c0_132 = arith.constant 0 : index
    %c0_133 = arith.constant 0 : index
    %424 = vector.load %arg12[%423, %c0_132, %c0_133] : memref<8x2x192xf32, #tpu.memory_space<vmem>>, vector<1x2x192xf32>
    %425 = vector.shape_cast %424 : vector<1x2x192xf32> to vector<2x192xf32>
    %426 = arith.index_cast %422 : i32 to index
    %c0_134 = arith.constant 0 : index
    %c0_135 = arith.constant 0 : index
    %427 = vector.load %arg12[%426, %c0_134, %c0_135] : memref<8x2x192xf32, #tpu.memory_space<vmem>>, vector<1x2x192xf32>
    %428 = vector.shape_cast %427 : vector<1x2x192xf32> to vector<2x192xf32>
    %c0_136 = arith.constant 0 : index
    %c0_137 = arith.constant 0 : index
    %429 = vector.load %arg10[%c0_136, %c0_137] : memref<2x32xf32, #tpu.memory_space<vmem>>, vector<2x32xf32>
    %430 = arith.truncf %429 : vector<2x32xf32> to vector<2x32xbf16>
    %cst_138 = arith.constant dense<0.000000e+00> : vector<2x96xf32>
    %431 = tpu.matmul %430, %14, %cst_138 {dimension_numbers = #tpu.dot_dimension_numbers<[1], [0], [0], [1], [0, 0, 1, 1], [], []>} : vector<2x32xbf16>, vector<32x96xbf16>, vector<2x96xf32> -> vector<2x96xf32>
    %432 = vector.broadcast %15 : vector<1x96xf32> to vector<2x96xf32>
    %433 = arith.addf %431, %432 : vector<2x96xf32>
    %434 = vector.extract_strided_slice %425 {offsets = [0, 0], sizes = [2, 96], strides = [1, 1]} : vector<2x192xf32> to vector<2x96xf32>
    %435 = vector.extract_strided_slice %434 {offsets = [0, 0], sizes = [2, 32], strides = [1, 1]} : vector<2x96xf32> to vector<2x32xf32>
    %436 = vector.extract_strided_slice %433 {offsets = [0, 0], sizes = [2, 32], strides = [1, 1]} : vector<2x96xf32> to vector<2x32xf32>
    %437 = arith.addf %435, %436 : vector<2x32xf32>
    %438 = arith.negf %437 : vector<2x32xf32>
    %439 = math.exp %438 : vector<2x32xf32>
    %cst_139 = arith.constant 1.000000e+00 : f32
    %440 = vector.broadcast %cst_139 : f32 to vector<2x32xf32>
    %441 = arith.addf %440, %439 : vector<2x32xf32>
    %442 = arith.divf %440, %441 : vector<2x32xf32>
    %443 = vector.extract_strided_slice %434 {offsets = [0, 32], sizes = [2, 32], strides = [1, 1]} : vector<2x96xf32> to vector<2x32xf32>
    %444 = vector.extract_strided_slice %433 {offsets = [0, 32], sizes = [2, 32], strides = [1, 1]} : vector<2x96xf32> to vector<2x32xf32>
    %445 = arith.addf %443, %444 : vector<2x32xf32>
    %446 = arith.negf %445 : vector<2x32xf32>
    %447 = math.exp %446 : vector<2x32xf32>
    %cst_140 = arith.constant 1.000000e+00 : f32
    %448 = vector.broadcast %cst_140 : f32 to vector<2x32xf32>
    %449 = arith.addf %448, %447 : vector<2x32xf32>
    %450 = arith.divf %448, %449 : vector<2x32xf32>
    %451 = vector.extract_strided_slice %434 {offsets = [0, 64], sizes = [2, 32], strides = [1, 1]} : vector<2x96xf32> to vector<2x32xf32>
    %452 = vector.extract_strided_slice %433 {offsets = [0, 64], sizes = [2, 32], strides = [1, 1]} : vector<2x96xf32> to vector<2x32xf32>
    %453 = arith.mulf %442, %452 : vector<2x32xf32>
    %454 = arith.addf %451, %453 : vector<2x32xf32>
    %455 = math.tanh %454 : vector<2x32xf32>
    %cst_141 = arith.constant 1.000000e+00 : f32
    %456 = vector.broadcast %cst_141 : f32 to vector<2x32xf32>
    %457 = arith.subf %456, %450 : vector<2x32xf32>
    %458 = arith.mulf %457, %455 : vector<2x32xf32>
    %459 = arith.mulf %450, %429 : vector<2x32xf32>
    %460 = arith.addf %458, %459 : vector<2x32xf32>
    %461 = vector.broadcast %c4_i32 : i32 to vector<2x1xi32>
    %462 = arith.cmpi slt, %461, %13 : vector<2x1xi32>
    %463 = vector.shape_cast %462 : vector<2x1xi1> to vector<2x1xi1>
    %464 = vector.broadcast %463 : vector<2x1xi1> to vector<2x32xi1>
    %465 = arith.select %464, %460, %429 : vector<2x32xi1>, vector<2x32xf32>
    %c0_142 = arith.constant 0 : index
    %c0_143 = arith.constant 0 : index
    %466 = vector.load %arg10[%c0_142, %c0_143] : memref<2x32xf32, #tpu.memory_space<vmem>>, vector<2x32xf32>
    tpu.vector_store %arg10[%c0_142, %c0_143], %465 {strides = array<i32>} : memref<2x32xf32, #tpu.memory_space<vmem>>, vector<2x32xf32>,
    %cst_144 = arith.constant 0.000000e+00 : f32
    %467 = vector.shape_cast %462 : vector<2x1xi1> to vector<2x1xi1>
    %468 = vector.broadcast %467 : vector<2x1xi1> to vector<2x32xi1>
    %469 = vector.broadcast %cst_144 : f32 to vector<2x32xf32>
    %470 = arith.select %468, %465, %469 : vector<2x32xi1>, vector<2x32xf32>
    %471 = arith.truncf %470 : vector<2x32xf32> to vector<2x32xbf16>
    %472 = arith.index_cast %c4_i32 : i32 to index
    %c0_145 = arith.constant 0 : index
    %c0_146 = arith.constant 0 : index
    %473 = vector.load %arg8[%472, %c0_145, %c0_146] : memref<8x2x64xbf16, #tpu.memory_space<vmem>>, vector<1x2x32xbf16>
    %474 = vector.shape_cast %473 : vector<1x2x32xbf16> to vector<2x32xbf16>
    %475 = vector.shape_cast %471 : vector<2x32xbf16> to vector<1x2x32xbf16>
    tpu.vector_store %arg8[%472, %c0_145, %c0_146], %475 {strides = array<i32>} : memref<8x2x64xbf16, #tpu.memory_space<vmem>>, vector<1x2x32xbf16>,
    %c0_147 = arith.constant 0 : index
    %c0_148 = arith.constant 0 : index
    %476 = vector.load %arg11[%c0_147, %c0_148] : memref<2x32xf32, #tpu.memory_space<vmem>>, vector<2x32xf32>
    %477 = arith.truncf %476 : vector<2x32xf32> to vector<2x32xbf16>
    %cst_149 = arith.constant dense<0.000000e+00> : vector<2x96xf32>
    %478 = tpu.matmul %477, %16, %cst_149 {dimension_numbers = #tpu.dot_dimension_numbers<[1], [0], [0], [1], [0, 0, 1, 1], [], []>} : vector<2x32xbf16>, vector<32x96xbf16>, vector<2x96xf32> -> vector<2x96xf32>
    %479 = vector.broadcast %17 : vector<1x96xf32> to vector<2x96xf32>
    %480 = arith.addf %478, %479 : vector<2x96xf32>
    %481 = vector.extract_strided_slice %428 {offsets = [0, 96], sizes = [2, 96], strides = [1, 1]} : vector<2x192xf32> to vector<2x96xf32>
    %482 = vector.extract_strided_slice %481 {offsets = [0, 0], sizes = [2, 32], strides = [1, 1]} : vector<2x96xf32> to vector<2x32xf32>
    %483 = vector.extract_strided_slice %480 {offsets = [0, 0], sizes = [2, 32], strides = [1, 1]} : vector<2x96xf32> to vector<2x32xf32>
    %484 = arith.addf %482, %483 : vector<2x32xf32>
    %485 = arith.negf %484 : vector<2x32xf32>
    %486 = math.exp %485 : vector<2x32xf32>
    %cst_150 = arith.constant 1.000000e+00 : f32
    %487 = vector.broadcast %cst_150 : f32 to vector<2x32xf32>
    %488 = arith.addf %487, %486 : vector<2x32xf32>
    %489 = arith.divf %487, %488 : vector<2x32xf32>
    %490 = vector.extract_strided_slice %481 {offsets = [0, 32], sizes = [2, 32], strides = [1, 1]} : vector<2x96xf32> to vector<2x32xf32>
    %491 = vector.extract_strided_slice %480 {offsets = [0, 32], sizes = [2, 32], strides = [1, 1]} : vector<2x96xf32> to vector<2x32xf32>
    %492 = arith.addf %490, %491 : vector<2x32xf32>
    %493 = arith.negf %492 : vector<2x32xf32>
    %494 = math.exp %493 : vector<2x32xf32>
    %cst_151 = arith.constant 1.000000e+00 : f32
    %495 = vector.broadcast %cst_151 : f32 to vector<2x32xf32>
    %496 = arith.addf %495, %494 : vector<2x32xf32>
    %497 = arith.divf %495, %496 : vector<2x32xf32>
    %498 = vector.extract_strided_slice %481 {offsets = [0, 64], sizes = [2, 32], strides = [1, 1]} : vector<2x96xf32> to vector<2x32xf32>
    %499 = vector.extract_strided_slice %480 {offsets = [0, 64], sizes = [2, 32], strides = [1, 1]} : vector<2x96xf32> to vector<2x32xf32>
    %500 = arith.mulf %489, %499 : vector<2x32xf32>
    %501 = arith.addf %498, %500 : vector<2x32xf32>
    %502 = math.tanh %501 : vector<2x32xf32>
    %cst_152 = arith.constant 1.000000e+00 : f32
    %503 = vector.broadcast %cst_152 : f32 to vector<2x32xf32>
    %504 = arith.subf %503, %497 : vector<2x32xf32>
    %505 = arith.mulf %504, %502 : vector<2x32xf32>
    %506 = arith.mulf %497, %476 : vector<2x32xf32>
    %507 = arith.addf %505, %506 : vector<2x32xf32>
    %508 = vector.broadcast %422 : i32 to vector<2x1xi32>
    %509 = arith.cmpi slt, %508, %13 : vector<2x1xi32>
    %510 = vector.shape_cast %509 : vector<2x1xi1> to vector<2x1xi1>
    %511 = vector.broadcast %510 : vector<2x1xi1> to vector<2x32xi1>
    %512 = arith.select %511, %507, %476 : vector<2x32xi1>, vector<2x32xf32>
    %c0_153 = arith.constant 0 : index
    %c0_154 = arith.constant 0 : index
    %513 = vector.load %arg11[%c0_153, %c0_154] : memref<2x32xf32, #tpu.memory_space<vmem>>, vector<2x32xf32>
    tpu.vector_store %arg11[%c0_153, %c0_154], %512 {strides = array<i32>} : memref<2x32xf32, #tpu.memory_space<vmem>>, vector<2x32xf32>,
    %cst_155 = arith.constant 0.000000e+00 : f32
    %514 = vector.shape_cast %509 : vector<2x1xi1> to vector<2x1xi1>
    %515 = vector.broadcast %514 : vector<2x1xi1> to vector<2x32xi1>
    %516 = vector.broadcast %cst_155 : f32 to vector<2x32xf32>
    %517 = arith.select %515, %512, %516 : vector<2x32xi1>, vector<2x32xf32>
    %518 = arith.truncf %517 : vector<2x32xf32> to vector<2x32xbf16>
    %519 = arith.index_cast %422 : i32 to index
    %c0_156 = arith.constant 0 : index
    %c32_157 = arith.constant 32 : index
    %520 = vector.load %arg8[%519, %c0_156, %c32_157] : memref<8x2x64xbf16, #tpu.memory_space<vmem>>, vector<1x2x32xbf16>
    %521 = vector.shape_cast %520 : vector<1x2x32xbf16> to vector<2x32xbf16>
    %522 = vector.shape_cast %518 : vector<2x32xbf16> to vector<1x2x32xbf16>
    tpu.vector_store %arg8[%519, %c0_156, %c32_157], %522 {strides = array<i32>} : memref<8x2x64xbf16, #tpu.memory_space<vmem>>, vector<1x2x32xbf16>,
    %c5_i32 = arith.constant 5 : i32
    %c7_i32_158 = arith.constant 7 : i32
    %523 = arith.subi %c7_i32_158, %c5_i32 : i32
    %524 = arith.index_cast %c5_i32 : i32 to index
    %c0_159 = arith.constant 0 : index
    %c0_160 = arith.constant 0 : index
    %525 = vector.load %arg12[%524, %c0_159, %c0_160] : memref<8x2x192xf32, #tpu.memory_space<vmem>>, vector<1x2x192xf32>
    %526 = vector.shape_cast %525 : vector<1x2x192xf32> to vector<2x192xf32>
    %527 = arith.index_cast %523 : i32 to index
    %c0_161 = arith.constant 0 : index
    %c0_162 = arith.constant 0 : index
    %528 = vector.load %arg12[%527, %c0_161, %c0_162] : memref<8x2x192xf32, #tpu.memory_space<vmem>>, vector<1x2x192xf32>
    %529 = vector.shape_cast %528 : vector<1x2x192xf32> to vector<2x192xf32>
    %c0_163 = arith.constant 0 : index
    %c0_164 = arith.constant 0 : index
    %530 = vector.load %arg10[%c0_163, %c0_164] : memref<2x32xf32, #tpu.memory_space<vmem>>, vector<2x32xf32>
    %531 = arith.truncf %530 : vector<2x32xf32> to vector<2x32xbf16>
    %cst_165 = arith.constant dense<0.000000e+00> : vector<2x96xf32>
    %532 = tpu.matmul %531, %14, %cst_165 {dimension_numbers = #tpu.dot_dimension_numbers<[1], [0], [0], [1], [0, 0, 1, 1], [], []>} : vector<2x32xbf16>, vector<32x96xbf16>, vector<2x96xf32> -> vector<2x96xf32>
    %533 = vector.broadcast %15 : vector<1x96xf32> to vector<2x96xf32>
    %534 = arith.addf %532, %533 : vector<2x96xf32>
    %535 = vector.extract_strided_slice %526 {offsets = [0, 0], sizes = [2, 96], strides = [1, 1]} : vector<2x192xf32> to vector<2x96xf32>
    %536 = vector.extract_strided_slice %535 {offsets = [0, 0], sizes = [2, 32], strides = [1, 1]} : vector<2x96xf32> to vector<2x32xf32>
    %537 = vector.extract_strided_slice %534 {offsets = [0, 0], sizes = [2, 32], strides = [1, 1]} : vector<2x96xf32> to vector<2x32xf32>
    %538 = arith.addf %536, %537 : vector<2x32xf32>
    %539 = arith.negf %538 : vector<2x32xf32>
    %540 = math.exp %539 : vector<2x32xf32>
    %cst_166 = arith.constant 1.000000e+00 : f32
    %541 = vector.broadcast %cst_166 : f32 to vector<2x32xf32>
    %542 = arith.addf %541, %540 : vector<2x32xf32>
    %543 = arith.divf %541, %542 : vector<2x32xf32>
    %544 = vector.extract_strided_slice %535 {offsets = [0, 32], sizes = [2, 32], strides = [1, 1]} : vector<2x96xf32> to vector<2x32xf32>
    %545 = vector.extract_strided_slice %534 {offsets = [0, 32], sizes = [2, 32], strides = [1, 1]} : vector<2x96xf32> to vector<2x32xf32>
    %546 = arith.addf %544, %545 : vector<2x32xf32>
    %547 = arith.negf %546 : vector<2x32xf32>
    %548 = math.exp %547 : vector<2x32xf32>
    %cst_167 = arith.constant 1.000000e+00 : f32
    %549 = vector.broadcast %cst_167 : f32 to vector<2x32xf32>
    %550 = arith.addf %549, %548 : vector<2x32xf32>
    %551 = arith.divf %549, %550 : vector<2x32xf32>
    %552 = vector.extract_strided_slice %535 {offsets = [0, 64], sizes = [2, 32], strides = [1, 1]} : vector<2x96xf32> to vector<2x32xf32>
    %553 = vector.extract_strided_slice %534 {offsets = [0, 64], sizes = [2, 32], strides = [1, 1]} : vector<2x96xf32> to vector<2x32xf32>
    %554 = arith.mulf %543, %553 : vector<2x32xf32>
    %555 = arith.addf %552, %554 : vector<2x32xf32>
    %556 = math.tanh %555 : vector<2x32xf32>
    %cst_168 = arith.constant 1.000000e+00 : f32
    %557 = vector.broadcast %cst_168 : f32 to vector<2x32xf32>
    %558 = arith.subf %557, %551 : vector<2x32xf32>
    %559 = arith.mulf %558, %556 : vector<2x32xf32>
    %560 = arith.mulf %551, %530 : vector<2x32xf32>
    %561 = arith.addf %559, %560 : vector<2x32xf32>
    %562 = vector.broadcast %c5_i32 : i32 to vector<2x1xi32>
    %563 = arith.cmpi slt, %562, %13 : vector<2x1xi32>
    %564 = vector.shape_cast %563 : vector<2x1xi1> to vector<2x1xi1>
    %565 = vector.broadcast %564 : vector<2x1xi1> to vector<2x32xi1>
    %566 = arith.select %565, %561, %530 : vector<2x32xi1>, vector<2x32xf32>
    %c0_169 = arith.constant 0 : index
    %c0_170 = arith.constant 0 : index
    %567 = vector.load %arg10[%c0_169, %c0_170] : memref<2x32xf32, #tpu.memory_space<vmem>>, vector<2x32xf32>
    tpu.vector_store %arg10[%c0_169, %c0_170], %566 {strides = array<i32>} : memref<2x32xf32, #tpu.memory_space<vmem>>, vector<2x32xf32>,
    %cst_171 = arith.constant 0.000000e+00 : f32
    %568 = vector.shape_cast %563 : vector<2x1xi1> to vector<2x1xi1>
    %569 = vector.broadcast %568 : vector<2x1xi1> to vector<2x32xi1>
    %570 = vector.broadcast %cst_171 : f32 to vector<2x32xf32>
    %571 = arith.select %569, %566, %570 : vector<2x32xi1>, vector<2x32xf32>
    %572 = arith.truncf %571 : vector<2x32xf32> to vector<2x32xbf16>
    %573 = arith.index_cast %c5_i32 : i32 to index
    %c0_172 = arith.constant 0 : index
    %c0_173 = arith.constant 0 : index
    %574 = vector.load %arg8[%573, %c0_172, %c0_173] : memref<8x2x64xbf16, #tpu.memory_space<vmem>>, vector<1x2x32xbf16>
    %575 = vector.shape_cast %574 : vector<1x2x32xbf16> to vector<2x32xbf16>
    %576 = vector.shape_cast %572 : vector<2x32xbf16> to vector<1x2x32xbf16>
    tpu.vector_store %arg8[%573, %c0_172, %c0_173], %576 {strides = array<i32>} : memref<8x2x64xbf16, #tpu.memory_space<vmem>>, vector<1x2x32xbf16>,
    %c0_174 = arith.constant 0 : index
    %c0_175 = arith.constant 0 : index
    %577 = vector.load %arg11[%c0_174, %c0_175] : memref<2x32xf32, #tpu.memory_space<vmem>>, vector<2x32xf32>
    %578 = arith.truncf %577 : vector<2x32xf32> to vector<2x32xbf16>
    %cst_176 = arith.constant dense<0.000000e+00> : vector<2x96xf32>
    %579 = tpu.matmul %578, %16, %cst_176 {dimension_numbers = #tpu.dot_dimension_numbers<[1], [0], [0], [1], [0, 0, 1, 1], [], []>} : vector<2x32xbf16>, vector<32x96xbf16>, vector<2x96xf32> -> vector<2x96xf32>
    %580 = vector.broadcast %17 : vector<1x96xf32> to vector<2x96xf32>
    %581 = arith.addf %579, %580 : vector<2x96xf32>
    %582 = vector.extract_strided_slice %529 {offsets = [0, 96], sizes = [2, 96], strides = [1, 1]} : vector<2x192xf32> to vector<2x96xf32>
    %583 = vector.extract_strided_slice %582 {offsets = [0, 0], sizes = [2, 32], strides = [1, 1]} : vector<2x96xf32> to vector<2x32xf32>
    %584 = vector.extract_strided_slice %581 {offsets = [0, 0], sizes = [2, 32], strides = [1, 1]} : vector<2x96xf32> to vector<2x32xf32>
    %585 = arith.addf %583, %584 : vector<2x32xf32>
    %586 = arith.negf %585 : vector<2x32xf32>
    %587 = math.exp %586 : vector<2x32xf32>
    %cst_177 = arith.constant 1.000000e+00 : f32
    %588 = vector.broadcast %cst_177 : f32 to vector<2x32xf32>
    %589 = arith.addf %588, %587 : vector<2x32xf32>
    %590 = arith.divf %588, %589 : vector<2x32xf32>
    %591 = vector.extract_strided_slice %582 {offsets = [0, 32], sizes = [2, 32], strides = [1, 1]} : vector<2x96xf32> to vector<2x32xf32>
    %592 = vector.extract_strided_slice %581 {offsets = [0, 32], sizes = [2, 32], strides = [1, 1]} : vector<2x96xf32> to vector<2x32xf32>
    %593 = arith.addf %591, %592 : vector<2x32xf32>
    %594 = arith.negf %593 : vector<2x32xf32>
    %595 = math.exp %594 : vector<2x32xf32>
    %cst_178 = arith.constant 1.000000e+00 : f32
    %596 = vector.broadcast %cst_178 : f32 to vector<2x32xf32>
    %597 = arith.addf %596, %595 : vector<2x32xf32>
    %598 = arith.divf %596, %597 : vector<2x32xf32>
    %599 = vector.extract_strided_slice %582 {offsets = [0, 64], sizes = [2, 32], strides = [1, 1]} : vector<2x96xf32> to vector<2x32xf32>
    %600 = vector.extract_strided_slice %581 {offsets = [0, 64], sizes = [2, 32], strides = [1, 1]} : vector<2x96xf32> to vector<2x32xf32>
    %601 = arith.mulf %590, %600 : vector<2x32xf32>
    %602 = arith.addf %599, %601 : vector<2x32xf32>
    %603 = math.tanh %602 : vector<2x32xf32>
    %cst_179 = arith.constant 1.000000e+00 : f32
    %604 = vector.broadcast %cst_179 : f32 to vector<2x32xf32>
    %605 = arith.subf %604, %598 : vector<2x32xf32>
    %606 = arith.mulf %605, %603 : vector<2x32xf32>
    %607 = arith.mulf %598, %577 : vector<2x32xf32>
    %608 = arith.addf %606, %607 : vector<2x32xf32>
    %609 = vector.broadcast %523 : i32 to vector<2x1xi32>
    %610 = arith.cmpi slt, %609, %13 : vector<2x1xi32>
    %611 = vector.shape_cast %610 : vector<2x1xi1> to vector<2x1xi1>
    %612 = vector.broadcast %611 : vector<2x1xi1> to vector<2x32xi1>
    %613 = arith.select %612, %608, %577 : vector<2x32xi1>, vector<2x32xf32>
    %c0_180 = arith.constant 0 : index
    %c0_181 = arith.constant 0 : index
    %614 = vector.load %arg11[%c0_180, %c0_181] : memref<2x32xf32, #tpu.memory_space<vmem>>, vector<2x32xf32>
    tpu.vector_store %arg11[%c0_180, %c0_181], %613 {strides = array<i32>} : memref<2x32xf32, #tpu.memory_space<vmem>>, vector<2x32xf32>,
    %cst_182 = arith.constant 0.000000e+00 : f32
    %615 = vector.shape_cast %610 : vector<2x1xi1> to vector<2x1xi1>
    %616 = vector.broadcast %615 : vector<2x1xi1> to vector<2x32xi1>
    %617 = vector.broadcast %cst_182 : f32 to vector<2x32xf32>
    %618 = arith.select %616, %613, %617 : vector<2x32xi1>, vector<2x32xf32>
    %619 = arith.truncf %618 : vector<2x32xf32> to vector<2x32xbf16>
    %620 = arith.index_cast %523 : i32 to index
    %c0_183 = arith.constant 0 : index
    %c32_184 = arith.constant 32 : index
    %621 = vector.load %arg8[%620, %c0_183, %c32_184] : memref<8x2x64xbf16, #tpu.memory_space<vmem>>, vector<1x2x32xbf16>
    %622 = vector.shape_cast %621 : vector<1x2x32xbf16> to vector<2x32xbf16>
    %623 = vector.shape_cast %619 : vector<2x32xbf16> to vector<1x2x32xbf16>
    tpu.vector_store %arg8[%620, %c0_183, %c32_184], %623 {strides = array<i32>} : memref<8x2x64xbf16, #tpu.memory_space<vmem>>, vector<1x2x32xbf16>,
    %c6_i32 = arith.constant 6 : i32
    %c7_i32_185 = arith.constant 7 : i32
    %624 = arith.subi %c7_i32_185, %c6_i32 : i32
    %625 = arith.index_cast %c6_i32 : i32 to index
    %c0_186 = arith.constant 0 : index
    %c0_187 = arith.constant 0 : index
    %626 = vector.load %arg12[%625, %c0_186, %c0_187] : memref<8x2x192xf32, #tpu.memory_space<vmem>>, vector<1x2x192xf32>
    %627 = vector.shape_cast %626 : vector<1x2x192xf32> to vector<2x192xf32>
    %628 = arith.index_cast %624 : i32 to index
    %c0_188 = arith.constant 0 : index
    %c0_189 = arith.constant 0 : index
    %629 = vector.load %arg12[%628, %c0_188, %c0_189] : memref<8x2x192xf32, #tpu.memory_space<vmem>>, vector<1x2x192xf32>
    %630 = vector.shape_cast %629 : vector<1x2x192xf32> to vector<2x192xf32>
    %c0_190 = arith.constant 0 : index
    %c0_191 = arith.constant 0 : index
    %631 = vector.load %arg10[%c0_190, %c0_191] : memref<2x32xf32, #tpu.memory_space<vmem>>, vector<2x32xf32>
    %632 = arith.truncf %631 : vector<2x32xf32> to vector<2x32xbf16>
    %cst_192 = arith.constant dense<0.000000e+00> : vector<2x96xf32>
    %633 = tpu.matmul %632, %14, %cst_192 {dimension_numbers = #tpu.dot_dimension_numbers<[1], [0], [0], [1], [0, 0, 1, 1], [], []>} : vector<2x32xbf16>, vector<32x96xbf16>, vector<2x96xf32> -> vector<2x96xf32>
    %634 = vector.broadcast %15 : vector<1x96xf32> to vector<2x96xf32>
    %635 = arith.addf %633, %634 : vector<2x96xf32>
    %636 = vector.extract_strided_slice %627 {offsets = [0, 0], sizes = [2, 96], strides = [1, 1]} : vector<2x192xf32> to vector<2x96xf32>
    %637 = vector.extract_strided_slice %636 {offsets = [0, 0], sizes = [2, 32], strides = [1, 1]} : vector<2x96xf32> to vector<2x32xf32>
    %638 = vector.extract_strided_slice %635 {offsets = [0, 0], sizes = [2, 32], strides = [1, 1]} : vector<2x96xf32> to vector<2x32xf32>
    %639 = arith.addf %637, %638 : vector<2x32xf32>
    %640 = arith.negf %639 : vector<2x32xf32>
    %641 = math.exp %640 : vector<2x32xf32>
    %cst_193 = arith.constant 1.000000e+00 : f32
    %642 = vector.broadcast %cst_193 : f32 to vector<2x32xf32>
    %643 = arith.addf %642, %641 : vector<2x32xf32>
    %644 = arith.divf %642, %643 : vector<2x32xf32>
    %645 = vector.extract_strided_slice %636 {offsets = [0, 32], sizes = [2, 32], strides = [1, 1]} : vector<2x96xf32> to vector<2x32xf32>
    %646 = vector.extract_strided_slice %635 {offsets = [0, 32], sizes = [2, 32], strides = [1, 1]} : vector<2x96xf32> to vector<2x32xf32>
    %647 = arith.addf %645, %646 : vector<2x32xf32>
    %648 = arith.negf %647 : vector<2x32xf32>
    %649 = math.exp %648 : vector<2x32xf32>
    %cst_194 = arith.constant 1.000000e+00 : f32
    %650 = vector.broadcast %cst_194 : f32 to vector<2x32xf32>
    %651 = arith.addf %650, %649 : vector<2x32xf32>
    %652 = arith.divf %650, %651 : vector<2x32xf32>
    %653 = vector.extract_strided_slice %636 {offsets = [0, 64], sizes = [2, 32], strides = [1, 1]} : vector<2x96xf32> to vector<2x32xf32>
    %654 = vector.extract_strided_slice %635 {offsets = [0, 64], sizes = [2, 32], strides = [1, 1]} : vector<2x96xf32> to vector<2x32xf32>
    %655 = arith.mulf %644, %654 : vector<2x32xf32>
    %656 = arith.addf %653, %655 : vector<2x32xf32>
    %657 = math.tanh %656 : vector<2x32xf32>
    %cst_195 = arith.constant 1.000000e+00 : f32
    %658 = vector.broadcast %cst_195 : f32 to vector<2x32xf32>
    %659 = arith.subf %658, %652 : vector<2x32xf32>
    %660 = arith.mulf %659, %657 : vector<2x32xf32>
    %661 = arith.mulf %652, %631 : vector<2x32xf32>
    %662 = arith.addf %660, %661 : vector<2x32xf32>
    %663 = vector.broadcast %c6_i32 : i32 to vector<2x1xi32>
    %664 = arith.cmpi slt, %663, %13 : vector<2x1xi32>
    %665 = vector.shape_cast %664 : vector<2x1xi1> to vector<2x1xi1>
    %666 = vector.broadcast %665 : vector<2x1xi1> to vector<2x32xi1>
    %667 = arith.select %666, %662, %631 : vector<2x32xi1>, vector<2x32xf32>
    %c0_196 = arith.constant 0 : index
    %c0_197 = arith.constant 0 : index
    %668 = vector.load %arg10[%c0_196, %c0_197] : memref<2x32xf32, #tpu.memory_space<vmem>>, vector<2x32xf32>
    tpu.vector_store %arg10[%c0_196, %c0_197], %667 {strides = array<i32>} : memref<2x32xf32, #tpu.memory_space<vmem>>, vector<2x32xf32>,
    %cst_198 = arith.constant 0.000000e+00 : f32
    %669 = vector.shape_cast %664 : vector<2x1xi1> to vector<2x1xi1>
    %670 = vector.broadcast %669 : vector<2x1xi1> to vector<2x32xi1>
    %671 = vector.broadcast %cst_198 : f32 to vector<2x32xf32>
    %672 = arith.select %670, %667, %671 : vector<2x32xi1>, vector<2x32xf32>
    %673 = arith.truncf %672 : vector<2x32xf32> to vector<2x32xbf16>
    %674 = arith.index_cast %c6_i32 : i32 to index
    %c0_199 = arith.constant 0 : index
    %c0_200 = arith.constant 0 : index
    %675 = vector.load %arg8[%674, %c0_199, %c0_200] : memref<8x2x64xbf16, #tpu.memory_space<vmem>>, vector<1x2x32xbf16>
    %676 = vector.shape_cast %675 : vector<1x2x32xbf16> to vector<2x32xbf16>
    %677 = vector.shape_cast %673 : vector<2x32xbf16> to vector<1x2x32xbf16>
    tpu.vector_store %arg8[%674, %c0_199, %c0_200], %677 {strides = array<i32>} : memref<8x2x64xbf16, #tpu.memory_space<vmem>>, vector<1x2x32xbf16>,
    %c0_201 = arith.constant 0 : index
    %c0_202 = arith.constant 0 : index
    %678 = vector.load %arg11[%c0_201, %c0_202] : memref<2x32xf32, #tpu.memory_space<vmem>>, vector<2x32xf32>
    %679 = arith.truncf %678 : vector<2x32xf32> to vector<2x32xbf16>
    %cst_203 = arith.constant dense<0.000000e+00> : vector<2x96xf32>
    %680 = tpu.matmul %679, %16, %cst_203 {dimension_numbers = #tpu.dot_dimension_numbers<[1], [0], [0], [1], [0, 0, 1, 1], [], []>} : vector<2x32xbf16>, vector<32x96xbf16>, vector<2x96xf32> -> vector<2x96xf32>
    %681 = vector.broadcast %17 : vector<1x96xf32> to vector<2x96xf32>
    %682 = arith.addf %680, %681 : vector<2x96xf32>
    %683 = vector.extract_strided_slice %630 {offsets = [0, 96], sizes = [2, 96], strides = [1, 1]} : vector<2x192xf32> to vector<2x96xf32>
    %684 = vector.extract_strided_slice %683 {offsets = [0, 0], sizes = [2, 32], strides = [1, 1]} : vector<2x96xf32> to vector<2x32xf32>
    %685 = vector.extract_strided_slice %682 {offsets = [0, 0], sizes = [2, 32], strides = [1, 1]} : vector<2x96xf32> to vector<2x32xf32>
    %686 = arith.addf %684, %685 : vector<2x32xf32>
    %687 = arith.negf %686 : vector<2x32xf32>
    %688 = math.exp %687 : vector<2x32xf32>
    %cst_204 = arith.constant 1.000000e+00 : f32
    %689 = vector.broadcast %cst_204 : f32 to vector<2x32xf32>
    %690 = arith.addf %689, %688 : vector<2x32xf32>
    %691 = arith.divf %689, %690 : vector<2x32xf32>
    %692 = vector.extract_strided_slice %683 {offsets = [0, 32], sizes = [2, 32], strides = [1, 1]} : vector<2x96xf32> to vector<2x32xf32>
    %693 = vector.extract_strided_slice %682 {offsets = [0, 32], sizes = [2, 32], strides = [1, 1]} : vector<2x96xf32> to vector<2x32xf32>
    %694 = arith.addf %692, %693 : vector<2x32xf32>
    %695 = arith.negf %694 : vector<2x32xf32>
    %696 = math.exp %695 : vector<2x32xf32>
    %cst_205 = arith.constant 1.000000e+00 : f32
    %697 = vector.broadcast %cst_205 : f32 to vector<2x32xf32>
    %698 = arith.addf %697, %696 : vector<2x32xf32>
    %699 = arith.divf %697, %698 : vector<2x32xf32>
    %700 = vector.extract_strided_slice %683 {offsets = [0, 64], sizes = [2, 32], strides = [1, 1]} : vector<2x96xf32> to vector<2x32xf32>
    %701 = vector.extract_strided_slice %682 {offsets = [0, 64], sizes = [2, 32], strides = [1, 1]} : vector<2x96xf32> to vector<2x32xf32>
    %702 = arith.mulf %691, %701 : vector<2x32xf32>
    %703 = arith.addf %700, %702 : vector<2x32xf32>
    %704 = math.tanh %703 : vector<2x32xf32>
    %cst_206 = arith.constant 1.000000e+00 : f32
    %705 = vector.broadcast %cst_206 : f32 to vector<2x32xf32>
    %706 = arith.subf %705, %699 : vector<2x32xf32>
    %707 = arith.mulf %706, %704 : vector<2x32xf32>
    %708 = arith.mulf %699, %678 : vector<2x32xf32>
    %709 = arith.addf %707, %708 : vector<2x32xf32>
    %710 = vector.broadcast %624 : i32 to vector<2x1xi32>
    %711 = arith.cmpi slt, %710, %13 : vector<2x1xi32>
    %712 = vector.shape_cast %711 : vector<2x1xi1> to vector<2x1xi1>
    %713 = vector.broadcast %712 : vector<2x1xi1> to vector<2x32xi1>
    %714 = arith.select %713, %709, %678 : vector<2x32xi1>, vector<2x32xf32>
    %c0_207 = arith.constant 0 : index
    %c0_208 = arith.constant 0 : index
    %715 = vector.load %arg11[%c0_207, %c0_208] : memref<2x32xf32, #tpu.memory_space<vmem>>, vector<2x32xf32>
    tpu.vector_store %arg11[%c0_207, %c0_208], %714 {strides = array<i32>} : memref<2x32xf32, #tpu.memory_space<vmem>>, vector<2x32xf32>,
    %cst_209 = arith.constant 0.000000e+00 : f32
    %716 = vector.shape_cast %711 : vector<2x1xi1> to vector<2x1xi1>
    %717 = vector.broadcast %716 : vector<2x1xi1> to vector<2x32xi1>
    %718 = vector.broadcast %cst_209 : f32 to vector<2x32xf32>
    %719 = arith.select %717, %714, %718 : vector<2x32xi1>, vector<2x32xf32>
    %720 = arith.truncf %719 : vector<2x32xf32> to vector<2x32xbf16>
    %721 = arith.index_cast %624 : i32 to index
    %c0_210 = arith.constant 0 : index
    %c32_211 = arith.constant 32 : index
    %722 = vector.load %arg8[%721, %c0_210, %c32_211] : memref<8x2x64xbf16, #tpu.memory_space<vmem>>, vector<1x2x32xbf16>
    %723 = vector.shape_cast %722 : vector<1x2x32xbf16> to vector<2x32xbf16>
    %724 = vector.shape_cast %720 : vector<2x32xbf16> to vector<1x2x32xbf16>
    tpu.vector_store %arg8[%721, %c0_210, %c32_211], %724 {strides = array<i32>} : memref<8x2x64xbf16, #tpu.memory_space<vmem>>, vector<1x2x32xbf16>,
    %c7_i32_212 = arith.constant 7 : i32
    %c7_i32_213 = arith.constant 7 : i32
    %725 = arith.subi %c7_i32_213, %c7_i32_212 : i32
    %726 = arith.index_cast %c7_i32_212 : i32 to index
    %c0_214 = arith.constant 0 : index
    %c0_215 = arith.constant 0 : index
    %727 = vector.load %arg12[%726, %c0_214, %c0_215] : memref<8x2x192xf32, #tpu.memory_space<vmem>>, vector<1x2x192xf32>
    %728 = vector.shape_cast %727 : vector<1x2x192xf32> to vector<2x192xf32>
    %729 = arith.index_cast %725 : i32 to index
    %c0_216 = arith.constant 0 : index
    %c0_217 = arith.constant 0 : index
    %730 = vector.load %arg12[%729, %c0_216, %c0_217] : memref<8x2x192xf32, #tpu.memory_space<vmem>>, vector<1x2x192xf32>
    %731 = vector.shape_cast %730 : vector<1x2x192xf32> to vector<2x192xf32>
    %c0_218 = arith.constant 0 : index
    %c0_219 = arith.constant 0 : index
    %732 = vector.load %arg10[%c0_218, %c0_219] : memref<2x32xf32, #tpu.memory_space<vmem>>, vector<2x32xf32>
    %733 = arith.truncf %732 : vector<2x32xf32> to vector<2x32xbf16>
    %cst_220 = arith.constant dense<0.000000e+00> : vector<2x96xf32>
    %734 = tpu.matmul %733, %14, %cst_220 {dimension_numbers = #tpu.dot_dimension_numbers<[1], [0], [0], [1], [0, 0, 1, 1], [], []>} : vector<2x32xbf16>, vector<32x96xbf16>, vector<2x96xf32> -> vector<2x96xf32>
    %735 = vector.broadcast %15 : vector<1x96xf32> to vector<2x96xf32>
    %736 = arith.addf %734, %735 : vector<2x96xf32>
    %737 = vector.extract_strided_slice %728 {offsets = [0, 0], sizes = [2, 96], strides = [1, 1]} : vector<2x192xf32> to vector<2x96xf32>
    %738 = vector.extract_strided_slice %737 {offsets = [0, 0], sizes = [2, 32], strides = [1, 1]} : vector<2x96xf32> to vector<2x32xf32>
    %739 = vector.extract_strided_slice %736 {offsets = [0, 0], sizes = [2, 32], strides = [1, 1]} : vector<2x96xf32> to vector<2x32xf32>
    %740 = arith.addf %738, %739 : vector<2x32xf32>
    %741 = arith.negf %740 : vector<2x32xf32>
    %742 = math.exp %741 : vector<2x32xf32>
    %cst_221 = arith.constant 1.000000e+00 : f32
    %743 = vector.broadcast %cst_221 : f32 to vector<2x32xf32>
    %744 = arith.addf %743, %742 : vector<2x32xf32>
    %745 = arith.divf %743, %744 : vector<2x32xf32>
    %746 = vector.extract_strided_slice %737 {offsets = [0, 32], sizes = [2, 32], strides = [1, 1]} : vector<2x96xf32> to vector<2x32xf32>
    %747 = vector.extract_strided_slice %736 {offsets = [0, 32], sizes = [2, 32], strides = [1, 1]} : vector<2x96xf32> to vector<2x32xf32>
    %748 = arith.addf %746, %747 : vector<2x32xf32>
    %749 = arith.negf %748 : vector<2x32xf32>
    %750 = math.exp %749 : vector<2x32xf32>
    %cst_222 = arith.constant 1.000000e+00 : f32
    %751 = vector.broadcast %cst_222 : f32 to vector<2x32xf32>
    %752 = arith.addf %751, %750 : vector<2x32xf32>
    %753 = arith.divf %751, %752 : vector<2x32xf32>
    %754 = vector.extract_strided_slice %737 {offsets = [0, 64], sizes = [2, 32], strides = [1, 1]} : vector<2x96xf32> to vector<2x32xf32>
    %755 = vector.extract_strided_slice %736 {offsets = [0, 64], sizes = [2, 32], strides = [1, 1]} : vector<2x96xf32> to vector<2x32xf32>
    %756 = arith.mulf %745, %755 : vector<2x32xf32>
    %757 = arith.addf %754, %756 : vector<2x32xf32>
    %758 = math.tanh %757 : vector<2x32xf32>
    %cst_223 = arith.constant 1.000000e+00 : f32
    %759 = vector.broadcast %cst_223 : f32 to vector<2x32xf32>
    %760 = arith.subf %759, %753 : vector<2x32xf32>
    %761 = arith.mulf %760, %758 : vector<2x32xf32>
    %762 = arith.mulf %753, %732 : vector<2x32xf32>
    %763 = arith.addf %761, %762 : vector<2x32xf32>
    %764 = vector.broadcast %c7_i32_212 : i32 to vector<2x1xi32>
    %765 = arith.cmpi slt, %764, %13 : vector<2x1xi32>
    %766 = vector.shape_cast %765 : vector<2x1xi1> to vector<2x1xi1>
    %767 = vector.broadcast %766 : vector<2x1xi1> to vector<2x32xi1>
    %768 = arith.select %767, %763, %732 : vector<2x32xi1>, vector<2x32xf32>
    %c0_224 = arith.constant 0 : index
    %c0_225 = arith.constant 0 : index
    %769 = vector.load %arg10[%c0_224, %c0_225] : memref<2x32xf32, #tpu.memory_space<vmem>>, vector<2x32xf32>
    tpu.vector_store %arg10[%c0_224, %c0_225], %768 {strides = array<i32>} : memref<2x32xf32, #tpu.memory_space<vmem>>, vector<2x32xf32>,
    %cst_226 = arith.constant 0.000000e+00 : f32
    %770 = vector.shape_cast %765 : vector<2x1xi1> to vector<2x1xi1>
    %771 = vector.broadcast %770 : vector<2x1xi1> to vector<2x32xi1>
    %772 = vector.broadcast %cst_226 : f32 to vector<2x32xf32>
    %773 = arith.select %771, %768, %772 : vector<2x32xi1>, vector<2x32xf32>
    %774 = arith.truncf %773 : vector<2x32xf32> to vector<2x32xbf16>
    %775 = arith.index_cast %c7_i32_212 : i32 to index
    %c0_227 = arith.constant 0 : index
    %c0_228 = arith.constant 0 : index
    %776 = vector.load %arg8[%775, %c0_227, %c0_228] : memref<8x2x64xbf16, #tpu.memory_space<vmem>>, vector<1x2x32xbf16>
    %777 = vector.shape_cast %776 : vector<1x2x32xbf16> to vector<2x32xbf16>
    %778 = vector.shape_cast %774 : vector<2x32xbf16> to vector<1x2x32xbf16>
    tpu.vector_store %arg8[%775, %c0_227, %c0_228], %778 {strides = array<i32>} : memref<8x2x64xbf16, #tpu.memory_space<vmem>>, vector<1x2x32xbf16>,
    %c0_229 = arith.constant 0 : index
    %c0_230 = arith.constant 0 : index
    %779 = vector.load %arg11[%c0_229, %c0_230] : memref<2x32xf32, #tpu.memory_space<vmem>>, vector<2x32xf32>
    %780 = arith.truncf %779 : vector<2x32xf32> to vector<2x32xbf16>
    %cst_231 = arith.constant dense<0.000000e+00> : vector<2x96xf32>
    %781 = tpu.matmul %780, %16, %cst_231 {dimension_numbers = #tpu.dot_dimension_numbers<[1], [0], [0], [1], [0, 0, 1, 1], [], []>} : vector<2x32xbf16>, vector<32x96xbf16>, vector<2x96xf32> -> vector<2x96xf32>
    %782 = vector.broadcast %17 : vector<1x96xf32> to vector<2x96xf32>
    %783 = arith.addf %781, %782 : vector<2x96xf32>
    %784 = vector.extract_strided_slice %731 {offsets = [0, 96], sizes = [2, 96], strides = [1, 1]} : vector<2x192xf32> to vector<2x96xf32>
    %785 = vector.extract_strided_slice %784 {offsets = [0, 0], sizes = [2, 32], strides = [1, 1]} : vector<2x96xf32> to vector<2x32xf32>
    %786 = vector.extract_strided_slice %783 {offsets = [0, 0], sizes = [2, 32], strides = [1, 1]} : vector<2x96xf32> to vector<2x32xf32>
    %787 = arith.addf %785, %786 : vector<2x32xf32>
    %788 = arith.negf %787 : vector<2x32xf32>
    %789 = math.exp %788 : vector<2x32xf32>
    %cst_232 = arith.constant 1.000000e+00 : f32
    %790 = vector.broadcast %cst_232 : f32 to vector<2x32xf32>
    %791 = arith.addf %790, %789 : vector<2x32xf32>
    %792 = arith.divf %790, %791 : vector<2x32xf32>
    %793 = vector.extract_strided_slice %784 {offsets = [0, 32], sizes = [2, 32], strides = [1, 1]} : vector<2x96xf32> to vector<2x32xf32>
    %794 = vector.extract_strided_slice %783 {offsets = [0, 32], sizes = [2, 32], strides = [1, 1]} : vector<2x96xf32> to vector<2x32xf32>
    %795 = arith.addf %793, %794 : vector<2x32xf32>
    %796 = arith.negf %795 : vector<2x32xf32>
    %797 = math.exp %796 : vector<2x32xf32>
    %cst_233 = arith.constant 1.000000e+00 : f32
    %798 = vector.broadcast %cst_233 : f32 to vector<2x32xf32>
    %799 = arith.addf %798, %797 : vector<2x32xf32>
    %800 = arith.divf %798, %799 : vector<2x32xf32>
    %801 = vector.extract_strided_slice %784 {offsets = [0, 64], sizes = [2, 32], strides = [1, 1]} : vector<2x96xf32> to vector<2x32xf32>
    %802 = vector.extract_strided_slice %783 {offsets = [0, 64], sizes = [2, 32], strides = [1, 1]} : vector<2x96xf32> to vector<2x32xf32>
    %803 = arith.mulf %792, %802 : vector<2x32xf32>
    %804 = arith.addf %801, %803 : vector<2x32xf32>
    %805 = math.tanh %804 : vector<2x32xf32>
    %cst_234 = arith.constant 1.000000e+00 : f32
    %806 = vector.broadcast %cst_234 : f32 to vector<2x32xf32>
    %807 = arith.subf %806, %800 : vector<2x32xf32>
    %808 = arith.mulf %807, %805 : vector<2x32xf32>
    %809 = arith.mulf %800, %779 : vector<2x32xf32>
    %810 = arith.addf %808, %809 : vector<2x32xf32>
    %811 = vector.broadcast %725 : i32 to vector<2x1xi32>
    %812 = arith.cmpi slt, %811, %13 : vector<2x1xi32>
    %813 = vector.shape_cast %812 : vector<2x1xi1> to vector<2x1xi1>
    %814 = vector.broadcast %813 : vector<2x1xi1> to vector<2x32xi1>
    %815 = arith.select %814, %810, %779 : vector<2x32xi1>, vector<2x32xf32>
    %c0_235 = arith.constant 0 : index
    %c0_236 = arith.constant 0 : index
    %816 = vector.load %arg11[%c0_235, %c0_236] : memref<2x32xf32, #tpu.memory_space<vmem>>, vector<2x32xf32>
    tpu.vector_store %arg11[%c0_235, %c0_236], %815 {strides = array<i32>} : memref<2x32xf32, #tpu.memory_space<vmem>>, vector<2x32xf32>,
    %cst_237 = arith.constant 0.000000e+00 : f32
    %817 = vector.shape_cast %812 : vector<2x1xi1> to vector<2x1xi1>
    %818 = vector.broadcast %817 : vector<2x1xi1> to vector<2x32xi1>
    %819 = vector.broadcast %cst_237 : f32 to vector<2x32xf32>
    %820 = arith.select %818, %815, %819 : vector<2x32xi1>, vector<2x32xf32>
    %821 = arith.truncf %820 : vector<2x32xf32> to vector<2x32xbf16>
    %822 = arith.index_cast %725 : i32 to index
    %c0_238 = arith.constant 0 : index
    %c32_239 = arith.constant 32 : index
    %823 = vector.load %arg8[%822, %c0_238, %c32_239] : memref<8x2x64xbf16, #tpu.memory_space<vmem>>, vector<1x2x32xbf16>
    %824 = vector.shape_cast %823 : vector<1x2x32xbf16> to vector<2x32xbf16>
    %825 = vector.shape_cast %821 : vector<2x32xbf16> to vector<1x2x32xbf16>
    tpu.vector_store %arg8[%822, %c0_238, %c32_239], %825 {strides = array<i32>} : memref<8x2x64xbf16, #tpu.memory_space<vmem>>, vector<1x2x32xbf16>,
    %c8_i32 = arith.constant 8 : i32
    %c0_240 = arith.constant 0 : index
    %c0_241 = arith.constant 0 : index
    %826 = vector.load %arg10[%c0_240, %c0_241] : memref<2x32xf32, #tpu.memory_space<vmem>>, vector<2x32xf32>
    %c0_242 = arith.constant 0 : index
    %c0_243 = arith.constant 0 : index
    %827 = vector.load %arg9[%c0_242, %c0_243] : memref<2x64xf32, #tpu.memory_space<vmem>>, vector<2x32xf32>
    tpu.vector_store %arg9[%c0_242, %c0_243], %826 {strides = array<i32>} : memref<2x64xf32, #tpu.memory_space<vmem>>, vector<2x32xf32>,
    %c0_244 = arith.constant 0 : index
    %c0_245 = arith.constant 0 : index
    %828 = vector.load %arg11[%c0_244, %c0_245] : memref<2x32xf32, #tpu.memory_space<vmem>>, vector<2x32xf32>
    %c0_246 = arith.constant 0 : index
    %c32_247 = arith.constant 32 : index
    %829 = vector.load %arg9[%c0_246, %c32_247] : memref<2x64xf32, #tpu.memory_space<vmem>>, vector<2x32xf32>
    tpu.vector_store %arg9[%c0_246, %c32_247], %828 {strides = array<i32>} : memref<2x64xf32, #tpu.memory_space<vmem>>, vector<2x32xf32>,
    return
  }
}

module attributes {stable_mosaic.version = 11 : i64} {
  func.func @classifier_kernel(%arg0: i32, %arg1: memref<4x2x64xbf16, #tpu.memory_space<vmem>>, %arg2: memref<4x2x64xbf16, #tpu.memory_space<vmem>>, %arg3: memref<64x128xbf16, #tpu.memory_space<vmem>>, %arg4: memref<64x128xbf16, #tpu.memory_space<vmem>>, %arg5: memref<1x128xf32, #tpu.memory_space<vmem>>, %arg6: memref<4x2x128xf32, #tpu.memory_space<vmem>>) attributes {dimension_semantics = [#tpu.dimension_semantics<arbitrary>], iteration_bounds = array<i64: 2>, scalar_prefetch = 0 : i64, scratch_operands = 0 : i64, tpu.core_type = #tpu.core_type<tc>, window_params = [{transform_indices = @transform_0, window_bounds = array<i64: 4, 2, 64>}, {transform_indices = @transform_1, window_bounds = array<i64: 4, 2, 64>}, {pipeline_mode = #tpu.pipeline_mode<synchronous>, transform_indices = @transform_2, window_bounds = array<i64: 64, 128>}, {pipeline_mode = #tpu.pipeline_mode<synchronous>, transform_indices = @transform_3, window_bounds = array<i64: 64, 128>}, {pipeline_mode = #tpu.pipeline_mode<synchronous>, transform_indices = @transform_4, window_bounds = array<i64: 1, 128>}, {transform_indices = @transform_5, window_bounds = array<i64: 4, 2, 128>}]} {
    %c0 = arith.constant 0 : index
    %c0_0 = arith.constant 0 : index
    %c0_1 = arith.constant 0 : index
    %0 = vector.load %arg1[%c0, %c0_0, %c0_1] : memref<4x2x64xbf16, #tpu.memory_space<vmem>>, vector<4x2x64xbf16>
    %1 = vector.shape_cast %0 : vector<4x2x64xbf16> to vector<8x64xbf16>
    %c0_2 = arith.constant 0 : index
    %c0_3 = arith.constant 0 : index
    %c0_4 = arith.constant 0 : index
    %2 = vector.load %arg2[%c0_2, %c0_3, %c0_4] : memref<4x2x64xbf16, #tpu.memory_space<vmem>>, vector<4x2x64xbf16>
    %3 = vector.shape_cast %2 : vector<4x2x64xbf16> to vector<8x64xbf16>
    %c0_5 = arith.constant 0 : index
    %c0_6 = arith.constant 0 : index
    %4 = vector.load %arg3[%c0_5, %c0_6] : memref<64x128xbf16, #tpu.memory_space<vmem>>, vector<64x128xbf16>
    %cst = arith.constant dense<0.000000e+00> : vector<8x128xf32>
    %5 = tpu.matmul %1, %4, %cst {dimension_numbers = #tpu.dot_dimension_numbers<[1], [0], [0], [1], [0, 0, 1, 1], [], []>} : vector<8x64xbf16>, vector<64x128xbf16>, vector<8x128xf32> -> vector<8x128xf32>
    %c0_7 = arith.constant 0 : index
    %c0_8 = arith.constant 0 : index
    %6 = vector.load %arg4[%c0_7, %c0_8] : memref<64x128xbf16, #tpu.memory_space<vmem>>, vector<64x128xbf16>
    %cst_9 = arith.constant dense<0.000000e+00> : vector<8x128xf32>
    %7 = tpu.matmul %3, %6, %cst_9 {dimension_numbers = #tpu.dot_dimension_numbers<[1], [0], [0], [1], [0, 0, 1, 1], [], []>} : vector<8x64xbf16>, vector<64x128xbf16>, vector<8x128xf32> -> vector<8x128xf32>
    %8 = arith.addf %5, %7 : vector<8x128xf32>
    %c0_10 = arith.constant 0 : index
    %c0_11 = arith.constant 0 : index
    %9 = vector.load %arg5[%c0_10, %c0_11] : memref<1x128xf32, #tpu.memory_space<vmem>>, vector<1x128xf32>
    %10 = vector.broadcast %9 : vector<1x128xf32> to vector<8x128xf32>
    %11 = arith.addf %8, %10 : vector<8x128xf32>
    %12 = vector.shape_cast %11 : vector<8x128xf32> to vector<4x2x128xf32>
    %c0_12 = arith.constant 0 : index
    %c0_13 = arith.constant 0 : index
    %c0_14 = arith.constant 0 : index
    %13 = vector.load %arg6[%c0_12, %c0_13, %c0_14] : memref<4x2x128xf32, #tpu.memory_space<vmem>>, vector<4x2x128xf32>
    tpu.vector_store %arg6[%c0_12, %c0_13, %c0_14], %12 {strides = array<i32>} : memref<4x2x128xf32, #tpu.memory_space<vmem>>, vector<4x2x128xf32>,
    return
  }
  func.func @transform_0(%arg0: i32) -> (i32, i32, i32) {
    %c0_i32 = arith.constant 0 : i32
    %c0_i32_0 = arith.constant 0 : i32
    %c0_i32_1 = arith.constant 0 : i32
    return %arg0, %c0_i32, %c0_i32_0 : i32, i32, i32
  }
  func.func @transform_1(%arg0: i32) -> (i32, i32, i32) {
    %c0_i32 = arith.constant 0 : i32
    %c0_i32_0 = arith.constant 0 : i32
    %c0_i32_1 = arith.constant 0 : i32
    return %arg0, %c0_i32, %c0_i32_0 : i32, i32, i32
  }
  func.func @transform_2(%arg0: i32) -> (i32, i32) {
    %c0_i32 = arith.constant 0 : i32
    %c0_i32_0 = arith.constant 0 : i32
    %c0_i32_1 = arith.constant 0 : i32
    return %c0_i32, %c0_i32_0 : i32, i32
  }
  func.func @transform_3(%arg0: i32) -> (i32, i32) {
    %c0_i32 = arith.constant 0 : i32
    %c0_i32_0 = arith.constant 0 : i32
    %c0_i32_1 = arith.constant 0 : i32
    return %c0_i32, %c0_i32_0 : i32, i32
  }
  func.func @transform_4(%arg0: i32) -> (i32, i32) {
    %c0_i32 = arith.constant 0 : i32
    %c0_i32_0 = arith.constant 0 : i32
    %c0_i32_1 = arith.constant 0 : i32
    return %c0_i32, %c0_i32_0 : i32, i32
  }
  func.func @transform_5(%arg0: i32) -> (i32, i32, i32) {
    %c0_i32 = arith.constant 0 : i32
    %c0_i32_0 = arith.constant 0 : i32
    %c0_i32_1 = arith.constant 0 : i32
    return %arg0, %c0_i32, %c0_i32_0 : i32, i32, i32
  }
}

module attributes {stable_mosaic.version = 11 : i64} {
  func.func @decoder_rnn_kernel(%arg0: memref<8x2x16xbf16, #tpu.memory_space<vmem>>, %arg1: memref<8x2x64xbf16, #tpu.memory_space<vmem>>, %arg2: memref<2x64xf32, #tpu.memory_space<vmem>>, %arg3: memref<64x64xbf16, #tpu.memory_space<vmem>>, %arg4: memref<1x64xf32, #tpu.memory_space<vmem>>, %arg5: memref<16x192xbf16, #tpu.memory_space<vmem>>, %arg6: memref<64x192xbf16, #tpu.memory_space<vmem>>, %arg7: memref<64x192xbf16, #tpu.memory_space<vmem>>, %arg8: memref<1x192xf32, #tpu.memory_space<vmem>>, %arg9: memref<1x192xf32, #tpu.memory_space<vmem>>, %arg10: memref<8x2x64xf32, #tpu.memory_space<vmem>>, %arg11: memref<8x2x64xf32, #tpu.memory_space<vmem>>, %arg12: memref<8x2x64xbf16, #tpu.memory_space<vmem>>, %arg13: memref<8x2x64xbf16, #tpu.memory_space<vmem>>, %arg14: memref<2x64xf32, #tpu.memory_space<vmem>>, %arg15: memref<2x64xf32, #tpu.memory_space<vmem>>, %arg16: memref<8x2x192xf32, #tpu.memory_space<vmem>>) attributes {dimension_semantics = [], scalar_prefetch = 0 : i64, scratch_operands = 3 : i64, tpu.core_type = #tpu.core_type<tc>} {
    %c0 = arith.constant 0 : index
    %c0_0 = arith.constant 0 : index
    %c0_1 = arith.constant 0 : index
    %0 = vector.load %arg0[%c0, %c0_0, %c0_1] : memref<8x2x16xbf16, #tpu.memory_space<vmem>>, vector<8x2x16xbf16>
    %1 = vector.shape_cast %0 : vector<8x2x16xbf16> to vector<16x16xbf16>
    %c0_2 = arith.constant 0 : index
    %c0_3 = arith.constant 0 : index
    %2 = vector.load %arg5[%c0_2, %c0_3] : memref<16x192xbf16, #tpu.memory_space<vmem>>, vector<16x192xbf16>
    %cst = arith.constant dense<0.000000e+00> : vector<16x192xf32>
    %3 = tpu.matmul %1, %2, %cst {dimension_numbers = #tpu.dot_dimension_numbers<[1], [0], [0], [1], [0, 0, 1, 1], [], []>} : vector<16x16xbf16>, vector<16x192xbf16>, vector<16x192xf32> -> vector<16x192xf32>
    %c0_4 = arith.constant 0 : index
    %c0_5 = arith.constant 0 : index
    %4 = vector.load %arg8[%c0_4, %c0_5] : memref<1x192xf32, #tpu.memory_space<vmem>>, vector<1x192xf32>
    %5 = vector.broadcast %4 : vector<1x192xf32> to vector<16x192xf32>
    %6 = arith.addf %3, %5 : vector<16x192xf32>
    %7 = vector.shape_cast %6 : vector<16x192xf32> to vector<8x2x192xf32>
    %c0_6 = arith.constant 0 : index
    %c0_7 = arith.constant 0 : index
    %c0_8 = arith.constant 0 : index
    %8 = vector.load %arg16[%c0_6, %c0_7, %c0_8] : memref<8x2x192xf32, #tpu.memory_space<vmem>>, vector<8x2x192xf32>
    tpu.vector_store %arg16[%c0_6, %c0_7, %c0_8], %7 {strides = array<i32>} : memref<8x2x192xf32, #tpu.memory_space<vmem>>, vector<8x2x192xf32>,
    %c0_9 = arith.constant 0 : index
    %c0_10 = arith.constant 0 : index
    %9 = vector.load %arg2[%c0_9, %c0_10] : memref<2x64xf32, #tpu.memory_space<vmem>>, vector<2x64xf32>
    %10 = arith.truncf %9 : vector<2x64xf32> to vector<2x64xbf16>
    %c0_11 = arith.constant 0 : index
    %c0_12 = arith.constant 0 : index
    %11 = vector.load %arg3[%c0_11, %c0_12] : memref<64x64xbf16, #tpu.memory_space<vmem>>, vector<64x64xbf16>
    %cst_13 = arith.constant dense<0.000000e+00> : vector<2x64xf32>
    %12 = tpu.matmul %10, %11, %cst_13 {dimension_numbers = #tpu.dot_dimension_numbers<[1], [0], [0], [1], [0, 0, 1, 1], [], []>} : vector<2x64xbf16>, vector<64x64xbf16>, vector<2x64xf32> -> vector<2x64xf32>
    %c0_14 = arith.constant 0 : index
    %c0_15 = arith.constant 0 : index
    %13 = vector.load %arg4[%c0_14, %c0_15] : memref<1x64xf32, #tpu.memory_space<vmem>>, vector<1x64xf32>
    %14 = vector.broadcast %13 : vector<1x64xf32> to vector<2x64xf32>
    %15 = arith.addf %12, %14 : vector<2x64xf32>
    %c0_16 = arith.constant 0 : index
    %c0_17 = arith.constant 0 : index
    %16 = vector.load %arg14[%c0_16, %c0_17] : memref<2x64xf32, #tpu.memory_space<vmem>>, vector<2x64xf32>
    tpu.vector_store %arg14[%c0_16, %c0_17], %15 {strides = array<i32>} : memref<2x64xf32, #tpu.memory_space<vmem>>, vector<2x64xf32>,
    %cst_18 = arith.constant 0.000000e+00 : f32
    %17 = vector.broadcast %cst_18 : f32 to vector<2x64xf32>
    %c0_19 = arith.constant 0 : index
    %c0_20 = arith.constant 0 : index
    %18 = vector.load %arg15[%c0_19, %c0_20] : memref<2x64xf32, #tpu.memory_space<vmem>>, vector<2x64xf32>
    tpu.vector_store %arg15[%c0_19, %c0_20], %17 {strides = array<i32>} : memref<2x64xf32, #tpu.memory_space<vmem>>, vector<2x64xf32>,
    %c0_21 = arith.constant 0 : index
    %c0_22 = arith.constant 0 : index
    %c0_23 = arith.constant 0 : index
    %19 = vector.load %arg1[%c0_21, %c0_22, %c0_23] : memref<8x2x64xbf16, #tpu.memory_space<vmem>>, vector<8x2x64xbf16>
    %20 = tpu.transpose %19, [1, 0, 2] : vector<8x2x64xbf16> -> vector<2x8x64xbf16>
    %c0_24 = arith.constant 0 : index
    %c0_25 = arith.constant 0 : index
    %21 = vector.load %arg6[%c0_24, %c0_25] : memref<64x192xbf16, #tpu.memory_space<vmem>>, vector<64x192xbf16>
    %c0_26 = arith.constant 0 : index
    %c0_27 = arith.constant 0 : index
    %22 = vector.load %arg7[%c0_26, %c0_27] : memref<64x192xbf16, #tpu.memory_space<vmem>>, vector<64x192xbf16>
    %c0_28 = arith.constant 0 : index
    %c0_29 = arith.constant 0 : index
    %23 = vector.load %arg9[%c0_28, %c0_29] : memref<1x192xf32, #tpu.memory_space<vmem>>, vector<1x192xf32>
    %c0_i32 = arith.constant 0 : i32
    %c0_30 = arith.constant 0 : index
    %c0_31 = arith.constant 0 : index
    %24 = vector.load %arg14[%c0_30, %c0_31] : memref<2x64xf32, #tpu.memory_space<vmem>>, vector<2x64xf32>
    %c0_32 = arith.constant 0 : index
    %c0_33 = arith.constant 0 : index
    %25 = vector.load %arg15[%c0_32, %c0_33] : memref<2x64xf32, #tpu.memory_space<vmem>>, vector<2x64xf32>
    %26 = arith.index_cast %c0_i32 : i32 to index
    %c0_34 = arith.constant 0 : index
    %c0_35 = arith.constant 0 : index
    %27 = vector.load %arg16[%26, %c0_34, %c0_35] : memref<8x2x192xf32, #tpu.memory_space<vmem>>, vector<1x2x192xf32>
    %28 = vector.shape_cast %27 : vector<1x2x192xf32> to vector<2x192xf32>
    %29 = arith.truncf %25 : vector<2x64xf32> to vector<2x64xbf16>
    %cst_36 = arith.constant dense<0.000000e+00> : vector<2x192xf32>
    %30 = tpu.matmul %29, %21, %cst_36 {dimension_numbers = #tpu.dot_dimension_numbers<[1], [0], [0], [1], [0, 0, 1, 1], [], []>} : vector<2x64xbf16>, vector<64x192xbf16>, vector<2x192xf32> -> vector<2x192xf32>
    %31 = arith.addf %28, %30 : vector<2x192xf32>
    %32 = arith.truncf %24 : vector<2x64xf32> to vector<2x64xbf16>
    %cst_37 = arith.constant dense<0.000000e+00> : vector<2x192xf32>
    %33 = tpu.matmul %32, %22, %cst_37 {dimension_numbers = #tpu.dot_dimension_numbers<[1], [0], [0], [1], [0, 0, 1, 1], [], []>} : vector<2x64xbf16>, vector<64x192xbf16>, vector<2x192xf32> -> vector<2x192xf32>
    %34 = vector.broadcast %23 : vector<1x192xf32> to vector<2x192xf32>
    %35 = arith.addf %33, %34 : vector<2x192xf32>
    %36 = vector.extract_strided_slice %31 {offsets = [0, 0], sizes = [2, 64], strides = [1, 1]} : vector<2x192xf32> to vector<2x64xf32>
    %37 = vector.extract_strided_slice %35 {offsets = [0, 0], sizes = [2, 64], strides = [1, 1]} : vector<2x192xf32> to vector<2x64xf32>
    %38 = arith.addf %36, %37 : vector<2x64xf32>
    %39 = arith.negf %38 : vector<2x64xf32>
    %40 = math.exp %39 : vector<2x64xf32>
    %cst_38 = arith.constant 1.000000e+00 : f32
    %41 = vector.broadcast %cst_38 : f32 to vector<2x64xf32>
    %42 = arith.addf %41, %40 : vector<2x64xf32>
    %43 = arith.divf %41, %42 : vector<2x64xf32>
    %44 = vector.extract_strided_slice %31 {offsets = [0, 64], sizes = [2, 64], strides = [1, 1]} : vector<2x192xf32> to vector<2x64xf32>
    %45 = vector.extract_strided_slice %35 {offsets = [0, 64], sizes = [2, 64], strides = [1, 1]} : vector<2x192xf32> to vector<2x64xf32>
    %46 = arith.addf %44, %45 : vector<2x64xf32>
    %47 = arith.negf %46 : vector<2x64xf32>
    %48 = math.exp %47 : vector<2x64xf32>
    %cst_39 = arith.constant 1.000000e+00 : f32
    %49 = vector.broadcast %cst_39 : f32 to vector<2x64xf32>
    %50 = arith.addf %49, %48 : vector<2x64xf32>
    %51 = arith.divf %49, %50 : vector<2x64xf32>
    %52 = vector.extract_strided_slice %31 {offsets = [0, 128], sizes = [2, 64], strides = [1, 1]} : vector<2x192xf32> to vector<2x64xf32>
    %53 = vector.extract_strided_slice %35 {offsets = [0, 128], sizes = [2, 64], strides = [1, 1]} : vector<2x192xf32> to vector<2x64xf32>
    %54 = arith.mulf %43, %53 : vector<2x64xf32>
    %55 = arith.addf %52, %54 : vector<2x64xf32>
    %56 = math.tanh %55 : vector<2x64xf32>
    %cst_40 = arith.constant 1.000000e+00 : f32
    %57 = vector.broadcast %cst_40 : f32 to vector<2x64xf32>
    %58 = arith.subf %57, %51 : vector<2x64xf32>
    %59 = arith.mulf %58, %56 : vector<2x64xf32>
    %60 = arith.mulf %51, %24 : vector<2x64xf32>
    %61 = arith.addf %59, %60 : vector<2x64xf32>
    %c0_41 = arith.constant 0 : index
    %c0_42 = arith.constant 0 : index
    %62 = vector.load %arg14[%c0_41, %c0_42] : memref<2x64xf32, #tpu.memory_space<vmem>>, vector<2x64xf32>
    tpu.vector_store %arg14[%c0_41, %c0_42], %61 {strides = array<i32>} : memref<2x64xf32, #tpu.memory_space<vmem>>, vector<2x64xf32>,
    %63 = arith.truncf %61 : vector<2x64xf32> to vector<2x64xbf16>
    %64 = vector.shape_cast %63 : vector<2x64xbf16> to vector<2x1x64xbf16>
    "tpu.trace_start"() <{level = 10 : i32, message = "bqd,btd->bqt"}> : () -> ()
    %cst_43 = arith.constant dense<0.000000e+00> : vector<2x1x8xf32>
    %65 = tpu.matmul %64, %20, %cst_43 {dimension_numbers = #tpu.dot_dimension_numbers<[2], [2], [1], [1], [0, 0, 0, 1, 1, 1], [0], [0]>} : vector<2x1x64xbf16>, vector<2x8x64xbf16>, vector<2x1x8xf32> -> vector<2x1x8xf32>
    "tpu.trace_stop"() : () -> ()
    %cst_44 = arith.constant dense<0xFF800000> : vector<2x1xf32>
    %66 = vector.multi_reduction <maximumf>, %65, %cst_44 [2] : vector<2x1x8xf32> to vector<2x1xf32>
    %67 = vector.shape_cast %66 : vector<2x1xf32> to vector<2x1x1xf32>
    %68 = vector.broadcast %67 : vector<2x1x1xf32> to vector<2x1x8xf32>
    %69 = arith.subf %65, %68 : vector<2x1x8xf32>
    %70 = math.exp %69 : vector<2x1x8xf32>
    %cst_45 = arith.constant dense<0.000000e+00> : vector<2x1xf32>
    %71 = vector.multi_reduction <add>, %70, %cst_45 [2] : vector<2x1x8xf32> to vector<2x1xf32>
    %72 = vector.shape_cast %71 : vector<2x1xf32> to vector<2x1x1xf32>
    %73 = vector.broadcast %72 : vector<2x1x1xf32> to vector<2x1x8xf32>
    %74 = arith.divf %70, %73 : vector<2x1x8xf32>
    %75 = arith.truncf %74 : vector<2x1x8xf32> to vector<2x1x8xbf16>
    "tpu.trace_start"() <{level = 10 : i32, message = "bqt,btd->bqd"}> : () -> ()
    %cst_46 = arith.constant dense<0.000000e+00> : vector<2x1x64xf32>
    %76 = tpu.matmul %75, %20, %cst_46 {dimension_numbers = #tpu.dot_dimension_numbers<[2], [1], [1], [2], [0, 0, 0, 1, 1, 2], [0], [0]>} : vector<2x1x8xbf16>, vector<2x8x64xbf16>, vector<2x1x64xf32> -> vector<2x1x64xf32>
    "tpu.trace_stop"() : () -> ()
    %77 = vector.shape_cast %76 : vector<2x1x64xf32> to vector<2x64xf32>
    %c0_47 = arith.constant 0 : index
    %c0_48 = arith.constant 0 : index
    %78 = vector.load %arg15[%c0_47, %c0_48] : memref<2x64xf32, #tpu.memory_space<vmem>>, vector<2x64xf32>
    tpu.vector_store %arg15[%c0_47, %c0_48], %77 {strides = array<i32>} : memref<2x64xf32, #tpu.memory_space<vmem>>, vector<2x64xf32>,
    %79 = arith.index_cast %c0_i32 : i32 to index
    %c0_49 = arith.constant 0 : index
    %c0_50 = arith.constant 0 : index
    %80 = vector.load %arg10[%79, %c0_49, %c0_50] : memref<8x2x64xf32, #tpu.memory_space<vmem>>, vector<1x2x64xf32>
    %81 = vector.shape_cast %80 : vector<1x2x64xf32> to vector<2x64xf32>
    %82 = arith.mulf %77, %81 : vector<2x64xf32>
    %83 = arith.truncf %82 : vector<2x64xf32> to vector<2x64xbf16>
    %84 = arith.index_cast %c0_i32 : i32 to index
    %c0_51 = arith.constant 0 : index
    %c0_52 = arith.constant 0 : index
    %85 = vector.load %arg12[%84, %c0_51, %c0_52] : memref<8x2x64xbf16, #tpu.memory_space<vmem>>, vector<1x2x64xbf16>
    %86 = vector.shape_cast %85 : vector<1x2x64xbf16> to vector<2x64xbf16>
    %87 = vector.shape_cast %83 : vector<2x64xbf16> to vector<1x2x64xbf16>
    tpu.vector_store %arg12[%84, %c0_51, %c0_52], %87 {strides = array<i32>} : memref<8x2x64xbf16, #tpu.memory_space<vmem>>, vector<1x2x64xbf16>,
    %88 = arith.index_cast %c0_i32 : i32 to index
    %c0_53 = arith.constant 0 : index
    %c0_54 = arith.constant 0 : index
    %89 = vector.load %arg11[%88, %c0_53, %c0_54] : memref<8x2x64xf32, #tpu.memory_space<vmem>>, vector<1x2x64xf32>
    %90 = vector.shape_cast %89 : vector<1x2x64xf32> to vector<2x64xf32>
    %91 = arith.mulf %61, %90 : vector<2x64xf32>
    %92 = arith.truncf %91 : vector<2x64xf32> to vector<2x64xbf16>
    %93 = arith.index_cast %c0_i32 : i32 to index
    %c0_55 = arith.constant 0 : index
    %c0_56 = arith.constant 0 : index
    %94 = vector.load %arg13[%93, %c0_55, %c0_56] : memref<8x2x64xbf16, #tpu.memory_space<vmem>>, vector<1x2x64xbf16>
    %95 = vector.shape_cast %94 : vector<1x2x64xbf16> to vector<2x64xbf16>
    %96 = vector.shape_cast %92 : vector<2x64xbf16> to vector<1x2x64xbf16>
    tpu.vector_store %arg13[%93, %c0_55, %c0_56], %96 {strides = array<i32>} : memref<8x2x64xbf16, #tpu.memory_space<vmem>>, vector<1x2x64xbf16>,
    %c1_i32 = arith.constant 1 : i32
    %c0_57 = arith.constant 0 : index
    %c0_58 = arith.constant 0 : index
    %97 = vector.load %arg14[%c0_57, %c0_58] : memref<2x64xf32, #tpu.memory_space<vmem>>, vector<2x64xf32>
    %c0_59 = arith.constant 0 : index
    %c0_60 = arith.constant 0 : index
    %98 = vector.load %arg15[%c0_59, %c0_60] : memref<2x64xf32, #tpu.memory_space<vmem>>, vector<2x64xf32>
    %99 = arith.index_cast %c1_i32 : i32 to index
    %c0_61 = arith.constant 0 : index
    %c0_62 = arith.constant 0 : index
    %100 = vector.load %arg16[%99, %c0_61, %c0_62] : memref<8x2x192xf32, #tpu.memory_space<vmem>>, vector<1x2x192xf32>
    %101 = vector.shape_cast %100 : vector<1x2x192xf32> to vector<2x192xf32>
    %102 = arith.truncf %98 : vector<2x64xf32> to vector<2x64xbf16>
    %cst_63 = arith.constant dense<0.000000e+00> : vector<2x192xf32>
    %103 = tpu.matmul %102, %21, %cst_63 {dimension_numbers = #tpu.dot_dimension_numbers<[1], [0], [0], [1], [0, 0, 1, 1], [], []>} : vector<2x64xbf16>, vector<64x192xbf16>, vector<2x192xf32> -> vector<2x192xf32>
    %104 = arith.addf %101, %103 : vector<2x192xf32>
    %105 = arith.truncf %97 : vector<2x64xf32> to vector<2x64xbf16>
    %cst_64 = arith.constant dense<0.000000e+00> : vector<2x192xf32>
    %106 = tpu.matmul %105, %22, %cst_64 {dimension_numbers = #tpu.dot_dimension_numbers<[1], [0], [0], [1], [0, 0, 1, 1], [], []>} : vector<2x64xbf16>, vector<64x192xbf16>, vector<2x192xf32> -> vector<2x192xf32>
    %107 = vector.broadcast %23 : vector<1x192xf32> to vector<2x192xf32>
    %108 = arith.addf %106, %107 : vector<2x192xf32>
    %109 = vector.extract_strided_slice %104 {offsets = [0, 0], sizes = [2, 64], strides = [1, 1]} : vector<2x192xf32> to vector<2x64xf32>
    %110 = vector.extract_strided_slice %108 {offsets = [0, 0], sizes = [2, 64], strides = [1, 1]} : vector<2x192xf32> to vector<2x64xf32>
    %111 = arith.addf %109, %110 : vector<2x64xf32>
    %112 = arith.negf %111 : vector<2x64xf32>
    %113 = math.exp %112 : vector<2x64xf32>
    %cst_65 = arith.constant 1.000000e+00 : f32
    %114 = vector.broadcast %cst_65 : f32 to vector<2x64xf32>
    %115 = arith.addf %114, %113 : vector<2x64xf32>
    %116 = arith.divf %114, %115 : vector<2x64xf32>
    %117 = vector.extract_strided_slice %104 {offsets = [0, 64], sizes = [2, 64], strides = [1, 1]} : vector<2x192xf32> to vector<2x64xf32>
    %118 = vector.extract_strided_slice %108 {offsets = [0, 64], sizes = [2, 64], strides = [1, 1]} : vector<2x192xf32> to vector<2x64xf32>
    %119 = arith.addf %117, %118 : vector<2x64xf32>
    %120 = arith.negf %119 : vector<2x64xf32>
    %121 = math.exp %120 : vector<2x64xf32>
    %cst_66 = arith.constant 1.000000e+00 : f32
    %122 = vector.broadcast %cst_66 : f32 to vector<2x64xf32>
    %123 = arith.addf %122, %121 : vector<2x64xf32>
    %124 = arith.divf %122, %123 : vector<2x64xf32>
    %125 = vector.extract_strided_slice %104 {offsets = [0, 128], sizes = [2, 64], strides = [1, 1]} : vector<2x192xf32> to vector<2x64xf32>
    %126 = vector.extract_strided_slice %108 {offsets = [0, 128], sizes = [2, 64], strides = [1, 1]} : vector<2x192xf32> to vector<2x64xf32>
    %127 = arith.mulf %116, %126 : vector<2x64xf32>
    %128 = arith.addf %125, %127 : vector<2x64xf32>
    %129 = math.tanh %128 : vector<2x64xf32>
    %cst_67 = arith.constant 1.000000e+00 : f32
    %130 = vector.broadcast %cst_67 : f32 to vector<2x64xf32>
    %131 = arith.subf %130, %124 : vector<2x64xf32>
    %132 = arith.mulf %131, %129 : vector<2x64xf32>
    %133 = arith.mulf %124, %97 : vector<2x64xf32>
    %134 = arith.addf %132, %133 : vector<2x64xf32>
    %c0_68 = arith.constant 0 : index
    %c0_69 = arith.constant 0 : index
    %135 = vector.load %arg14[%c0_68, %c0_69] : memref<2x64xf32, #tpu.memory_space<vmem>>, vector<2x64xf32>
    tpu.vector_store %arg14[%c0_68, %c0_69], %134 {strides = array<i32>} : memref<2x64xf32, #tpu.memory_space<vmem>>, vector<2x64xf32>,
    %136 = arith.truncf %134 : vector<2x64xf32> to vector<2x64xbf16>
    %137 = vector.shape_cast %136 : vector<2x64xbf16> to vector<2x1x64xbf16>
    "tpu.trace_start"() <{level = 10 : i32, message = "bqd,btd->bqt"}> : () -> ()
    %cst_70 = arith.constant dense<0.000000e+00> : vector<2x1x8xf32>
    %138 = tpu.matmul %137, %20, %cst_70 {dimension_numbers = #tpu.dot_dimension_numbers<[2], [2], [1], [1], [0, 0, 0, 1, 1, 1], [0], [0]>} : vector<2x1x64xbf16>, vector<2x8x64xbf16>, vector<2x1x8xf32> -> vector<2x1x8xf32>
    "tpu.trace_stop"() : () -> ()
    %cst_71 = arith.constant dense<0xFF800000> : vector<2x1xf32>
    %139 = vector.multi_reduction <maximumf>, %138, %cst_71 [2] : vector<2x1x8xf32> to vector<2x1xf32>
    %140 = vector.shape_cast %139 : vector<2x1xf32> to vector<2x1x1xf32>
    %141 = vector.broadcast %140 : vector<2x1x1xf32> to vector<2x1x8xf32>
    %142 = arith.subf %138, %141 : vector<2x1x8xf32>
    %143 = math.exp %142 : vector<2x1x8xf32>
    %cst_72 = arith.constant dense<0.000000e+00> : vector<2x1xf32>
    %144 = vector.multi_reduction <add>, %143, %cst_72 [2] : vector<2x1x8xf32> to vector<2x1xf32>
    %145 = vector.shape_cast %144 : vector<2x1xf32> to vector<2x1x1xf32>
    %146 = vector.broadcast %145 : vector<2x1x1xf32> to vector<2x1x8xf32>
    %147 = arith.divf %143, %146 : vector<2x1x8xf32>
    %148 = arith.truncf %147 : vector<2x1x8xf32> to vector<2x1x8xbf16>
    "tpu.trace_start"() <{level = 10 : i32, message = "bqt,btd->bqd"}> : () -> ()
    %cst_73 = arith.constant dense<0.000000e+00> : vector<2x1x64xf32>
    %149 = tpu.matmul %148, %20, %cst_73 {dimension_numbers = #tpu.dot_dimension_numbers<[2], [1], [1], [2], [0, 0, 0, 1, 1, 2], [0], [0]>} : vector<2x1x8xbf16>, vector<2x8x64xbf16>, vector<2x1x64xf32> -> vector<2x1x64xf32>
    "tpu.trace_stop"() : () -> ()
    %150 = vector.shape_cast %149 : vector<2x1x64xf32> to vector<2x64xf32>
    %c0_74 = arith.constant 0 : index
    %c0_75 = arith.constant 0 : index
    %151 = vector.load %arg15[%c0_74, %c0_75] : memref<2x64xf32, #tpu.memory_space<vmem>>, vector<2x64xf32>
    tpu.vector_store %arg15[%c0_74, %c0_75], %150 {strides = array<i32>} : memref<2x64xf32, #tpu.memory_space<vmem>>, vector<2x64xf32>,
    %152 = arith.index_cast %c1_i32 : i32 to index
    %c0_76 = arith.constant 0 : index
    %c0_77 = arith.constant 0 : index
    %153 = vector.load %arg10[%152, %c0_76, %c0_77] : memref<8x2x64xf32, #tpu.memory_space<vmem>>, vector<1x2x64xf32>
    %154 = vector.shape_cast %153 : vector<1x2x64xf32> to vector<2x64xf32>
    %155 = arith.mulf %150, %154 : vector<2x64xf32>
    %156 = arith.truncf %155 : vector<2x64xf32> to vector<2x64xbf16>
    %157 = arith.index_cast %c1_i32 : i32 to index
    %c0_78 = arith.constant 0 : index
    %c0_79 = arith.constant 0 : index
    %158 = vector.load %arg12[%157, %c0_78, %c0_79] : memref<8x2x64xbf16, #tpu.memory_space<vmem>>, vector<1x2x64xbf16>
    %159 = vector.shape_cast %158 : vector<1x2x64xbf16> to vector<2x64xbf16>
    %160 = vector.shape_cast %156 : vector<2x64xbf16> to vector<1x2x64xbf16>
    tpu.vector_store %arg12[%157, %c0_78, %c0_79], %160 {strides = array<i32>} : memref<8x2x64xbf16, #tpu.memory_space<vmem>>, vector<1x2x64xbf16>,
    %161 = arith.index_cast %c1_i32 : i32 to index
    %c0_80 = arith.constant 0 : index
    %c0_81 = arith.constant 0 : index
    %162 = vector.load %arg11[%161, %c0_80, %c0_81] : memref<8x2x64xf32, #tpu.memory_space<vmem>>, vector<1x2x64xf32>
    %163 = vector.shape_cast %162 : vector<1x2x64xf32> to vector<2x64xf32>
    %164 = arith.mulf %134, %163 : vector<2x64xf32>
    %165 = arith.truncf %164 : vector<2x64xf32> to vector<2x64xbf16>
    %166 = arith.index_cast %c1_i32 : i32 to index
    %c0_82 = arith.constant 0 : index
    %c0_83 = arith.constant 0 : index
    %167 = vector.load %arg13[%166, %c0_82, %c0_83] : memref<8x2x64xbf16, #tpu.memory_space<vmem>>, vector<1x2x64xbf16>
    %168 = vector.shape_cast %167 : vector<1x2x64xbf16> to vector<2x64xbf16>
    %169 = vector.shape_cast %165 : vector<2x64xbf16> to vector<1x2x64xbf16>
    tpu.vector_store %arg13[%166, %c0_82, %c0_83], %169 {strides = array<i32>} : memref<8x2x64xbf16, #tpu.memory_space<vmem>>, vector<1x2x64xbf16>,
    %c2_i32 = arith.constant 2 : i32
    %c0_84 = arith.constant 0 : index
    %c0_85 = arith.constant 0 : index
    %170 = vector.load %arg14[%c0_84, %c0_85] : memref<2x64xf32, #tpu.memory_space<vmem>>, vector<2x64xf32>
    %c0_86 = arith.constant 0 : index
    %c0_87 = arith.constant 0 : index
    %171 = vector.load %arg15[%c0_86, %c0_87] : memref<2x64xf32, #tpu.memory_space<vmem>>, vector<2x64xf32>
    %172 = arith.index_cast %c2_i32 : i32 to index
    %c0_88 = arith.constant 0 : index
    %c0_89 = arith.constant 0 : index
    %173 = vector.load %arg16[%172, %c0_88, %c0_89] : memref<8x2x192xf32, #tpu.memory_space<vmem>>, vector<1x2x192xf32>
    %174 = vector.shape_cast %173 : vector<1x2x192xf32> to vector<2x192xf32>
    %175 = arith.truncf %171 : vector<2x64xf32> to vector<2x64xbf16>
    %cst_90 = arith.constant dense<0.000000e+00> : vector<2x192xf32>
    %176 = tpu.matmul %175, %21, %cst_90 {dimension_numbers = #tpu.dot_dimension_numbers<[1], [0], [0], [1], [0, 0, 1, 1], [], []>} : vector<2x64xbf16>, vector<64x192xbf16>, vector<2x192xf32> -> vector<2x192xf32>
    %177 = arith.addf %174, %176 : vector<2x192xf32>
    %178 = arith.truncf %170 : vector<2x64xf32> to vector<2x64xbf16>
    %cst_91 = arith.constant dense<0.000000e+00> : vector<2x192xf32>
    %179 = tpu.matmul %178, %22, %cst_91 {dimension_numbers = #tpu.dot_dimension_numbers<[1], [0], [0], [1], [0, 0, 1, 1], [], []>} : vector<2x64xbf16>, vector<64x192xbf16>, vector<2x192xf32> -> vector<2x192xf32>
    %180 = vector.broadcast %23 : vector<1x192xf32> to vector<2x192xf32>
    %181 = arith.addf %179, %180 : vector<2x192xf32>
    %182 = vector.extract_strided_slice %177 {offsets = [0, 0], sizes = [2, 64], strides = [1, 1]} : vector<2x192xf32> to vector<2x64xf32>
    %183 = vector.extract_strided_slice %181 {offsets = [0, 0], sizes = [2, 64], strides = [1, 1]} : vector<2x192xf32> to vector<2x64xf32>
    %184 = arith.addf %182, %183 : vector<2x64xf32>
    %185 = arith.negf %184 : vector<2x64xf32>
    %186 = math.exp %185 : vector<2x64xf32>
    %cst_92 = arith.constant 1.000000e+00 : f32
    %187 = vector.broadcast %cst_92 : f32 to vector<2x64xf32>
    %188 = arith.addf %187, %186 : vector<2x64xf32>
    %189 = arith.divf %187, %188 : vector<2x64xf32>
    %190 = vector.extract_strided_slice %177 {offsets = [0, 64], sizes = [2, 64], strides = [1, 1]} : vector<2x192xf32> to vector<2x64xf32>
    %191 = vector.extract_strided_slice %181 {offsets = [0, 64], sizes = [2, 64], strides = [1, 1]} : vector<2x192xf32> to vector<2x64xf32>
    %192 = arith.addf %190, %191 : vector<2x64xf32>
    %193 = arith.negf %192 : vector<2x64xf32>
    %194 = math.exp %193 : vector<2x64xf32>
    %cst_93 = arith.constant 1.000000e+00 : f32
    %195 = vector.broadcast %cst_93 : f32 to vector<2x64xf32>
    %196 = arith.addf %195, %194 : vector<2x64xf32>
    %197 = arith.divf %195, %196 : vector<2x64xf32>
    %198 = vector.extract_strided_slice %177 {offsets = [0, 128], sizes = [2, 64], strides = [1, 1]} : vector<2x192xf32> to vector<2x64xf32>
    %199 = vector.extract_strided_slice %181 {offsets = [0, 128], sizes = [2, 64], strides = [1, 1]} : vector<2x192xf32> to vector<2x64xf32>
    %200 = arith.mulf %189, %199 : vector<2x64xf32>
    %201 = arith.addf %198, %200 : vector<2x64xf32>
    %202 = math.tanh %201 : vector<2x64xf32>
    %cst_94 = arith.constant 1.000000e+00 : f32
    %203 = vector.broadcast %cst_94 : f32 to vector<2x64xf32>
    %204 = arith.subf %203, %197 : vector<2x64xf32>
    %205 = arith.mulf %204, %202 : vector<2x64xf32>
    %206 = arith.mulf %197, %170 : vector<2x64xf32>
    %207 = arith.addf %205, %206 : vector<2x64xf32>
    %c0_95 = arith.constant 0 : index
    %c0_96 = arith.constant 0 : index
    %208 = vector.load %arg14[%c0_95, %c0_96] : memref<2x64xf32, #tpu.memory_space<vmem>>, vector<2x64xf32>
    tpu.vector_store %arg14[%c0_95, %c0_96], %207 {strides = array<i32>} : memref<2x64xf32, #tpu.memory_space<vmem>>, vector<2x64xf32>,
    %209 = arith.truncf %207 : vector<2x64xf32> to vector<2x64xbf16>
    %210 = vector.shape_cast %209 : vector<2x64xbf16> to vector<2x1x64xbf16>
    "tpu.trace_start"() <{level = 10 : i32, message = "bqd,btd->bqt"}> : () -> ()
    %cst_97 = arith.constant dense<0.000000e+00> : vector<2x1x8xf32>
    %211 = tpu.matmul %210, %20, %cst_97 {dimension_numbers = #tpu.dot_dimension_numbers<[2], [2], [1], [1], [0, 0, 0, 1, 1, 1], [0], [0]>} : vector<2x1x64xbf16>, vector<2x8x64xbf16>, vector<2x1x8xf32> -> vector<2x1x8xf32>
    "tpu.trace_stop"() : () -> ()
    %cst_98 = arith.constant dense<0xFF800000> : vector<2x1xf32>
    %212 = vector.multi_reduction <maximumf>, %211, %cst_98 [2] : vector<2x1x8xf32> to vector<2x1xf32>
    %213 = vector.shape_cast %212 : vector<2x1xf32> to vector<2x1x1xf32>
    %214 = vector.broadcast %213 : vector<2x1x1xf32> to vector<2x1x8xf32>
    %215 = arith.subf %211, %214 : vector<2x1x8xf32>
    %216 = math.exp %215 : vector<2x1x8xf32>
    %cst_99 = arith.constant dense<0.000000e+00> : vector<2x1xf32>
    %217 = vector.multi_reduction <add>, %216, %cst_99 [2] : vector<2x1x8xf32> to vector<2x1xf32>
    %218 = vector.shape_cast %217 : vector<2x1xf32> to vector<2x1x1xf32>
    %219 = vector.broadcast %218 : vector<2x1x1xf32> to vector<2x1x8xf32>
    %220 = arith.divf %216, %219 : vector<2x1x8xf32>
    %221 = arith.truncf %220 : vector<2x1x8xf32> to vector<2x1x8xbf16>
    "tpu.trace_start"() <{level = 10 : i32, message = "bqt,btd->bqd"}> : () -> ()
    %cst_100 = arith.constant dense<0.000000e+00> : vector<2x1x64xf32>
    %222 = tpu.matmul %221, %20, %cst_100 {dimension_numbers = #tpu.dot_dimension_numbers<[2], [1], [1], [2], [0, 0, 0, 1, 1, 2], [0], [0]>} : vector<2x1x8xbf16>, vector<2x8x64xbf16>, vector<2x1x64xf32> -> vector<2x1x64xf32>
    "tpu.trace_stop"() : () -> ()
    %223 = vector.shape_cast %222 : vector<2x1x64xf32> to vector<2x64xf32>
    %c0_101 = arith.constant 0 : index
    %c0_102 = arith.constant 0 : index
    %224 = vector.load %arg15[%c0_101, %c0_102] : memref<2x64xf32, #tpu.memory_space<vmem>>, vector<2x64xf32>
    tpu.vector_store %arg15[%c0_101, %c0_102], %223 {strides = array<i32>} : memref<2x64xf32, #tpu.memory_space<vmem>>, vector<2x64xf32>,
    %225 = arith.index_cast %c2_i32 : i32 to index
    %c0_103 = arith.constant 0 : index
    %c0_104 = arith.constant 0 : index
    %226 = vector.load %arg10[%225, %c0_103, %c0_104] : memref<8x2x64xf32, #tpu.memory_space<vmem>>, vector<1x2x64xf32>
    %227 = vector.shape_cast %226 : vector<1x2x64xf32> to vector<2x64xf32>
    %228 = arith.mulf %223, %227 : vector<2x64xf32>
    %229 = arith.truncf %228 : vector<2x64xf32> to vector<2x64xbf16>
    %230 = arith.index_cast %c2_i32 : i32 to index
    %c0_105 = arith.constant 0 : index
    %c0_106 = arith.constant 0 : index
    %231 = vector.load %arg12[%230, %c0_105, %c0_106] : memref<8x2x64xbf16, #tpu.memory_space<vmem>>, vector<1x2x64xbf16>
    %232 = vector.shape_cast %231 : vector<1x2x64xbf16> to vector<2x64xbf16>
    %233 = vector.shape_cast %229 : vector<2x64xbf16> to vector<1x2x64xbf16>
    tpu.vector_store %arg12[%230, %c0_105, %c0_106], %233 {strides = array<i32>} : memref<8x2x64xbf16, #tpu.memory_space<vmem>>, vector<1x2x64xbf16>,
    %234 = arith.index_cast %c2_i32 : i32 to index
    %c0_107 = arith.constant 0 : index
    %c0_108 = arith.constant 0 : index
    %235 = vector.load %arg11[%234, %c0_107, %c0_108] : memref<8x2x64xf32, #tpu.memory_space<vmem>>, vector<1x2x64xf32>
    %236 = vector.shape_cast %235 : vector<1x2x64xf32> to vector<2x64xf32>
    %237 = arith.mulf %207, %236 : vector<2x64xf32>
    %238 = arith.truncf %237 : vector<2x64xf32> to vector<2x64xbf16>
    %239 = arith.index_cast %c2_i32 : i32 to index
    %c0_109 = arith.constant 0 : index
    %c0_110 = arith.constant 0 : index
    %240 = vector.load %arg13[%239, %c0_109, %c0_110] : memref<8x2x64xbf16, #tpu.memory_space<vmem>>, vector<1x2x64xbf16>
    %241 = vector.shape_cast %240 : vector<1x2x64xbf16> to vector<2x64xbf16>
    %242 = vector.shape_cast %238 : vector<2x64xbf16> to vector<1x2x64xbf16>
    tpu.vector_store %arg13[%239, %c0_109, %c0_110], %242 {strides = array<i32>} : memref<8x2x64xbf16, #tpu.memory_space<vmem>>, vector<1x2x64xbf16>,
    %c3_i32 = arith.constant 3 : i32
    %c0_111 = arith.constant 0 : index
    %c0_112 = arith.constant 0 : index
    %243 = vector.load %arg14[%c0_111, %c0_112] : memref<2x64xf32, #tpu.memory_space<vmem>>, vector<2x64xf32>
    %c0_113 = arith.constant 0 : index
    %c0_114 = arith.constant 0 : index
    %244 = vector.load %arg15[%c0_113, %c0_114] : memref<2x64xf32, #tpu.memory_space<vmem>>, vector<2x64xf32>
    %245 = arith.index_cast %c3_i32 : i32 to index
    %c0_115 = arith.constant 0 : index
    %c0_116 = arith.constant 0 : index
    %246 = vector.load %arg16[%245, %c0_115, %c0_116] : memref<8x2x192xf32, #tpu.memory_space<vmem>>, vector<1x2x192xf32>
    %247 = vector.shape_cast %246 : vector<1x2x192xf32> to vector<2x192xf32>
    %248 = arith.truncf %244 : vector<2x64xf32> to vector<2x64xbf16>
    %cst_117 = arith.constant dense<0.000000e+00> : vector<2x192xf32>
    %249 = tpu.matmul %248, %21, %cst_117 {dimension_numbers = #tpu.dot_dimension_numbers<[1], [0], [0], [1], [0, 0, 1, 1], [], []>} : vector<2x64xbf16>, vector<64x192xbf16>, vector<2x192xf32> -> vector<2x192xf32>
    %250 = arith.addf %247, %249 : vector<2x192xf32>
    %251 = arith.truncf %243 : vector<2x64xf32> to vector<2x64xbf16>
    %cst_118 = arith.constant dense<0.000000e+00> : vector<2x192xf32>
    %252 = tpu.matmul %251, %22, %cst_118 {dimension_numbers = #tpu.dot_dimension_numbers<[1], [0], [0], [1], [0, 0, 1, 1], [], []>} : vector<2x64xbf16>, vector<64x192xbf16>, vector<2x192xf32> -> vector<2x192xf32>
    %253 = vector.broadcast %23 : vector<1x192xf32> to vector<2x192xf32>
    %254 = arith.addf %252, %253 : vector<2x192xf32>
    %255 = vector.extract_strided_slice %250 {offsets = [0, 0], sizes = [2, 64], strides = [1, 1]} : vector<2x192xf32> to vector<2x64xf32>
    %256 = vector.extract_strided_slice %254 {offsets = [0, 0], sizes = [2, 64], strides = [1, 1]} : vector<2x192xf32> to vector<2x64xf32>
    %257 = arith.addf %255, %256 : vector<2x64xf32>
    %258 = arith.negf %257 : vector<2x64xf32>
    %259 = math.exp %258 : vector<2x64xf32>
    %cst_119 = arith.constant 1.000000e+00 : f32
    %260 = vector.broadcast %cst_119 : f32 to vector<2x64xf32>
    %261 = arith.addf %260, %259 : vector<2x64xf32>
    %262 = arith.divf %260, %261 : vector<2x64xf32>
    %263 = vector.extract_strided_slice %250 {offsets = [0, 64], sizes = [2, 64], strides = [1, 1]} : vector<2x192xf32> to vector<2x64xf32>
    %264 = vector.extract_strided_slice %254 {offsets = [0, 64], sizes = [2, 64], strides = [1, 1]} : vector<2x192xf32> to vector<2x64xf32>
    %265 = arith.addf %263, %264 : vector<2x64xf32>
    %266 = arith.negf %265 : vector<2x64xf32>
    %267 = math.exp %266 : vector<2x64xf32>
    %cst_120 = arith.constant 1.000000e+00 : f32
    %268 = vector.broadcast %cst_120 : f32 to vector<2x64xf32>
    %269 = arith.addf %268, %267 : vector<2x64xf32>
    %270 = arith.divf %268, %269 : vector<2x64xf32>
    %271 = vector.extract_strided_slice %250 {offsets = [0, 128], sizes = [2, 64], strides = [1, 1]} : vector<2x192xf32> to vector<2x64xf32>
    %272 = vector.extract_strided_slice %254 {offsets = [0, 128], sizes = [2, 64], strides = [1, 1]} : vector<2x192xf32> to vector<2x64xf32>
    %273 = arith.mulf %262, %272 : vector<2x64xf32>
    %274 = arith.addf %271, %273 : vector<2x64xf32>
    %275 = math.tanh %274 : vector<2x64xf32>
    %cst_121 = arith.constant 1.000000e+00 : f32
    %276 = vector.broadcast %cst_121 : f32 to vector<2x64xf32>
    %277 = arith.subf %276, %270 : vector<2x64xf32>
    %278 = arith.mulf %277, %275 : vector<2x64xf32>
    %279 = arith.mulf %270, %243 : vector<2x64xf32>
    %280 = arith.addf %278, %279 : vector<2x64xf32>
    %c0_122 = arith.constant 0 : index
    %c0_123 = arith.constant 0 : index
    %281 = vector.load %arg14[%c0_122, %c0_123] : memref<2x64xf32, #tpu.memory_space<vmem>>, vector<2x64xf32>
    tpu.vector_store %arg14[%c0_122, %c0_123], %280 {strides = array<i32>} : memref<2x64xf32, #tpu.memory_space<vmem>>, vector<2x64xf32>,
    %282 = arith.truncf %280 : vector<2x64xf32> to vector<2x64xbf16>
    %283 = vector.shape_cast %282 : vector<2x64xbf16> to vector<2x1x64xbf16>
    "tpu.trace_start"() <{level = 10 : i32, message = "bqd,btd->bqt"}> : () -> ()
    %cst_124 = arith.constant dense<0.000000e+00> : vector<2x1x8xf32>
    %284 = tpu.matmul %283, %20, %cst_124 {dimension_numbers = #tpu.dot_dimension_numbers<[2], [2], [1], [1], [0, 0, 0, 1, 1, 1], [0], [0]>} : vector<2x1x64xbf16>, vector<2x8x64xbf16>, vector<2x1x8xf32> -> vector<2x1x8xf32>
    "tpu.trace_stop"() : () -> ()
    %cst_125 = arith.constant dense<0xFF800000> : vector<2x1xf32>
    %285 = vector.multi_reduction <maximumf>, %284, %cst_125 [2] : vector<2x1x8xf32> to vector<2x1xf32>
    %286 = vector.shape_cast %285 : vector<2x1xf32> to vector<2x1x1xf32>
    %287 = vector.broadcast %286 : vector<2x1x1xf32> to vector<2x1x8xf32>
    %288 = arith.subf %284, %287 : vector<2x1x8xf32>
    %289 = math.exp %288 : vector<2x1x8xf32>
    %cst_126 = arith.constant dense<0.000000e+00> : vector<2x1xf32>
    %290 = vector.multi_reduction <add>, %289, %cst_126 [2] : vector<2x1x8xf32> to vector<2x1xf32>
    %291 = vector.shape_cast %290 : vector<2x1xf32> to vector<2x1x1xf32>
    %292 = vector.broadcast %291 : vector<2x1x1xf32> to vector<2x1x8xf32>
    %293 = arith.divf %289, %292 : vector<2x1x8xf32>
    %294 = arith.truncf %293 : vector<2x1x8xf32> to vector<2x1x8xbf16>
    "tpu.trace_start"() <{level = 10 : i32, message = "bqt,btd->bqd"}> : () -> ()
    %cst_127 = arith.constant dense<0.000000e+00> : vector<2x1x64xf32>
    %295 = tpu.matmul %294, %20, %cst_127 {dimension_numbers = #tpu.dot_dimension_numbers<[2], [1], [1], [2], [0, 0, 0, 1, 1, 2], [0], [0]>} : vector<2x1x8xbf16>, vector<2x8x64xbf16>, vector<2x1x64xf32> -> vector<2x1x64xf32>
    "tpu.trace_stop"() : () -> ()
    %296 = vector.shape_cast %295 : vector<2x1x64xf32> to vector<2x64xf32>
    %c0_128 = arith.constant 0 : index
    %c0_129 = arith.constant 0 : index
    %297 = vector.load %arg15[%c0_128, %c0_129] : memref<2x64xf32, #tpu.memory_space<vmem>>, vector<2x64xf32>
    tpu.vector_store %arg15[%c0_128, %c0_129], %296 {strides = array<i32>} : memref<2x64xf32, #tpu.memory_space<vmem>>, vector<2x64xf32>,
    %298 = arith.index_cast %c3_i32 : i32 to index
    %c0_130 = arith.constant 0 : index
    %c0_131 = arith.constant 0 : index
    %299 = vector.load %arg10[%298, %c0_130, %c0_131] : memref<8x2x64xf32, #tpu.memory_space<vmem>>, vector<1x2x64xf32>
    %300 = vector.shape_cast %299 : vector<1x2x64xf32> to vector<2x64xf32>
    %301 = arith.mulf %296, %300 : vector<2x64xf32>
    %302 = arith.truncf %301 : vector<2x64xf32> to vector<2x64xbf16>
    %303 = arith.index_cast %c3_i32 : i32 to index
    %c0_132 = arith.constant 0 : index
    %c0_133 = arith.constant 0 : index
    %304 = vector.load %arg12[%303, %c0_132, %c0_133] : memref<8x2x64xbf16, #tpu.memory_space<vmem>>, vector<1x2x64xbf16>
    %305 = vector.shape_cast %304 : vector<1x2x64xbf16> to vector<2x64xbf16>
    %306 = vector.shape_cast %302 : vector<2x64xbf16> to vector<1x2x64xbf16>
    tpu.vector_store %arg12[%303, %c0_132, %c0_133], %306 {strides = array<i32>} : memref<8x2x64xbf16, #tpu.memory_space<vmem>>, vector<1x2x64xbf16>,
    %307 = arith.index_cast %c3_i32 : i32 to index
    %c0_134 = arith.constant 0 : index
    %c0_135 = arith.constant 0 : index
    %308 = vector.load %arg11[%307, %c0_134, %c0_135] : memref<8x2x64xf32, #tpu.memory_space<vmem>>, vector<1x2x64xf32>
    %309 = vector.shape_cast %308 : vector<1x2x64xf32> to vector<2x64xf32>
    %310 = arith.mulf %280, %309 : vector<2x64xf32>
    %311 = arith.truncf %310 : vector<2x64xf32> to vector<2x64xbf16>
    %312 = arith.index_cast %c3_i32 : i32 to index
    %c0_136 = arith.constant 0 : index
    %c0_137 = arith.constant 0 : index
    %313 = vector.load %arg13[%312, %c0_136, %c0_137] : memref<8x2x64xbf16, #tpu.memory_space<vmem>>, vector<1x2x64xbf16>
    %314 = vector.shape_cast %313 : vector<1x2x64xbf16> to vector<2x64xbf16>
    %315 = vector.shape_cast %311 : vector<2x64xbf16> to vector<1x2x64xbf16>
    tpu.vector_store %arg13[%312, %c0_136, %c0_137], %315 {strides = array<i32>} : memref<8x2x64xbf16, #tpu.memory_space<vmem>>, vector<1x2x64xbf16>,
    %c4_i32 = arith.constant 4 : i32
    %c0_138 = arith.constant 0 : index
    %c0_139 = arith.constant 0 : index
    %316 = vector.load %arg14[%c0_138, %c0_139] : memref<2x64xf32, #tpu.memory_space<vmem>>, vector<2x64xf32>
    %c0_140 = arith.constant 0 : index
    %c0_141 = arith.constant 0 : index
    %317 = vector.load %arg15[%c0_140, %c0_141] : memref<2x64xf32, #tpu.memory_space<vmem>>, vector<2x64xf32>
    %318 = arith.index_cast %c4_i32 : i32 to index
    %c0_142 = arith.constant 0 : index
    %c0_143 = arith.constant 0 : index
    %319 = vector.load %arg16[%318, %c0_142, %c0_143] : memref<8x2x192xf32, #tpu.memory_space<vmem>>, vector<1x2x192xf32>
    %320 = vector.shape_cast %319 : vector<1x2x192xf32> to vector<2x192xf32>
    %321 = arith.truncf %317 : vector<2x64xf32> to vector<2x64xbf16>
    %cst_144 = arith.constant dense<0.000000e+00> : vector<2x192xf32>
    %322 = tpu.matmul %321, %21, %cst_144 {dimension_numbers = #tpu.dot_dimension_numbers<[1], [0], [0], [1], [0, 0, 1, 1], [], []>} : vector<2x64xbf16>, vector<64x192xbf16>, vector<2x192xf32> -> vector<2x192xf32>
    %323 = arith.addf %320, %322 : vector<2x192xf32>
    %324 = arith.truncf %316 : vector<2x64xf32> to vector<2x64xbf16>
    %cst_145 = arith.constant dense<0.000000e+00> : vector<2x192xf32>
    %325 = tpu.matmul %324, %22, %cst_145 {dimension_numbers = #tpu.dot_dimension_numbers<[1], [0], [0], [1], [0, 0, 1, 1], [], []>} : vector<2x64xbf16>, vector<64x192xbf16>, vector<2x192xf32> -> vector<2x192xf32>
    %326 = vector.broadcast %23 : vector<1x192xf32> to vector<2x192xf32>
    %327 = arith.addf %325, %326 : vector<2x192xf32>
    %328 = vector.extract_strided_slice %323 {offsets = [0, 0], sizes = [2, 64], strides = [1, 1]} : vector<2x192xf32> to vector<2x64xf32>
    %329 = vector.extract_strided_slice %327 {offsets = [0, 0], sizes = [2, 64], strides = [1, 1]} : vector<2x192xf32> to vector<2x64xf32>
    %330 = arith.addf %328, %329 : vector<2x64xf32>
    %331 = arith.negf %330 : vector<2x64xf32>
    %332 = math.exp %331 : vector<2x64xf32>
    %cst_146 = arith.constant 1.000000e+00 : f32
    %333 = vector.broadcast %cst_146 : f32 to vector<2x64xf32>
    %334 = arith.addf %333, %332 : vector<2x64xf32>
    %335 = arith.divf %333, %334 : vector<2x64xf32>
    %336 = vector.extract_strided_slice %323 {offsets = [0, 64], sizes = [2, 64], strides = [1, 1]} : vector<2x192xf32> to vector<2x64xf32>
    %337 = vector.extract_strided_slice %327 {offsets = [0, 64], sizes = [2, 64], strides = [1, 1]} : vector<2x192xf32> to vector<2x64xf32>
    %338 = arith.addf %336, %337 : vector<2x64xf32>
    %339 = arith.negf %338 : vector<2x64xf32>
    %340 = math.exp %339 : vector<2x64xf32>
    %cst_147 = arith.constant 1.000000e+00 : f32
    %341 = vector.broadcast %cst_147 : f32 to vector<2x64xf32>
    %342 = arith.addf %341, %340 : vector<2x64xf32>
    %343 = arith.divf %341, %342 : vector<2x64xf32>
    %344 = vector.extract_strided_slice %323 {offsets = [0, 128], sizes = [2, 64], strides = [1, 1]} : vector<2x192xf32> to vector<2x64xf32>
    %345 = vector.extract_strided_slice %327 {offsets = [0, 128], sizes = [2, 64], strides = [1, 1]} : vector<2x192xf32> to vector<2x64xf32>
    %346 = arith.mulf %335, %345 : vector<2x64xf32>
    %347 = arith.addf %344, %346 : vector<2x64xf32>
    %348 = math.tanh %347 : vector<2x64xf32>
    %cst_148 = arith.constant 1.000000e+00 : f32
    %349 = vector.broadcast %cst_148 : f32 to vector<2x64xf32>
    %350 = arith.subf %349, %343 : vector<2x64xf32>
    %351 = arith.mulf %350, %348 : vector<2x64xf32>
    %352 = arith.mulf %343, %316 : vector<2x64xf32>
    %353 = arith.addf %351, %352 : vector<2x64xf32>
    %c0_149 = arith.constant 0 : index
    %c0_150 = arith.constant 0 : index
    %354 = vector.load %arg14[%c0_149, %c0_150] : memref<2x64xf32, #tpu.memory_space<vmem>>, vector<2x64xf32>
    tpu.vector_store %arg14[%c0_149, %c0_150], %353 {strides = array<i32>} : memref<2x64xf32, #tpu.memory_space<vmem>>, vector<2x64xf32>,
    %355 = arith.truncf %353 : vector<2x64xf32> to vector<2x64xbf16>
    %356 = vector.shape_cast %355 : vector<2x64xbf16> to vector<2x1x64xbf16>
    "tpu.trace_start"() <{level = 10 : i32, message = "bqd,btd->bqt"}> : () -> ()
    %cst_151 = arith.constant dense<0.000000e+00> : vector<2x1x8xf32>
    %357 = tpu.matmul %356, %20, %cst_151 {dimension_numbers = #tpu.dot_dimension_numbers<[2], [2], [1], [1], [0, 0, 0, 1, 1, 1], [0], [0]>} : vector<2x1x64xbf16>, vector<2x8x64xbf16>, vector<2x1x8xf32> -> vector<2x1x8xf32>
    "tpu.trace_stop"() : () -> ()
    %cst_152 = arith.constant dense<0xFF800000> : vector<2x1xf32>
    %358 = vector.multi_reduction <maximumf>, %357, %cst_152 [2] : vector<2x1x8xf32> to vector<2x1xf32>
    %359 = vector.shape_cast %358 : vector<2x1xf32> to vector<2x1x1xf32>
    %360 = vector.broadcast %359 : vector<2x1x1xf32> to vector<2x1x8xf32>
    %361 = arith.subf %357, %360 : vector<2x1x8xf32>
    %362 = math.exp %361 : vector<2x1x8xf32>
    %cst_153 = arith.constant dense<0.000000e+00> : vector<2x1xf32>
    %363 = vector.multi_reduction <add>, %362, %cst_153 [2] : vector<2x1x8xf32> to vector<2x1xf32>
    %364 = vector.shape_cast %363 : vector<2x1xf32> to vector<2x1x1xf32>
    %365 = vector.broadcast %364 : vector<2x1x1xf32> to vector<2x1x8xf32>
    %366 = arith.divf %362, %365 : vector<2x1x8xf32>
    %367 = arith.truncf %366 : vector<2x1x8xf32> to vector<2x1x8xbf16>
    "tpu.trace_start"() <{level = 10 : i32, message = "bqt,btd->bqd"}> : () -> ()
    %cst_154 = arith.constant dense<0.000000e+00> : vector<2x1x64xf32>
    %368 = tpu.matmul %367, %20, %cst_154 {dimension_numbers = #tpu.dot_dimension_numbers<[2], [1], [1], [2], [0, 0, 0, 1, 1, 2], [0], [0]>} : vector<2x1x8xbf16>, vector<2x8x64xbf16>, vector<2x1x64xf32> -> vector<2x1x64xf32>
    "tpu.trace_stop"() : () -> ()
    %369 = vector.shape_cast %368 : vector<2x1x64xf32> to vector<2x64xf32>
    %c0_155 = arith.constant 0 : index
    %c0_156 = arith.constant 0 : index
    %370 = vector.load %arg15[%c0_155, %c0_156] : memref<2x64xf32, #tpu.memory_space<vmem>>, vector<2x64xf32>
    tpu.vector_store %arg15[%c0_155, %c0_156], %369 {strides = array<i32>} : memref<2x64xf32, #tpu.memory_space<vmem>>, vector<2x64xf32>,
    %371 = arith.index_cast %c4_i32 : i32 to index
    %c0_157 = arith.constant 0 : index
    %c0_158 = arith.constant 0 : index
    %372 = vector.load %arg10[%371, %c0_157, %c0_158] : memref<8x2x64xf32, #tpu.memory_space<vmem>>, vector<1x2x64xf32>
    %373 = vector.shape_cast %372 : vector<1x2x64xf32> to vector<2x64xf32>
    %374 = arith.mulf %369, %373 : vector<2x64xf32>
    %375 = arith.truncf %374 : vector<2x64xf32> to vector<2x64xbf16>
    %376 = arith.index_cast %c4_i32 : i32 to index
    %c0_159 = arith.constant 0 : index
    %c0_160 = arith.constant 0 : index
    %377 = vector.load %arg12[%376, %c0_159, %c0_160] : memref<8x2x64xbf16, #tpu.memory_space<vmem>>, vector<1x2x64xbf16>
    %378 = vector.shape_cast %377 : vector<1x2x64xbf16> to vector<2x64xbf16>
    %379 = vector.shape_cast %375 : vector<2x64xbf16> to vector<1x2x64xbf16>
    tpu.vector_store %arg12[%376, %c0_159, %c0_160], %379 {strides = array<i32>} : memref<8x2x64xbf16, #tpu.memory_space<vmem>>, vector<1x2x64xbf16>,
    %380 = arith.index_cast %c4_i32 : i32 to index
    %c0_161 = arith.constant 0 : index
    %c0_162 = arith.constant 0 : index
    %381 = vector.load %arg11[%380, %c0_161, %c0_162] : memref<8x2x64xf32, #tpu.memory_space<vmem>>, vector<1x2x64xf32>
    %382 = vector.shape_cast %381 : vector<1x2x64xf32> to vector<2x64xf32>
    %383 = arith.mulf %353, %382 : vector<2x64xf32>
    %384 = arith.truncf %383 : vector<2x64xf32> to vector<2x64xbf16>
    %385 = arith.index_cast %c4_i32 : i32 to index
    %c0_163 = arith.constant 0 : index
    %c0_164 = arith.constant 0 : index
    %386 = vector.load %arg13[%385, %c0_163, %c0_164] : memref<8x2x64xbf16, #tpu.memory_space<vmem>>, vector<1x2x64xbf16>
    %387 = vector.shape_cast %386 : vector<1x2x64xbf16> to vector<2x64xbf16>
    %388 = vector.shape_cast %384 : vector<2x64xbf16> to vector<1x2x64xbf16>
    tpu.vector_store %arg13[%385, %c0_163, %c0_164], %388 {strides = array<i32>} : memref<8x2x64xbf16, #tpu.memory_space<vmem>>, vector<1x2x64xbf16>,
    %c5_i32 = arith.constant 5 : i32
    %c0_165 = arith.constant 0 : index
    %c0_166 = arith.constant 0 : index
    %389 = vector.load %arg14[%c0_165, %c0_166] : memref<2x64xf32, #tpu.memory_space<vmem>>, vector<2x64xf32>
    %c0_167 = arith.constant 0 : index
    %c0_168 = arith.constant 0 : index
    %390 = vector.load %arg15[%c0_167, %c0_168] : memref<2x64xf32, #tpu.memory_space<vmem>>, vector<2x64xf32>
    %391 = arith.index_cast %c5_i32 : i32 to index
    %c0_169 = arith.constant 0 : index
    %c0_170 = arith.constant 0 : index
    %392 = vector.load %arg16[%391, %c0_169, %c0_170] : memref<8x2x192xf32, #tpu.memory_space<vmem>>, vector<1x2x192xf32>
    %393 = vector.shape_cast %392 : vector<1x2x192xf32> to vector<2x192xf32>
    %394 = arith.truncf %390 : vector<2x64xf32> to vector<2x64xbf16>
    %cst_171 = arith.constant dense<0.000000e+00> : vector<2x192xf32>
    %395 = tpu.matmul %394, %21, %cst_171 {dimension_numbers = #tpu.dot_dimension_numbers<[1], [0], [0], [1], [0, 0, 1, 1], [], []>} : vector<2x64xbf16>, vector<64x192xbf16>, vector<2x192xf32> -> vector<2x192xf32>
    %396 = arith.addf %393, %395 : vector<2x192xf32>
    %397 = arith.truncf %389 : vector<2x64xf32> to vector<2x64xbf16>
    %cst_172 = arith.constant dense<0.000000e+00> : vector<2x192xf32>
    %398 = tpu.matmul %397, %22, %cst_172 {dimension_numbers = #tpu.dot_dimension_numbers<[1], [0], [0], [1], [0, 0, 1, 1], [], []>} : vector<2x64xbf16>, vector<64x192xbf16>, vector<2x192xf32> -> vector<2x192xf32>
    %399 = vector.broadcast %23 : vector<1x192xf32> to vector<2x192xf32>
    %400 = arith.addf %398, %399 : vector<2x192xf32>
    %401 = vector.extract_strided_slice %396 {offsets = [0, 0], sizes = [2, 64], strides = [1, 1]} : vector<2x192xf32> to vector<2x64xf32>
    %402 = vector.extract_strided_slice %400 {offsets = [0, 0], sizes = [2, 64], strides = [1, 1]} : vector<2x192xf32> to vector<2x64xf32>
    %403 = arith.addf %401, %402 : vector<2x64xf32>
    %404 = arith.negf %403 : vector<2x64xf32>
    %405 = math.exp %404 : vector<2x64xf32>
    %cst_173 = arith.constant 1.000000e+00 : f32
    %406 = vector.broadcast %cst_173 : f32 to vector<2x64xf32>
    %407 = arith.addf %406, %405 : vector<2x64xf32>
    %408 = arith.divf %406, %407 : vector<2x64xf32>
    %409 = vector.extract_strided_slice %396 {offsets = [0, 64], sizes = [2, 64], strides = [1, 1]} : vector<2x192xf32> to vector<2x64xf32>
    %410 = vector.extract_strided_slice %400 {offsets = [0, 64], sizes = [2, 64], strides = [1, 1]} : vector<2x192xf32> to vector<2x64xf32>
    %411 = arith.addf %409, %410 : vector<2x64xf32>
    %412 = arith.negf %411 : vector<2x64xf32>
    %413 = math.exp %412 : vector<2x64xf32>
    %cst_174 = arith.constant 1.000000e+00 : f32
    %414 = vector.broadcast %cst_174 : f32 to vector<2x64xf32>
    %415 = arith.addf %414, %413 : vector<2x64xf32>
    %416 = arith.divf %414, %415 : vector<2x64xf32>
    %417 = vector.extract_strided_slice %396 {offsets = [0, 128], sizes = [2, 64], strides = [1, 1]} : vector<2x192xf32> to vector<2x64xf32>
    %418 = vector.extract_strided_slice %400 {offsets = [0, 128], sizes = [2, 64], strides = [1, 1]} : vector<2x192xf32> to vector<2x64xf32>
    %419 = arith.mulf %408, %418 : vector<2x64xf32>
    %420 = arith.addf %417, %419 : vector<2x64xf32>
    %421 = math.tanh %420 : vector<2x64xf32>
    %cst_175 = arith.constant 1.000000e+00 : f32
    %422 = vector.broadcast %cst_175 : f32 to vector<2x64xf32>
    %423 = arith.subf %422, %416 : vector<2x64xf32>
    %424 = arith.mulf %423, %421 : vector<2x64xf32>
    %425 = arith.mulf %416, %389 : vector<2x64xf32>
    %426 = arith.addf %424, %425 : vector<2x64xf32>
    %c0_176 = arith.constant 0 : index
    %c0_177 = arith.constant 0 : index
    %427 = vector.load %arg14[%c0_176, %c0_177] : memref<2x64xf32, #tpu.memory_space<vmem>>, vector<2x64xf32>
    tpu.vector_store %arg14[%c0_176, %c0_177], %426 {strides = array<i32>} : memref<2x64xf32, #tpu.memory_space<vmem>>, vector<2x64xf32>,
    %428 = arith.truncf %426 : vector<2x64xf32> to vector<2x64xbf16>
    %429 = vector.shape_cast %428 : vector<2x64xbf16> to vector<2x1x64xbf16>
    "tpu.trace_start"() <{level = 10 : i32, message = "bqd,btd->bqt"}> : () -> ()
    %cst_178 = arith.constant dense<0.000000e+00> : vector<2x1x8xf32>
    %430 = tpu.matmul %429, %20, %cst_178 {dimension_numbers = #tpu.dot_dimension_numbers<[2], [2], [1], [1], [0, 0, 0, 1, 1, 1], [0], [0]>} : vector<2x1x64xbf16>, vector<2x8x64xbf16>, vector<2x1x8xf32> -> vector<2x1x8xf32>
    "tpu.trace_stop"() : () -> ()
    %cst_179 = arith.constant dense<0xFF800000> : vector<2x1xf32>
    %431 = vector.multi_reduction <maximumf>, %430, %cst_179 [2] : vector<2x1x8xf32> to vector<2x1xf32>
    %432 = vector.shape_cast %431 : vector<2x1xf32> to vector<2x1x1xf32>
    %433 = vector.broadcast %432 : vector<2x1x1xf32> to vector<2x1x8xf32>
    %434 = arith.subf %430, %433 : vector<2x1x8xf32>
    %435 = math.exp %434 : vector<2x1x8xf32>
    %cst_180 = arith.constant dense<0.000000e+00> : vector<2x1xf32>
    %436 = vector.multi_reduction <add>, %435, %cst_180 [2] : vector<2x1x8xf32> to vector<2x1xf32>
    %437 = vector.shape_cast %436 : vector<2x1xf32> to vector<2x1x1xf32>
    %438 = vector.broadcast %437 : vector<2x1x1xf32> to vector<2x1x8xf32>
    %439 = arith.divf %435, %438 : vector<2x1x8xf32>
    %440 = arith.truncf %439 : vector<2x1x8xf32> to vector<2x1x8xbf16>
    "tpu.trace_start"() <{level = 10 : i32, message = "bqt,btd->bqd"}> : () -> ()
    %cst_181 = arith.constant dense<0.000000e+00> : vector<2x1x64xf32>
    %441 = tpu.matmul %440, %20, %cst_181 {dimension_numbers = #tpu.dot_dimension_numbers<[2], [1], [1], [2], [0, 0, 0, 1, 1, 2], [0], [0]>} : vector<2x1x8xbf16>, vector<2x8x64xbf16>, vector<2x1x64xf32> -> vector<2x1x64xf32>
    "tpu.trace_stop"() : () -> ()
    %442 = vector.shape_cast %441 : vector<2x1x64xf32> to vector<2x64xf32>
    %c0_182 = arith.constant 0 : index
    %c0_183 = arith.constant 0 : index
    %443 = vector.load %arg15[%c0_182, %c0_183] : memref<2x64xf32, #tpu.memory_space<vmem>>, vector<2x64xf32>
    tpu.vector_store %arg15[%c0_182, %c0_183], %442 {strides = array<i32>} : memref<2x64xf32, #tpu.memory_space<vmem>>, vector<2x64xf32>,
    %444 = arith.index_cast %c5_i32 : i32 to index
    %c0_184 = arith.constant 0 : index
    %c0_185 = arith.constant 0 : index
    %445 = vector.load %arg10[%444, %c0_184, %c0_185] : memref<8x2x64xf32, #tpu.memory_space<vmem>>, vector<1x2x64xf32>
    %446 = vector.shape_cast %445 : vector<1x2x64xf32> to vector<2x64xf32>
    %447 = arith.mulf %442, %446 : vector<2x64xf32>
    %448 = arith.truncf %447 : vector<2x64xf32> to vector<2x64xbf16>
    %449 = arith.index_cast %c5_i32 : i32 to index
    %c0_186 = arith.constant 0 : index
    %c0_187 = arith.constant 0 : index
    %450 = vector.load %arg12[%449, %c0_186, %c0_187] : memref<8x2x64xbf16, #tpu.memory_space<vmem>>, vector<1x2x64xbf16>
    %451 = vector.shape_cast %450 : vector<1x2x64xbf16> to vector<2x64xbf16>
    %452 = vector.shape_cast %448 : vector<2x64xbf16> to vector<1x2x64xbf16>
    tpu.vector_store %arg12[%449, %c0_186, %c0_187], %452 {strides = array<i32>} : memref<8x2x64xbf16, #tpu.memory_space<vmem>>, vector<1x2x64xbf16>,
    %453 = arith.index_cast %c5_i32 : i32 to index
    %c0_188 = arith.constant 0 : index
    %c0_189 = arith.constant 0 : index
    %454 = vector.load %arg11[%453, %c0_188, %c0_189] : memref<8x2x64xf32, #tpu.memory_space<vmem>>, vector<1x2x64xf32>
    %455 = vector.shape_cast %454 : vector<1x2x64xf32> to vector<2x64xf32>
    %456 = arith.mulf %426, %455 : vector<2x64xf32>
    %457 = arith.truncf %456 : vector<2x64xf32> to vector<2x64xbf16>
    %458 = arith.index_cast %c5_i32 : i32 to index
    %c0_190 = arith.constant 0 : index
    %c0_191 = arith.constant 0 : index
    %459 = vector.load %arg13[%458, %c0_190, %c0_191] : memref<8x2x64xbf16, #tpu.memory_space<vmem>>, vector<1x2x64xbf16>
    %460 = vector.shape_cast %459 : vector<1x2x64xbf16> to vector<2x64xbf16>
    %461 = vector.shape_cast %457 : vector<2x64xbf16> to vector<1x2x64xbf16>
    tpu.vector_store %arg13[%458, %c0_190, %c0_191], %461 {strides = array<i32>} : memref<8x2x64xbf16, #tpu.memory_space<vmem>>, vector<1x2x64xbf16>,
    %c6_i32 = arith.constant 6 : i32
    %c0_192 = arith.constant 0 : index
    %c0_193 = arith.constant 0 : index
    %462 = vector.load %arg14[%c0_192, %c0_193] : memref<2x64xf32, #tpu.memory_space<vmem>>, vector<2x64xf32>
    %c0_194 = arith.constant 0 : index
    %c0_195 = arith.constant 0 : index
    %463 = vector.load %arg15[%c0_194, %c0_195] : memref<2x64xf32, #tpu.memory_space<vmem>>, vector<2x64xf32>
    %464 = arith.index_cast %c6_i32 : i32 to index
    %c0_196 = arith.constant 0 : index
    %c0_197 = arith.constant 0 : index
    %465 = vector.load %arg16[%464, %c0_196, %c0_197] : memref<8x2x192xf32, #tpu.memory_space<vmem>>, vector<1x2x192xf32>
    %466 = vector.shape_cast %465 : vector<1x2x192xf32> to vector<2x192xf32>
    %467 = arith.truncf %463 : vector<2x64xf32> to vector<2x64xbf16>
    %cst_198 = arith.constant dense<0.000000e+00> : vector<2x192xf32>
    %468 = tpu.matmul %467, %21, %cst_198 {dimension_numbers = #tpu.dot_dimension_numbers<[1], [0], [0], [1], [0, 0, 1, 1], [], []>} : vector<2x64xbf16>, vector<64x192xbf16>, vector<2x192xf32> -> vector<2x192xf32>
    %469 = arith.addf %466, %468 : vector<2x192xf32>
    %470 = arith.truncf %462 : vector<2x64xf32> to vector<2x64xbf16>
    %cst_199 = arith.constant dense<0.000000e+00> : vector<2x192xf32>
    %471 = tpu.matmul %470, %22, %cst_199 {dimension_numbers = #tpu.dot_dimension_numbers<[1], [0], [0], [1], [0, 0, 1, 1], [], []>} : vector<2x64xbf16>, vector<64x192xbf16>, vector<2x192xf32> -> vector<2x192xf32>
    %472 = vector.broadcast %23 : vector<1x192xf32> to vector<2x192xf32>
    %473 = arith.addf %471, %472 : vector<2x192xf32>
    %474 = vector.extract_strided_slice %469 {offsets = [0, 0], sizes = [2, 64], strides = [1, 1]} : vector<2x192xf32> to vector<2x64xf32>
    %475 = vector.extract_strided_slice %473 {offsets = [0, 0], sizes = [2, 64], strides = [1, 1]} : vector<2x192xf32> to vector<2x64xf32>
    %476 = arith.addf %474, %475 : vector<2x64xf32>
    %477 = arith.negf %476 : vector<2x64xf32>
    %478 = math.exp %477 : vector<2x64xf32>
    %cst_200 = arith.constant 1.000000e+00 : f32
    %479 = vector.broadcast %cst_200 : f32 to vector<2x64xf32>
    %480 = arith.addf %479, %478 : vector<2x64xf32>
    %481 = arith.divf %479, %480 : vector<2x64xf32>
    %482 = vector.extract_strided_slice %469 {offsets = [0, 64], sizes = [2, 64], strides = [1, 1]} : vector<2x192xf32> to vector<2x64xf32>
    %483 = vector.extract_strided_slice %473 {offsets = [0, 64], sizes = [2, 64], strides = [1, 1]} : vector<2x192xf32> to vector<2x64xf32>
    %484 = arith.addf %482, %483 : vector<2x64xf32>
    %485 = arith.negf %484 : vector<2x64xf32>
    %486 = math.exp %485 : vector<2x64xf32>
    %cst_201 = arith.constant 1.000000e+00 : f32
    %487 = vector.broadcast %cst_201 : f32 to vector<2x64xf32>
    %488 = arith.addf %487, %486 : vector<2x64xf32>
    %489 = arith.divf %487, %488 : vector<2x64xf32>
    %490 = vector.extract_strided_slice %469 {offsets = [0, 128], sizes = [2, 64], strides = [1, 1]} : vector<2x192xf32> to vector<2x64xf32>
    %491 = vector.extract_strided_slice %473 {offsets = [0, 128], sizes = [2, 64], strides = [1, 1]} : vector<2x192xf32> to vector<2x64xf32>
    %492 = arith.mulf %481, %491 : vector<2x64xf32>
    %493 = arith.addf %490, %492 : vector<2x64xf32>
    %494 = math.tanh %493 : vector<2x64xf32>
    %cst_202 = arith.constant 1.000000e+00 : f32
    %495 = vector.broadcast %cst_202 : f32 to vector<2x64xf32>
    %496 = arith.subf %495, %489 : vector<2x64xf32>
    %497 = arith.mulf %496, %494 : vector<2x64xf32>
    %498 = arith.mulf %489, %462 : vector<2x64xf32>
    %499 = arith.addf %497, %498 : vector<2x64xf32>
    %c0_203 = arith.constant 0 : index
    %c0_204 = arith.constant 0 : index
    %500 = vector.load %arg14[%c0_203, %c0_204] : memref<2x64xf32, #tpu.memory_space<vmem>>, vector<2x64xf32>
    tpu.vector_store %arg14[%c0_203, %c0_204], %499 {strides = array<i32>} : memref<2x64xf32, #tpu.memory_space<vmem>>, vector<2x64xf32>,
    %501 = arith.truncf %499 : vector<2x64xf32> to vector<2x64xbf16>
    %502 = vector.shape_cast %501 : vector<2x64xbf16> to vector<2x1x64xbf16>
    "tpu.trace_start"() <{level = 10 : i32, message = "bqd,btd->bqt"}> : () -> ()
    %cst_205 = arith.constant dense<0.000000e+00> : vector<2x1x8xf32>
    %503 = tpu.matmul %502, %20, %cst_205 {dimension_numbers = #tpu.dot_dimension_numbers<[2], [2], [1], [1], [0, 0, 0, 1, 1, 1], [0], [0]>} : vector<2x1x64xbf16>, vector<2x8x64xbf16>, vector<2x1x8xf32> -> vector<2x1x8xf32>
    "tpu.trace_stop"() : () -> ()
    %cst_206 = arith.constant dense<0xFF800000> : vector<2x1xf32>
    %504 = vector.multi_reduction <maximumf>, %503, %cst_206 [2] : vector<2x1x8xf32> to vector<2x1xf32>
    %505 = vector.shape_cast %504 : vector<2x1xf32> to vector<2x1x1xf32>
    %506 = vector.broadcast %505 : vector<2x1x1xf32> to vector<2x1x8xf32>
    %507 = arith.subf %503, %506 : vector<2x1x8xf32>
    %508 = math.exp %507 : vector<2x1x8xf32>
    %cst_207 = arith.constant dense<0.000000e+00> : vector<2x1xf32>
    %509 = vector.multi_reduction <add>, %508, %cst_207 [2] : vector<2x1x8xf32> to vector<2x1xf32>
    %510 = vector.shape_cast %509 : vector<2x1xf32> to vector<2x1x1xf32>
    %511 = vector.broadcast %510 : vector<2x1x1xf32> to vector<2x1x8xf32>
    %512 = arith.divf %508, %511 : vector<2x1x8xf32>
    %513 = arith.truncf %512 : vector<2x1x8xf32> to vector<2x1x8xbf16>
    "tpu.trace_start"() <{level = 10 : i32, message = "bqt,btd->bqd"}> : () -> ()
    %cst_208 = arith.constant dense<0.000000e+00> : vector<2x1x64xf32>
    %514 = tpu.matmul %513, %20, %cst_208 {dimension_numbers = #tpu.dot_dimension_numbers<[2], [1], [1], [2], [0, 0, 0, 1, 1, 2], [0], [0]>} : vector<2x1x8xbf16>, vector<2x8x64xbf16>, vector<2x1x64xf32> -> vector<2x1x64xf32>
    "tpu.trace_stop"() : () -> ()
    %515 = vector.shape_cast %514 : vector<2x1x64xf32> to vector<2x64xf32>
    %c0_209 = arith.constant 0 : index
    %c0_210 = arith.constant 0 : index
    %516 = vector.load %arg15[%c0_209, %c0_210] : memref<2x64xf32, #tpu.memory_space<vmem>>, vector<2x64xf32>
    tpu.vector_store %arg15[%c0_209, %c0_210], %515 {strides = array<i32>} : memref<2x64xf32, #tpu.memory_space<vmem>>, vector<2x64xf32>,
    %517 = arith.index_cast %c6_i32 : i32 to index
    %c0_211 = arith.constant 0 : index
    %c0_212 = arith.constant 0 : index
    %518 = vector.load %arg10[%517, %c0_211, %c0_212] : memref<8x2x64xf32, #tpu.memory_space<vmem>>, vector<1x2x64xf32>
    %519 = vector.shape_cast %518 : vector<1x2x64xf32> to vector<2x64xf32>
    %520 = arith.mulf %515, %519 : vector<2x64xf32>
    %521 = arith.truncf %520 : vector<2x64xf32> to vector<2x64xbf16>
    %522 = arith.index_cast %c6_i32 : i32 to index
    %c0_213 = arith.constant 0 : index
    %c0_214 = arith.constant 0 : index
    %523 = vector.load %arg12[%522, %c0_213, %c0_214] : memref<8x2x64xbf16, #tpu.memory_space<vmem>>, vector<1x2x64xbf16>
    %524 = vector.shape_cast %523 : vector<1x2x64xbf16> to vector<2x64xbf16>
    %525 = vector.shape_cast %521 : vector<2x64xbf16> to vector<1x2x64xbf16>
    tpu.vector_store %arg12[%522, %c0_213, %c0_214], %525 {strides = array<i32>} : memref<8x2x64xbf16, #tpu.memory_space<vmem>>, vector<1x2x64xbf16>,
    %526 = arith.index_cast %c6_i32 : i32 to index
    %c0_215 = arith.constant 0 : index
    %c0_216 = arith.constant 0 : index
    %527 = vector.load %arg11[%526, %c0_215, %c0_216] : memref<8x2x64xf32, #tpu.memory_space<vmem>>, vector<1x2x64xf32>
    %528 = vector.shape_cast %527 : vector<1x2x64xf32> to vector<2x64xf32>
    %529 = arith.mulf %499, %528 : vector<2x64xf32>
    %530 = arith.truncf %529 : vector<2x64xf32> to vector<2x64xbf16>
    %531 = arith.index_cast %c6_i32 : i32 to index
    %c0_217 = arith.constant 0 : index
    %c0_218 = arith.constant 0 : index
    %532 = vector.load %arg13[%531, %c0_217, %c0_218] : memref<8x2x64xbf16, #tpu.memory_space<vmem>>, vector<1x2x64xbf16>
    %533 = vector.shape_cast %532 : vector<1x2x64xbf16> to vector<2x64xbf16>
    %534 = vector.shape_cast %530 : vector<2x64xbf16> to vector<1x2x64xbf16>
    tpu.vector_store %arg13[%531, %c0_217, %c0_218], %534 {strides = array<i32>} : memref<8x2x64xbf16, #tpu.memory_space<vmem>>, vector<1x2x64xbf16>,
    %c7_i32 = arith.constant 7 : i32
    %c0_219 = arith.constant 0 : index
    %c0_220 = arith.constant 0 : index
    %535 = vector.load %arg14[%c0_219, %c0_220] : memref<2x64xf32, #tpu.memory_space<vmem>>, vector<2x64xf32>
    %c0_221 = arith.constant 0 : index
    %c0_222 = arith.constant 0 : index
    %536 = vector.load %arg15[%c0_221, %c0_222] : memref<2x64xf32, #tpu.memory_space<vmem>>, vector<2x64xf32>
    %537 = arith.index_cast %c7_i32 : i32 to index
    %c0_223 = arith.constant 0 : index
    %c0_224 = arith.constant 0 : index
    %538 = vector.load %arg16[%537, %c0_223, %c0_224] : memref<8x2x192xf32, #tpu.memory_space<vmem>>, vector<1x2x192xf32>
    %539 = vector.shape_cast %538 : vector<1x2x192xf32> to vector<2x192xf32>
    %540 = arith.truncf %536 : vector<2x64xf32> to vector<2x64xbf16>
    %cst_225 = arith.constant dense<0.000000e+00> : vector<2x192xf32>
    %541 = tpu.matmul %540, %21, %cst_225 {dimension_numbers = #tpu.dot_dimension_numbers<[1], [0], [0], [1], [0, 0, 1, 1], [], []>} : vector<2x64xbf16>, vector<64x192xbf16>, vector<2x192xf32> -> vector<2x192xf32>
    %542 = arith.addf %539, %541 : vector<2x192xf32>
    %543 = arith.truncf %535 : vector<2x64xf32> to vector<2x64xbf16>
    %cst_226 = arith.constant dense<0.000000e+00> : vector<2x192xf32>
    %544 = tpu.matmul %543, %22, %cst_226 {dimension_numbers = #tpu.dot_dimension_numbers<[1], [0], [0], [1], [0, 0, 1, 1], [], []>} : vector<2x64xbf16>, vector<64x192xbf16>, vector<2x192xf32> -> vector<2x192xf32>
    %545 = vector.broadcast %23 : vector<1x192xf32> to vector<2x192xf32>
    %546 = arith.addf %544, %545 : vector<2x192xf32>
    %547 = vector.extract_strided_slice %542 {offsets = [0, 0], sizes = [2, 64], strides = [1, 1]} : vector<2x192xf32> to vector<2x64xf32>
    %548 = vector.extract_strided_slice %546 {offsets = [0, 0], sizes = [2, 64], strides = [1, 1]} : vector<2x192xf32> to vector<2x64xf32>
    %549 = arith.addf %547, %548 : vector<2x64xf32>
    %550 = arith.negf %549 : vector<2x64xf32>
    %551 = math.exp %550 : vector<2x64xf32>
    %cst_227 = arith.constant 1.000000e+00 : f32
    %552 = vector.broadcast %cst_227 : f32 to vector<2x64xf32>
    %553 = arith.addf %552, %551 : vector<2x64xf32>
    %554 = arith.divf %552, %553 : vector<2x64xf32>
    %555 = vector.extract_strided_slice %542 {offsets = [0, 64], sizes = [2, 64], strides = [1, 1]} : vector<2x192xf32> to vector<2x64xf32>
    %556 = vector.extract_strided_slice %546 {offsets = [0, 64], sizes = [2, 64], strides = [1, 1]} : vector<2x192xf32> to vector<2x64xf32>
    %557 = arith.addf %555, %556 : vector<2x64xf32>
    %558 = arith.negf %557 : vector<2x64xf32>
    %559 = math.exp %558 : vector<2x64xf32>
    %cst_228 = arith.constant 1.000000e+00 : f32
    %560 = vector.broadcast %cst_228 : f32 to vector<2x64xf32>
    %561 = arith.addf %560, %559 : vector<2x64xf32>
    %562 = arith.divf %560, %561 : vector<2x64xf32>
    %563 = vector.extract_strided_slice %542 {offsets = [0, 128], sizes = [2, 64], strides = [1, 1]} : vector<2x192xf32> to vector<2x64xf32>
    %564 = vector.extract_strided_slice %546 {offsets = [0, 128], sizes = [2, 64], strides = [1, 1]} : vector<2x192xf32> to vector<2x64xf32>
    %565 = arith.mulf %554, %564 : vector<2x64xf32>
    %566 = arith.addf %563, %565 : vector<2x64xf32>
    %567 = math.tanh %566 : vector<2x64xf32>
    %cst_229 = arith.constant 1.000000e+00 : f32
    %568 = vector.broadcast %cst_229 : f32 to vector<2x64xf32>
    %569 = arith.subf %568, %562 : vector<2x64xf32>
    %570 = arith.mulf %569, %567 : vector<2x64xf32>
    %571 = arith.mulf %562, %535 : vector<2x64xf32>
    %572 = arith.addf %570, %571 : vector<2x64xf32>
    %c0_230 = arith.constant 0 : index
    %c0_231 = arith.constant 0 : index
    %573 = vector.load %arg14[%c0_230, %c0_231] : memref<2x64xf32, #tpu.memory_space<vmem>>, vector<2x64xf32>
    tpu.vector_store %arg14[%c0_230, %c0_231], %572 {strides = array<i32>} : memref<2x64xf32, #tpu.memory_space<vmem>>, vector<2x64xf32>,
    %574 = arith.truncf %572 : vector<2x64xf32> to vector<2x64xbf16>
    %575 = vector.shape_cast %574 : vector<2x64xbf16> to vector<2x1x64xbf16>
    "tpu.trace_start"() <{level = 10 : i32, message = "bqd,btd->bqt"}> : () -> ()
    %cst_232 = arith.constant dense<0.000000e+00> : vector<2x1x8xf32>
    %576 = tpu.matmul %575, %20, %cst_232 {dimension_numbers = #tpu.dot_dimension_numbers<[2], [2], [1], [1], [0, 0, 0, 1, 1, 1], [0], [0]>} : vector<2x1x64xbf16>, vector<2x8x64xbf16>, vector<2x1x8xf32> -> vector<2x1x8xf32>
    "tpu.trace_stop"() : () -> ()
    %cst_233 = arith.constant dense<0xFF800000> : vector<2x1xf32>
    %577 = vector.multi_reduction <maximumf>, %576, %cst_233 [2] : vector<2x1x8xf32> to vector<2x1xf32>
    %578 = vector.shape_cast %577 : vector<2x1xf32> to vector<2x1x1xf32>
    %579 = vector.broadcast %578 : vector<2x1x1xf32> to vector<2x1x8xf32>
    %580 = arith.subf %576, %579 : vector<2x1x8xf32>
    %581 = math.exp %580 : vector<2x1x8xf32>
    %cst_234 = arith.constant dense<0.000000e+00> : vector<2x1xf32>
    %582 = vector.multi_reduction <add>, %581, %cst_234 [2] : vector<2x1x8xf32> to vector<2x1xf32>
    %583 = vector.shape_cast %582 : vector<2x1xf32> to vector<2x1x1xf32>
    %584 = vector.broadcast %583 : vector<2x1x1xf32> to vector<2x1x8xf32>
    %585 = arith.divf %581, %584 : vector<2x1x8xf32>
    %586 = arith.truncf %585 : vector<2x1x8xf32> to vector<2x1x8xbf16>
    "tpu.trace_start"() <{level = 10 : i32, message = "bqt,btd->bqd"}> : () -> ()
    %cst_235 = arith.constant dense<0.000000e+00> : vector<2x1x64xf32>
    %587 = tpu.matmul %586, %20, %cst_235 {dimension_numbers = #tpu.dot_dimension_numbers<[2], [1], [1], [2], [0, 0, 0, 1, 1, 2], [0], [0]>} : vector<2x1x8xbf16>, vector<2x8x64xbf16>, vector<2x1x64xf32> -> vector<2x1x64xf32>
    "tpu.trace_stop"() : () -> ()
    %588 = vector.shape_cast %587 : vector<2x1x64xf32> to vector<2x64xf32>
    %c0_236 = arith.constant 0 : index
    %c0_237 = arith.constant 0 : index
    %589 = vector.load %arg15[%c0_236, %c0_237] : memref<2x64xf32, #tpu.memory_space<vmem>>, vector<2x64xf32>
    tpu.vector_store %arg15[%c0_236, %c0_237], %588 {strides = array<i32>} : memref<2x64xf32, #tpu.memory_space<vmem>>, vector<2x64xf32>,
    %590 = arith.index_cast %c7_i32 : i32 to index
    %c0_238 = arith.constant 0 : index
    %c0_239 = arith.constant 0 : index
    %591 = vector.load %arg10[%590, %c0_238, %c0_239] : memref<8x2x64xf32, #tpu.memory_space<vmem>>, vector<1x2x64xf32>
    %592 = vector.shape_cast %591 : vector<1x2x64xf32> to vector<2x64xf32>
    %593 = arith.mulf %588, %592 : vector<2x64xf32>
    %594 = arith.truncf %593 : vector<2x64xf32> to vector<2x64xbf16>
    %595 = arith.index_cast %c7_i32 : i32 to index
    %c0_240 = arith.constant 0 : index
    %c0_241 = arith.constant 0 : index
    %596 = vector.load %arg12[%595, %c0_240, %c0_241] : memref<8x2x64xbf16, #tpu.memory_space<vmem>>, vector<1x2x64xbf16>
    %597 = vector.shape_cast %596 : vector<1x2x64xbf16> to vector<2x64xbf16>
    %598 = vector.shape_cast %594 : vector<2x64xbf16> to vector<1x2x64xbf16>
    tpu.vector_store %arg12[%595, %c0_240, %c0_241], %598 {strides = array<i32>} : memref<8x2x64xbf16, #tpu.memory_space<vmem>>, vector<1x2x64xbf16>,
    %599 = arith.index_cast %c7_i32 : i32 to index
    %c0_242 = arith.constant 0 : index
    %c0_243 = arith.constant 0 : index
    %600 = vector.load %arg11[%599, %c0_242, %c0_243] : memref<8x2x64xf32, #tpu.memory_space<vmem>>, vector<1x2x64xf32>
    %601 = vector.shape_cast %600 : vector<1x2x64xf32> to vector<2x64xf32>
    %602 = arith.mulf %572, %601 : vector<2x64xf32>
    %603 = arith.truncf %602 : vector<2x64xf32> to vector<2x64xbf16>
    %604 = arith.index_cast %c7_i32 : i32 to index
    %c0_244 = arith.constant 0 : index
    %c0_245 = arith.constant 0 : index
    %605 = vector.load %arg13[%604, %c0_244, %c0_245] : memref<8x2x64xbf16, #tpu.memory_space<vmem>>, vector<1x2x64xbf16>
    %606 = vector.shape_cast %605 : vector<1x2x64xbf16> to vector<2x64xbf16>
    %607 = vector.shape_cast %603 : vector<2x64xbf16> to vector<1x2x64xbf16>
    tpu.vector_store %arg13[%604, %c0_244, %c0_245], %607 {strides = array<i32>} : memref<8x2x64xbf16, #tpu.memory_space<vmem>>, vector<1x2x64xbf16>,
    %c8_i32 = arith.constant 8 : i32
    return
  }
}

</mosaic_0001>

<llo_original>
// kernel: nmt_forward.5
$region0: #{nmt_forward.5}
  #allocation0 [shape = 'u32[]', space=smem, size = 0x4, offset = 0x4, fixed_abs, tag = 'smem constant byte address 0x4 - core index']
  #allocation1 [shape = 'u32[144,128]{1,0:T(1,128)}', space=vmem, size = 0x12000, scoped, tag = 'internal scratch']
  %s0 = inlined_call_operand.vmem [shape: bf16[8,2,64], index: 0, kind: input, shape index: {}]
  %s1 = inlined_call_operand.vmem [shape: bf16[8,2,64], index: 1, kind: input, shape index: {}]
  %s2 = inlined_call_operand.vmem [shape: bf16[64,128], index: 2, kind: input, shape index: {}]
  %s3 = inlined_call_operand.vmem [shape: bf16[64,128], index: 3, kind: input, shape index: {}]
  %s4 = inlined_call_operand.vmem [shape: f32[1,128], index: 4, kind: input, shape index: {}]
  %s5 = inlined_call_operand.vmem [shape: f32[8,2,128], index: 5, kind: output, shape index: {}]
  %s6 = sld [smem:[#allocation0]]
  $region53: #{nmt_forward.5} parent=0
    _
  %s8 = ssub.s32 1, %s6
  %s9 = scalar_select 0, %s8, %s6
  loop: start=0, step=1, limit=4
  $region2: #{nmt_forward.5} parent=0 // loop_pre_header
    _
  $region3: #{nmt_forward.5} parent=0 // loop_header
    %s11 = sphi 0, %s15
    %p12 = scmp.ge.s32.totalorder %s11, 4
    %s21 = sphi 0, %s23
    %s24 = sphi 0, %s21
    %s25 = sphi 0, %s24
    %s41 = sphi 0, %s25
    %s47 = sphi 0, %s49
    %s50 = sphi 0, %s47
    %s51 = sphi 0, %s50
    %s67 = sphi 0, %s51
    %s71 = sphi 0, %s71
    %s73 = sphi 0, %s71
    %s74 = sphi 0, %s73
    %s88 = sphi 0, %s74
    %s92 = sphi 0, %s92
    %s94 = sphi 0, %s92
    %s95 = sphi 0, %s94
    %s109 = sphi 0, %s95
    %s113 = sphi 0, %s113
    %s115 = sphi 0, %s113
    %s116 = sphi 0, %s115
    %s130 = sphi 0, %s116
    %s136 = sphi 0, %s138
    %s139 = sphi 0, %s136
    %s140 = sphi 0, %s139
    %s156 = sphi 0, %s140
  $region4: #{nmt_forward.5} parent=0 // loop_header_branch
    %14 = sbr.rel (%p12) target = $region8
  $region5: #{nmt_forward.5} parent=0 // loop_body
    %s16 = ssub.s32 %s11, 1
    %s17 = ssub.s32 %s11, 2
    %s18 = sadd.s32 %s11, 1
    %s19 = ssub.s32 %s11, %s18
    %p20 = scmp.eq.s32.totalorder %s19, 0
    %s22 = sadd.s32 %s21, 1
    %s23 = scalar_select %p20, %s21, %s22
    %p26 = pneg %p20
    %p27 = scmp.eq.s32.totalorder %s11, 1
    %p28 = por %p26, %p27
    %p29 = scmp.ne.s32.totalorder %s21, %s24
    %p30 = scmp.eq.s32.totalorder %s11, 0
    %p31 = por %p29, %p30
    %p32 = scmp.ne.s32.totalorder %s21, %s24
    %p33 = scmp.eq.s32.totalorder %s16, 1
    %p34 = por %p32, %p33
    %p35 = scmp.ne.s32.totalorder %s24, %s25
    %p36 = scmp.eq.s32.totalorder %s16, 0
    %p37 = por %p35, %p36
    %p38 = scmp.ne.s32.totalorder %s24, %s25
    %p39 = scmp.eq.s32.totalorder %s17, 1
    %p40 = por %p38, %p39
    %p42 = scmp.ne.s32.totalorder %s25, %s41
    %p43 = scmp.eq.s32.totalorder %s17, 0
    %p44 = por %p42, %p43
    %s45 = ssub.s32 %s11, %s18
    %p46 = scmp.eq.s32.totalorder %s45, 0
    %s48 = sadd.s32 %s47, 1
    %s49 = scalar_select %p46, %s47, %s48
    %p52 = pneg %p46
    %p53 = scmp.eq.s32.totalorder %s11, 1
    %p54 = por %p52, %p53
    %p55 = scmp.ne.s32.totalorder %s47, %s50
    %p56 = scmp.eq.s32.totalorder %s11, 0
    %p57 = por %p55, %p56
    %p58 = scmp.ne.s32.totalorder %s47, %s50
    %p59 = scmp.eq.s32.totalorder %s16, 1
    %p60 = por %p58, %p59
    %p61 = scmp.ne.s32.totalorder %s50, %s51
    %p62 = scmp.eq.s32.totalorder %s16, 0
    %p63 = por %p61, %p62
    %p64 = scmp.ne.s32.totalorder %s50, %s51
    %p65 = scmp.eq.s32.totalorder %s17, 1
    %p66 = por %p64, %p65
    %p68 = scmp.ne.s32.totalorder %s51, %s67
    %p69 = scmp.eq.s32.totalorder %s17, 0
    %p70 = por %p68, %p69
    %s72 = sadd.s32 %s71, 1
    %p75 = scmp.eq.s32.totalorder %s11, 1
    %p76 = scmp.ne.s32.totalorder %s71, %s73
    %p77 = scmp.eq.s32.totalorder %s11, 0
    %p78 = por %p76, %p77
    %p79 = scmp.ne.s32.totalorder %s71, %s73
    %p80 = scmp.eq.s32.totalorder %s16, 1
    %p81 = por %p79, %p80
    %p82 = scmp.ne.s32.totalorder %s73, %s74
    %p83 = scmp.eq.s32.totalorder %s16, 0
    %p84 = por %p82, %p83
    %p85 = scmp.ne.s32.totalorder %s73, %s74
    %p86 = scmp.eq.s32.totalorder %s17, 1
    %p87 = por %p85, %p86
    %p89 = scmp.ne.s32.totalorder %s74, %s88
    %p90 = scmp.eq.s32.totalorder %s17, 0
    %p91 = por %p89, %p90
    %s93 = sadd.s32 %s92, 1
    %p96 = scmp.eq.s32.totalorder %s11, 1
    %p97 = scmp.ne.s32.totalorder %s92, %s94
    %p98 = scmp.eq.s32.totalorder %s11, 0
    %p99 = por %p97, %p98
    %p100 = scmp.ne.s32.totalorder %s92, %s94
    %p101 = scmp.eq.s32.totalorder %s16, 1
    %p102 = por %p100, %p101
    %p103 = scmp.ne.s32.totalorder %s94, %s95
    %p104 = scmp.eq.s32.totalorder %s16, 0
    %p105 = por %p103, %p104
    %p106 = scmp.ne.s32.totalorder %s94, %s95
    %p107 = scmp.eq.s32.totalorder %s17, 1
    %p108 = por %p106, %p107
    %p110 = scmp.ne.s32.totalorder %s95, %s109
    %p111 = scmp.eq.s32.totalorder %s17, 0
    %p112 = por %p110, %p111
    %s114 = sadd.s32 %s113, 1
    %p117 = scmp.eq.s32.totalorder %s11, 1
    %p118 = scmp.ne.s32.totalorder %s113, %s115
    %p119 = scmp.eq.s32.totalorder %s11, 0
    %p120 = por %p118, %p119
    %p121 = scmp.ne.s32.totalorder %s113, %s115
    %p122 = scmp.eq.s32.totalorder %s16, 1
    %p123 = por %p121, %p122
    %p124 = scmp.ne.s32.totalorder %s115, %s116
    %p125 = scmp.eq.s32.totalorder %s16, 0
    %p126 = por %p124, %p125
    %p127 = scmp.ne.s32.totalorder %s115, %s116
    %p128 = scmp.eq.s32.totalorder %s17, 1
    %p129 = por %p127, %p128
    %p131 = scmp.ne.s32.totalorder %s116, %s130
    %p132 = scmp.eq.s32.totalorder %s17, 0
    %p133 = por %p131, %p132
    %s134 = ssub.s32 %s11, %s18
    %p135 = scmp.eq.s32.totalorder %s134, 0
    %s137 = sadd.s32 %s136, 1
    %s138 = scalar_select %p135, %s136, %s137
    %p141 = pneg %p135
    %p142 = scmp.eq.s32.totalorder %s11, 1
    %p143 = por %p141, %p142
    %p144 = scmp.ne.s32.totalorder %s136, %s139
    %p145 = scmp.eq.s32.totalorder %s11, 0
    %p146 = por %p144, %p145
    %p147 = scmp.ne.s32.totalorder %s136, %s139
    %p148 = scmp.eq.s32.totalorder %s16, 1
    %p149 = por %p147, %p148
    %p150 = scmp.ne.s32.totalorder %s139, %s140
    %p151 = scmp.eq.s32.totalorder %s16, 0
    %p152 = por %p150, %p151
    %p153 = scmp.ne.s32.totalorder %s139, %s140
    %p154 = scmp.eq.s32.totalorder %s17, 1
    %p155 = por %p153, %p154
    %p157 = scmp.ne.s32.totalorder %s140, %s156
    %p158 = scmp.eq.s32.totalorder %s17, 0
    %p159 = por %p157, %p158
    %p160 = scmp.le.s32.totalorder 1, %s11
    %p161 = scmp.lt.s32.totalorder %s11, 3
    %p162 = pnand %p160, %p161
    %p163 = pneg %p162
    // Predicated region
    $region9: #{nmt_forward.5} parent=5 // pred_check
      _
    $region10: #{nmt_forward.5} parent=5 // pred_check_branch
      %165 = sbr.rel (%p162) target = $region12
    $region11: #{nmt_forward.5} parent=5 // pred_region
      %s166 = ssub.s32 %s11, 1
      // Predicated region
      $region13: #{nmt_forward.5} parent=11 // pred_check
        %p167 = pneg %p84
      $region14: #{nmt_forward.5} parent=11 // pred_check_branch
        %169 = sbr.rel (%p167) target = $region16
      $region15: #{nmt_forward.5} parent=11 // pred_region
        _
      $region16: #{nmt_forward.5} parent=11 // pred_fallthru
        _
      // Predicated region
      $region17: #{nmt_forward.5} parent=11 // pred_check
        %p170 = pneg %p105
      $region18: #{nmt_forward.5} parent=11 // pred_check_branch
        %172 = sbr.rel (%p170) target = $region20
      $region19: #{nmt_forward.5} parent=11 // pred_region
        _
      $region20: #{nmt_forward.5} parent=11 // pred_fallthru
        _
      // Predicated region
      $region21: #{nmt_forward.5} parent=11 // pred_check
        %p173 = pneg %p126
      $region22: #{nmt_forward.5} parent=11 // pred_check_branch
        %175 = sbr.rel (%p173) target = $region24
      $region23: #{nmt_forward.5} parent=11 // pred_region
        _
      $region24: #{nmt_forward.5} parent=11 // pred_fallthru
        _
    $region12: #{nmt_forward.5} parent=5 // pred_fallthru
      _
    %p176 = scmp.lt.s32.totalorder %s11, 2
    // Predicated region
    $region25: #{nmt_forward.5} parent=5 // pred_check
      %p177 = pneg %p176
    $region26: #{nmt_forward.5} parent=5 // pred_check_branch
      %179 = sbr.rel (%p177) target = $region28
    $region27: #{nmt_forward.5} parent=5 // pred_region
      // Predicated region
      $region29: #{nmt_forward.5} parent=27 // pred_check
        %p180 = pneg %p31
      $region30: #{nmt_forward.5} parent=27 // pred_check_branch
        %182 = sbr.rel (%p180) target = $region32
      $region31: #{nmt_forward.5} parent=27 // pred_region
        %s183 = smul.u32 4, %s11
        %p184 = scmp.lt.s32.totalorder %s183, 7
        %s185 = scalar_select %p184, %s183, 7
        %s186 = scalar_lea.vmem %s0, %s185
        %s187 = smul.u32 4, %s11
      $region32: #{nmt_forward.5} parent=27 // pred_fallthru
        _
      // Predicated region
      $region33: #{nmt_forward.5} parent=27 // pred_check
        %p188 = pneg %p57
      $region34: #{nmt_forward.5} parent=27 // pred_check_branch
        %190 = sbr.rel (%p188) target = $region36
      $region35: #{nmt_forward.5} parent=27 // pred_region
        %s191 = smul.u32 4, %s11
        %p192 = scmp.lt.s32.totalorder %s191, 7
        %s193 = scalar_select %p192, %s191, 7
        %s194 = scalar_lea.vmem %s1, %s193
        %s195 = smul.u32 4, %s11
      $region36: #{nmt_forward.5} parent=27 // pred_fallthru
        _
    $region28: #{nmt_forward.5} parent=5 // pred_fallthru
      _
    %p196 = scmp.le.s32.totalorder 1, %s11
    %p197 = scmp.lt.s32.totalorder %s11, 3
    %p198 = pnand %p196, %p197
    %p199 = pneg %p198
    // Predicated region
    $region37: #{nmt_forward.5} parent=5 // pred_check
      _
    $region38: #{nmt_forward.5} parent=5 // pred_check_branch
      %201 = sbr.rel (%p198) target = $region40
    $region39: #{nmt_forward.5} parent=5 // pred_region
      %s202 = ssub.s32 %s11, 1
      %s203 = smul.u32 4, %s16
      %p204 = scmp.lt.s32.totalorder %s203, 7
      %s205 = scalar_select %p204, %s203, 7
      %s206 = scalar_lea.vmem %s0, %s205
      %p207 = pneg %p37
      %p208 = pneg %p34
      %s209 = smul.u32 4, %s16
      %p210 = scmp.lt.s32.totalorder %s209, 7
      %s211 = scalar_select %p210, %s209, 7
      %s212 = scalar_lea.vmem %s1, %s211
      %p213 = pneg %p63
      %p214 = pneg %p60
      %p215 = pneg %p84
      %p216 = pneg %p81
      %p217 = pneg %p105
      %p218 = pneg %p102
      %p219 = pneg %p126
      %p220 = pneg %p123
      %p221 = pneg %p152
      %p222 = pneg %p149
      %s223 = smul.u32 4, %s16
      %p224 = scmp.lt.s32.totalorder %s223, 7
      %s225 = scalar_select %p224, %s223, 7
      %s226 = smul.addr %s225, 2
      %s227 = scalar_lea.vmem %s5, %s226
      %s228 = smul.u32 4, %s16
      %p229 = scmp.lt.s32.totalorder %s228, 7
      %s230 = scalar_select %p229, %s228, 7
      %s231 = scalar_lea.vmem %s0, %s230
      %s232 = smul.u32 4, %s16
      %s233 = smul.u32 4, %s16
      %p234 = scmp.lt.s32.totalorder %s233, 7
      %s235 = scalar_select %p234, %s233, 7
      %s236 = scalar_lea.vmem %s1, %s235
      %s237 = smul.u32 4, %s16
      %s238 = smul.u32 4, %s16
      %p239 = scmp.lt.s32.totalorder %s238, 7
      %s240 = scalar_select %p239, %s238, 7
      %s241 = smul.addr %s240, 2
      %s242 = scalar_lea.vmem %s5, %s241
      %s243 = smul.u32 4, %s16
      %v245 = vld [vmem:[%s231] sm:$0x1]
      %v246 = vld [vmem:[%s231 + $0x1] sm:$0x1]
      %v247 = vld [vmem:[%s231 + $0x2] sm:$0x1]
      %v248 = vld [vmem:[%s231 + $0x3] sm:$0x1]
      %v249 = vld [vmem:[%s236] sm:$0x1]
      %v250 = vld [vmem:[%s236 + $0x1] sm:$0x1]
      %v251 = vld [vmem:[%s236 + $0x2] sm:$0x1]
      %v252 = vld [vmem:[%s236 + $0x3] sm:$0x1]
      %v253 = vld [vmem:[%s2] sm:$0xf]
      %v254 = vld [vmem:[%s2 + $0x4] sm:$0xf]
      %v255 = vld [vmem:[%s2 + $0x8] sm:$0xf]
      %v256 = vld [vmem:[%s2 + $0xc] sm:$0xf]
      %v257 = vld [vmem:[%s2 + $0x10] sm:$0xf]
      %v258 = vld [vmem:[%s2 + $0x14] sm:$0xf]
      %v259 = vld [vmem:[%s2 + $0x18] sm:$0xf]
      %v260 = vld [vmem:[%s2 + $0x1c] sm:$0xf]
      %v261 = vld [vmem:[%s3] sm:$0xf]
      %v262 = vld [vmem:[%s3 + $0x4] sm:$0xf]
      %v263 = vld [vmem:[%s3 + $0x8] sm:$0xf]
      %v264 = vld [vmem:[%s3 + $0xc] sm:$0xf]
      %v265 = vld [vmem:[%s3 + $0x10] sm:$0xf]
      %v266 = vld [vmem:[%s3 + $0x14] sm:$0xf]
      %v267 = vld [vmem:[%s3 + $0x18] sm:$0xf]
      %v268 = vld [vmem:[%s3 + $0x1c] sm:$0xf]
      %v273 = vcombine.low %v249, %v250
      %v274 = vcombine.low %v251, %v252
      %v276 = vunpack.c.l.s4 1966171168
      %v277 = vunpack.c.0.s8 %v276
      %v278 = vlaneseq
      %v279 = vshrl.u32 %v278, 7
      %v280 = vsub.s32 %v277, %v279
      %v281 = vrot.slane %v273, %v280
      %v283 = vunpack.c.l.s4 1966171168
      %v284 = vunpack.c.0.s8 %v283
      %v285 = vlaneseq
      %v286 = vshrl.u32 %v285, 7
      %v287 = vsub.s32 %v284, %v286
      %v288 = vrot.slane %v274, %v287
      %v289 = vcombine.low %v281, %v288
      %v291 = vunpack.c.l.s4 1966171168
      %v292 = vunpack.c.0.s8 %v291
      %v293 = vlaneseq
      %v294 = vshrl.u32 %v293, 7
      %v295 = vsub.s32 %v292, %v294
      %v296 = vrot.slane %v289, %v295
      %v305 = vunpack.c.l.b16 %v261
      %v306 = vunpack.c.l.b16 %v262
      %v307 = vunpack.c.l.b16 %v263
      %v308 = vunpack.c.l.b16 %v264
      %v309 = vunpack.c.l.b16 %v265
      %v310 = vunpack.c.l.b16 %v266
      %v311 = vunpack.c.l.b16 %v267
      %v312 = vunpack.c.l.b16 %v268
      %v313 = vpack.c.b16 %v306, %v305
      %v314 = vpack.c.b16 %v308, %v307
      %v315 = vpack.c.b16 %v310, %v309
      %v316 = vpack.c.b16 %v312, %v311
      %vm321 = vcmask 523264
      %v323 = vsel %vm321, %v296, 0
      %325 = vmatprep.subr.bf16.mxu0 0
      %326 = vmatpush1.bf16.msra.mxu0 %v313
      %327 = vmatprep.subr.bf16.mxu0 0
      %328 = vmatpush1.bf16.msra.mxu0 %v314
      %329 = vmatprep.subr.bf16.mxu0 0
      %330 = vmatpush1.bf16.msra.mxu0 %v315
      %331 = vmatprep.subr.bf16.mxu0 0
      %332 = vmatpush1.bf16.msra.mxu0 %v316
      %333 = vmatprep.subr.bf16.mxu0 0
      %334 = vmatpush1.bf16.msra.mxu0 0
      %335 = vmatprep.subr.bf16.mxu0 0
      %336 = vmatpush1.bf16.msra.mxu0 0
      %337 = vmatprep.subr.bf16.mxu0 0
      %338 = vmatpush1.bf16.msra.mxu0 0
      %339 = vmatprep.subr.bf16.mxu0 0
      %340 = vmatpush1.bf16.msra.mxu0 0
      %341 = vmatprep.subr.bf16.mxu0 0
      %342 = vmatpush1.bf16.msra.mxu0 0
      %343 = vmatprep.subr.bf16.mxu0 0
      %344 = vmatpush1.bf16.msra.mxu0 0
      %345 = vmatprep.subr.bf16.mxu0 0
      %346 = vmatpush1.bf16.msra.mxu0 0
      %347 = vmatprep.subr.bf16.mxu0 0
      %348 = vmatpush1.bf16.msra.mxu0 0
      %349 = vmatprep.subr.bf16.mxu0 0
      %350 = vmatpush1.bf16.msra.mxu0 0
      %351 = vmatprep.subr.bf16.mxu0 0
      %352 = vmatpush1.bf16.msra.mxu0 0
      %353 = vmatprep.subr.bf16.mxu0 0
      %354 = vmatpush1.bf16.msra.mxu0 0
      %355 = vmatprep.subr.bf16.mxu0 0
      %356 = vmatpush1.bf16.msra.mxu0 0
      %357 = vmatprep.mubr.bf16.mxu0 0
      %358 = vmatmul.mubr.bf16.gmra.mrb[0].mxu0 %v323
      %v359 = vpop.f32.mrb[0].mxu0
      %v360 = vadd.f32 0.0, %v359
      %v361 = vpop.f32.mrb[0].mxu0
      %v362 = vpop.f32.mrb[0].mxu0
      %v363 = vpop.f32.mrb[0].mxu0
      %364 = vdwg.mxu0
      %v369 = vcombine.low %v245, %v246
      %v370 = vcombine.low %v247, %v248
      %v372 = vunpack.c.l.s4 1966171168
      %v373 = vunpack.c.0.s8 %v372
      %v374 = vlaneseq
      %v375 = vshrl.u32 %v374, 7
      %v376 = vsub.s32 %v373, %v375
      %v377 = vrot.slane %v369, %v376
      %v379 = vunpack.c.l.s4 1966171168
      %v380 = vunpack.c.0.s8 %v379
      %v381 = vlaneseq
      %v382 = vshrl.u32 %v381, 7
      %v383 = vsub.s32 %v380, %v382
      %v384 = vrot.slane %v370, %v383
      %v385 = vcombine.low %v377, %v384
      %v387 = vunpack.c.l.s4 1966171168
      %v388 = vunpack.c.0.s8 %v387
      %v389 = vlaneseq
      %v390 = vshrl.u32 %v389, 7
      %v391 = vsub.s32 %v388, %v390
      %v392 = vrot.slane %v385, %v391
      %v401 = vunpack.c.l.b16 %v253
      %v402 = vunpack.c.l.b16 %v254
      %v403 = vunpack.c.l.b16 %v255
      %v404 = vunpack.c.l.b16 %v256
      %v405 = vunpack.c.l.b16 %v257
      %v406 = vunpack.c.l.b16 %v258
      %v407 = vunpack.c.l.b16 %v259
      %v408 = vunpack.c.l.b16 %v260
      %v409 = vpack.c.b16 %v402, %v401
      %v410 = vpack.c.b16 %v404, %v403
      %v411 = vpack.c.b16 %v406, %v405
      %v412 = vpack.c.b16 %v408, %v407
      %v418 = vsel %vm321, %v392, 0
      %420 = vmatprep.subr.bf16.mxu0 0
      %421 = vmatpush1.bf16.msra.mxu0 %v409
      %422 = vmatprep.subr.bf16.mxu0 0
      %423 = vmatpush1.bf16.msra.mxu0 %v410
      %424 = vmatprep.subr.bf16.mxu0 0
      %425 = vmatpush1.bf16.msra.mxu0 %v411
      %426 = vmatprep.subr.bf16.mxu0 0
      %427 = vmatpush1.bf16.msra.mxu0 %v412
      %428 = vmatprep.subr.bf16.mxu0 0
      %429 = vmatpush1.bf16.msra.mxu0 0
      %430 = vmatprep.subr.bf16.mxu0 0
      %431 = vmatpush1.bf16.msra.mxu0 0
      %432 = vmatprep.subr.bf16.mxu0 0
      %433 = vmatpush1.bf16.msra.mxu0 0
      %434 = vmatprep.subr.bf16.mxu0 0
      %435 = vmatpush1.bf16.msra.mxu0 0
      %436 = vmatprep.subr.bf16.mxu0 0
      %437 = vmatpush1.bf16.msra.mxu0 0
      %438 = vmatprep.subr.bf16.mxu0 0
      %439 = vmatpush1.bf16.msra.mxu0 0
      %440 = vmatprep.subr.bf16.mxu0 0
      %441 = vmatpush1.bf16.msra.mxu0 0
      %442 = vmatprep.subr.bf16.mxu0 0
      %443 = vmatpush1.bf16.msra.mxu0 0
      %444 = vmatprep.subr.bf16.mxu0 0
      %445 = vmatpush1.bf16.msra.mxu0 0
      %446 = vmatprep.subr.bf16.mxu0 0
      %447 = vmatpush1.bf16.msra.mxu0 0
      %448 = vmatprep.subr.bf16.mxu0 0
      %449 = vmatpush1.bf16.msra.mxu0 0
      %450 = vmatprep.subr.bf16.mxu0 0
      %451 = vmatpush1.bf16.msra.mxu0 0
      %452 = vmatprep.mubr.bf16.mxu0 0
      %453 = vmatmul.mubr.bf16.gmra.mrb[0].mxu0 %v418
      %v454 = vpop.f32.mrb[0].mxu0
      %v455 = vadd.f32 %v360, %v454
      %v456 = vpop.f32.mrb[0].mxu0
      %v457 = vpop.f32.mrb[0].mxu0
      %v458 = vpop.f32.mrb[0].mxu0
      %459 = vdwg.mxu0
      %v460 = vld [vmem:[%s4] sm:$0x1]
      %v462 = vlaneseq
      %v463 = vshrl.u32 %v462, 7
      %v464 = vsub.s32 0, %v463
      %v465 = vrot.slane %v460, %v464
      %v467 = vadd.f32 %v455, %v465
      %v469 = vcombine.high %v467, %v467
      %v471 = vunpack.c.l.s4 1983009808
      %v472 = vunpack.c.0.s8 %v471
      %v473 = vlaneseq
      %v474 = vshrl.u32 %v473, 7
      %v475 = vsub.s32 %v472, %v474
      %v476 = vrot.slane %v467, %v475
      %v478 = vunpack.c.l.s4 1983009808
      %v479 = vunpack.c.0.s8 %v478
      %v480 = vlaneseq
      %v481 = vshrl.u32 %v480, 7
      %v482 = vsub.s32 %v479, %v481
      %v483 = vrot.slane %v469, %v482
      %v484 = vcombine.high %v476, %v476
      %v485 = vcombine.high %v483, %v483
      %490 = vst [vmem:[%s242] sm:$0x3] %v476
      %491 = vst [vmem:[%s242 + $0x2] sm:$0x3] %v484
      %492 = vst [vmem:[%s242 + $0x4] sm:$0x3] %v483
      %493 = vst [vmem:[%s242 + $0x6] sm:$0x3] %v485
      %s494 = smul.u32 4, %s16
      %p495 = scmp.lt.s32.totalorder %s494, 7
      %s496 = scalar_select %p495, %s494, 7
      %s497 = smul.addr %s496, 2
      %s498 = scalar_lea.vmem %s5, %s497
      // Predicated region
      $region41: #{nmt_forward.5} parent=39 // pred_check
        %p499 = pneg %p149
      $region42: #{nmt_forward.5} parent=39 // pred_check_branch
        %501 = sbr.rel (%p499) target = $region44
      $region43: #{nmt_forward.5} parent=39 // pred_region
        %s502 = smul.u32 4, %s16
      $region44: #{nmt_forward.5} parent=39 // pred_fallthru
        _
    $region40: #{nmt_forward.5} parent=5 // pred_fallthru
      _
    %p503 = scmp.le.s32.totalorder 2, %s11
    // Predicated region
    $region45: #{nmt_forward.5} parent=5 // pred_check
      %p504 = pneg %p503
    $region46: #{nmt_forward.5} parent=5 // pred_check_branch
      %506 = sbr.rel (%p504) target = $region48
    $region47: #{nmt_forward.5} parent=5 // pred_region
      %s507 = ssub.s32 %s11, 2
      // Predicated region
      $region49: #{nmt_forward.5} parent=47 // pred_check
        %p508 = pneg %p155
      $region50: #{nmt_forward.5} parent=47 // pred_check_branch
        %510 = sbr.rel (%p508) target = $region52
      $region51: #{nmt_forward.5} parent=47 // pred_region
        %s511 = smul.u32 4, %s17
        %p512 = scmp.lt.s32.totalorder %s511, 7
        %s513 = scalar_select %p512, %s511, 7
        %s514 = smul.addr %s513, 2
        %s515 = scalar_lea.vmem %s5, %s514
      $region52: #{nmt_forward.5} parent=47 // pred_fallthru
        _
    $region48: #{nmt_forward.5} parent=5 // pred_fallthru
      _
  $region6: #{nmt_forward.5} parent=0 // loop_footer
    %s15 = sadd.s32 1, %s11
  $region7: #{nmt_forward.5} parent=0 // loop_footer_branch
    %10 = sbr.rel target = $region3
  $region8: #{nmt_forward.5} parent=0 // loop_exit
    _

// kernel: nmt_forward.3
$region0: #{nmt_forward.3}
  #allocation0 [shape = 'u32[]', space=smem, size = 0x4, offset = 0x4, fixed_abs, tag = 'smem constant byte address 0x4 - core index']
  #allocation1 [shape = 'u32[144,128]{1,0:T(1,128)}', space=vmem, size = 0x12000, scoped, tag = 'internal scratch']
  #allocation2 [shape = 'f32[2,32]{1,0:T(2,128)}', space=vmem, size = 0x400, scoped, tag = 'scratch operand']
  #allocation3 [shape = 'f32[2,32]{1,0:T(2,128)}', space=vmem, size = 0x400, scoped, tag = 'scratch operand']
  #allocation4 [shape = 'f32[8,2,192]{2,1,0:T(2,128)}', space=vmem, size = 0x4000, scoped, tag = 'scratch operand']
  %s0 = inlined_call_operand.vmem [shape: bf16[8,2,16], index: 0, kind: input, shape index: {}]
  %s1 = inlined_call_operand.vmem [shape: s32[2,1], index: 1, kind: input, shape index: {}]
  %s2 = inlined_call_operand.vmem [shape: bf16[16,192], index: 2, kind: input, shape index: {}]
  %s3 = inlined_call_operand.vmem [shape: f32[1,192], index: 3, kind: input, shape index: {}]
  %s4 = inlined_call_operand.vmem [shape: bf16[32,96], index: 4, kind: input, shape index: {}]
  %s5 = inlined_call_operand.vmem [shape: f32[1,96], index: 5, kind: input, shape index: {}]
  %s6 = inlined_call_operand.vmem [shape: bf16[32,96], index: 6, kind: input, shape index: {}]
  %s7 = inlined_call_operand.vmem [shape: f32[1,96], index: 7, kind: input, shape index: {}]
  %s8 = inlined_call_operand.vmem [shape: bf16[8,2,64], index: 8, kind: output, shape index: {0}]
  %s9 = inlined_call_operand.vmem [shape: f32[2,64], index: 9, kind: output, shape index: {1}]
  %10 = xla_tuple %s8, %s9
  %s11 = sld [smem:[#allocation0]]
  $region50: #{nmt_forward.3} parent=0
    _
  %s13 = ssub.s32 1, %s11
  %s14 = scalar_select 0, %s13, %s11
  // Predicated region
  $region2: #{nmt_forward.3} parent=0 // pred_check
    _
  $region3: #{nmt_forward.3} parent=0 // pred_check_branch
    %16 = sbr.rel (0) target = $region5
  $region4: #{nmt_forward.3} parent=0 // pred_region
    _
  $region5: #{nmt_forward.3} parent=0 // pred_fallthru
    _
  // Predicated region
  $region6: #{nmt_forward.3} parent=0 // pred_check
    _
  $region7: #{nmt_forward.3} parent=0 // pred_check_branch
    %18 = sbr.rel (0) target = $region9
  $region8: #{nmt_forward.3} parent=0 // pred_region
    _
  $region9: #{nmt_forward.3} parent=0 // pred_fallthru
    _
  // Predicated region
  $region10: #{nmt_forward.3} parent=0 // pred_check
    _
  $region11: #{nmt_forward.3} parent=0 // pred_check_branch
    %20 = sbr.rel (0) target = $region13
  $region12: #{nmt_forward.3} parent=0 // pred_region
    _
  $region13: #{nmt_forward.3} parent=0 // pred_fallthru
    _
  // Predicated region
  $region14: #{nmt_forward.3} parent=0 // pred_check
    _
  $region15: #{nmt_forward.3} parent=0 // pred_check_branch
    %22 = sbr.rel (0) target = $region17
  $region16: #{nmt_forward.3} parent=0 // pred_region
    _
  $region17: #{nmt_forward.3} parent=0 // pred_fallthru
    _
  // Predicated region
  $region18: #{nmt_forward.3} parent=0 // pred_check
    _
  $region19: #{nmt_forward.3} parent=0 // pred_check_branch
    %24 = sbr.rel (0) target = $region21
  $region20: #{nmt_forward.3} parent=0 // pred_region
    _
  $region21: #{nmt_forward.3} parent=0 // pred_fallthru
    _
  // Predicated region
  $region22: #{nmt_forward.3} parent=0 // pred_check
    _
  $region23: #{nmt_forward.3} parent=0 // pred_check_branch
    %26 = sbr.rel (0) target = $region25
  $region24: #{nmt_forward.3} parent=0 // pred_region
    _
  $region25: #{nmt_forward.3} parent=0 // pred_fallthru
    _
  // Predicated region
  $region26: #{nmt_forward.3} parent=0 // pred_check
    _
  $region27: #{nmt_forward.3} parent=0 // pred_check_branch
    %28 = sbr.rel (0) target = $region29
  $region28: #{nmt_forward.3} parent=0 // pred_region
    _
  $region29: #{nmt_forward.3} parent=0 // pred_fallthru
    _
  // Predicated region
  $region30: #{nmt_forward.3} parent=0 // pred_check
    _
  $region31: #{nmt_forward.3} parent=0 // pred_check_branch
    %30 = sbr.rel (0) target = $region33
  $region32: #{nmt_forward.3} parent=0 // pred_region
    _
  $region33: #{nmt_forward.3} parent=0 // pred_fallthru
    _
  %v32 = vld [vmem:[%s0] sm:$0x1]
  %v33 = vld [vmem:[%s0 + $0x1] sm:$0x1]
  %v34 = vld [vmem:[%s0 + $0x2] sm:$0x1]
  %v35 = vld [vmem:[%s0 + $0x3] sm:$0x1]
  %v36 = vld [vmem:[%s0 + $0x4] sm:$0x1]
  %v37 = vld [vmem:[%s0 + $0x5] sm:$0x1]
  %v38 = vld [vmem:[%s0 + $0x6] sm:$0x1]
  %v39 = vld [vmem:[%s0 + $0x7] sm:$0x1]
  %v40 = vld [vmem:[%s2] sm:$0xff]
  %v41 = vld [vmem:[%s2 + $0x8] sm:$0xff]
  %v42 = vld [vmem:[%s3] sm:$0x3]
  %v44 = vlaneseq
  %v45 = vshrl.u32 %v44, 7
  %v46 = vsub.s32 0, %v45
  %v47 = vrot.slane %v42, %v46
  %v48 = vlaneseq
  %v49 = vshrl.u32 %v48, 7
  %v50 = vsub.s32 1, %v49
  %v51 = vrot.slane %v42, %v50
  %v62 = vcombine.low %v32, %v33
  %v63 = vcombine.low %v34, %v35
  %v64 = vcombine.low %v36, %v37
  %v65 = vcombine.low %v38, %v39
  %v67 = vunpack.c.l.s4 1966171168
  %v68 = vunpack.c.0.s8 %v67
  %v69 = vlaneseq
  %v70 = vshrl.u32 %v69, 7
  %v71 = vsub.s32 %v68, %v70
  %v72 = vrot.slane %v62, %v71
  %v74 = vunpack.c.l.s4 1966171168
  %v75 = vunpack.c.0.s8 %v74
  %v76 = vlaneseq
  %v77 = vshrl.u32 %v76, 7
  %v78 = vsub.s32 %v75, %v77
  %v79 = vrot.slane %v63, %v78
  %v81 = vunpack.c.l.s4 1966171168
  %v82 = vunpack.c.0.s8 %v81
  %v83 = vlaneseq
  %v84 = vshrl.u32 %v83, 7
  %v85 = vsub.s32 %v82, %v84
  %v86 = vrot.slane %v64, %v85
  %v88 = vunpack.c.l.s4 1966171168
  %v89 = vunpack.c.0.s8 %v88
  %v90 = vlaneseq
  %v91 = vshrl.u32 %v90, 7
  %v92 = vsub.s32 %v89, %v91
  %v93 = vrot.slane %v65, %v92
  %v94 = vcombine.low %v72, %v79
  %v95 = vcombine.low %v86, %v93
  %v97 = vunpack.c.l.s4 1966171168
  %v98 = vunpack.c.0.s8 %v97
  %v99 = vlaneseq
  %v100 = vshrl.u32 %v99, 7
  %v101 = vsub.s32 %v98, %v100
  %v102 = vrot.slane %v94, %v101
  %v104 = vunpack.c.l.s4 1966171168
  %v105 = vunpack.c.0.s8 %v104
  %v106 = vlaneseq
  %v107 = vshrl.u32 %v106, 7
  %v108 = vsub.s32 %v105, %v107
  %v109 = vrot.slane %v95, %v108
  %v110 = vcombine.low %v102, %v109
  %v113 = vunpack.c.l.b16 %v40
  %v114 = vunpack.c.h.b16 %v40
  %v115 = vunpack.c.l.b16 %v41
  %v116 = vunpack.c.h.b16 %v41
  %v117 = vpack.c.b16 %v115, %v113
  %v118 = vpack.c.b16 %v116, %v114
  %vm121 = vcmask 130048
  %v123 = vsel %vm121, %v110, 0
  %125 = vmatprep.subr.bf16.mxu0 %v118
  %126 = vmatpush1.bf16.msra.mxu0 %v117
  %127 = vmatprep.subr.bf16.mxu0 0
  %128 = vmatpush1.bf16.msra.mxu0 0
  %129 = vmatprep.subr.bf16.mxu0 0
  %130 = vmatpush1.bf16.msra.mxu0 0
  %131 = vmatprep.subr.bf16.mxu0 0
  %132 = vmatpush1.bf16.msra.mxu0 0
  %133 = vmatprep.subr.bf16.mxu0 0
  %134 = vmatpush1.bf16.msra.mxu0 0
  %135 = vmatprep.subr.bf16.mxu0 0
  %136 = vmatpush1.bf16.msra.mxu0 0
  %137 = vmatprep.subr.bf16.mxu0 0
  %138 = vmatpush1.bf16.msra.mxu0 0
  %139 = vmatprep.subr.bf16.mxu0 0
  %140 = vmatpush1.bf16.msra.mxu0 0
  %141 = vmatprep.subr.bf16.mxu0 0
  %142 = vmatpush1.bf16.msra.mxu0 0
  %143 = vmatprep.subr.bf16.mxu0 0
  %144 = vmatpush1.bf16.msra.mxu0 0
  %145 = vmatprep.subr.bf16.mxu0 0
  %146 = vmatpush1.bf16.msra.mxu0 0
  %147 = vmatprep.subr.bf16.mxu0 0
  %148 = vmatpush1.bf16.msra.mxu0 0
  %149 = vmatprep.subr.bf16.mxu0 0
  %150 = vmatpush1.bf16.msra.mxu0 0
  %151 = vmatprep.subr.bf16.mxu0 0
  %152 = vmatpush1.bf16.msra.mxu0 0
  %153 = vmatprep.subr.bf16.mxu0 0
  %154 = vmatpush1.bf16.msra.mxu0 0
  %155 = vmatprep.subr.bf16.mxu0 0
  %156 = vmatpush1.bf16.msra.mxu0 0
  %157 = vmatprep.mubr.bf16.mxu0 0
  %158 = vmatmul.mubr.bf16.gmra.mrb[0].mxu0 %v123
  %v159 = vpop.f32.mrb[0].mxu0
  %v160 = vadd.f32 %v47, %v159
  %v161 = vpop.f32.mrb[0].mxu0
  %v162 = vadd.f32 %v51, %v161
  %v163 = vpop.f32.mrb[0].mxu0
  %v164 = vadd.f32 %v47, %v163
  %v165 = vpop.f32.mrb[0].mxu0
  %v166 = vadd.f32 %v51, %v165
  %167 = vdwg.mxu0
  %v172 = vcombine.low %v160, %v162
  %v173 = vcombine.high %v160, %v162
  %v175 = vunpack.c.l.s4 1983009808
  %v176 = vunpack.c.0.s8 %v175
  %v177 = vlaneseq
  %v178 = vshrl.u32 %v177, 7
  %v179 = vsub.s32 %v176, %v178
  %v180 = vrot.slane %v172, %v179
  %v182 = vunpack.c.l.s4 1983009808
  %v183 = vunpack.c.0.s8 %v182
  %v184 = vlaneseq
  %v185 = vshrl.u32 %v184, 7
  %v186 = vsub.s32 %v183, %v185
  %v187 = vrot.slane %v173, %v186
  %v188 = vcombine.high %v180, %v180
  %v189 = vcombine.high %v187, %v187
  %v190 = vcombine.low %v164, %v166
  %v191 = vcombine.high %v164, %v166
  %v193 = vunpack.c.l.s4 1983009808
  %v194 = vunpack.c.0.s8 %v193
  %v195 = vlaneseq
  %v196 = vshrl.u32 %v195, 7
  %v197 = vsub.s32 %v194, %v196
  %v198 = vrot.slane %v190, %v197
  %v200 = vunpack.c.l.s4 1983009808
  %v201 = vunpack.c.0.s8 %v200
  %v202 = vlaneseq
  %v203 = vshrl.u32 %v202, 7
  %v204 = vsub.s32 %v201, %v203
  %v205 = vrot.slane %v191, %v204
  %v206 = vcombine.high %v198, %v198
  %v207 = vcombine.high %v205, %v205
  %vm216 = vcmask 1041408
  %vm217 = vcmask 519170
  %vm218 = vmor %vm217, %vm216
  %219 = vst.msk [vmem:[#allocation4] sm:$0xf] %vm218, %v180
  %220 = vst.msk [vmem:[#allocation4 + $0x4] sm:$0xf] %vm218, %v188
  %221 = vst.msk [vmem:[#allocation4 + $0x8] sm:$0xf] %vm218, %v187
  %222 = vst.msk [vmem:[#allocation4 + $0xc] sm:$0xf] %vm218, %v189
  %223 = vst.msk [vmem:[#allocation4 + $0x10] sm:$0xf] %vm218, %v198
  %224 = vst.msk [vmem:[#allocation4 + $0x14] sm:$0xf] %vm218, %v206
  %225 = vst.msk [vmem:[#allocation4 + $0x18] sm:$0xf] %vm218, %v205
  %226 = vst.msk [vmem:[#allocation4 + $0x1c] sm:$0xf] %vm218, %v207
  %vm227 = vcmask 254976
  %228 = vst.msk [vmem:[#allocation2] sm:$0x3] %vm227, 0.0
  %229 = vst.msk [vmem:[#allocation3] sm:$0x3] %vm227, 0.0
  %v230 = vld [vmem:[%s1] sm:$0x3]
  %v231 = vld [vmem:[%s4] sm:$0xf]
  %v232 = vld [vmem:[%s4 + $0x4] sm:$0xf]
  %v233 = vld [vmem:[%s4 + $0x8] sm:$0xf]
  %v234 = vld [vmem:[%s4 + $0xc] sm:$0xf]
  %v235 = vld [vmem:[%s5] sm:$0x1]
  %v236 = vld [vmem:[%s6] sm:$0xf]
  %v237 = vld [vmem:[%s6 + $0x4] sm:$0xf]
  %v238 = vld [vmem:[%s6 + $0x8] sm:$0xf]
  %v239 = vld [vmem:[%s6 + $0xc] sm:$0xf]
  %v240 = vld [vmem:[%s7] sm:$0x1]
  %v241 = vld [vmem:[#allocation4] sm:$0xf]
  %s242 = scalar_lea.vmem [#allocation4], 28
  %v243 = vld [vmem:[%s242] sm:$0xf]
  %v244 = vld [vmem:[#allocation2] sm:$0x3]
  %v245 = vpack.c.bf16 %v244, %v244
  %v247 = vlaneseq
  %v248 = vshrl.u32 %v247, 7
  %v249 = vsub.s32 0, %v248
  %v250 = vrot.slane %v235, %v249
  %v256 = vunpack.c.l.b16 %v231
  %v257 = vunpack.c.l.b16 %v232
  %v258 = vunpack.c.l.b16 %v233
  %v259 = vunpack.c.l.b16 %v234
  %v260 = vpack.c.b16 %v257, %v256
  %v261 = vpack.c.b16 %v259, %v258
  %vm264 = vcmask 261120
  %v266 = vsel %vm264, %v245, 0
  %268 = vmatprep.subr.bf16.mxu0 0
  %269 = vmatpush1.bf16.msra.mxu0 %v260
  %270 = vmatprep.subr.bf16.mxu0 0
  %271 = vmatpush1.bf16.msra.mxu0 %v261
  %272 = vmatprep.subr.bf16.mxu0 0
  %273 = vmatpush1.bf16.msra.mxu0 0
  %274 = vmatprep.subr.bf16.mxu0 0
  %275 = vmatpush1.bf16.msra.mxu0 0
  %276 = vmatprep.subr.bf16.mxu0 0
  %277 = vmatpush1.bf16.msra.mxu0 0
  %278 = vmatprep.subr.bf16.mxu0 0
  %279 = vmatpush1.bf16.msra.mxu0 0
  %280 = vmatprep.subr.bf16.mxu0 0
  %281 = vmatpush1.bf16.msra.mxu0 0
  %282 = vmatprep.subr.bf16.mxu0 0
  %283 = vmatpush1.bf16.msra.mxu0 0
  %284 = vmatprep.subr.bf16.mxu0 0
  %285 = vmatpush1.bf16.msra.mxu0 0
  %286 = vmatprep.subr.bf16.mxu0 0
  %287 = vmatpush1.bf16.msra.mxu0 0
  %288 = vmatprep.subr.bf16.mxu0 0
  %289 = vmatpush1.bf16.msra.mxu0 0
  %290 = vmatprep.subr.bf16.mxu0 0
  %291 = vmatpush1.bf16.msra.mxu0 0
  %292 = vmatprep.subr.bf16.mxu0 0
  %293 = vmatpush1.bf16.msra.mxu0 0
  %294 = vmatprep.subr.bf16.mxu0 0
  %295 = vmatpush1.bf16.msra.mxu0 0
  %296 = vmatprep.subr.bf16.mxu0 0
  %297 = vmatpush1.bf16.msra.mxu0 0
  %298 = vmatprep.subr.bf16.mxu0 0
  %299 = vmatpush1.bf16.msra.mxu0 0
  %300 = vmatprep.mubr.bf16.mxu0 0
  %301 = vmatmul.mubr.bf16.gmra.mrb[0].mxu0 %v266
  %v302 = vpop.f32.mrb[0].mxu0
  %v303 = vadd.f32 %v250, %v302
  %v304 = vpop.f32.mrb[0].mxu0
  %v305 = vpop.f32.mrb[0].mxu0
  %v306 = vpop.f32.mrb[0].mxu0
  %307 = vdwg.mxu0
  %v308 = vadd.f32 %v241, %v303
  %v309 = vxor.u32 %v308, 2147483648
  %v310 = vmul.f32 %v309, 1.442695
  %v311 = vpow.pop %v310
  %v312 = vadd.f32 %v311, 1.0
  %v313 = vrcp.pop %v312
  %v314 = vmul.f32 1.0, %v313
  %v317 = vunpack.c.l.s4 1983009808
  %v318 = vunpack.c.0.s8 %v317
  %v319 = vlaneseq
  %v320 = vshrl.u32 %v319, 7
  %v321 = vsub.s32 %v318, %v320
  %v322 = vrot.slane %v303, %v321
  %323 = vrot.lane.b32.xlu0 %v322, 64
  %v324 = vpop.permute.xlu0 %323
  %v326 = vmul.f32 %v314, %v324
  %328 = vrot.lane.b32.xlu0 %v326, 64
  %v329 = vpop.permute.xlu0 %328
  %v331 = vadd.f32 %v241, %v329
  %v332 = vtanh.pop %v331
  %v333 = vsub.f32 1.0, %v314
  %335 = vrot.lane.b32.xlu0 %v332, 96
  %v336 = vpop.permute.xlu0 %335
  %v338 = vmul.f32 %v333, %v336
  %v341 = vunpack.c.l.s4 1983009808
  %v342 = vunpack.c.0.s8 %v341
  %v343 = vlaneseq
  %v344 = vshrl.u32 %v343, 7
  %v345 = vsub.s32 %v342, %v344
  %v346 = vrot.slane %v244, %v345
  %347 = vrot.lane.b32.xlu0 %v346, 32
  %v348 = vpop.permute.xlu0 %347
  %v350 = vmul.f32 %v314, %v348
  %v351 = vadd.f32 %v338, %v350
  %vm352 = vcmp.gt.s32.totalorder %v230, 0
  %v353 = vsel %vm352, 1, 0
  %354 = vset.pattern.permute.xlu0 0
  %355 = vperm.xlu0 %354, %v353
  %v356 = vpop.permute.xlu0 %355
  %vm357 = vcmp.eq.s32.totalorder %v356, 1
  %v360 = vunpack.c.l.s4 1983009808
  %v361 = vunpack.c.0.s8 %v360
  %v362 = vlaneseq
  %v363 = vshrl.u32 %v362, 7
  %v364 = vsub.s32 %v361, %v363
  %v365 = vrot.slane %v351, %v364
  %366 = vrot.lane.b32.xlu0 %v365, 96
  %v367 = vpop.permute.xlu0 %366
  %v369 = vsel %vm357, %v367, %v244
  %370 = vst.msk [vmem:[#allocation2] sm:$0x3] %vm227, %v369
  %v371 = vsel %vm357, %v367, 0.0
  %v372 = vpack.c.bf16 %v371, %v371
  %vm373 = vcmask 253952
  %374 = vst.msk [vmem:[%s8] sm:$0x1] %vm373, %v372
  %v375 = vld [vmem:[#allocation3] sm:$0x3]
  %v376 = vpack.c.bf16 %v375, %v375
  %v378 = vlaneseq
  %v379 = vshrl.u32 %v378, 7
  %v380 = vsub.s32 0, %v379
  %v381 = vrot.slane %v240, %v380
  %v387 = vunpack.c.l.b16 %v236
  %v388 = vunpack.c.l.b16 %v237
  %v389 = vunpack.c.l.b16 %v238
  %v390 = vunpack.c.l.b16 %v239
  %v391 = vpack.c.b16 %v388, %v387
  %v392 = vpack.c.b16 %v390, %v389
  %v396 = vsel %vm264, %v376, 0
  %398 = vmatprep.subr.bf16.mxu0 0
  %399 = vmatpush1.bf16.msra.mxu0 %v391
  %400 = vmatprep.subr.bf16.mxu0 0
  %401 = vmatpush1.bf16.msra.mxu0 %v392
  %402 = vmatprep.subr.bf16.mxu0 0
  %403 = vmatpush1.bf16.msra.mxu0 0
  %404 = vmatprep.subr.bf16.mxu0 0
  %405 = vmatpush1.bf16.msra.mxu0 0
  %406 = vmatprep.subr.bf16.mxu0 0
  %407 = vmatpush1.bf16.msra.mxu0 0
  %408 = vmatprep.subr.bf16.mxu0 0
  %409 = vmatpush1.bf16.msra.mxu0 0
  %410 = vmatprep.subr.bf16.mxu0 0
  %411 = vmatpush1.bf16.msra.mxu0 0
  %412 = vmatprep.subr.bf16.mxu0 0
  %413 = vmatpush1.bf16.msra.mxu0 0
  %414 = vmatprep.subr.bf16.mxu0 0
  %415 = vmatpush1.bf16.msra.mxu0 0
  %416 = vmatprep.subr.bf16.mxu0 0
  %417 = vmatpush1.bf16.msra.mxu0 0
  %418 = vmatprep.subr.bf16.mxu0 0
  %419 = vmatpush1.bf16.msra.mxu0 0
  %420 = vmatprep.subr.bf16.mxu0 0
  %421 = vmatpush1.bf16.msra.mxu0 0
  %422 = vmatprep.subr.bf16.mxu0 0
  %423 = vmatpush1.bf16.msra.mxu0 0
  %424 = vmatprep.subr.bf16.mxu0 0
  %425 = vmatpush1.bf16.msra.mxu0 0
  %426 = vmatprep.subr.bf16.mxu0 0
  %427 = vmatpush1.bf16.msra.mxu0 0
  %428 = vmatprep.subr.bf16.mxu0 0
  %429 = vmatpush1.bf16.msra.mxu0 0
  %430 = vmatprep.mubr.bf16.mxu0 0
  %431 = vmatmul.mubr.bf16.gmra.mrb[0].mxu0 %v396
  %v432 = vpop.f32.mrb[0].mxu0
  %v433 = vadd.f32 %v381, %v432
  %v434 = vpop.f32.mrb[0].mxu0
  %v435 = vpop.f32.mrb[0].mxu0
  %v436 = vpop.f32.mrb[0].mxu0
  %437 = vdwg.mxu0
  %v440 = vunpack.c.l.s4 1983009808
  %v441 = vunpack.c.0.s8 %v440
  %v442 = vlaneseq
  %v443 = vshrl.u32 %v442, 7
  %v444 = vsub.s32 %v441, %v443
  %v445 = vrot.slane %v433, %v444
  %446 = vrot.lane.b32.xlu0 %v445, 96
  %v447 = vpop.permute.xlu0 %446
  %v449 = vadd.f32 %v243, %v447
  %v450 = vxor.u32 %v449, 2147483648
  %v451 = vmul.f32 %v450, 1.442695
  %v452 = vpow.pop %v451
  %v453 = vadd.f32 %v452, 1.0
  %v454 = vrcp.pop %v453
  %v455 = vmul.f32 1.0, %v454
  %v457 = vrot.slane %v243, 2
  %v459 = vadd.f32 %v457, %v447
  %v460 = vxor.u32 %v459, 2147483648
  %v461 = vmul.f32 %v460, 1.442695
  %v462 = vpow.pop %v461
  %v463 = vadd.f32 %v462, 1.0
  %v464 = vrcp.pop %v463
  %v465 = vmul.f32 1.0, %v464
  %466 = vrot.lane.b32.xlu0 %v445, 32
  %v467 = vpop.permute.xlu0 %466
  %v469 = vmul.f32 %v455, %v467
  %470 = vrot.lane.b32.xlu0 %v243, 96
  %v471 = vpop.permute.xlu0 %470
  %v472 = vrot.slane %v471, 2
  %475 = vrot.lane.b32.xlu0 %v469, 32
  %v476 = vpop.permute.xlu0 %475
  %v478 = vadd.f32 %v472, %v476
  %v479 = vtanh.pop %v478
  %v480 = vsub.f32 1.0, %v465
  %v481 = vmul.f32 %v480, %v479
  %v482 = vmul.f32 %v465, %v375
  %v483 = vadd.f32 %v481, %v482
  %vm484 = vcmp.gt.s32.totalorder %v230, 7
  %v485 = vsel %vm484, 1, 0
  %486 = vset.pattern.permute.xlu0 0
  %487 = vperm.xlu0 %486, %v485
  %v488 = vpop.permute.xlu0 %487
  %vm489 = vcmp.eq.s32.totalorder %v488, 1
  %v490 = vsel %vm489, %v483, %v375
  %491 = vst.msk [vmem:[#allocation3] sm:$0x3] %vm227, %v490
  %v492 = vsel %vm489, %v483, 0.0
  %v493 = vpack.c.bf16 %v492, %v492
  %v496 = vunpack.c.l.s4 1966171168
  %v497 = vunpack.c.0.s8 %v496
  %v498 = vlaneseq
  %v499 = vshrl.u32 %v498, 7
  %v500 = vsub.s32 %v497, %v499
  %v501 = vrot.slane %v493, %v500
  %v503 = vunpack.c.l.s4 1966171168
  %v504 = vunpack.c.0.s8 %v503
  %v505 = vlaneseq
  %v506 = vshrl.u32 %v505, 7
  %v507 = vsub.s32 %v504, %v506
  %v508 = vrot.slane %v501, %v507
  %509 = vrot.lane.b32.xlu0 %v508, 32
  %v510 = vpop.permute.xlu0 %509
  %s512 = scalar_lea.vmem %s8, 7
  %vm513 = vcmask 516352
  %514 = vst.msk [vmem:[%s512] sm:$0x1] %vm513, %v510
  %s515 = scalar_lea.vmem [#allocation4], 4
  %v516 = vld [vmem:[%s515] sm:$0xf]
  %s517 = scalar_lea.vmem [#allocation4], 24
  %v518 = vld [vmem:[%s517] sm:$0xf]
  %v519 = vld [vmem:[#allocation2] sm:$0x3]
  %v520 = vpack.c.bf16 %v519, %v519
  %v522 = vsel %vm264, %v520, 0
  %524 = vmatprep.subr.bf16.mxu0 0
  %525 = vmatpush1.bf16.msra.mxu0 %v260
  %526 = vmatprep.subr.bf16.mxu0 0
  %527 = vmatpush1.bf16.msra.mxu0 %v261
  %528 = vmatprep.subr.bf16.mxu0 0
  %529 = vmatpush1.bf16.msra.mxu0 0
  %530 = vmatprep.subr.bf16.mxu0 0
  %531 = vmatpush1.bf16.msra.mxu0 0
  %532 = vmatprep.subr.bf16.mxu0 0
  %533 = vmatpush1.bf16.msra.mxu0 0
  %534 = vmatprep.subr.bf16.mxu0 0
  %535 = vmatpush1.bf16.msra.mxu0 0
  %536 = vmatprep.subr.bf16.mxu0 0
  %537 = vmatpush1.bf16.msra.mxu0 0
  %538 = vmatprep.subr.bf16.mxu0 0
  %539 = vmatpush1.bf16.msra.mxu0 0
  %540 = vmatprep.subr.bf16.mxu0 0
  %541 = vmatpush1.bf16.msra.mxu0 0
  %542 = vmatprep.subr.bf16.mxu0 0
  %543 = vmatpush1.bf16.msra.mxu0 0
  %544 = vmatprep.subr.bf16.mxu0 0
  %545 = vmatpush1.bf16.msra.mxu0 0
  %546 = vmatprep.subr.bf16.mxu0 0
  %547 = vmatpush1.bf16.msra.mxu0 0
  %548 = vmatprep.subr.bf16.mxu0 0
  %549 = vmatpush1.bf16.msra.mxu0 0
  %550 = vmatprep.subr.bf16.mxu0 0
  %551 = vmatpush1.bf16.msra.mxu0 0
  %552 = vmatprep.subr.bf16.mxu0 0
  %553 = vmatpush1.bf16.msra.mxu0 0
  %554 = vmatprep.subr.bf16.mxu0 0
  %555 = vmatpush1.bf16.msra.mxu0 0
  %556 = vmatprep.mubr.bf16.mxu0 0
  %557 = vmatmul.mubr.bf16.gmra.mrb[0].mxu0 %v522
  %v558 = vpop.f32.mrb[0].mxu0
  %v559 = vadd.f32 %v250, %v558
  %v560 = vpop.f32.mrb[0].mxu0
  %v561 = vpop.f32.mrb[0].mxu0
  %v562 = vpop.f32.mrb[0].mxu0
  %563 = vdwg.mxu0
  %v564 = vadd.f32 %v516, %v559
  %v565 = vxor.u32 %v564, 2147483648
  %v566 = vmul.f32 %v565, 1.442695
  %v567 = vpow.pop %v566
  %v568 = vadd.f32 %v567, 1.0
  %v569 = vrcp.pop %v568
  %v570 = vmul.f32 1.0, %v569
  %v573 = vunpack.c.l.s4 1983009808
  %v574 = vunpack.c.0.s8 %v573
  %v575 = vlaneseq
  %v576 = vshrl.u32 %v575, 7
  %v577 = vsub.s32 %v574, %v576
  %v578 = vrot.slane %v559, %v577
  %579 = vrot.lane.b32.xlu0 %v578, 64
  %v580 = vpop.permute.xlu0 %579
  %v582 = vmul.f32 %v570, %v580
  %584 = vrot.lane.b32.xlu0 %v582, 64
  %v585 = vpop.permute.xlu0 %584
  %v587 = vadd.f32 %v516, %v585
  %v588 = vtanh.pop %v587
  %v589 = vsub.f32 1.0, %v570
  %591 = vrot.lane.b32.xlu0 %v588, 96
  %v592 = vpop.permute.xlu0 %591
  %v594 = vmul.f32 %v589, %v592
  %v597 = vunpack.c.l.s4 1983009808
  %v598 = vunpack.c.0.s8 %v597
  %v599 = vlaneseq
  %v600 = vshrl.u32 %v599, 7
  %v601 = vsub.s32 %v598, %v600
  %v602 = vrot.slane %v519, %v601
  %603 = vrot.lane.b32.xlu0 %v602, 32
  %v604 = vpop.permute.xlu0 %603
  %v606 = vmul.f32 %v570, %v604
  %v607 = vadd.f32 %v594, %v606
  %vm608 = vcmp.gt.s32.totalorder %v230, 1
  %v609 = vsel %vm608, 1, 0
  %610 = vset.pattern.permute.xlu0 0
  %611 = vperm.xlu0 %610, %v609
  %v612 = vpop.permute.xlu0 %611
  %vm613 = vcmp.eq.s32.totalorder %v612, 1
  %v616 = vunpack.c.l.s4 1983009808
  %v617 = vunpack.c.0.s8 %v616
  %v618 = vlaneseq
  %v619 = vshrl.u32 %v618, 7
  %v620 = vsub.s32 %v617, %v619
  %v621 = vrot.slane %v607, %v620
  %622 = vrot.lane.b32.xlu0 %v621, 96
  %v623 = vpop.permute.xlu0 %622
  %v625 = vsel %vm613, %v623, %v519
  %626 = vst.msk [vmem:[#allocation2] sm:$0x3] %vm227, %v625
  %v627 = vsel %vm613, %v623, 0.0
  %v628 = vpack.c.bf16 %v627, %v627
  %s629 = scalar_lea.vmem %s8, 1
  %630 = vst.msk [vmem:[%s629] sm:$0x1] %vm373, %v628
  %v631 = vld [vmem:[#allocation3] sm:$0x3]
  %v632 = vpack.c.bf16 %v631, %v631
  %v634 = vsel %vm264, %v632, 0
  %636 = vmatprep.subr.bf16.mxu0 0
  %637 = vmatpush1.bf16.msra.mxu0 %v391
  %638 = vmatprep.subr.bf16.mxu0 0
  %639 = vmatpush1.bf16.msra.mxu0 %v392
  %640 = vmatprep.subr.bf16.mxu0 0
  %641 = vmatpush1.bf16.msra.mxu0 0
  %642 = vmatprep.subr.bf16.mxu0 0
  %643 = vmatpush1.bf16.msra.mxu0 0
  %644 = vmatprep.subr.bf16.mxu0 0
  %645 = vmatpush1.bf16.msra.mxu0 0
  %646 = vmatprep.subr.bf16.mxu0 0
  %647 = vmatpush1.bf16.msra.mxu0 0
  %648 = vmatprep.subr.bf16.mxu0 0
  %649 = vmatpush1.bf16.msra.mxu0 0
  %650 = vmatprep.subr.bf16.mxu0 0
  %651 = vmatpush1.bf16.msra.mxu0 0
  %652 = vmatprep.subr.bf16.mxu0 0
  %653 = vmatpush1.bf16.msra.mxu0 0
  %654 = vmatprep.subr.bf16.mxu0 0
  %655 = vmatpush1.bf16.msra.mxu0 0
  %656 = vmatprep.subr.bf16.mxu0 0
  %657 = vmatpush1.bf16.msra.mxu0 0
  %658 = vmatprep.subr.bf16.mxu0 0
  %659 = vmatpush1.bf16.msra.mxu0 0
  %660 = vmatprep.subr.bf16.mxu0 0
  %661 = vmatpush1.bf16.msra.mxu0 0
  %662 = vmatprep.subr.bf16.mxu0 0
  %663 = vmatpush1.bf16.msra.mxu0 0
  %664 = vmatprep.subr.bf16.mxu0 0
  %665 = vmatpush1.bf16.msra.mxu0 0
  %666 = vmatprep.subr.bf16.mxu0 0
  %667 = vmatpush1.bf16.msra.mxu0 0
  %668 = vmatprep.mubr.bf16.mxu0 0
  %669 = vmatmul.mubr.bf16.gmra.mrb[0].mxu0 %v634
  %v670 = vpop.f32.mrb[0].mxu0
  %v671 = vadd.f32 %v381, %v670
  %v672 = vpop.f32.mrb[0].mxu0
  %v673 = vpop.f32.mrb[0].mxu0
  %v674 = vpop.f32.mrb[0].mxu0
  %675 = vdwg.mxu0
  %v678 = vunpack.c.l.s4 1983009808
  %v679 = vunpack.c.0.s8 %v678
  %v680 = vlaneseq
  %v681 = vshrl.u32 %v680, 7
  %v682 = vsub.s32 %v679, %v681
  %v683 = vrot.slane %v671, %v682
  %684 = vrot.lane.b32.xlu0 %v683, 96
  %v685 = vpop.permute.xlu0 %684
  %v687 = vadd.f32 %v518, %v685
  %v688 = vxor.u32 %v687, 2147483648
  %v689 = vmul.f32 %v688, 1.442695
  %v690 = vpow.pop %v689
  %v691 = vadd.f32 %v690, 1.0
  %v692 = vrcp.pop %v691
  %v693 = vmul.f32 1.0, %v692
  %v695 = vrot.slane %v518, 2
  %v697 = vadd.f32 %v695, %v685
  %v698 = vxor.u32 %v697, 2147483648
  %v699 = vmul.f32 %v698, 1.442695
  %v700 = vpow.pop %v699
  %v701 = vadd.f32 %v700, 1.0
  %v702 = vrcp.pop %v701
  %v703 = vmul.f32 1.0, %v702
  %704 = vrot.lane.b32.xlu0 %v683, 32
  %v705 = vpop.permute.xlu0 %704
  %v707 = vmul.f32 %v693, %v705
  %708 = vrot.lane.b32.xlu0 %v518, 96
  %v709 = vpop.permute.xlu0 %708
  %v710 = vrot.slane %v709, 2
  %713 = vrot.lane.b32.xlu0 %v707, 32
  %v714 = vpop.permute.xlu0 %713
  %v716 = vadd.f32 %v710, %v714
  %v717 = vtanh.pop %v716
  %v718 = vsub.f32 1.0, %v703
  %v719 = vmul.f32 %v718, %v717
  %v720 = vmul.f32 %v703, %v631
  %v721 = vadd.f32 %v719, %v720
  %vm722 = vcmp.gt.s32.totalorder %v230, 6
  %v723 = vsel %vm722, 1, 0
  %724 = vset.pattern.permute.xlu0 0
  %725 = vperm.xlu0 %724, %v723
  %v726 = vpop.permute.xlu0 %725
  %vm727 = vcmp.eq.s32.totalorder %v726, 1
  %v728 = vsel %vm727, %v721, %v631
  %729 = vst.msk [vmem:[#allocation3] sm:$0x3] %vm227, %v728
  %v730 = vsel %vm727, %v721, 0.0
  %v731 = vpack.c.bf16 %v730, %v730
  %v734 = vunpack.c.l.s4 1966171168
  %v735 = vunpack.c.0.s8 %v734
  %v736 = vlaneseq
  %v737 = vshrl.u32 %v736, 7
  %v738 = vsub.s32 %v735, %v737
  %v739 = vrot.slane %v731, %v738
  %v741 = vunpack.c.l.s4 1966171168
  %v742 = vunpack.c.0.s8 %v741
  %v743 = vlaneseq
  %v744 = vshrl.u32 %v743, 7
  %v745 = vsub.s32 %v742, %v744
  %v746 = vrot.slane %v739, %v745
  %747 = vrot.lane.b32.xlu0 %v746, 32
  %v748 = vpop.permute.xlu0 %747
  %s750 = scalar_lea.vmem %s8, 6
  %751 = vst.msk [vmem:[%s750] sm:$0x1] %vm513, %v748
  %s752 = scalar_lea.vmem [#allocation4], 8
  %v753 = vld [vmem:[%s752] sm:$0xf]
  %s754 = scalar_lea.vmem [#allocation4], 20
  %v755 = vld [vmem:[%s754] sm:$0xf]
  %v756 = vld [vmem:[#allocation2] sm:$0x3]
  %v757 = vpack.c.bf16 %v756, %v756
  %v759 = vsel %vm264, %v757, 0
  %761 = vmatprep.subr.bf16.mxu0 0
  %762 = vmatpush1.bf16.msra.mxu0 %v260
  %763 = vmatprep.subr.bf16.mxu0 0
  %764 = vmatpush1.bf16.msra.mxu0 %v261
  %765 = vmatprep.subr.bf16.mxu0 0
  %766 = vmatpush1.bf16.msra.mxu0 0
  %767 = vmatprep.subr.bf16.mxu0 0
  %768 = vmatpush1.bf16.msra.mxu0 0
  %769 = vmatprep.subr.bf16.mxu0 0
  %770 = vmatpush1.bf16.msra.mxu0 0
  %771 = vmatprep.subr.bf16.mxu0 0
  %772 = vmatpush1.bf16.msra.mxu0 0
  %773 = vmatprep.subr.bf16.mxu0 0
  %774 = vmatpush1.bf16.msra.mxu0 0
  %775 = vmatprep.subr.bf16.mxu0 0
  %776 = vmatpush1.bf16.msra.mxu0 0
  %777 = vmatprep.subr.bf16.mxu0 0
  %778 = vmatpush1.bf16.msra.mxu0 0
  %779 = vmatprep.subr.bf16.mxu0 0
  %780 = vmatpush1.bf16.msra.mxu0 0
  %781 = vmatprep.subr.bf16.mxu0 0
  %782 = vmatpush1.bf16.msra.mxu0 0
  %783 = vmatprep.subr.bf16.mxu0 0
  %784 = vmatpush1.bf16.msra.mxu0 0
  %785 = vmatprep.subr.bf16.mxu0 0
  %786 = vmatpush1.bf16.msra.mxu0 0
  %787 = vmatprep.subr.bf16.mxu0 0
  %788 = vmatpush1.bf16.msra.mxu0 0
  %789 = vmatprep.subr.bf16.mxu0 0
  %790 = vmatpush1.bf16.msra.mxu0 0
  %791 = vmatprep.subr.bf16.mxu0 0
  %792 = vmatpush1.bf16.msra.mxu0 0
  %793 = vmatprep.mubr.bf16.mxu0 0
  %794 = vmatmul.mubr.bf16.gmra.mrb[0].mxu0 %v759
  %v795 = vpop.f32.mrb[0].mxu0
  %v796 = vadd.f32 %v250, %v795
  %v797 = vpop.f32.mrb[0].mxu0
  %v798 = vpop.f32.mrb[0].mxu0
  %v799 = vpop.f32.mrb[0].mxu0
  %800 = vdwg.mxu0
  %v801 = vadd.f32 %v753, %v796
  %v802 = vxor.u32 %v801, 2147483648
  %v803 = vmul.f32 %v802, 1.442695
  %v804 = vpow.pop %v803
  %v805 = vadd.f32 %v804, 1.0
  %v806 = vrcp.pop %v805
  %v807 = vmul.f32 1.0, %v806
  %v810 = vunpack.c.l.s4 1983009808
  %v811 = vunpack.c.0.s8 %v810
  %v812 = vlaneseq
  %v813 = vshrl.u32 %v812, 7
  %v814 = vsub.s32 %v811, %v813
  %v815 = vrot.slane %v796, %v814
  %816 = vrot.lane.b32.xlu0 %v815, 64
  %v817 = vpop.permute.xlu0 %816
  %v819 = vmul.f32 %v807, %v817
  %821 = vrot.lane.b32.xlu0 %v819, 64
  %v822 = vpop.permute.xlu0 %821
  %v824 = vadd.f32 %v753, %v822
  %v825 = vtanh.pop %v824
  %v826 = vsub.f32 1.0, %v807
  %828 = vrot.lane.b32.xlu0 %v825, 96
  %v829 = vpop.permute.xlu0 %828
  %v831 = vmul.f32 %v826, %v829
  %v834 = vunpack.c.l.s4 1983009808
  %v835 = vunpack.c.0.s8 %v834
  %v836 = vlaneseq
  %v837 = vshrl.u32 %v836, 7
  %v838 = vsub.s32 %v835, %v837
  %v839 = vrot.slane %v756, %v838
  %840 = vrot.lane.b32.xlu0 %v839, 32
  %v841 = vpop.permute.xlu0 %840
  %v843 = vmul.f32 %v807, %v841
  %v844 = vadd.f32 %v831, %v843
  %vm845 = vcmp.gt.s32.totalorder %v230, 2
  %v846 = vsel %vm845, 1, 0
  %847 = vset.pattern.permute.xlu0 0
  %848 = vperm.xlu0 %847, %v846
  %v849 = vpop.permute.xlu0 %848
  %vm850 = vcmp.eq.s32.totalorder %v849, 1
  %v853 = vunpack.c.l.s4 1983009808
  %v854 = vunpack.c.0.s8 %v853
  %v855 = vlaneseq
  %v856 = vshrl.u32 %v855, 7
  %v857 = vsub.s32 %v854, %v856
  %v858 = vrot.slane %v844, %v857
  %859 = vrot.lane.b32.xlu0 %v858, 96
  %v860 = vpop.permute.xlu0 %859
  %v862 = vsel %vm850, %v860, %v756
  %863 = vst.msk [vmem:[#allocation2] sm:$0x3] %vm227, %v862
  %v864 = vsel %vm850, %v860, 0.0
  %v865 = vpack.c.bf16 %v864, %v864
  %s866 = scalar_lea.vmem %s8, 2
  %867 = vst.msk [vmem:[%s866] sm:$0x1] %vm373, %v865
  %v868 = vld [vmem:[#allocation3] sm:$0x3]
  %v869 = vpack.c.bf16 %v868, %v868
  %v871 = vsel %vm264, %v869, 0
  %873 = vmatprep.subr.bf16.mxu0 0
  %874 = vmatpush1.bf16.msra.mxu0 %v391
  %875 = vmatprep.subr.bf16.mxu0 0
  %876 = vmatpush1.bf16.msra.mxu0 %v392
  %877 = vmatprep.subr.bf16.mxu0 0
  %878 = vmatpush1.bf16.msra.mxu0 0
  %879 = vmatprep.subr.bf16.mxu0 0
  %880 = vmatpush1.bf16.msra.mxu0 0
  %881 = vmatprep.subr.bf16.mxu0 0
  %882 = vmatpush1.bf16.msra.mxu0 0
  %883 = vmatprep.subr.bf16.mxu0 0
  %884 = vmatpush1.bf16.msra.mxu0 0
  %885 = vmatprep.subr.bf16.mxu0 0
  %886 = vmatpush1.bf16.msra.mxu0 0
  %887 = vmatprep.subr.bf16.mxu0 0
  %888 = vmatpush1.bf16.msra.mxu0 0
  %889 = vmatprep.subr.bf16.mxu0 0
  %890 = vmatpush1.bf16.msra.mxu0 0
  %891 = vmatprep.subr.bf16.mxu0 0
  %892 = vmatpush1.bf16.msra.mxu0 0
  %893 = vmatprep.subr.bf16.mxu0 0
  %894 = vmatpush1.bf16.msra.mxu0 0
  %895 = vmatprep.subr.bf16.mxu0 0
  %896 = vmatpush1.bf16.msra.mxu0 0
  %897 = vmatprep.subr.bf16.mxu0 0
  %898 = vmatpush1.bf16.msra.mxu0 0
  %899 = vmatprep.subr.bf16.mxu0 0
  %900 = vmatpush1.bf16.msra.mxu0 0
  %901 = vmatprep.subr.bf16.mxu0 0
  %902 = vmatpush1.bf16.msra.mxu0 0
  %903 = vmatprep.subr.bf16.mxu0 0
  %904 = vmatpush1.bf16.msra.mxu0 0
  %905 = vmatprep.mubr.bf16.mxu0 0
  %906 = vmatmul.mubr.bf16.gmra.mrb[0].mxu0 %v871
  %v907 = vpop.f32.mrb[0].mxu0
  %v908 = vadd.f32 %v381, %v907
  %v909 = vpop.f32.mrb[0].mxu0
  %v910 = vpop.f32.mrb[0].mxu0
  %v911 = vpop.f32.mrb[0].mxu0
  %912 = vdwg.mxu0
  %v915 = vunpack.c.l.s4 1983009808
  %v916 = vunpack.c.0.s8 %v915
  %v917 = vlaneseq
  %v918 = vshrl.u32 %v917, 7
  %v919 = vsub.s32 %v916, %v918
  %v920 = vrot.slane %v908, %v919
  %921 = vrot.lane.b32.xlu0 %v920, 96
  %v922 = vpop.permute.xlu0 %921
  %v924 = vadd.f32 %v755, %v922
  %v925 = vxor.u32 %v924, 2147483648
  %v926 = vmul.f32 %v925, 1.442695
  %v927 = vpow.pop %v926
  %v928 = vadd.f32 %v927, 1.0
  %v929 = vrcp.pop %v928
  %v930 = vmul.f32 1.0, %v929
  %v932 = vrot.slane %v755, 2
  %v934 = vadd.f32 %v932, %v922
  %v935 = vxor.u32 %v934, 2147483648
  %v936 = vmul.f32 %v935, 1.442695
  %v937 = vpow.pop %v936
  %v938 = vadd.f32 %v937, 1.0
  %v939 = vrcp.pop %v938
  %v940 = vmul.f32 1.0, %v939
  %941 = vrot.lane.b32.xlu0 %v920, 32
  %v942 = vpop.permute.xlu0 %941
  %v944 = vmul.f32 %v930, %v942
  %945 = vrot.lane.b32.xlu0 %v755, 96
  %v946 = vpop.permute.xlu0 %945
  %v947 = vrot.slane %v946, 2
  %950 = vrot.lane.b32.xlu0 %v944, 32
  %v951 = vpop.permute.xlu0 %950
  %v953 = vadd.f32 %v947, %v951
  %v954 = vtanh.pop %v953
  %v955 = vsub.f32 1.0, %v940
  %v956 = vmul.f32 %v955, %v954
  %v957 = vmul.f32 %v940, %v868
  %v958 = vadd.f32 %v956, %v957
  %vm959 = vcmp.gt.s32.totalorder %v230, 5
  %v960 = vsel %vm959, 1, 0
  %961 = vset.pattern.permute.xlu0 0
  %962 = vperm.xlu0 %961, %v960
  %v963 = vpop.permute.xlu0 %962
  %vm964 = vcmp.eq.s32.totalorder %v963, 1
  %v965 = vsel %vm964, %v958, %v868
  %966 = vst.msk [vmem:[#allocation3] sm:$0x3] %vm227, %v965
  %v967 = vsel %vm964, %v958, 0.0
  %v968 = vpack.c.bf16 %v967, %v967
  %v971 = vunpack.c.l.s4 1966171168
  %v972 = vunpack.c.0.s8 %v971
  %v973 = vlaneseq
  %v974 = vshrl.u32 %v973, 7
  %v975 = vsub.s32 %v972, %v974
  %v976 = vrot.slane %v968, %v975
  %v978 = vunpack.c.l.s4 1966171168
  %v979 = vunpack.c.0.s8 %v978
  %v980 = vlaneseq
  %v981 = vshrl.u32 %v980, 7
  %v982 = vsub.s32 %v979, %v981
  %v983 = vrot.slane %v976, %v982
  %984 = vrot.lane.b32.xlu0 %v983, 32
  %v985 = vpop.permute.xlu0 %984
  %s987 = scalar_lea.vmem %s8, 5
  %988 = vst.msk [vmem:[%s987] sm:$0x1] %vm513, %v985
  %s989 = scalar_lea.vmem [#allocation4], 12
  %v990 = vld [vmem:[%s989] sm:$0xf]
  %s991 = scalar_lea.vmem [#allocation4], 16
  %v992 = vld [vmem:[%s991] sm:$0xf]
  %v993 = vld [vmem:[#allocation2] sm:$0x3]
  %v994 = vpack.c.bf16 %v993, %v993
  %v996 = vsel %vm264, %v994, 0
  %998 = vmatprep.subr.bf16.mxu0 0
  %999 = vmatpush1.bf16.msra.mxu0 %v260
  %1000 = vmatprep.subr.bf16.mxu0 0
  %1001 = vmatpush1.bf16.msra.mxu0 %v261
  %1002 = vmatprep.subr.bf16.mxu0 0
  %1003 = vmatpush1.bf16.msra.mxu0 0
  %1004 = vmatprep.subr.bf16.mxu0 0
  %1005 = vmatpush1.bf16.msra.mxu0 0
  %1006 = vmatprep.subr.bf16.mxu0 0
  %1007 = vmatpush1.bf16.msra.mxu0 0
  %1008 = vmatprep.subr.bf16.mxu0 0
  %1009 = vmatpush1.bf16.msra.mxu0 0
  %1010 = vmatprep.subr.bf16.mxu0 0
  %1011 = vmatpush1.bf16.msra.mxu0 0
  %1012 = vmatprep.subr.bf16.mxu0 0
  %1013 = vmatpush1.bf16.msra.mxu0 0
  %1014 = vmatprep.subr.bf16.mxu0 0
  %1015 = vmatpush1.bf16.msra.mxu0 0
  %1016 = vmatprep.subr.bf16.mxu0 0
  %1017 = vmatpush1.bf16.msra.mxu0 0
  %1018 = vmatprep.subr.bf16.mxu0 0
  %1019 = vmatpush1.bf16.msra.mxu0 0
  %1020 = vmatprep.subr.bf16.mxu0 0
  %1021 = vmatpush1.bf16.msra.mxu0 0
  %1022 = vmatprep.subr.bf16.mxu0 0
  %1023 = vmatpush1.bf16.msra.mxu0 0
  %1024 = vmatprep.subr.bf16.mxu0 0
  %1025 = vmatpush1.bf16.msra.mxu0 0
  %1026 = vmatprep.subr.bf16.mxu0 0
  %1027 = vmatpush1.bf16.msra.mxu0 0
  %1028 = vmatprep.subr.bf16.mxu0 0
  %1029 = vmatpush1.bf16.msra.mxu0 0
  %1030 = vmatprep.mubr.bf16.mxu0 0
  %1031 = vmatmul.mubr.bf16.gmra.mrb[0].mxu0 %v996
  %v1032 = vpop.f32.mrb[0].mxu0
  %v1033 = vadd.f32 %v250, %v1032
  %v1034 = vpop.f32.mrb[0].mxu0
  %v1035 = vpop.f32.mrb[0].mxu0
  %v1036 = vpop.f32.mrb[0].mxu0
  %1037 = vdwg.mxu0
  %v1038 = vadd.f32 %v990, %v1033
  %v1039 = vxor.u32 %v1038, 2147483648
  %v1040 = vmul.f32 %v1039, 1.442695
  %v1041 = vpow.pop %v1040
  %v1042 = vadd.f32 %v1041, 1.0
  %v1043 = vrcp.pop %v1042
  %v1044 = vmul.f32 1.0, %v1043
  %v1047 = vunpack.c.l.s4 1983009808
  %v1048 = vunpack.c.0.s8 %v1047
  %v1049 = vlaneseq
  %v1050 = vshrl.u32 %v1049, 7
  %v1051 = vsub.s32 %v1048, %v1050
  %v1052 = vrot.slane %v1033, %v1051
  %1053 = vrot.lane.b32.xlu0 %v1052, 64
  %v1054 = vpop.permute.xlu0 %1053
  %v1056 = vmul.f32 %v1044, %v1054
  %1058 = vrot.lane.b32.xlu0 %v1056, 64
  %v1059 = vpop.permute.xlu0 %1058
  %v1061 = vadd.f32 %v990, %v1059
  %v1062 = vtanh.pop %v1061
  %v1063 = vsub.f32 1.0, %v1044
  %1065 = vrot.lane.b32.xlu0 %v1062, 96
  %v1066 = vpop.permute.xlu0 %1065
  %v1068 = vmul.f32 %v1063, %v1066
  %v1071 = vunpack.c.l.s4 1983009808
  %v1072 = vunpack.c.0.s8 %v1071
  %v1073 = vlaneseq
  %v1074 = vshrl.u32 %v1073, 7
  %v1075 = vsub.s32 %v1072, %v1074
  %v1076 = vrot.slane %v993, %v1075
  %1077 = vrot.lane.b32.xlu0 %v1076, 32
  %v1078 = vpop.permute.xlu0 %1077
  %v1080 = vmul.f32 %v1044, %v1078
  %v1081 = vadd.f32 %v1068, %v1080
  %vm1082 = vcmp.gt.s32.totalorder %v230, 3
  %v1083 = vsel %vm1082, 1, 0
  %1084 = vset.pattern.permute.xlu0 0
  %1085 = vperm.xlu0 %1084, %v1083
  %v1086 = vpop.permute.xlu0 %1085
  %vm1087 = vcmp.eq.s32.totalorder %v1086, 1
  %v1090 = vunpack.c.l.s4 1983009808
  %v1091 = vunpack.c.0.s8 %v1090
  %v1092 = vlaneseq
  %v1093 = vshrl.u32 %v1092, 7
  %v1094 = vsub.s32 %v1091, %v1093
  %v1095 = vrot.slane %v1081, %v1094
  %1096 = vrot.lane.b32.xlu0 %v1095, 96
  %v1097 = vpop.permute.xlu0 %1096
  %v1099 = vsel %vm1087, %v1097, %v993
  %1100 = vst.msk [vmem:[#allocation2] sm:$0x3] %vm227, %v1099
  %v1101 = vsel %vm1087, %v1097, 0.0
  %v1102 = vpack.c.bf16 %v1101, %v1101
  %s1103 = scalar_lea.vmem %s8, 3
  %1104 = vst.msk [vmem:[%s1103] sm:$0x1] %vm373, %v1102
  %v1105 = vld [vmem:[#allocation3] sm:$0x3]
  %v1106 = vpack.c.bf16 %v1105, %v1105
  %v1108 = vsel %vm264, %v1106, 0
  %1110 = vmatprep.subr.bf16.mxu0 0
  %1111 = vmatpush1.bf16.msra.mxu0 %v391
  %1112 = vmatprep.subr.bf16.mxu0 0
  %1113 = vmatpush1.bf16.msra.mxu0 %v392
  %1114 = vmatprep.subr.bf16.mxu0 0
  %1115 = vmatpush1.bf16.msra.mxu0 0
  %1116 = vmatprep.subr.bf16.mxu0 0
  %1117 = vmatpush1.bf16.msra.mxu0 0
  %1118 = vmatprep.subr.bf16.mxu0 0
  %1119 = vmatpush1.bf16.msra.mxu0 0
  %1120 = vmatprep.subr.bf16.mxu0 0
  %1121 = vmatpush1.bf16.msra.mxu0 0
  %1122 = vmatprep.subr.bf16.mxu0 0
  %1123 = vmatpush1.bf16.msra.mxu0 0
  %1124 = vmatprep.subr.bf16.mxu0 0
  %1125 = vmatpush1.bf16.msra.mxu0 0
  %1126 = vmatprep.subr.bf16.mxu0 0
  %1127 = vmatpush1.bf16.msra.mxu0 0
  %1128 = vmatprep.subr.bf16.mxu0 0
  %1129 = vmatpush1.bf16.msra.mxu0 0
  %1130 = vmatprep.subr.bf16.mxu0 0
  %1131 = vmatpush1.bf16.msra.mxu0 0
  %1132 = vmatprep.subr.bf16.mxu0 0
  %1133 = vmatpush1.bf16.msra.mxu0 0
  %1134 = vmatprep.subr.bf16.mxu0 0
  %1135 = vmatpush1.bf16.msra.mxu0 0
  %1136 = vmatprep.subr.bf16.mxu0 0
  %1137 = vmatpush1.bf16.msra.mxu0 0
  %1138 = vmatprep.subr.bf16.mxu0 0
  %1139 = vmatpush1.bf16.msra.mxu0 0
  %1140 = vmatprep.subr.bf16.mxu0 0
  %1141 = vmatpush1.bf16.msra.mxu0 0
  %1142 = vmatprep.mubr.bf16.mxu0 0
  %1143 = vmatmul.mubr.bf16.gmra.mrb[0].mxu0 %v1108
  %v1144 = vpop.f32.mrb[0].mxu0
  %v1145 = vadd.f32 %v381, %v1144
  %v1146 = vpop.f32.mrb[0].mxu0
  %v1147 = vpop.f32.mrb[0].mxu0
  %v1148 = vpop.f32.mrb[0].mxu0
  %1149 = vdwg.mxu0
  %v1152 = vunpack.c.l.s4 1983009808
  %v1153 = vunpack.c.0.s8 %v1152
  %v1154 = vlaneseq
  %v1155 = vshrl.u32 %v1154, 7
  %v1156 = vsub.s32 %v1153, %v1155
  %v1157 = vrot.slane %v1145, %v1156
  %1158 = vrot.lane.b32.xlu0 %v1157, 96
  %v1159 = vpop.permute.xlu0 %1158
  %v1161 = vadd.f32 %v992, %v1159
  %v1162 = vxor.u32 %v1161, 2147483648
  %v1163 = vmul.f32 %v1162, 1.442695
  %v1164 = vpow.pop %v1163
  %v1165 = vadd.f32 %v1164, 1.0
  %v1166 = vrcp.pop %v1165
  %v1167 = vmul.f32 1.0, %v1166
  %v1169 = vrot.slane %v992, 2
  %v1171 = vadd.f32 %v1169, %v1159
  %v1172 = vxor.u32 %v1171, 2147483648
  %v1173 = vmul.f32 %v1172, 1.442695
  %v1174 = vpow.pop %v1173
  %v1175 = vadd.f32 %v1174, 1.0
  %v1176 = vrcp.pop %v1175
  %v1177 = vmul.f32 1.0, %v1176
  %1178 = vrot.lane.b32.xlu0 %v1157, 32
  %v1179 = vpop.permute.xlu0 %1178
  %v1181 = vmul.f32 %v1167, %v1179
  %1182 = vrot.lane.b32.xlu0 %v992, 96
  %v1183 = vpop.permute.xlu0 %1182
  %v1184 = vrot.slane %v1183, 2
  %1187 = vrot.lane.b32.xlu0 %v1181, 32
  %v1188 = vpop.permute.xlu0 %1187
  %v1190 = vadd.f32 %v1184, %v1188
  %v1191 = vtanh.pop %v1190
  %v1192 = vsub.f32 1.0, %v1177
  %v1193 = vmul.f32 %v1192, %v1191
  %v1194 = vmul.f32 %v1177, %v1105
  %v1195 = vadd.f32 %v1193, %v1194
  %vm1196 = vcmp.gt.s32.totalorder %v230, 4
  %v1197 = vsel %vm1196, 1, 0
  %1198 = vset.pattern.permute.xlu0 0
  %1199 = vperm.xlu0 %1198, %v1197
  %v1200 = vpop.permute.xlu0 %1199
  %vm1201 = vcmp.eq.s32.totalorder %v1200, 1
  %v1202 = vsel %vm1201, %v1195, %v1105
  %1203 = vst.msk [vmem:[#allocation3] sm:$0x3] %vm227, %v1202
  %v1204 = vsel %vm1201, %v1195, 0.0
  %v1205 = vpack.c.bf16 %v1204, %v1204
  %v1208 = vunpack.c.l.s4 1966171168
  %v1209 = vunpack.c.0.s8 %v1208
  %v1210 = vlaneseq
  %v1211 = vshrl.u32 %v1210, 7
  %v1212 = vsub.s32 %v1209, %v1211
  %v1213 = vrot.slane %v1205, %v1212
  %v1215 = vunpack.c.l.s4 1966171168
  %v1216 = vunpack.c.0.s8 %v1215
  %v1217 = vlaneseq
  %v1218 = vshrl.u32 %v1217, 7
  %v1219 = vsub.s32 %v1216, %v1218
  %v1220 = vrot.slane %v1213, %v1219
  %1221 = vrot.lane.b32.xlu0 %v1220, 32
  %v1222 = vpop.permute.xlu0 %1221
  %s1224 = scalar_lea.vmem %s8, 4
  %1225 = vst.msk [vmem:[%s1224] sm:$0x1] %vm513, %v1222
  %v1226 = vld [vmem:[%s991] sm:$0xf]
  %v1227 = vld [vmem:[%s989] sm:$0xf]
  %v1228 = vld [vmem:[#allocation2] sm:$0x3]
  %v1229 = vpack.c.bf16 %v1228, %v1228
  %v1231 = vsel %vm264, %v1229, 0
  %1233 = vmatprep.subr.bf16.mxu0 0
  %1234 = vmatpush1.bf16.msra.mxu0 %v260
  %1235 = vmatprep.subr.bf16.mxu0 0
  %1236 = vmatpush1.bf16.msra.mxu0 %v261
  %1237 = vmatprep.subr.bf16.mxu0 0
  %1238 = vmatpush1.bf16.msra.mxu0 0
  %1239 = vmatprep.subr.bf16.mxu0 0
  %1240 = vmatpush1.bf16.msra.mxu0 0
  %1241 = vmatprep.subr.bf16.mxu0 0
  %1242 = vmatpush1.bf16.msra.mxu0 0
  %1243 = vmatprep.subr.bf16.mxu0 0
  %1244 = vmatpush1.bf16.msra.mxu0 0
  %1245 = vmatprep.subr.bf16.mxu0 0
  %1246 = vmatpush1.bf16.msra.mxu0 0
  %1247 = vmatprep.subr.bf16.mxu0 0
  %1248 = vmatpush1.bf16.msra.mxu0 0
  %1249 = vmatprep.subr.bf16.mxu0 0
  %1250 = vmatpush1.bf16.msra.mxu0 0
  %1251 = vmatprep.subr.bf16.mxu0 0
  %1252 = vmatpush1.bf16.msra.mxu0 0
  %1253 = vmatprep.subr.bf16.mxu0 0
  %1254 = vmatpush1.bf16.msra.mxu0 0
  %1255 = vmatprep.subr.bf16.mxu0 0
  %1256 = vmatpush1.bf16.msra.mxu0 0
  %1257 = vmatprep.subr.bf16.mxu0 0
  %1258 = vmatpush1.bf16.msra.mxu0 0
  %1259 = vmatprep.subr.bf16.mxu0 0
  %1260 = vmatpush1.bf16.msra.mxu0 0
  %1261 = vmatprep.subr.bf16.mxu0 0
  %1262 = vmatpush1.bf16.msra.mxu0 0
  %1263 = vmatprep.subr.bf16.mxu0 0
  %1264 = vmatpush1.bf16.msra.mxu0 0
  %1265 = vmatprep.mubr.bf16.mxu0 0
  %1266 = vmatmul.mubr.bf16.gmra.mrb[0].mxu0 %v1231
  %v1267 = vpop.f32.mrb[0].mxu0
  %v1268 = vadd.f32 %v250, %v1267
  %v1269 = vpop.f32.mrb[0].mxu0
  %v1270 = vpop.f32.mrb[0].mxu0
  %v1271 = vpop.f32.mrb[0].mxu0
  %1272 = vdwg.mxu0
  %v1273 = vadd.f32 %v1226, %v1268
  %v1274 = vxor.u32 %v1273, 2147483648
  %v1275 = vmul.f32 %v1274, 1.442695
  %v1276 = vpow.pop %v1275
  %v1277 = vadd.f32 %v1276, 1.0
  %v1278 = vrcp.pop %v1277
  %v1279 = vmul.f32 1.0, %v1278
  %v1282 = vunpack.c.l.s4 1983009808
  %v1283 = vunpack.c.0.s8 %v1282
  %v1284 = vlaneseq
  %v1285 = vshrl.u32 %v1284, 7
  %v1286 = vsub.s32 %v1283, %v1285
  %v1287 = vrot.slane %v1268, %v1286
  %1288 = vrot.lane.b32.xlu0 %v1287, 64
  %v1289 = vpop.permute.xlu0 %1288
  %v1291 = vmul.f32 %v1279, %v1289
  %1293 = vrot.lane.b32.xlu0 %v1291, 64
  %v1294 = vpop.permute.xlu0 %1293
  %v1296 = vadd.f32 %v1226, %v1294
  %v1297 = vtanh.pop %v1296
  %v1298 = vsub.f32 1.0, %v1279
  %1300 = vrot.lane.b32.xlu0 %v1297, 96
  %v1301 = vpop.permute.xlu0 %1300
  %v1303 = vmul.f32 %v1298, %v1301
  %v1306 = vunpack.c.l.s4 1983009808
  %v1307 = vunpack.c.0.s8 %v1306
  %v1308 = vlaneseq
  %v1309 = vshrl.u32 %v1308, 7
  %v1310 = vsub.s32 %v1307, %v1309
  %v1311 = vrot.slane %v1228, %v1310
  %1312 = vrot.lane.b32.xlu0 %v1311, 32
  %v1313 = vpop.permute.xlu0 %1312
  %v1315 = vmul.f32 %v1279, %v1313
  %v1316 = vadd.f32 %v1303, %v1315
  %v1319 = vunpack.c.l.s4 1983009808
  %v1320 = vunpack.c.0.s8 %v1319
  %v1321 = vlaneseq
  %v1322 = vshrl.u32 %v1321, 7
  %v1323 = vsub.s32 %v1320, %v1322
  %v1324 = vrot.slane %v1316, %v1323
  %1325 = vrot.lane.b32.xlu0 %v1324, 96
  %v1326 = vpop.permute.xlu0 %1325
  %v1328 = vsel %vm1201, %v1326, %v1228
  %1329 = vst.msk [vmem:[#allocation2] sm:$0x3] %vm227, %v1328
  %v1330 = vsel %vm1201, %v1326, 0.0
  %v1331 = vpack.c.bf16 %v1330, %v1330
  %1332 = vst.msk [vmem:[%s1224] sm:$0x1] %vm373, %v1331
  %v1333 = vld [vmem:[#allocation3] sm:$0x3]
  %v1334 = vpack.c.bf16 %v1333, %v1333
  %v1336 = vsel %vm264, %v1334, 0
  %1338 = vmatprep.subr.bf16.mxu0 0
  %1339 = vmatpush1.bf16.msra.mxu0 %v391
  %1340 = vmatprep.subr.bf16.mxu0 0
  %1341 = vmatpush1.bf16.msra.mxu0 %v392
  %1342 = vmatprep.subr.bf16.mxu0 0
  %1343 = vmatpush1.bf16.msra.mxu0 0
  %1344 = vmatprep.subr.bf16.mxu0 0
  %1345 = vmatpush1.bf16.msra.mxu0 0
  %1346 = vmatprep.subr.bf16.mxu0 0
  %1347 = vmatpush1.bf16.msra.mxu0 0
  %1348 = vmatprep.subr.bf16.mxu0 0
  %1349 = vmatpush1.bf16.msra.mxu0 0
  %1350 = vmatprep.subr.bf16.mxu0 0
  %1351 = vmatpush1.bf16.msra.mxu0 0
  %1352 = vmatprep.subr.bf16.mxu0 0
  %1353 = vmatpush1.bf16.msra.mxu0 0
  %1354 = vmatprep.subr.bf16.mxu0 0
  %1355 = vmatpush1.bf16.msra.mxu0 0
  %1356 = vmatprep.subr.bf16.mxu0 0
  %1357 = vmatpush1.bf16.msra.mxu0 0
  %1358 = vmatprep.subr.bf16.mxu0 0
  %1359 = vmatpush1.bf16.msra.mxu0 0
  %1360 = vmatprep.subr.bf16.mxu0 0
  %1361 = vmatpush1.bf16.msra.mxu0 0
  %1362 = vmatprep.subr.bf16.mxu0 0
  %1363 = vmatpush1.bf16.msra.mxu0 0
  %1364 = vmatprep.subr.bf16.mxu0 0
  %1365 = vmatpush1.bf16.msra.mxu0 0
  %1366 = vmatprep.subr.bf16.mxu0 0
  %1367 = vmatpush1.bf16.msra.mxu0 0
  %1368 = vmatprep.subr.bf16.mxu0 0
  %1369 = vmatpush1.bf16.msra.mxu0 0
  %1370 = vmatprep.mubr.bf16.mxu0 0
  %1371 = vmatmul.mubr.bf16.gmra.mrb[0].mxu0 %v1336
  %v1372 = vpop.f32.mrb[0].mxu0
  %v1373 = vadd.f32 %v381, %v1372
  %v1374 = vpop.f32.mrb[0].mxu0
  %v1375 = vpop.f32.mrb[0].mxu0
  %v1376 = vpop.f32.mrb[0].mxu0
  %1377 = vdwg.mxu0
  %v1380 = vunpack.c.l.s4 1983009808
  %v1381 = vunpack.c.0.s8 %v1380
  %v1382 = vlaneseq
  %v1383 = vshrl.u32 %v1382, 7
  %v1384 = vsub.s32 %v1381, %v1383
  %v1385 = vrot.slane %v1373, %v1384
  %1386 = vrot.lane.b32.xlu0 %v1385, 96
  %v1387 = vpop.permute.xlu0 %1386
  %v1389 = vadd.f32 %v1227, %v1387
  %v1390 = vxor.u32 %v1389, 2147483648
  %v1391 = vmul.f32 %v1390, 1.442695
  %v1392 = vpow.pop %v1391
  %v1393 = vadd.f32 %v1392, 1.0
  %v1394 = vrcp.pop %v1393
  %v1395 = vmul.f32 1.0, %v1394
  %v1397 = vrot.slane %v1227, 2
  %v1399 = vadd.f32 %v1397, %v1387
  %v1400 = vxor.u32 %v1399, 2147483648
  %v1401 = vmul.f32 %v1400, 1.442695
  %v1402 = vpow.pop %v1401
  %v1403 = vadd.f32 %v1402, 1.0
  %v1404 = vrcp.pop %v1403
  %v1405 = vmul.f32 1.0, %v1404
  %1406 = vrot.lane.b32.xlu0 %v1385, 32
  %v1407 = vpop.permute.xlu0 %1406
  %v1409 = vmul.f32 %v1395, %v1407
  %1410 = vrot.lane.b32.xlu0 %v1227, 96
  %v1411 = vpop.permute.xlu0 %1410
  %v1412 = vrot.slane %v1411, 2
  %1415 = vrot.lane.b32.xlu0 %v1409, 32
  %v1416 = vpop.permute.xlu0 %1415
  %v1418 = vadd.f32 %v1412, %v1416
  %v1419 = vtanh.pop %v1418
  %v1420 = vsub.f32 1.0, %v1405
  %v1421 = vmul.f32 %v1420, %v1419
  %v1422 = vmul.f32 %v1405, %v1333
  %v1423 = vadd.f32 %v1421, %v1422
  %v1424 = vsel %vm1087, %v1423, %v1333
  %1425 = vst.msk [vmem:[#allocation3] sm:$0x3] %vm227, %v1424
  %v1426 = vsel %vm1087, %v1423, 0.0
  %v1427 = vpack.c.bf16 %v1426, %v1426
  %v1430 = vunpack.c.l.s4 1966171168
  %v1431 = vunpack.c.0.s8 %v1430
  %v1432 = vlaneseq
  %v1433 = vshrl.u32 %v1432, 7
  %v1434 = vsub.s32 %v1431, %v1433
  %v1435 = vrot.slane %v1427, %v1434
  %v1437 = vunpack.c.l.s4 1966171168
  %v1438 = vunpack.c.0.s8 %v1437
  %v1439 = vlaneseq
  %v1440 = vshrl.u32 %v1439, 7
  %v1441 = vsub.s32 %v1438, %v1440
  %v1442 = vrot.slane %v1435, %v1441
  %1443 = vrot.lane.b32.xlu0 %v1442, 32
  %v1444 = vpop.permute.xlu0 %1443
  %1446 = vst.msk [vmem:[%s1103] sm:$0x1] %vm513, %v1444
  %v1447 = vld [vmem:[%s754] sm:$0xf]
  %v1448 = vld [vmem:[%s752] sm:$0xf]
  %v1449 = vld [vmem:[#allocation2] sm:$0x3]
  %v1450 = vpack.c.bf16 %v1449, %v1449
  %v1452 = vsel %vm264, %v1450, 0
  %1454 = vmatprep.subr.bf16.mxu0 0
  %1455 = vmatpush1.bf16.msra.mxu0 %v260
  %1456 = vmatprep.subr.bf16.mxu0 0
  %1457 = vmatpush1.bf16.msra.mxu0 %v261
  %1458 = vmatprep.subr.bf16.mxu0 0
  %1459 = vmatpush1.bf16.msra.mxu0 0
  %1460 = vmatprep.subr.bf16.mxu0 0
  %1461 = vmatpush1.bf16.msra.mxu0 0
  %1462 = vmatprep.subr.bf16.mxu0 0
  %1463 = vmatpush1.bf16.msra.mxu0 0
  %1464 = vmatprep.subr.bf16.mxu0 0
  %1465 = vmatpush1.bf16.msra.mxu0 0
  %1466 = vmatprep.subr.bf16.mxu0 0
  %1467 = vmatpush1.bf16.msra.mxu0 0
  %1468 = vmatprep.subr.bf16.mxu0 0
  %1469 = vmatpush1.bf16.msra.mxu0 0
  %1470 = vmatprep.subr.bf16.mxu0 0
  %1471 = vmatpush1.bf16.msra.mxu0 0
  %1472 = vmatprep.subr.bf16.mxu0 0
  %1473 = vmatpush1.bf16.msra.mxu0 0
  %1474 = vmatprep.subr.bf16.mxu0 0
  %1475 = vmatpush1.bf16.msra.mxu0 0
  %1476 = vmatprep.subr.bf16.mxu0 0
  %1477 = vmatpush1.bf16.msra.mxu0 0
  %1478 = vmatprep.subr.bf16.mxu0 0
  %1479 = vmatpush1.bf16.msra.mxu0 0
  %1480 = vmatprep.subr.bf16.mxu0 0
  %1481 = vmatpush1.bf16.msra.mxu0 0
  %1482 = vmatprep.subr.bf16.mxu0 0
  %1483 = vmatpush1.bf16.msra.mxu0 0
  %1484 = vmatprep.subr.bf16.mxu0 0
  %1485 = vmatpush1.bf16.msra.mxu0 0
  %1486 = vmatprep.mubr.bf16.mxu0 0
  %1487 = vmatmul.mubr.bf16.gmra.mrb[0].mxu0 %v1452
  %v1488 = vpop.f32.mrb[0].mxu0
  %v1489 = vadd.f32 %v250, %v1488
  %v1490 = vpop.f32.mrb[0].mxu0
  %v1491 = vpop.f32.mrb[0].mxu0
  %v1492 = vpop.f32.mrb[0].mxu0
  %1493 = vdwg.mxu0
  %v1494 = vadd.f32 %v1447, %v1489
  %v1495 = vxor.u32 %v1494, 2147483648
  %v1496 = vmul.f32 %v1495, 1.442695
  %v1497 = vpow.pop %v1496
  %v1498 = vadd.f32 %v1497, 1.0
  %v1499 = vrcp.pop %v1498
  %v1500 = vmul.f32 1.0, %v1499
  %v1503 = vunpack.c.l.s4 1983009808
  %v1504 = vunpack.c.0.s8 %v1503
  %v1505 = vlaneseq
  %v1506 = vshrl.u32 %v1505, 7
  %v1507 = vsub.s32 %v1504, %v1506
  %v1508 = vrot.slane %v1489, %v1507
  %1509 = vrot.lane.b32.xlu0 %v1508, 64
  %v1510 = vpop.permute.xlu0 %1509
  %v1512 = vmul.f32 %v1500, %v1510
  %1514 = vrot.lane.b32.xlu0 %v1512, 64
  %v1515 = vpop.permute.xlu0 %1514
  %v1517 = vadd.f32 %v1447, %v1515
  %v1518 = vtanh.pop %v1517
  %v1519 = vsub.f32 1.0, %v1500
  %1521 = vrot.lane.b32.xlu0 %v1518, 96
  %v1522 = vpop.permute.xlu0 %1521
  %v1524 = vmul.f32 %v1519, %v1522
  %v1527 = vunpack.c.l.s4 1983009808
  %v1528 = vunpack.c.0.s8 %v1527
  %v1529 = vlaneseq
  %v1530 = vshrl.u32 %v1529, 7
  %v1531 = vsub.s32 %v1528, %v1530
  %v1532 = vrot.slane %v1449, %v1531
  %1533 = vrot.lane.b32.xlu0 %v1532, 32
  %v1534 = vpop.permute.xlu0 %1533
  %v1536 = vmul.f32 %v1500, %v1534
  %v1537 = vadd.f32 %v1524, %v1536
  %v1540 = vunpack.c.l.s4 1983009808
  %v1541 = vunpack.c.0.s8 %v1540
  %v1542 = vlaneseq
  %v1543 = vshrl.u32 %v1542, 7
  %v1544 = vsub.s32 %v1541, %v1543
  %v1545 = vrot.slane %v1537, %v1544
  %1546 = vrot.lane.b32.xlu0 %v1545, 96
  %v1547 = vpop.permute.xlu0 %1546
  %v1549 = vsel %vm964, %v1547, %v1449
  %1550 = vst.msk [vmem:[#allocation2] sm:$0x3] %vm227, %v1549
  %v1551 = vsel %vm964, %v1547, 0.0
  %v1552 = vpack.c.bf16 %v1551, %v1551
  %1553 = vst.msk [vmem:[%s987] sm:$0x1] %vm373, %v1552
  %v1554 = vld [vmem:[#allocation3] sm:$0x3]
  %v1555 = vpack.c.bf16 %v1554, %v1554
  %v1557 = vsel %vm264, %v1555, 0
  %1559 = vmatprep.subr.bf16.mxu0 0
  %1560 = vmatpush1.bf16.msra.mxu0 %v391
  %1561 = vmatprep.subr.bf16.mxu0 0
  %1562 = vmatpush1.bf16.msra.mxu0 %v392
  %1563 = vmatprep.subr.bf16.mxu0 0
  %1564 = vmatpush1.bf16.msra.mxu0 0
  %1565 = vmatprep.subr.bf16.mxu0 0
  %1566 = vmatpush1.bf16.msra.mxu0 0
  %1567 = vmatprep.subr.bf16.mxu0 0
  %1568 = vmatpush1.bf16.msra.mxu0 0
  %1569 = vmatprep.subr.bf16.mxu0 0
  %1570 = vmatpush1.bf16.msra.mxu0 0
  %1571 = vmatprep.subr.bf16.mxu0 0
  %1572 = vmatpush1.bf16.msra.mxu0 0
  %1573 = vmatprep.subr.bf16.mxu0 0
  %1574 = vmatpush1.bf16.msra.mxu0 0
  %1575 = vmatprep.subr.bf16.mxu0 0
  %1576 = vmatpush1.bf16.msra.mxu0 0
  %1577 = vmatprep.subr.bf16.mxu0 0
  %1578 = vmatpush1.bf16.msra.mxu0 0
  %1579 = vmatprep.subr.bf16.mxu0 0
  %1580 = vmatpush1.bf16.msra.mxu0 0
  %1581 = vmatprep.subr.bf16.mxu0 0
  %1582 = vmatpush1.bf16.msra.mxu0 0
  %1583 = vmatprep.subr.bf16.mxu0 0
  %1584 = vmatpush1.bf16.msra.mxu0 0
  %1585 = vmatprep.subr.bf16.mxu0 0
  %1586 = vmatpush1.bf16.msra.mxu0 0
  %1587 = vmatprep.subr.bf16.mxu0 0
  %1588 = vmatpush1.bf16.msra.mxu0 0
  %1589 = vmatprep.subr.bf16.mxu0 0
  %1590 = vmatpush1.bf16.msra.mxu0 0
  %1591 = vmatprep.mubr.bf16.mxu0 0
  %1592 = vmatmul.mubr.bf16.gmra.mrb[0].mxu0 %v1557
  %v1593 = vpop.f32.mrb[0].mxu0
  %v1594 = vadd.f32 %v381, %v1593
  %v1595 = vpop.f32.mrb[0].mxu0
  %v1596 = vpop.f32.mrb[0].mxu0
  %v1597 = vpop.f32.mrb[0].mxu0
  %1598 = vdwg.mxu0
  %v1601 = vunpack.c.l.s4 1983009808
  %v1602 = vunpack.c.0.s8 %v1601
  %v1603 = vlaneseq
  %v1604 = vshrl.u32 %v1603, 7
  %v1605 = vsub.s32 %v1602, %v1604
  %v1606 = vrot.slane %v1594, %v1605
  %1607 = vrot.lane.b32.xlu0 %v1606, 96
  %v1608 = vpop.permute.xlu0 %1607
  %v1610 = vadd.f32 %v1448, %v1608
  %v1611 = vxor.u32 %v1610, 2147483648
  %v1612 = vmul.f32 %v1611, 1.442695
  %v1613 = vpow.pop %v1612
  %v1614 = vadd.f32 %v1613, 1.0
  %v1615 = vrcp.pop %v1614
  %v1616 = vmul.f32 1.0, %v1615
  %v1618 = vrot.slane %v1448, 2
  %v1620 = vadd.f32 %v1618, %v1608
  %v1621 = vxor.u32 %v1620, 2147483648
  %v1622 = vmul.f32 %v1621, 1.442695
  %v1623 = vpow.pop %v1622
  %v1624 = vadd.f32 %v1623, 1.0
  %v1625 = vrcp.pop %v1624
  %v1626 = vmul.f32 1.0, %v1625
  %1627 = vrot.lane.b32.xlu0 %v1606, 32
  %v1628 = vpop.permute.xlu0 %1627
  %v1630 = vmul.f32 %v1616, %v1628
  %1631 = vrot.lane.b32.xlu0 %v1448, 96
  %v1632 = vpop.permute.xlu0 %1631
  %v1633 = vrot.slane %v1632, 2
  %1636 = vrot.lane.b32.xlu0 %v1630, 32
  %v1637 = vpop.permute.xlu0 %1636
  %v1639 = vadd.f32 %v1633, %v1637
  %v1640 = vtanh.pop %v1639
  %v1641 = vsub.f32 1.0, %v1626
  %v1642 = vmul.f32 %v1641, %v1640
  %v1643 = vmul.f32 %v1626, %v1554
  %v1644 = vadd.f32 %v1642, %v1643
  %v1645 = vsel %vm850, %v1644, %v1554
  %1646 = vst.msk [vmem:[#allocation3] sm:$0x3] %vm227, %v1645
  %v1647 = vsel %vm850, %v1644, 0.0
  %v1648 = vpack.c.bf16 %v1647, %v1647
  %v1651 = vunpack.c.l.s4 1966171168
  %v1652 = vunpack.c.0.s8 %v1651
  %v1653 = vlaneseq
  %v1654 = vshrl.u32 %v1653, 7
  %v1655 = vsub.s32 %v1652, %v1654
  %v1656 = vrot.slane %v1648, %v1655
  %v1658 = vunpack.c.l.s4 1966171168
  %v1659 = vunpack.c.0.s8 %v1658
  %v1660 = vlaneseq
  %v1661 = vshrl.u32 %v1660, 7
  %v1662 = vsub.s32 %v1659, %v1661
  %v1663 = vrot.slane %v1656, %v1662
  %1664 = vrot.lane.b32.xlu0 %v1663, 32
  %v1665 = vpop.permute.xlu0 %1664
  %1667 = vst.msk [vmem:[%s866] sm:$0x1] %vm513, %v1665
  %v1668 = vld [vmem:[%s517] sm:$0xf]
  %v1669 = vld [vmem:[%s515] sm:$0xf]
  %v1670 = vld [vmem:[#allocation2] sm:$0x3]
  %v1671 = vpack.c.bf16 %v1670, %v1670
  %v1673 = vsel %vm264, %v1671, 0
  %1675 = vmatprep.subr.bf16.mxu0 0
  %1676 = vmatpush1.bf16.msra.mxu0 %v260
  %1677 = vmatprep.subr.bf16.mxu0 0
  %1678 = vmatpush1.bf16.msra.mxu0 %v261
  %1679 = vmatprep.subr.bf16.mxu0 0
  %1680 = vmatpush1.bf16.msra.mxu0 0
  %1681 = vmatprep.subr.bf16.mxu0 0
  %1682 = vmatpush1.bf16.msra.mxu0 0
  %1683 = vmatprep.subr.bf16.mxu0 0
  %1684 = vmatpush1.bf16.msra.mxu0 0
  %1685 = vmatprep.subr.bf16.mxu0 0
  %1686 = vmatpush1.bf16.msra.mxu0 0
  %1687 = vmatprep.subr.bf16.mxu0 0
  %1688 = vmatpush1.bf16.msra.mxu0 0
  %1689 = vmatprep.subr.bf16.mxu0 0
  %1690 = vmatpush1.bf16.msra.mxu0 0
  %1691 = vmatprep.subr.bf16.mxu0 0
  %1692 = vmatpush1.bf16.msra.mxu0 0
  %1693 = vmatprep.subr.bf16.mxu0 0
  %1694 = vmatpush1.bf16.msra.mxu0 0
  %1695 = vmatprep.subr.bf16.mxu0 0
  %1696 = vmatpush1.bf16.msra.mxu0 0
  %1697 = vmatprep.subr.bf16.mxu0 0
  %1698 = vmatpush1.bf16.msra.mxu0 0
  %1699 = vmatprep.subr.bf16.mxu0 0
  %1700 = vmatpush1.bf16.msra.mxu0 0
  %1701 = vmatprep.subr.bf16.mxu0 0
  %1702 = vmatpush1.bf16.msra.mxu0 0
  %1703 = vmatprep.subr.bf16.mxu0 0
  %1704 = vmatpush1.bf16.msra.mxu0 0
  %1705 = vmatprep.subr.bf16.mxu0 0
  %1706 = vmatpush1.bf16.msra.mxu0 0
  %1707 = vmatprep.mubr.bf16.mxu0 0
  %1708 = vmatmul.mubr.bf16.gmra.mrb[0].mxu0 %v1673
  %v1709 = vpop.f32.mrb[0].mxu0
  %v1710 = vadd.f32 %v250, %v1709
  %v1711 = vpop.f32.mrb[0].mxu0
  %v1712 = vpop.f32.mrb[0].mxu0
  %v1713 = vpop.f32.mrb[0].mxu0
  %1714 = vdwg.mxu0
  %v1715 = vadd.f32 %v1668, %v1710
  %v1716 = vxor.u32 %v1715, 2147483648
  %v1717 = vmul.f32 %v1716, 1.442695
  %v1718 = vpow.pop %v1717
  %v1719 = vadd.f32 %v1718, 1.0
  %v1720 = vrcp.pop %v1719
  %v1721 = vmul.f32 1.0, %v1720
  %v1724 = vunpack.c.l.s4 1983009808
  %v1725 = vunpack.c.0.s8 %v1724
  %v1726 = vlaneseq
  %v1727 = vshrl.u32 %v1726, 7
  %v1728 = vsub.s32 %v1725, %v1727
  %v1729 = vrot.slane %v1710, %v1728
  %1730 = vrot.lane.b32.xlu0 %v1729, 64
  %v1731 = vpop.permute.xlu0 %1730
  %v1733 = vmul.f32 %v1721, %v1731
  %1735 = vrot.lane.b32.xlu0 %v1733, 64
  %v1736 = vpop.permute.xlu0 %1735
  %v1738 = vadd.f32 %v1668, %v1736
  %v1739 = vtanh.pop %v1738
  %v1740 = vsub.f32 1.0, %v1721
  %1742 = vrot.lane.b32.xlu0 %v1739, 96
  %v1743 = vpop.permute.xlu0 %1742
  %v1745 = vmul.f32 %v1740, %v1743
  %v1748 = vunpack.c.l.s4 1983009808
  %v1749 = vunpack.c.0.s8 %v1748
  %v1750 = vlaneseq
  %v1751 = vshrl.u32 %v1750, 7
  %v1752 = vsub.s32 %v1749, %v1751
  %v1753 = vrot.slane %v1670, %v1752
  %1754 = vrot.lane.b32.xlu0 %v1753, 32
  %v1755 = vpop.permute.xlu0 %1754
  %v1757 = vmul.f32 %v1721, %v1755
  %v1758 = vadd.f32 %v1745, %v1757
  %v1761 = vunpack.c.l.s4 1983009808
  %v1762 = vunpack.c.0.s8 %v1761
  %v1763 = vlaneseq
  %v1764 = vshrl.u32 %v1763, 7
  %v1765 = vsub.s32 %v1762, %v1764
  %v1766 = vrot.slane %v1758, %v1765
  %1767 = vrot.lane.b32.xlu0 %v1766, 96
  %v1768 = vpop.permute.xlu0 %1767
  %v1770 = vsel %vm727, %v1768, %v1670
  %1771 = vst.msk [vmem:[#allocation2] sm:$0x3] %vm227, %v1770
  %v1772 = vsel %vm727, %v1768, 0.0
  %v1773 = vpack.c.bf16 %v1772, %v1772
  %1774 = vst.msk [vmem:[%s750] sm:$0x1] %vm373, %v1773
  %v1775 = vld [vmem:[#allocation3] sm:$0x3]
  %v1776 = vpack.c.bf16 %v1775, %v1775
  %v1778 = vsel %vm264, %v1776, 0
  %1780 = vmatprep.subr.bf16.mxu0 0
  %1781 = vmatpush1.bf16.msra.mxu0 %v391
  %1782 = vmatprep.subr.bf16.mxu0 0
  %1783 = vmatpush1.bf16.msra.mxu0 %v392
  %1784 = vmatprep.subr.bf16.mxu0 0
  %1785 = vmatpush1.bf16.msra.mxu0 0
  %1786 = vmatprep.subr.bf16.mxu0 0
  %1787 = vmatpush1.bf16.msra.mxu0 0
  %1788 = vmatprep.subr.bf16.mxu0 0
  %1789 = vmatpush1.bf16.msra.mxu0 0
  %1790 = vmatprep.subr.bf16.mxu0 0
  %1791 = vmatpush1.bf16.msra.mxu0 0
  %1792 = vmatprep.subr.bf16.mxu0 0
  %1793 = vmatpush1.bf16.msra.mxu0 0
  %1794 = vmatprep.subr.bf16.mxu0 0
  %1795 = vmatpush1.bf16.msra.mxu0 0
  %1796 = vmatprep.subr.bf16.mxu0 0
  %1797 = vmatpush1.bf16.msra.mxu0 0
  %1798 = vmatprep.subr.bf16.mxu0 0
  %1799 = vmatpush1.bf16.msra.mxu0 0
  %1800 = vmatprep.subr.bf16.mxu0 0
  %1801 = vmatpush1.bf16.msra.mxu0 0
  %1802 = vmatprep.subr.bf16.mxu0 0
  %1803 = vmatpush1.bf16.msra.mxu0 0
  %1804 = vmatprep.subr.bf16.mxu0 0
  %1805 = vmatpush1.bf16.msra.mxu0 0
  %1806 = vmatprep.subr.bf16.mxu0 0
  %1807 = vmatpush1.bf16.msra.mxu0 0
  %1808 = vmatprep.subr.bf16.mxu0 0
  %1809 = vmatpush1.bf16.msra.mxu0 0
  %1810 = vmatprep.subr.bf16.mxu0 0
  %1811 = vmatpush1.bf16.msra.mxu0 0
  %1812 = vmatprep.mubr.bf16.mxu0 0
  %1813 = vmatmul.mubr.bf16.gmra.mrb[0].mxu0 %v1778
  %v1814 = vpop.f32.mrb[0].mxu0
  %v1815 = vadd.f32 %v381, %v1814
  %v1816 = vpop.f32.mrb[0].mxu0
  %v1817 = vpop.f32.mrb[0].mxu0
  %v1818 = vpop.f32.mrb[0].mxu0
  %1819 = vdwg.mxu0
  %v1822 = vunpack.c.l.s4 1983009808
  %v1823 = vunpack.c.0.s8 %v1822
  %v1824 = vlaneseq
  %v1825 = vshrl.u32 %v1824, 7
  %v1826 = vsub.s32 %v1823, %v1825
  %v1827 = vrot.slane %v1815, %v1826
  %1828 = vrot.lane.b32.xlu0 %v1827, 96
  %v1829 = vpop.permute.xlu0 %1828
  %v1831 = vadd.f32 %v1669, %v1829
  %v1832 = vxor.u32 %v1831, 2147483648
  %v1833 = vmul.f32 %v1832, 1.442695
  %v1834 = vpow.pop %v1833
  %v1835 = vadd.f32 %v1834, 1.0
  %v1836 = vrcp.pop %v1835
  %v1837 = vmul.f32 1.0, %v1836
  %v1839 = vrot.slane %v1669, 2
  %v1841 = vadd.f32 %v1839, %v1829
  %v1842 = vxor.u32 %v1841, 2147483648
  %v1843 = vmul.f32 %v1842, 1.442695
  %v1844 = vpow.pop %v1843
  %v1845 = vadd.f32 %v1844, 1.0
  %v1846 = vrcp.pop %v1845
  %v1847 = vmul.f32 1.0, %v1846
  %1848 = vrot.lane.b32.xlu0 %v1827, 32
  %v1849 = vpop.permute.xlu0 %1848
  %v1851 = vmul.f32 %v1837, %v1849
  %1852 = vrot.lane.b32.xlu0 %v1669, 96
  %v1853 = vpop.permute.xlu0 %1852
  %v1854 = vrot.slane %v1853, 2
  %1857 = vrot.lane.b32.xlu0 %v1851, 32
  %v1858 = vpop.permute.xlu0 %1857
  %v1860 = vadd.f32 %v1854, %v1858
  %v1861 = vtanh.pop %v1860
  %v1862 = vsub.f32 1.0, %v1847
  %v1863 = vmul.f32 %v1862, %v1861
  %v1864 = vmul.f32 %v1847, %v1775
  %v1865 = vadd.f32 %v1863, %v1864
  %v1866 = vsel %vm613, %v1865, %v1775
  %1867 = vst.msk [vmem:[#allocation3] sm:$0x3] %vm227, %v1866
  %v1868 = vsel %vm613, %v1865, 0.0
  %v1869 = vpack.c.bf16 %v1868, %v1868
  %v1872 = vunpack.c.l.s4 1966171168
  %v1873 = vunpack.c.0.s8 %v1872
  %v1874 = vlaneseq
  %v1875 = vshrl.u32 %v1874, 7
  %v1876 = vsub.s32 %v1873, %v1875
  %v1877 = vrot.slane %v1869, %v1876
  %v1879 = vunpack.c.l.s4 1966171168
  %v1880 = vunpack.c.0.s8 %v1879
  %v1881 = vlaneseq
  %v1882 = vshrl.u32 %v1881, 7
  %v1883 = vsub.s32 %v1880, %v1882
  %v1884 = vrot.slane %v1877, %v1883
  %1885 = vrot.lane.b32.xlu0 %v1884, 32
  %v1886 = vpop.permute.xlu0 %1885
  %1888 = vst.msk [vmem:[%s629] sm:$0x1] %vm513, %v1886
  %v1889 = vld [vmem:[%s242] sm:$0xf]
  %v1890 = vld [vmem:[#allocation4] sm:$0xf]
  %v1891 = vld [vmem:[#allocation2] sm:$0x3]
  %v1892 = vpack.c.bf16 %v1891, %v1891
  %v1894 = vsel %vm264, %v1892, 0
  %1896 = vmatprep.subr.bf16.mxu0 0
  %1897 = vmatpush1.bf16.msra.mxu0 %v260
  %1898 = vmatprep.subr.bf16.mxu0 0
  %1899 = vmatpush1.bf16.msra.mxu0 %v261
  %1900 = vmatprep.subr.bf16.mxu0 0
  %1901 = vmatpush1.bf16.msra.mxu0 0
  %1902 = vmatprep.subr.bf16.mxu0 0
  %1903 = vmatpush1.bf16.msra.mxu0 0
  %1904 = vmatprep.subr.bf16.mxu0 0
  %1905 = vmatpush1.bf16.msra.mxu0 0
  %1906 = vmatprep.subr.bf16.mxu0 0
  %1907 = vmatpush1.bf16.msra.mxu0 0
  %1908 = vmatprep.subr.bf16.mxu0 0
  %1909 = vmatpush1.bf16.msra.mxu0 0
  %1910 = vmatprep.subr.bf16.mxu0 0
  %1911 = vmatpush1.bf16.msra.mxu0 0
  %1912 = vmatprep.subr.bf16.mxu0 0
  %1913 = vmatpush1.bf16.msra.mxu0 0
  %1914 = vmatprep.subr.bf16.mxu0 0
  %1915 = vmatpush1.bf16.msra.mxu0 0
  %1916 = vmatprep.subr.bf16.mxu0 0
  %1917 = vmatpush1.bf16.msra.mxu0 0
  %1918 = vmatprep.subr.bf16.mxu0 0
  %1919 = vmatpush1.bf16.msra.mxu0 0
  %1920 = vmatprep.subr.bf16.mxu0 0
  %1921 = vmatpush1.bf16.msra.mxu0 0
  %1922 = vmatprep.subr.bf16.mxu0 0
  %1923 = vmatpush1.bf16.msra.mxu0 0
  %1924 = vmatprep.subr.bf16.mxu0 0
  %1925 = vmatpush1.bf16.msra.mxu0 0
  %1926 = vmatprep.subr.bf16.mxu0 0
  %1927 = vmatpush1.bf16.msra.mxu0 0
  %1928 = vmatprep.mubr.bf16.mxu0 0
  %1929 = vmatmul.mubr.bf16.gmra.mrb[0].mxu0 %v1894
  %v1930 = vpop.f32.mrb[0].mxu0
  %v1931 = vadd.f32 %v250, %v1930
  %v1932 = vpop.f32.mrb[0].mxu0
  %v1933 = vpop.f32.mrb[0].mxu0
  %v1934 = vpop.f32.mrb[0].mxu0
  %1935 = vdwg.mxu0
  %v1936 = vadd.f32 %v1889, %v1931
  %v1937 = vxor.u32 %v1936, 2147483648
  %v1938 = vmul.f32 %v1937, 1.442695
  %v1939 = vpow.pop %v1938
  %v1940 = vadd.f32 %v1939, 1.0
  %v1941 = vrcp.pop %v1940
  %v1942 = vmul.f32 1.0, %v1941
  %v1945 = vunpack.c.l.s4 1983009808
  %v1946 = vunpack.c.0.s8 %v1945
  %v1947 = vlaneseq
  %v1948 = vshrl.u32 %v1947, 7
  %v1949 = vsub.s32 %v1946, %v1948
  %v1950 = vrot.slane %v1931, %v1949
  %1951 = vrot.lane.b32.xlu0 %v1950, 64
  %v1952 = vpop.permute.xlu0 %1951
  %v1954 = vmul.f32 %v1942, %v1952
  %1956 = vrot.lane.b32.xlu0 %v1954, 64
  %v1957 = vpop.permute.xlu0 %1956
  %v1959 = vadd.f32 %v1889, %v1957
  %v1960 = vtanh.pop %v1959
  %v1961 = vsub.f32 1.0, %v1942
  %1963 = vrot.lane.b32.xlu0 %v1960, 96
  %v1964 = vpop.permute.xlu0 %1963
  %v1966 = vmul.f32 %v1961, %v1964
  %v1969 = vunpack.c.l.s4 1983009808
  %v1970 = vunpack.c.0.s8 %v1969
  %v1971 = vlaneseq
  %v1972 = vshrl.u32 %v1971, 7
  %v1973 = vsub.s32 %v1970, %v1972
  %v1974 = vrot.slane %v1891, %v1973
  %1975 = vrot.lane.b32.xlu0 %v1974, 32
  %v1976 = vpop.permute.xlu0 %1975
  %v1978 = vmul.f32 %v1942, %v1976
  %v1979 = vadd.f32 %v1966, %v1978
  %v1982 = vunpack.c.l.s4 1983009808
  %v1983 = vunpack.c.0.s8 %v1982
  %v1984 = vlaneseq
  %v1985 = vshrl.u32 %v1984, 7
  %v1986 = vsub.s32 %v1983, %v1985
  %v1987 = vrot.slane %v1979, %v1986
  %1988 = vrot.lane.b32.xlu0 %v1987, 96
  %v1989 = vpop.permute.xlu0 %1988
  %v1991 = vsel %vm489, %v1989, %v1891
  %1992 = vst.msk [vmem:[#allocation2] sm:$0x3] %vm227, %v1991
  %v1993 = vsel %vm489, %v1989, 0.0
  %v1994 = vpack.c.bf16 %v1993, %v1993
  %1995 = vst.msk [vmem:[%s512] sm:$0x1] %vm373, %v1994
  %v1996 = vld [vmem:[#allocation3] sm:$0x3]
  %v1997 = vpack.c.bf16 %v1996, %v1996
  %v1999 = vsel %vm264, %v1997, 0
  %2001 = vmatprep.subr.bf16.mxu0 0
  %2002 = vmatpush1.bf16.msra.mxu0 %v391
  %2003 = vmatprep.subr.bf16.mxu0 0
  %2004 = vmatpush1.bf16.msra.mxu0 %v392
  %2005 = vmatprep.subr.bf16.mxu0 0
  %2006 = vmatpush1.bf16.msra.mxu0 0
  %2007 = vmatprep.subr.bf16.mxu0 0
  %2008 = vmatpush1.bf16.msra.mxu0 0
  %2009 = vmatprep.subr.bf16.mxu0 0
  %2010 = vmatpush1.bf16.msra.mxu0 0
  %2011 = vmatprep.subr.bf16.mxu0 0
  %2012 = vmatpush1.bf16.msra.mxu0 0
  %2013 = vmatprep.subr.bf16.mxu0 0
  %2014 = vmatpush1.bf16.msra.mxu0 0
  %2015 = vmatprep.subr.bf16.mxu0 0
  %2016 = vmatpush1.bf16.msra.mxu0 0
  %2017 = vmatprep.subr.bf16.mxu0 0
  %2018 = vmatpush1.bf16.msra.mxu0 0
  %2019 = vmatprep.subr.bf16.mxu0 0
  %2020 = vmatpush1.bf16.msra.mxu0 0
  %2021 = vmatprep.subr.bf16.mxu0 0
  %2022 = vmatpush1.bf16.msra.mxu0 0
  %2023 = vmatprep.subr.bf16.mxu0 0
  %2024 = vmatpush1.bf16.msra.mxu0 0
  %2025 = vmatprep.subr.bf16.mxu0 0
  %2026 = vmatpush1.bf16.msra.mxu0 0
  %2027 = vmatprep.subr.bf16.mxu0 0
  %2028 = vmatpush1.bf16.msra.mxu0 0
  %2029 = vmatprep.subr.bf16.mxu0 0
  %2030 = vmatpush1.bf16.msra.mxu0 0
  %2031 = vmatprep.subr.bf16.mxu0 0
  %2032 = vmatpush1.bf16.msra.mxu0 0
  %2033 = vmatprep.mubr.bf16.mxu0 0
  %2034 = vmatmul.mubr.bf16.gmra.mrb[0].mxu0 %v1999
  %v2035 = vpop.f32.mrb[0].mxu0
  %v2036 = vadd.f32 %v381, %v2035
  %v2037 = vpop.f32.mrb[0].mxu0
  %v2038 = vpop.f32.mrb[0].mxu0
  %v2039 = vpop.f32.mrb[0].mxu0
  %2040 = vdwg.mxu0
  %v2043 = vunpack.c.l.s4 1983009808
  %v2044 = vunpack.c.0.s8 %v2043
  %v2045 = vlaneseq
  %v2046 = vshrl.u32 %v2045, 7
  %v2047 = vsub.s32 %v2044, %v2046
  %v2048 = vrot.slane %v2036, %v2047
  %2049 = vrot.lane.b32.xlu0 %v2048, 96
  %v2050 = vpop.permute.xlu0 %2049
  %v2052 = vadd.f32 %v1890, %v2050
  %v2053 = vxor.u32 %v2052, 2147483648
  %v2054 = vmul.f32 %v2053, 1.442695
  %v2055 = vpow.pop %v2054
  %v2056 = vadd.f32 %v2055, 1.0
  %v2057 = vrcp.pop %v2056
  %v2058 = vmul.f32 1.0, %v2057
  %v2060 = vrot.slane %v1890, 2
  %v2062 = vadd.f32 %v2060, %v2050
  %v2063 = vxor.u32 %v2062, 2147483648
  %v2064 = vmul.f32 %v2063, 1.442695
  %v2065 = vpow.pop %v2064
  %v2066 = vadd.f32 %v2065, 1.0
  %v2067 = vrcp.pop %v2066
  %v2068 = vmul.f32 1.0, %v2067
  %2069 = vrot.lane.b32.xlu0 %v2048, 32
  %v2070 = vpop.permute.xlu0 %2069
  %v2072 = vmul.f32 %v2058, %v2070
  %2073 = vrot.lane.b32.xlu0 %v1890, 96
  %v2074 = vpop.permute.xlu0 %2073
  %v2075 = vrot.slane %v2074, 2
  %2078 = vrot.lane.b32.xlu0 %v2072, 32
  %v2079 = vpop.permute.xlu0 %2078
  %v2081 = vadd.f32 %v2075, %v2079
  %v2082 = vtanh.pop %v2081
  %v2083 = vsub.f32 1.0, %v2068
  %v2084 = vmul.f32 %v2083, %v2082
  %v2085 = vmul.f32 %v2068, %v1996
  %v2086 = vadd.f32 %v2084, %v2085
  %v2087 = vsel %vm357, %v2086, %v1996
  %2088 = vst.msk [vmem:[#allocation3] sm:$0x3] %vm227, %v2087
  %v2089 = vsel %vm357, %v2086, 0.0
  %v2090 = vpack.c.bf16 %v2089, %v2089
  %v2093 = vunpack.c.l.s4 1966171168
  %v2094 = vunpack.c.0.s8 %v2093
  %v2095 = vlaneseq
  %v2096 = vshrl.u32 %v2095, 7
  %v2097 = vsub.s32 %v2094, %v2096
  %v2098 = vrot.slane %v2090, %v2097
  %v2100 = vunpack.c.l.s4 1966171168
  %v2101 = vunpack.c.0.s8 %v2100
  %v2102 = vlaneseq
  %v2103 = vshrl.u32 %v2102, 7
  %v2104 = vsub.s32 %v2101, %v2103
  %v2105 = vrot.slane %v2098, %v2104
  %2106 = vrot.lane.b32.xlu0 %v2105, 32
  %v2107 = vpop.permute.xlu0 %2106
  %2109 = vst.msk [vmem:[%s8] sm:$0x1] %vm513, %v2107
  %v2110 = vld [vmem:[#allocation2] sm:$0x3]
  %2111 = vst.msk [vmem:[%s9] sm:$0x3] %vm227, %v2110
  %v2112 = vld [vmem:[#allocation3] sm:$0x3]
  %2114 = vrot.lane.b32.xlu0 %v2112, 32
  %v2115 = vpop.permute.xlu0 %2114
  %vm2117 = vcmask 517376
  %2118 = vst.msk [vmem:[%s9] sm:$0x3] %vm2117, %v2115
  // Predicated region
  $region34: #{nmt_forward.3} parent=0 // pred_check
    _
  $region35: #{nmt_forward.3} parent=0 // pred_check_branch
    %2120 = sbr.rel (0) target = $region37
  $region36: #{nmt_forward.3} parent=0 // pred_region
    _
  $region37: #{nmt_forward.3} parent=0 // pred_fallthru
    _
  // Predicated region
  $region38: #{nmt_forward.3} parent=0 // pred_check
    _
  $region39: #{nmt_forward.3} parent=0 // pred_check_branch
    %2122 = sbr.rel (0) target = $region41
  $region40: #{nmt_forward.3} parent=0 // pred_region
    _
  $region41: #{nmt_forward.3} parent=0 // pred_fallthru
    _
  // Predicated region
  $region42: #{nmt_forward.3} parent=0 // pred_check
    _
  $region43: #{nmt_forward.3} parent=0 // pred_check_branch
    %2124 = sbr.rel (0) target = $region45
  $region44: #{nmt_forward.3} parent=0 // pred_region
    _
  $region45: #{nmt_forward.3} parent=0 // pred_fallthru
    _
  // Predicated region
  $region46: #{nmt_forward.3} parent=0 // pred_check
    _
  $region47: #{nmt_forward.3} parent=0 // pred_check_branch
    %2126 = sbr.rel (0) target = $region49
  $region48: #{nmt_forward.3} parent=0 // pred_region
    _
  $region49: #{nmt_forward.3} parent=0 // pred_fallthru
    _

// kernel: nmt_forward.4
$region0: #{nmt_forward.4}
  #allocation0 [shape = 'u32[]', space=smem, size = 0x4, offset = 0x4, fixed_abs, tag = 'smem constant byte address 0x4 - core index']
  #allocation1 [shape = 'u32[144,128]{1,0:T(1,128)}', space=vmem, size = 0x12000, scoped, tag = 'internal scratch']
  #allocation2 [shape = 'f32[2,64]{1,0:T(2,128)}', space=vmem, size = 0x400, scoped, tag = 'scratch operand']
  #allocation3 [shape = 'f32[2,64]{1,0:T(2,128)}', space=vmem, size = 0x400, scoped, tag = 'scratch operand']
  #allocation4 [shape = 'f32[8,2,192]{2,1,0:T(2,128)}', space=vmem, size = 0x4000, scoped, tag = 'scratch operand']
  %s0 = inlined_call_operand.vmem [shape: bf16[8,2,16], index: 0, kind: input, shape index: {}]
  %s1 = inlined_call_operand.vmem [shape: bf16[8,2,64], index: 1, kind: input, shape index: {}]
  %s2 = inlined_call_operand.vmem [shape: f32[2,64], index: 2, kind: input, shape index: {}]
  %s3 = inlined_call_operand.vmem [shape: bf16[64,64], index: 3, kind: input, shape index: {}]
  %s4 = inlined_call_operand.vmem [shape: f32[1,64], index: 4, kind: input, shape index: {}]
  %s5 = inlined_call_operand.vmem [shape: bf16[16,192], index: 5, kind: input, shape index: {}]
  %s6 = inlined_call_operand.vmem [shape: bf16[64,192], index: 6, kind: input, shape index: {}]
  %s7 = inlined_call_operand.vmem [shape: bf16[64,192], index: 7, kind: input, shape index: {}]
  %s8 = inlined_call_operand.vmem [shape: f32[1,192], index: 8, kind: input, shape index: {}]
  %s9 = inlined_call_operand.vmem [shape: f32[1,192], index: 9, kind: input, shape index: {}]
  %s10 = inlined_call_operand.vmem [shape: f32[8,2,64], index: 10, kind: input, shape index: {}]
  %s11 = inlined_call_operand.vmem [shape: f32[8,2,64], index: 11, kind: input, shape index: {}]
  %s12 = inlined_call_operand.vmem [shape: bf16[8,2,64], index: 12, kind: output, shape index: {0}]
  %s13 = inlined_call_operand.vmem [shape: bf16[8,2,64], index: 13, kind: output, shape index: {1}]
  %14 = xla_tuple %s12, %s13
  %s15 = sld [smem:[#allocation0]]
  $region66: #{nmt_forward.4} parent=0
    _
  %s17 = ssub.s32 1, %s15
  %s18 = scalar_select 0, %s17, %s15
  // Predicated region
  $region2: #{nmt_forward.4} parent=0 // pred_check
    _
  $region3: #{nmt_forward.4} parent=0 // pred_check_branch
    %20 = sbr.rel (0) target = $region5
  $region4: #{nmt_forward.4} parent=0 // pred_region
    _
  $region5: #{nmt_forward.4} parent=0 // pred_fallthru
    _
  // Predicated region
  $region6: #{nmt_forward.4} parent=0 // pred_check
    _
  $region7: #{nmt_forward.4} parent=0 // pred_check_branch
    %22 = sbr.rel (0) target = $region9
  $region8: #{nmt_forward.4} parent=0 // pred_region
    _
  $region9: #{nmt_forward.4} parent=0 // pred_fallthru
    _
  // Predicated region
  $region10: #{nmt_forward.4} parent=0 // pred_check
    _
  $region11: #{nmt_forward.4} parent=0 // pred_check_branch
    %24 = sbr.rel (0) target = $region13
  $region12: #{nmt_forward.4} parent=0 // pred_region
    _
  $region13: #{nmt_forward.4} parent=0 // pred_fallthru
    _
  // Predicated region
  $region14: #{nmt_forward.4} parent=0 // pred_check
    _
  $region15: #{nmt_forward.4} parent=0 // pred_check_branch
    %26 = sbr.rel (0) target = $region17
  $region16: #{nmt_forward.4} parent=0 // pred_region
    _
  $region17: #{nmt_forward.4} parent=0 // pred_fallthru
    _
  // Predicated region
  $region18: #{nmt_forward.4} parent=0 // pred_check
    _
  $region19: #{nmt_forward.4} parent=0 // pred_check_branch
    %28 = sbr.rel (0) target = $region21
  $region20: #{nmt_forward.4} parent=0 // pred_region
    _
  $region21: #{nmt_forward.4} parent=0 // pred_fallthru
    _
  // Predicated region
  $region22: #{nmt_forward.4} parent=0 // pred_check
    _
  $region23: #{nmt_forward.4} parent=0 // pred_check_branch
    %30 = sbr.rel (0) target = $region25
  $region24: #{nmt_forward.4} parent=0 // pred_region
    _
  $region25: #{nmt_forward.4} parent=0 // pred_fallthru
    _
  // Predicated region
  $region26: #{nmt_forward.4} parent=0 // pred_check
    _
  $region27: #{nmt_forward.4} parent=0 // pred_check_branch
    %32 = sbr.rel (0) target = $region29
  $region28: #{nmt_forward.4} parent=0 // pred_region
    _
  $region29: #{nmt_forward.4} parent=0 // pred_fallthru
    _
  // Predicated region
  $region30: #{nmt_forward.4} parent=0 // pred_check
    _
  $region31: #{nmt_forward.4} parent=0 // pred_check_branch
    %34 = sbr.rel (0) target = $region33
  $region32: #{nmt_forward.4} parent=0 // pred_region
    _
  $region33: #{nmt_forward.4} parent=0 // pred_fallthru
    _
  // Predicated region
  $region34: #{nmt_forward.4} parent=0 // pred_check
    _
  $region35: #{nmt_forward.4} parent=0 // pred_check_branch
    %36 = sbr.rel (0) target = $region37
  $region36: #{nmt_forward.4} parent=0 // pred_region
    _
  $region37: #{nmt_forward.4} parent=0 // pred_fallthru
    _
  // Predicated region
  $region38: #{nmt_forward.4} parent=0 // pred_check
    _
  $region39: #{nmt_forward.4} parent=0 // pred_check_branch
    %38 = sbr.rel (0) target = $region41
  $region40: #{nmt_forward.4} parent=0 // pred_region
    _
  $region41: #{nmt_forward.4} parent=0 // pred_fallthru
    _
  // Predicated region
  $region42: #{nmt_forward.4} parent=0 // pred_check
    _
  $region43: #{nmt_forward.4} parent=0 // pred_check_branch
    %40 = sbr.rel (0) target = $region45
  $region44: #{nmt_forward.4} parent=0 // pred_region
    _
  $region45: #{nmt_forward.4} parent=0 // pred_fallthru
    _
  // Predicated region
  $region46: #{nmt_forward.4} parent=0 // pred_check
    _
  $region47: #{nmt_forward.4} parent=0 // pred_check_branch
    %42 = sbr.rel (0) target = $region49
  $region48: #{nmt_forward.4} parent=0 // pred_region
    _
  $region49: #{nmt_forward.4} parent=0 // pred_fallthru
    _
  %v44 = vld [vmem:[%s0] sm:$0x1]
  %v45 = vld [vmem:[%s0 + $0x1] sm:$0x1]
  %v46 = vld [vmem:[%s0 + $0x2] sm:$0x1]
  %v47 = vld [vmem:[%s0 + $0x3] sm:$0x1]
  %v48 = vld [vmem:[%s0 + $0x4] sm:$0x1]
  %v49 = vld [vmem:[%s0 + $0x5] sm:$0x1]
  %v50 = vld [vmem:[%s0 + $0x6] sm:$0x1]
  %v51 = vld [vmem:[%s0 + $0x7] sm:$0x1]
  %v52 = vld [vmem:[%s5] sm:$0xff]
  %v53 = vld [vmem:[%s5 + $0x8] sm:$0xff]
  %v54 = vld [vmem:[%s8] sm:$0x3]
  %v56 = vlaneseq
  %v57 = vshrl.u32 %v56, 7
  %v58 = vsub.s32 0, %v57
  %v59 = vrot.slane %v54, %v58
  %v60 = vlaneseq
  %v61 = vshrl.u32 %v60, 7
  %v62 = vsub.s32 1, %v61
  %v63 = vrot.slane %v54, %v62
  %v74 = vcombine.low %v44, %v45
  %v75 = vcombine.low %v46, %v47
  %v76 = vcombine.low %v48, %v49
  %v77 = vcombine.low %v50, %v51
  %v79 = vunpack.c.l.s4 1966171168
  %v80 = vunpack.c.0.s8 %v79
  %v81 = vlaneseq
  %v82 = vshrl.u32 %v81, 7
  %v83 = vsub.s32 %v80, %v82
  %v84 = vrot.slane %v74, %v83
  %v86 = vunpack.c.l.s4 1966171168
  %v87 = vunpack.c.0.s8 %v86
  %v88 = vlaneseq
  %v89 = vshrl.u32 %v88, 7
  %v90 = vsub.s32 %v87, %v89
  %v91 = vrot.slane %v75, %v90
  %v93 = vunpack.c.l.s4 1966171168
  %v94 = vunpack.c.0.s8 %v93
  %v95 = vlaneseq
  %v96 = vshrl.u32 %v95, 7
  %v97 = vsub.s32 %v94, %v96
  %v98 = vrot.slane %v76, %v97
  %v100 = vunpack.c.l.s4 1966171168
  %v101 = vunpack.c.0.s8 %v100
  %v102 = vlaneseq
  %v103 = vshrl.u32 %v102, 7
  %v104 = vsub.s32 %v101, %v103
  %v105 = vrot.slane %v77, %v104
  %v106 = vcombine.low %v84, %v91
  %v107 = vcombine.low %v98, %v105
  %v109 = vunpack.c.l.s4 1966171168
  %v110 = vunpack.c.0.s8 %v109
  %v111 = vlaneseq
  %v112 = vshrl.u32 %v111, 7
  %v113 = vsub.s32 %v110, %v112
  %v114 = vrot.slane %v106, %v113
  %v116 = vunpack.c.l.s4 1966171168
  %v117 = vunpack.c.0.s8 %v116
  %v118 = vlaneseq
  %v119 = vshrl.u32 %v118, 7
  %v120 = vsub.s32 %v117, %v119
  %v121 = vrot.slane %v107, %v120
  %v122 = vcombine.low %v114, %v121
  %v125 = vunpack.c.l.b16 %v52
  %v126 = vunpack.c.h.b16 %v52
  %v127 = vunpack.c.l.b16 %v53
  %v128 = vunpack.c.h.b16 %v53
  %v129 = vpack.c.b16 %v127, %v125
  %v130 = vpack.c.b16 %v128, %v126
  %vm133 = vcmask 130048
  %v135 = vsel %vm133, %v122, 0
  %137 = vmatprep.subr.bf16.mxu0 %v130
  %138 = vmatpush1.bf16.msra.mxu0 %v129
  %139 = vmatprep.subr.bf16.mxu0 0
  %140 = vmatpush1.bf16.msra.mxu0 0
  %141 = vmatprep.subr.bf16.mxu0 0
  %142 = vmatpush1.bf16.msra.mxu0 0
  %143 = vmatprep.subr.bf16.mxu0 0
  %144 = vmatpush1.bf16.msra.mxu0 0
  %145 = vmatprep.subr.bf16.mxu0 0
  %146 = vmatpush1.bf16.msra.mxu0 0
  %147 = vmatprep.subr.bf16.mxu0 0
  %148 = vmatpush1.bf16.msra.mxu0 0
  %149 = vmatprep.subr.bf16.mxu0 0
  %150 = vmatpush1.bf16.msra.mxu0 0
  %151 = vmatprep.subr.bf16.mxu0 0
  %152 = vmatpush1.bf16.msra.mxu0 0
  %153 = vmatprep.subr.bf16.mxu0 0
  %154 = vmatpush1.bf16.msra.mxu0 0
  %155 = vmatprep.subr.bf16.mxu0 0
  %156 = vmatpush1.bf16.msra.mxu0 0
  %157 = vmatprep.subr.bf16.mxu0 0
  %158 = vmatpush1.bf16.msra.mxu0 0
  %159 = vmatprep.subr.bf16.mxu0 0
  %160 = vmatpush1.bf16.msra.mxu0 0
  %161 = vmatprep.subr.bf16.mxu0 0
  %162 = vmatpush1.bf16.msra.mxu0 0
  %163 = vmatprep.subr.bf16.mxu0 0
  %164 = vmatpush1.bf16.msra.mxu0 0
  %165 = vmatprep.subr.bf16.mxu0 0
  %166 = vmatpush1.bf16.msra.mxu0 0
  %167 = vmatprep.subr.bf16.mxu0 0
  %168 = vmatpush1.bf16.msra.mxu0 0
  %169 = vmatprep.mubr.bf16.mxu0 0
  %170 = vmatmul.mubr.bf16.gmra.mrb[0].mxu0 %v135
  %v171 = vpop.f32.mrb[0].mxu0
  %v172 = vadd.f32 %v59, %v171
  %v173 = vpop.f32.mrb[0].mxu0
  %v174 = vadd.f32 %v63, %v173
  %v175 = vpop.f32.mrb[0].mxu0
  %v176 = vadd.f32 %v59, %v175
  %v177 = vpop.f32.mrb[0].mxu0
  %v178 = vadd.f32 %v63, %v177
  %179 = vdwg.mxu0
  %v184 = vcombine.low %v172, %v174
  %v185 = vcombine.high %v172, %v174
  %v187 = vunpack.c.l.s4 1983009808
  %v188 = vunpack.c.0.s8 %v187
  %v189 = vlaneseq
  %v190 = vshrl.u32 %v189, 7
  %v191 = vsub.s32 %v188, %v190
  %v192 = vrot.slane %v184, %v191
  %v194 = vunpack.c.l.s4 1983009808
  %v195 = vunpack.c.0.s8 %v194
  %v196 = vlaneseq
  %v197 = vshrl.u32 %v196, 7
  %v198 = vsub.s32 %v195, %v197
  %v199 = vrot.slane %v185, %v198
  %v200 = vcombine.high %v192, %v192
  %v201 = vcombine.high %v199, %v199
  %v202 = vcombine.low %v176, %v178
  %v203 = vcombine.high %v176, %v178
  %v205 = vunpack.c.l.s4 1983009808
  %v206 = vunpack.c.0.s8 %v205
  %v207 = vlaneseq
  %v208 = vshrl.u32 %v207, 7
  %v209 = vsub.s32 %v206, %v208
  %v210 = vrot.slane %v202, %v209
  %v212 = vunpack.c.l.s4 1983009808
  %v213 = vunpack.c.0.s8 %v212
  %v214 = vlaneseq
  %v215 = vshrl.u32 %v214, 7
  %v216 = vsub.s32 %v213, %v215
  %v217 = vrot.slane %v203, %v216
  %v218 = vcombine.high %v210, %v210
  %v219 = vcombine.high %v217, %v217
  %vm228 = vcmask 1041408
  %vm229 = vcmask 519170
  %vm230 = vmor %vm229, %vm228
  %231 = vst.msk [vmem:[#allocation4] sm:$0xf] %vm230, %v192
  %232 = vst.msk [vmem:[#allocation4 + $0x4] sm:$0xf] %vm230, %v200
  %233 = vst.msk [vmem:[#allocation4 + $0x8] sm:$0xf] %vm230, %v199
  %234 = vst.msk [vmem:[#allocation4 + $0xc] sm:$0xf] %vm230, %v201
  %235 = vst.msk [vmem:[#allocation4 + $0x10] sm:$0xf] %vm230, %v210
  %236 = vst.msk [vmem:[#allocation4 + $0x14] sm:$0xf] %vm230, %v218
  %237 = vst.msk [vmem:[#allocation4 + $0x18] sm:$0xf] %vm230, %v217
  %238 = vst.msk [vmem:[#allocation4 + $0x1c] sm:$0xf] %vm230, %v219
  %v239 = vld [vmem:[%s2] sm:$0x3]
  %v240 = vpack.c.bf16 %v239, %v239
  %v241 = vld [vmem:[%s3] sm:$0xf]
  %v242 = vld [vmem:[%s3 + $0x4] sm:$0xf]
  %v243 = vld [vmem:[%s3 + $0x8] sm:$0xf]
  %v244 = vld [vmem:[%s3 + $0xc] sm:$0xf]
  %v245 = vld [vmem:[%s3 + $0x10] sm:$0xf]
  %v246 = vld [vmem:[%s3 + $0x14] sm:$0xf]
  %v247 = vld [vmem:[%s3 + $0x18] sm:$0xf]
  %v248 = vld [vmem:[%s3 + $0x1c] sm:$0xf]
  %v249 = vld [vmem:[%s4] sm:$0x1]
  %v251 = vlaneseq
  %v252 = vshrl.u32 %v251, 7
  %v253 = vsub.s32 0, %v252
  %v254 = vrot.slane %v249, %v253
  %v264 = vunpack.c.l.b16 %v241
  %v265 = vunpack.c.l.b16 %v242
  %v266 = vunpack.c.l.b16 %v243
  %v267 = vunpack.c.l.b16 %v244
  %v268 = vunpack.c.l.b16 %v245
  %v269 = vunpack.c.l.b16 %v246
  %v270 = vunpack.c.l.b16 %v247
  %v271 = vunpack.c.l.b16 %v248
  %v272 = vpack.c.b16 %v265, %v264
  %v273 = vpack.c.b16 %v267, %v266
  %v274 = vpack.c.b16 %v269, %v268
  %v275 = vpack.c.b16 %v271, %v270
  %vm280 = vcmask 523264
  %v282 = vsel %vm280, %v240, 0
  %284 = vmatprep.subr.bf16.mxu0 0
  %285 = vmatpush1.bf16.msra.mxu0 %v272
  %286 = vmatprep.subr.bf16.mxu0 0
  %287 = vmatpush1.bf16.msra.mxu0 %v273
  %288 = vmatprep.subr.bf16.mxu0 0
  %289 = vmatpush1.bf16.msra.mxu0 %v274
  %290 = vmatprep.subr.bf16.mxu0 0
  %291 = vmatpush1.bf16.msra.mxu0 %v275
  %292 = vmatprep.subr.bf16.mxu0 0
  %293 = vmatpush1.bf16.msra.mxu0 0
  %294 = vmatprep.subr.bf16.mxu0 0
  %295 = vmatpush1.bf16.msra.mxu0 0
  %296 = vmatprep.subr.bf16.mxu0 0
  %297 = vmatpush1.bf16.msra.mxu0 0
  %298 = vmatprep.subr.bf16.mxu0 0
  %299 = vmatpush1.bf16.msra.mxu0 0
  %300 = vmatprep.subr.bf16.mxu0 0
  %301 = vmatpush1.bf16.msra.mxu0 0
  %302 = vmatprep.subr.bf16.mxu0 0
  %303 = vmatpush1.bf16.msra.mxu0 0
  %304 = vmatprep.subr.bf16.mxu0 0
  %305 = vmatpush1.bf16.msra.mxu0 0
  %306 = vmatprep.subr.bf16.mxu0 0
  %307 = vmatpush1.bf16.msra.mxu0 0
  %308 = vmatprep.subr.bf16.mxu0 0
  %309 = vmatpush1.bf16.msra.mxu0 0
  %310 = vmatprep.subr.bf16.mxu0 0
  %311 = vmatpush1.bf16.msra.mxu0 0
  %312 = vmatprep.subr.bf16.mxu0 0
  %313 = vmatpush1.bf16.msra.mxu0 0
  %314 = vmatprep.subr.bf16.mxu0 0
  %315 = vmatpush1.bf16.msra.mxu0 0
  %316 = vmatprep.mubr.bf16.mxu0 0
  %317 = vmatmul.mubr.bf16.gmra.mrb[0].mxu0 %v282
  %v318 = vpop.f32.mrb[0].mxu0
  %v319 = vadd.f32 %v254, %v318
  %v320 = vpop.f32.mrb[0].mxu0
  %v321 = vpop.f32.mrb[0].mxu0
  %v322 = vpop.f32.mrb[0].mxu0
  %323 = vdwg.mxu0
  %vm324 = vcmask 517120
  %325 = vst.msk [vmem:[#allocation2] sm:$0x3] %vm324, %v319
  %326 = vst.msk [vmem:[#allocation3] sm:$0x3] %vm324, 0.0
  %v327 = vld [vmem:[%s1] sm:$0x1]
  %v328 = vld [vmem:[%s1 + $0x1] sm:$0x1]
  %v329 = vld [vmem:[%s1 + $0x2] sm:$0x1]
  %v330 = vld [vmem:[%s1 + $0x3] sm:$0x1]
  %v331 = vld [vmem:[%s1 + $0x4] sm:$0x1]
  %v332 = vld [vmem:[%s1 + $0x5] sm:$0x1]
  %v333 = vld [vmem:[%s1 + $0x6] sm:$0x1]
  %v334 = vld [vmem:[%s1 + $0x7] sm:$0x1]
  %v337 = vpack.i.b16 %v328, %v327
  %v338 = vshrl.u32 %v327, 16
  %v339 = vshrl.u32 %v328, 16
  %v340 = vpack.i.b16 %v339, %v338
  %v343 = vpack.i.b16 %v330, %v329
  %v344 = vshrl.u32 %v329, 16
  %v345 = vshrl.u32 %v330, 16
  %v346 = vpack.i.b16 %v345, %v344
  %v349 = vpack.i.b16 %v332, %v331
  %v350 = vshrl.u32 %v331, 16
  %v351 = vshrl.u32 %v332, 16
  %v352 = vpack.i.b16 %v351, %v350
  %v355 = vpack.i.b16 %v334, %v333
  %v356 = vshrl.u32 %v333, 16
  %v357 = vshrl.u32 %v334, 16
  %v358 = vpack.i.b16 %v357, %v356
  %v359 = vld [vmem:[%s6] sm:$0xff]
  %v360 = vld [vmem:[%s6 + $0x8] sm:$0xff]
  %v361 = vld [vmem:[%s6 + $0x10] sm:$0xff]
  %v362 = vld [vmem:[%s6 + $0x18] sm:$0xff]
  %v363 = vld [vmem:[%s6 + $0x20] sm:$0xff]
  %v364 = vld [vmem:[%s6 + $0x28] sm:$0xff]
  %v365 = vld [vmem:[%s6 + $0x30] sm:$0xff]
  %v366 = vld [vmem:[%s6 + $0x38] sm:$0xff]
  %v367 = vld [vmem:[%s7] sm:$0xff]
  %v368 = vld [vmem:[%s7 + $0x8] sm:$0xff]
  %v369 = vld [vmem:[%s7 + $0x10] sm:$0xff]
  %v370 = vld [vmem:[%s7 + $0x18] sm:$0xff]
  %v371 = vld [vmem:[%s7 + $0x20] sm:$0xff]
  %v372 = vld [vmem:[%s7 + $0x28] sm:$0xff]
  %v373 = vld [vmem:[%s7 + $0x30] sm:$0xff]
  %v374 = vld [vmem:[%s7 + $0x38] sm:$0xff]
  %v375 = vld [vmem:[%s9] sm:$0x3]
  %v376 = vld [vmem:[#allocation2] sm:$0x3]
  %v377 = vld [vmem:[#allocation3] sm:$0x3]
  %v378 = vld [vmem:[#allocation4] sm:$0xf]
  %v379 = vpack.c.bf16 %v377, %v377
  %v388 = vunpack.c.l.b16 %v359
  %v389 = vunpack.c.h.b16 %v359
  %v390 = vunpack.c.l.b16 %v360
  %v391 = vunpack.c.h.b16 %v360
  %v392 = vunpack.c.l.b16 %v361
  %v393 = vunpack.c.h.b16 %v361
  %v394 = vunpack.c.l.b16 %v362
  %v395 = vunpack.c.h.b16 %v362
  %v396 = vunpack.c.l.b16 %v363
  %v397 = vunpack.c.h.b16 %v363
  %v398 = vunpack.c.l.b16 %v364
  %v399 = vunpack.c.h.b16 %v364
  %v400 = vunpack.c.l.b16 %v365
  %v401 = vunpack.c.h.b16 %v365
  %v402 = vunpack.c.l.b16 %v366
  %v403 = vunpack.c.h.b16 %v366
  %v404 = vpack.c.b16 %v390, %v388
  %v405 = vpack.c.b16 %v391, %v389
  %v406 = vpack.c.b16 %v394, %v392
  %v407 = vpack.c.b16 %v395, %v393
  %v408 = vpack.c.b16 %v398, %v396
  %v409 = vpack.c.b16 %v399, %v397
  %v410 = vpack.c.b16 %v402, %v400
  %v411 = vpack.c.b16 %v403, %v401
  %v421 = vsel %vm280, %v379, 0
  %423 = vmatprep.subr.bf16.mxu0 %v405
  %424 = vmatpush1.bf16.msra.mxu0 %v404
  %425 = vmatprep.subr.bf16.mxu0 %v407
  %426 = vmatpush1.bf16.msra.mxu0 %v406
  %427 = vmatprep.subr.bf16.mxu0 %v409
  %428 = vmatpush1.bf16.msra.mxu0 %v408
  %429 = vmatprep.subr.bf16.mxu0 %v411
  %430 = vmatpush1.bf16.msra.mxu0 %v410
  %431 = vmatprep.subr.bf16.mxu0 0
  %432 = vmatpush1.bf16.msra.mxu0 0
  %433 = vmatprep.subr.bf16.mxu0 0
  %434 = vmatpush1.bf16.msra.mxu0 0
  %435 = vmatprep.subr.bf16.mxu0 0
  %436 = vmatpush1.bf16.msra.mxu0 0
  %437 = vmatprep.subr.bf16.mxu0 0
  %438 = vmatpush1.bf16.msra.mxu0 0
  %439 = vmatprep.subr.bf16.mxu0 0
  %440 = vmatpush1.bf16.msra.mxu0 0
  %441 = vmatprep.subr.bf16.mxu0 0
  %442 = vmatpush1.bf16.msra.mxu0 0
  %443 = vmatprep.subr.bf16.mxu0 0
  %444 = vmatpush1.bf16.msra.mxu0 0
  %445 = vmatprep.subr.bf16.mxu0 0
  %446 = vmatpush1.bf16.msra.mxu0 0
  %447 = vmatprep.subr.bf16.mxu0 0
  %448 = vmatpush1.bf16.msra.mxu0 0
  %449 = vmatprep.subr.bf16.mxu0 0
  %450 = vmatpush1.bf16.msra.mxu0 0
  %451 = vmatprep.subr.bf16.mxu0 0
  %452 = vmatpush1.bf16.msra.mxu0 0
  %453 = vmatprep.subr.bf16.mxu0 0
  %454 = vmatpush1.bf16.msra.mxu0 0
  %455 = vmatprep.mubr.bf16.mxu0 0
  %456 = vmatmul.mubr.bf16.gmra.mrb[0].mxu0 %v421
  %v457 = vpop.f32.mrb[0].mxu0
  %v458 = vadd.f32 0.0, %v457
  %v459 = vpop.f32.mrb[0].mxu0
  %v460 = vadd.f32 0.0, %v459
  %v461 = vpop.f32.mrb[0].mxu0
  %v462 = vpop.f32.mrb[0].mxu0
  %463 = vdwg.mxu0
  %v466 = vcombine.low %v458, %v460
  %v468 = vunpack.c.l.s4 1983009808
  %v469 = vunpack.c.0.s8 %v468
  %v470 = vlaneseq
  %v471 = vshrl.u32 %v470, 7
  %v472 = vsub.s32 %v469, %v471
  %v473 = vrot.slane %v466, %v472
  %v475 = vadd.f32 %v378, %v473
  %v476 = vpack.c.bf16 %v376, %v376
  %v478 = vlaneseq
  %v479 = vshrl.u32 %v478, 7
  %v480 = vsub.s32 0, %v479
  %v481 = vrot.slane %v375, %v480
  %v482 = vlaneseq
  %v483 = vshrl.u32 %v482, 7
  %v484 = vsub.s32 1, %v483
  %v485 = vrot.slane %v375, %v484
  %v496 = vunpack.c.l.b16 %v367
  %v497 = vunpack.c.h.b16 %v367
  %v498 = vunpack.c.l.b16 %v368
  %v499 = vunpack.c.h.b16 %v368
  %v500 = vunpack.c.l.b16 %v369
  %v501 = vunpack.c.h.b16 %v369
  %v502 = vunpack.c.l.b16 %v370
  %v503 = vunpack.c.h.b16 %v370
  %v504 = vunpack.c.l.b16 %v371
  %v505 = vunpack.c.h.b16 %v371
  %v506 = vunpack.c.l.b16 %v372
  %v507 = vunpack.c.h.b16 %v372
  %v508 = vunpack.c.l.b16 %v373
  %v509 = vunpack.c.h.b16 %v373
  %v510 = vunpack.c.l.b16 %v374
  %v511 = vunpack.c.h.b16 %v374
  %v512 = vpack.c.b16 %v498, %v496
  %v513 = vpack.c.b16 %v499, %v497
  %v514 = vpack.c.b16 %v502, %v500
  %v515 = vpack.c.b16 %v503, %v501
  %v516 = vpack.c.b16 %v506, %v504
  %v517 = vpack.c.b16 %v507, %v505
  %v518 = vpack.c.b16 %v510, %v508
  %v519 = vpack.c.b16 %v511, %v509
  %v529 = vsel %vm280, %v476, 0
  %531 = vmatprep.subr.bf16.mxu0 %v513
  %532 = vmatpush1.bf16.msra.mxu0 %v512
  %533 = vmatprep.subr.bf16.mxu0 %v515
  %534 = vmatpush1.bf16.msra.mxu0 %v514
  %535 = vmatprep.subr.bf16.mxu0 %v517
  %536 = vmatpush1.bf16.msra.mxu0 %v516
  %537 = vmatprep.subr.bf16.mxu0 %v519
  %538 = vmatpush1.bf16.msra.mxu0 %v518
  %539 = vmatprep.subr.bf16.mxu0 0
  %540 = vmatpush1.bf16.msra.mxu0 0
  %541 = vmatprep.subr.bf16.mxu0 0
  %542 = vmatpush1.bf16.msra.mxu0 0
  %543 = vmatprep.subr.bf16.mxu0 0
  %544 = vmatpush1.bf16.msra.mxu0 0
  %545 = vmatprep.subr.bf16.mxu0 0
  %546 = vmatpush1.bf16.msra.mxu0 0
  %547 = vmatprep.subr.bf16.mxu0 0
  %548 = vmatpush1.bf16.msra.mxu0 0
  %549 = vmatprep.subr.bf16.mxu0 0
  %550 = vmatpush1.bf16.msra.mxu0 0
  %551 = vmatprep.subr.bf16.mxu0 0
  %552 = vmatpush1.bf16.msra.mxu0 0
  %553 = vmatprep.subr.bf16.mxu0 0
  %554 = vmatpush1.bf16.msra.mxu0 0
  %555 = vmatprep.subr.bf16.mxu0 0
  %556 = vmatpush1.bf16.msra.mxu0 0
  %557 = vmatprep.subr.bf16.mxu0 0
  %558 = vmatpush1.bf16.msra.mxu0 0
  %559 = vmatprep.subr.bf16.mxu0 0
  %560 = vmatpush1.bf16.msra.mxu0 0
  %561 = vmatprep.subr.bf16.mxu0 0
  %562 = vmatpush1.bf16.msra.mxu0 0
  %563 = vmatprep.mubr.bf16.mxu0 0
  %564 = vmatmul.mubr.bf16.gmra.mrb[0].mxu0 %v529
  %v565 = vpop.f32.mrb[0].mxu0
  %v566 = vadd.f32 %v481, %v565
  %v567 = vpop.f32.mrb[0].mxu0
  %v568 = vadd.f32 %v485, %v567
  %v569 = vpop.f32.mrb[0].mxu0
  %v570 = vpop.f32.mrb[0].mxu0
  %571 = vdwg.mxu0
  %v572 = vadd.f32 %v475, %v566
  %v573 = vxor.u32 %v572, 2147483648
  %v574 = vmul.f32 %v573, 1.442695
  %v575 = vpow.pop %v574
  %v576 = vadd.f32 %v575, 1.0
  %v577 = vrcp.pop %v576
  %v578 = vmul.f32 1.0, %v577
  %v579 = vmul.f32 %v578, %v568
  %v581 = vrot.slane %v475, 2
  %v583 = vadd.f32 %v581, %v579
  %v584 = vtanh.pop %v583
  %v585 = vsub.f32 1.0, %v578
  %587 = vrot.lane.b32.xlu0 %v584, 64
  %v588 = vpop.permute.xlu0 %587
  %v590 = vmul.f32 %v585, %v588
  %v593 = vunpack.c.l.s4 1983009808
  %v594 = vunpack.c.0.s8 %v593
  %v595 = vlaneseq
  %v596 = vshrl.u32 %v595, 7
  %v597 = vsub.s32 %v594, %v596
  %v598 = vrot.slane %v376, %v597
  %599 = vrot.lane.b32.xlu0 %v598, 64
  %v600 = vpop.permute.xlu0 %599
  %v602 = vmul.f32 %v578, %v600
  %v603 = vadd.f32 %v590, %v602
  %v606 = vunpack.c.l.s4 1983009808
  %v607 = vunpack.c.0.s8 %v606
  %v608 = vlaneseq
  %v609 = vshrl.u32 %v608, 7
  %v610 = vsub.s32 %v607, %v609
  %v611 = vrot.slane %v603, %v610
  %612 = vrot.lane.b32.xlu0 %v611, 64
  %v613 = vpop.permute.xlu0 %612
  %615 = vst.msk [vmem:[#allocation2] sm:$0x3] %vm324, %v613
  %v616 = vpack.c.bf16 %v603, %v603
  %v619 = vunpack.c.l.s4 1966171168
  %v620 = vunpack.c.0.s8 %v619
  %v621 = vlaneseq
  %v622 = vshrl.u32 %v621, 7
  %v623 = vsub.s32 %v620, %v622
  %v624 = vrot.slane %v616, %v623
  %v626 = vunpack.c.l.s4 1966171168
  %v627 = vunpack.c.0.s8 %v626
  %v628 = vlaneseq
  %v629 = vshrl.u32 %v628, 7
  %v630 = vsub.s32 %v627, %v629
  %v631 = vrot.slane %v624, %v630
  %v632 = vunpack.i.l.s16 %v631
  %v633 = vunpack.i.h.s16 %v631
  %v634 = vpack.i.b16 %v632, %v632
  %v635 = vlaneseq
  %v636 = vshrl.u32 %v635, 7
  %v637 = vsub.s32 0, %v636
  %v638 = vrot.slane %v634, %v637
  %639 = vrot.lane.b32.xlu0 %v638, 64
  %v640 = vpop.permute.xlu0 %639
  %v641 = vcombine.low %v337, %v343
  %v642 = vcombine.low %v349, %v355
  %v644 = vunpack.c.l.s4 1966171168
  %v645 = vunpack.c.0.s8 %v644
  %v646 = vlaneseq
  %v647 = vshrl.u32 %v646, 7
  %v648 = vsub.s32 %v645, %v647
  %v649 = vrot.slane %v641, %v648
  %v651 = vunpack.c.l.s4 1966171168
  %v652 = vunpack.c.0.s8 %v651
  %v653 = vlaneseq
  %v654 = vshrl.u32 %v653, 7
  %v655 = vsub.s32 %v652, %v654
  %v656 = vrot.slane %v642, %v655
  %v657 = vcombine.low %v649, %v656
  %v659 = vunpack.c.l.s4 1966171168
  %v660 = vunpack.c.0.s8 %v659
  %v661 = vlaneseq
  %v662 = vshrl.u32 %v661, 7
  %v663 = vsub.s32 %v660, %v662
  %v664 = vrot.slane %v657, %v663
  %v666 = vsel %vm280, %v640, 0
  %v669 = vsel %vm280, %v664, 0
  %671 = vmatprep.subr.bf16.mxu0 0
  %672 = vmatpush1.bf16.xpose.msra.mxu0 %v669
  %673 = vmatprep.subr.bf16.mxu0 0
  %674 = vmatpush1.bf16.xpose.msra.mxu0 0
  %675 = vmatprep.subr.bf16.mxu0 0
  %676 = vmatpush1.bf16.xpose.msra.mxu0 0
  %677 = vmatprep.subr.bf16.mxu0 0
  %678 = vmatpush1.bf16.xpose.msra.mxu0 0
  %679 = vmatprep.subr.bf16.mxu0 0
  %680 = vmatpush1.bf16.xpose.msra.mxu0 0
  %681 = vmatprep.subr.bf16.mxu0 0
  %682 = vmatpush1.bf16.xpose.msra.mxu0 0
  %683 = vmatprep.subr.bf16.mxu0 0
  %684 = vmatpush1.bf16.xpose.msra.mxu0 0
  %685 = vmatprep.subr.bf16.mxu0 0
  %686 = vmatpush1.bf16.xpose.msra.mxu0 0
  %687 = vmatprep.subr.bf16.mxu0 0
  %688 = vmatpush1.bf16.xpose.msra.mxu0 0
  %689 = vmatprep.subr.bf16.mxu0 0
  %690 = vmatpush1.bf16.xpose.msra.mxu0 0
  %691 = vmatprep.subr.bf16.mxu0 0
  %692 = vmatpush1.bf16.xpose.msra.mxu0 0
  %693 = vmatprep.subr.bf16.mxu0 0
  %694 = vmatpush1.bf16.xpose.msra.mxu0 0
  %695 = vmatprep.subr.bf16.mxu0 0
  %696 = vmatpush1.bf16.xpose.msra.mxu0 0
  %697 = vmatprep.subr.bf16.mxu0 0
  %698 = vmatpush1.bf16.xpose.msra.mxu0 0
  %699 = vmatprep.subr.bf16.mxu0 0
  %700 = vmatpush1.bf16.xpose.msra.mxu0 0
  %701 = vmatprep.subr.bf16.mxu0 0
  %702 = vmatpush1.bf16.xpose.msra.mxu0 0
  %703 = vmatprep.mubr.bf16.mxu0 0
  %704 = vmatmul.mubr.bf16.gmra.mrb[0].mxu0 %v666
  %v705 = vpop.f32.mrb[0].mxu0
  %v706 = vadd.f32 0.0, %v705
  %v707 = vpop.f32.mrb[0].mxu0
  %v708 = vpop.f32.mrb[0].mxu0
  %v709 = vpop.f32.mrb[0].mxu0
  %710 = vdwg.mxu0
  %v711 = vpack.i.b16 %v633, %v633
  %v712 = vlaneseq
  %v713 = vshrl.u32 %v712, 7
  %v714 = vsub.s32 0, %v713
  %v715 = vrot.slane %v711, %v714
  %716 = vrot.lane.b32.xlu0 %v715, 64
  %v717 = vpop.permute.xlu0 %716
  %v718 = vcombine.low %v340, %v346
  %v719 = vcombine.low %v352, %v358
  %v721 = vunpack.c.l.s4 1966171168
  %v722 = vunpack.c.0.s8 %v721
  %v723 = vlaneseq
  %v724 = vshrl.u32 %v723, 7
  %v725 = vsub.s32 %v722, %v724
  %v726 = vrot.slane %v718, %v725
  %v728 = vunpack.c.l.s4 1966171168
  %v729 = vunpack.c.0.s8 %v728
  %v730 = vlaneseq
  %v731 = vshrl.u32 %v730, 7
  %v732 = vsub.s32 %v729, %v731
  %v733 = vrot.slane %v719, %v732
  %v734 = vcombine.low %v726, %v733
  %v736 = vunpack.c.l.s4 1966171168
  %v737 = vunpack.c.0.s8 %v736
  %v738 = vlaneseq
  %v739 = vshrl.u32 %v738, 7
  %v740 = vsub.s32 %v737, %v739
  %v741 = vrot.slane %v734, %v740
  %v743 = vsel %vm280, %v717, 0
  %v746 = vsel %vm280, %v741, 0
  %748 = vmatprep.subr.bf16.mxu0 0
  %749 = vmatpush1.bf16.xpose.msra.mxu0 %v746
  %750 = vmatprep.subr.bf16.mxu0 0
  %751 = vmatpush1.bf16.xpose.msra.mxu0 0
  %752 = vmatprep.subr.bf16.mxu0 0
  %753 = vmatpush1.bf16.xpose.msra.mxu0 0
  %754 = vmatprep.subr.bf16.mxu0 0
  %755 = vmatpush1.bf16.xpose.msra.mxu0 0
  %756 = vmatprep.subr.bf16.mxu0 0
  %757 = vmatpush1.bf16.xpose.msra.mxu0 0
  %758 = vmatprep.subr.bf16.mxu0 0
  %759 = vmatpush1.bf16.xpose.msra.mxu0 0
  %760 = vmatprep.subr.bf16.mxu0 0
  %761 = vmatpush1.bf16.xpose.msra.mxu0 0
  %762 = vmatprep.subr.bf16.mxu0 0
  %763 = vmatpush1.bf16.xpose.msra.mxu0 0
  %764 = vmatprep.subr.bf16.mxu0 0
  %765 = vmatpush1.bf16.xpose.msra.mxu0 0
  %766 = vmatprep.subr.bf16.mxu0 0
  %767 = vmatpush1.bf16.xpose.msra.mxu0 0
  %768 = vmatprep.subr.bf16.mxu0 0
  %769 = vmatpush1.bf16.xpose.msra.mxu0 0
  %770 = vmatprep.subr.bf16.mxu0 0
  %771 = vmatpush1.bf16.xpose.msra.mxu0 0
  %772 = vmatprep.subr.bf16.mxu0 0
  %773 = vmatpush1.bf16.xpose.msra.mxu0 0
  %774 = vmatprep.subr.bf16.mxu0 0
  %775 = vmatpush1.bf16.xpose.msra.mxu0 0
  %776 = vmatprep.subr.bf16.mxu0 0
  %777 = vmatpush1.bf16.xpose.msra.mxu0 0
  %778 = vmatprep.subr.bf16.mxu0 0
  %779 = vmatpush1.bf16.xpose.msra.mxu0 0
  %780 = vmatprep.mubr.bf16.mxu0 0
  %781 = vmatmul.mubr.bf16.gmra.mrb[0].mxu0 %v743
  %v782 = vpop.f32.mrb[0].mxu0
  %v783 = vadd.f32 0.0, %v782
  %v784 = vpop.f32.mrb[0].mxu0
  %v785 = vpop.f32.mrb[0].mxu0
  %v786 = vpop.f32.mrb[0].mxu0
  %787 = vdwg.mxu0
  %vm788 = vcmask 57344
  %v789 = vsel %vm788, %v706, -inf
  %790 = vmax.xlane.f32.xlu0 %v789
  %v791 = vpop.xlane.xlu0 %790
  %v792 = vsel %vm788, %v783, -inf
  %793 = vmax.xlane.f32.xlu0 %v792
  %v794 = vpop.xlane.xlu0 %793
  %v795 = vsub.f32 %v706, %v791
  %v796 = vsub.f32 %v783, %v794
  %v797 = vmul.f32 %v795, 1.442695
  %v798 = vpow.pop %v797
  %v799 = vmul.f32 %v796, 1.442695
  %v800 = vpow.pop %v799
  %v801 = vsel %vm788, %v798, 0.0
  %802 = vadd.xlane.f32.xlu0 %v801
  %v803 = vpop.xlane.xlu0 %802
  %v804 = vsel %vm788, %v800, 0.0
  %805 = vadd.xlane.f32.xlu0 %v804
  %v806 = vpop.xlane.xlu0 %805
  %v807 = vrcp.pop %v803
  %v808 = vmul.f32 %v798, %v807
  %v809 = vrcp.pop %v806
  %v810 = vmul.f32 %v800, %v809
  %v811 = vpack.c.bf16 %v808, %v808
  %v812 = vpack.c.bf16 %v810, %v810
  %vm813 = vcmask 64512
  %v815 = vsel %vm813, %v811, 0
  %vm817 = vcmask 1043456
  %v818 = vsel %vm817, %v664, 0
  %820 = vmatprep.subr.bf16.mxu0 0
  %821 = vmatpush1.bf16.msra.mxu0 %v818
  %822 = vmatprep.subr.bf16.mxu0 0
  %823 = vmatpush1.bf16.msra.mxu0 0
  %824 = vmatprep.subr.bf16.mxu0 0
  %825 = vmatpush1.bf16.msra.mxu0 0
  %826 = vmatprep.subr.bf16.mxu0 0
  %827 = vmatpush1.bf16.msra.mxu0 0
  %828 = vmatprep.subr.bf16.mxu0 0
  %829 = vmatpush1.bf16.msra.mxu0 0
  %830 = vmatprep.subr.bf16.mxu0 0
  %831 = vmatpush1.bf16.msra.mxu0 0
  %832 = vmatprep.subr.bf16.mxu0 0
  %833 = vmatpush1.bf16.msra.mxu0 0
  %834 = vmatprep.subr.bf16.mxu0 0
  %835 = vmatpush1.bf16.msra.mxu0 0
  %836 = vmatprep.subr.bf16.mxu0 0
  %837 = vmatpush1.bf16.msra.mxu0 0
  %838 = vmatprep.subr.bf16.mxu0 0
  %839 = vmatpush1.bf16.msra.mxu0 0
  %840 = vmatprep.subr.bf16.mxu0 0
  %841 = vmatpush1.bf16.msra.mxu0 0
  %842 = vmatprep.subr.bf16.mxu0 0
  %843 = vmatpush1.bf16.msra.mxu0 0
  %844 = vmatprep.subr.bf16.mxu0 0
  %845 = vmatpush1.bf16.msra.mxu0 0
  %846 = vmatprep.subr.bf16.mxu0 0
  %847 = vmatpush1.bf16.msra.mxu0 0
  %848 = vmatprep.subr.bf16.mxu0 0
  %849 = vmatpush1.bf16.msra.mxu0 0
  %850 = vmatprep.subr.bf16.mxu0 0
  %851 = vmatpush1.bf16.msra.mxu0 0
  %852 = vmatprep.mubr.bf16.mxu0 0
  %853 = vmatmul.mubr.bf16.gmra.mrb[0].mxu0 %v815
  %v854 = vpop.f32.mrb[0].mxu0
  %v855 = vadd.f32 0.0, %v854
  %v856 = vpop.f32.mrb[0].mxu0
  %v857 = vpop.f32.mrb[0].mxu0
  %v858 = vpop.f32.mrb[0].mxu0
  %859 = vdwg.mxu0
  %v861 = vsel %vm813, %v812, 0
  %v863 = vsel %vm817, %v741, 0
  %865 = vmatprep.subr.bf16.mxu0 0
  %866 = vmatpush1.bf16.msra.mxu0 %v863
  %867 = vmatprep.subr.bf16.mxu0 0
  %868 = vmatpush1.bf16.msra.mxu0 0
  %869 = vmatprep.subr.bf16.mxu0 0
  %870 = vmatpush1.bf16.msra.mxu0 0
  %871 = vmatprep.subr.bf16.mxu0 0
  %872 = vmatpush1.bf16.msra.mxu0 0
  %873 = vmatprep.subr.bf16.mxu0 0
  %874 = vmatpush1.bf16.msra.mxu0 0
  %875 = vmatprep.subr.bf16.mxu0 0
  %876 = vmatpush1.bf16.msra.mxu0 0
  %877 = vmatprep.subr.bf16.mxu0 0
  %878 = vmatpush1.bf16.msra.mxu0 0
  %879 = vmatprep.subr.bf16.mxu0 0
  %880 = vmatpush1.bf16.msra.mxu0 0
  %881 = vmatprep.subr.bf16.mxu0 0
  %882 = vmatpush1.bf16.msra.mxu0 0
  %883 = vmatprep.subr.bf16.mxu0 0
  %884 = vmatpush1.bf16.msra.mxu0 0
  %885 = vmatprep.subr.bf16.mxu0 0
  %886 = vmatpush1.bf16.msra.mxu0 0
  %887 = vmatprep.subr.bf16.mxu0 0
  %888 = vmatpush1.bf16.msra.mxu0 0
  %889 = vmatprep.subr.bf16.mxu0 0
  %890 = vmatpush1.bf16.msra.mxu0 0
  %891 = vmatprep.subr.bf16.mxu0 0
  %892 = vmatpush1.bf16.msra.mxu0 0
  %893 = vmatprep.subr.bf16.mxu0 0
  %894 = vmatpush1.bf16.msra.mxu0 0
  %895 = vmatprep.subr.bf16.mxu0 0
  %896 = vmatpush1.bf16.msra.mxu0 0
  %897 = vmatprep.mubr.bf16.mxu0 0
  %898 = vmatmul.mubr.bf16.gmra.mrb[0].mxu0 %v861
  %v899 = vpop.f32.mrb[0].mxu0
  %v900 = vadd.f32 0.0, %v899
  %v901 = vpop.f32.mrb[0].mxu0
  %v902 = vpop.f32.mrb[0].mxu0
  %v903 = vpop.f32.mrb[0].mxu0
  %904 = vdwg.mxu0
  %v907 = vrot.slane %v900, 7
  %vm908 = vcmask 1041409
  %v909 = vsel %vm908, %v907, %v855
  %911 = vst.msk [vmem:[#allocation3] sm:$0x3] %vm324, %v909
  %v912 = vld [vmem:[%s10] sm:$0x3]
  %v914 = vrot.slane %v912, 1
  %v917 = vmul.f32 %v855, %v912
  %v918 = vmul.f32 %v900, %v914
  %v919 = vpack.c.bf16 %v917, %v917
  %v920 = vpack.c.bf16 %v918, %v918
  %v924 = vunpack.c.l.s4 1966171168
  %v925 = vunpack.c.0.s8 %v924
  %v926 = vlaneseq
  %v927 = vshrl.u32 %v926, 7
  %v928 = vsub.s32 %v925, %v927
  %v929 = vrot.slane %v919, %v928
  %v931 = vunpack.c.l.s4 1966171168
  %v932 = vunpack.c.0.s8 %v931
  %v933 = vlaneseq
  %v934 = vshrl.u32 %v933, 7
  %v935 = vsub.s32 %v932, %v934
  %v936 = vrot.slane %v929, %v935
  %v938 = vunpack.c.l.s4 1966171168
  %v939 = vunpack.c.0.s8 %v938
  %v940 = vlaneseq
  %v941 = vshrl.u32 %v940, 7
  %v942 = vsub.s32 %v939, %v941
  %v943 = vrot.slane %v920, %v942
  %v945 = vunpack.c.l.s4 1966171168
  %v946 = vunpack.c.0.s8 %v945
  %v947 = vlaneseq
  %v948 = vshrl.u32 %v947, 7
  %v949 = vsub.s32 %v946, %v948
  %v950 = vrot.slane %v943, %v949
  %v952 = vunpack.c.l.s4 1935823168
  %v953 = vunpack.c.0.s8 %v952
  %v954 = vlaneseq
  %v955 = vshrl.u32 %v954, 7
  %v956 = vsub.s32 %v953, %v955
  %v957 = vrot.slane %v936, %v956
  %v959 = vunpack.c.l.s4 1935823168
  %v960 = vunpack.c.0.s8 %v959
  %v961 = vlaneseq
  %v962 = vshrl.u32 %v961, 7
  %v963 = vsub.s32 %v960, %v962
  %v964 = vrot.slane %v957, %v963
  %v966 = vunpack.c.l.s4 1935823168
  %v967 = vunpack.c.0.s8 %v966
  %v968 = vlaneseq
  %v969 = vshrl.u32 %v968, 7
  %v970 = vsub.s32 %v967, %v969
  %v971 = vrot.slane %v950, %v970
  %v973 = vunpack.c.l.s4 1935823168
  %v974 = vunpack.c.0.s8 %v973
  %v975 = vlaneseq
  %v976 = vshrl.u32 %v975, 7
  %v977 = vsub.s32 %v974, %v976
  %v978 = vrot.slane %v971, %v977
  %v979 = vunpack.c.l.b16 %v964
  %v980 = vunpack.c.l.b16 %v978
  %v981 = vrot.slane %v980, 7
  %v982 = vsel %vm908, %v981, %v979
  %v983 = vpack.c.b16 %v982, %v982
  %v985 = vunpack.c.l.s4 1966171168
  %v986 = vunpack.c.0.s8 %v985
  %v987 = vlaneseq
  %v988 = vshrl.u32 %v987, 7
  %v989 = vsub.s32 %v986, %v988
  %v990 = vrot.slane %v983, %v989
  %v992 = vunpack.c.l.s4 1966171168
  %v993 = vunpack.c.0.s8 %v992
  %v994 = vlaneseq
  %v995 = vshrl.u32 %v994, 7
  %v996 = vsub.s32 %v993, %v995
  %v997 = vrot.slane %v990, %v996
  %vm999 = vcmask 516096
  %1000 = vst.msk [vmem:[%s12] sm:$0x1] %vm999, %v997
  %v1001 = vld [vmem:[%s11] sm:$0x3]
  %v1004 = vunpack.c.l.s4 1983009808
  %v1005 = vunpack.c.0.s8 %v1004
  %v1006 = vlaneseq
  %v1007 = vshrl.u32 %v1006, 7
  %v1008 = vsub.s32 %v1005, %v1007
  %v1009 = vrot.slane %v1001, %v1008
  %1010 = vrot.lane.b32.xlu0 %v1009, 64
  %v1011 = vpop.permute.xlu0 %1010
  %v1013 = vmul.f32 %v603, %v1011
  %v1014 = vpack.c.bf16 %v1013, %v1013
  %v1017 = vunpack.c.l.s4 1966171168
  %v1018 = vunpack.c.0.s8 %v1017
  %v1019 = vlaneseq
  %v1020 = vshrl.u32 %v1019, 7
  %v1021 = vsub.s32 %v1018, %v1020
  %v1022 = vrot.slane %v1014, %v1021
  %v1024 = vunpack.c.l.s4 1966171168
  %v1025 = vunpack.c.0.s8 %v1024
  %v1026 = vlaneseq
  %v1027 = vshrl.u32 %v1026, 7
  %v1028 = vsub.s32 %v1025, %v1027
  %v1029 = vrot.slane %v1022, %v1028
  %1030 = vrot.lane.b32.xlu0 %v1029, 64
  %v1031 = vpop.permute.xlu0 %1030
  %1033 = vst.msk [vmem:[%s13] sm:$0x1] %vm999, %v1031
  %v1034 = vld [vmem:[#allocation2] sm:$0x3]
  %v1035 = vld [vmem:[#allocation3] sm:$0x3]
  %s1036 = scalar_lea.vmem [#allocation4], 4
  %v1037 = vld [vmem:[%s1036] sm:$0xf]
  %v1038 = vpack.c.bf16 %v1035, %v1035
  %v1040 = vsel %vm280, %v1038, 0
  %1042 = vmatprep.subr.bf16.mxu0 %v405
  %1043 = vmatpush1.bf16.msra.mxu0 %v404
  %1044 = vmatprep.subr.bf16.mxu0 %v407
  %1045 = vmatpush1.bf16.msra.mxu0 %v406
  %1046 = vmatprep.subr.bf16.mxu0 %v409
  %1047 = vmatpush1.bf16.msra.mxu0 %v408
  %1048 = vmatprep.subr.bf16.mxu0 %v411
  %1049 = vmatpush1.bf16.msra.mxu0 %v410
  %1050 = vmatprep.subr.bf16.mxu0 0
  %1051 = vmatpush1.bf16.msra.mxu0 0
  %1052 = vmatprep.subr.bf16.mxu0 0
  %1053 = vmatpush1.bf16.msra.mxu0 0
  %1054 = vmatprep.subr.bf16.mxu0 0
  %1055 = vmatpush1.bf16.msra.mxu0 0
  %1056 = vmatprep.subr.bf16.mxu0 0
  %1057 = vmatpush1.bf16.msra.mxu0 0
  %1058 = vmatprep.subr.bf16.mxu0 0
  %1059 = vmatpush1.bf16.msra.mxu0 0
  %1060 = vmatprep.subr.bf16.mxu0 0
  %1061 = vmatpush1.bf16.msra.mxu0 0
  %1062 = vmatprep.subr.bf16.mxu0 0
  %1063 = vmatpush1.bf16.msra.mxu0 0
  %1064 = vmatprep.subr.bf16.mxu0 0
  %1065 = vmatpush1.bf16.msra.mxu0 0
  %1066 = vmatprep.subr.bf16.mxu0 0
  %1067 = vmatpush1.bf16.msra.mxu0 0
  %1068 = vmatprep.subr.bf16.mxu0 0
  %1069 = vmatpush1.bf16.msra.mxu0 0
  %1070 = vmatprep.subr.bf16.mxu0 0
  %1071 = vmatpush1.bf16.msra.mxu0 0
  %1072 = vmatprep.subr.bf16.mxu0 0
  %1073 = vmatpush1.bf16.msra.mxu0 0
  %1074 = vmatprep.mubr.bf16.mxu0 0
  %1075 = vmatmul.mubr.bf16.gmra.mrb[0].mxu0 %v1040
  %v1076 = vpop.f32.mrb[0].mxu0
  %v1077 = vadd.f32 0.0, %v1076
  %v1078 = vpop.f32.mrb[0].mxu0
  %v1079 = vadd.f32 0.0, %v1078
  %v1080 = vpop.f32.mrb[0].mxu0
  %v1081 = vpop.f32.mrb[0].mxu0
  %1082 = vdwg.mxu0
  %v1085 = vcombine.low %v1077, %v1079
  %v1087 = vunpack.c.l.s4 1983009808
  %v1088 = vunpack.c.0.s8 %v1087
  %v1089 = vlaneseq
  %v1090 = vshrl.u32 %v1089, 7
  %v1091 = vsub.s32 %v1088, %v1090
  %v1092 = vrot.slane %v1085, %v1091
  %v1094 = vadd.f32 %v1037, %v1092
  %v1095 = vpack.c.bf16 %v1034, %v1034
  %v1097 = vsel %vm280, %v1095, 0
  %1099 = vmatprep.subr.bf16.mxu0 %v513
  %1100 = vmatpush1.bf16.msra.mxu0 %v512
  %1101 = vmatprep.subr.bf16.mxu0 %v515
  %1102 = vmatpush1.bf16.msra.mxu0 %v514
  %1103 = vmatprep.subr.bf16.mxu0 %v517
  %1104 = vmatpush1.bf16.msra.mxu0 %v516
  %1105 = vmatprep.subr.bf16.mxu0 %v519
  %1106 = vmatpush1.bf16.msra.mxu0 %v518
  %1107 = vmatprep.subr.bf16.mxu0 0
  %1108 = vmatpush1.bf16.msra.mxu0 0
  %1109 = vmatprep.subr.bf16.mxu0 0
  %1110 = vmatpush1.bf16.msra.mxu0 0
  %1111 = vmatprep.subr.bf16.mxu0 0
  %1112 = vmatpush1.bf16.msra.mxu0 0
  %1113 = vmatprep.subr.bf16.mxu0 0
  %1114 = vmatpush1.bf16.msra.mxu0 0
  %1115 = vmatprep.subr.bf16.mxu0 0
  %1116 = vmatpush1.bf16.msra.mxu0 0
  %1117 = vmatprep.subr.bf16.mxu0 0
  %1118 = vmatpush1.bf16.msra.mxu0 0
  %1119 = vmatprep.subr.bf16.mxu0 0
  %1120 = vmatpush1.bf16.msra.mxu0 0
  %1121 = vmatprep.subr.bf16.mxu0 0
  %1122 = vmatpush1.bf16.msra.mxu0 0
  %1123 = vmatprep.subr.bf16.mxu0 0
  %1124 = vmatpush1.bf16.msra.mxu0 0
  %1125 = vmatprep.subr.bf16.mxu0 0
  %1126 = vmatpush1.bf16.msra.mxu0 0
  %1127 = vmatprep.subr.bf16.mxu0 0
  %1128 = vmatpush1.bf16.msra.mxu0 0
  %1129 = vmatprep.subr.bf16.mxu0 0
  %1130 = vmatpush1.bf16.msra.mxu0 0
  %1131 = vmatprep.mubr.bf16.mxu0 0
  %1132 = vmatmul.mubr.bf16.gmra.mrb[0].mxu0 %v1097
  %v1133 = vpop.f32.mrb[0].mxu0
  %v1134 = vadd.f32 %v481, %v1133
  %v1135 = vpop.f32.mrb[0].mxu0
  %v1136 = vadd.f32 %v485, %v1135
  %v1137 = vpop.f32.mrb[0].mxu0
  %v1138 = vpop.f32.mrb[0].mxu0
  %1139 = vdwg.mxu0
  %v1140 = vadd.f32 %v1094, %v1134
  %v1141 = vxor.u32 %v1140, 2147483648
  %v1142 = vmul.f32 %v1141, 1.442695
  %v1143 = vpow.pop %v1142
  %v1144 = vadd.f32 %v1143, 1.0
  %v1145 = vrcp.pop %v1144
  %v1146 = vmul.f32 1.0, %v1145
  %v1147 = vmul.f32 %v1146, %v1136
  %v1149 = vrot.slane %v1094, 2
  %v1151 = vadd.f32 %v1149, %v1147
  %v1152 = vtanh.pop %v1151
  %v1153 = vsub.f32 1.0, %v1146
  %1155 = vrot.lane.b32.xlu0 %v1152, 64
  %v1156 = vpop.permute.xlu0 %1155
  %v1158 = vmul.f32 %v1153, %v1156
  %v1161 = vunpack.c.l.s4 1983009808
  %v1162 = vunpack.c.0.s8 %v1161
  %v1163 = vlaneseq
  %v1164 = vshrl.u32 %v1163, 7
  %v1165 = vsub.s32 %v1162, %v1164
  %v1166 = vrot.slane %v1034, %v1165
  %1167 = vrot.lane.b32.xlu0 %v1166, 64
  %v1168 = vpop.permute.xlu0 %1167
  %v1170 = vmul.f32 %v1146, %v1168
  %v1171 = vadd.f32 %v1158, %v1170
  %v1174 = vunpack.c.l.s4 1983009808
  %v1175 = vunpack.c.0.s8 %v1174
  %v1176 = vlaneseq
  %v1177 = vshrl.u32 %v1176, 7
  %v1178 = vsub.s32 %v1175, %v1177
  %v1179 = vrot.slane %v1171, %v1178
  %1180 = vrot.lane.b32.xlu0 %v1179, 64
  %v1181 = vpop.permute.xlu0 %1180
  %1183 = vst.msk [vmem:[#allocation2] sm:$0x3] %vm324, %v1181
  %v1184 = vpack.c.bf16 %v1171, %v1171
  %v1187 = vunpack.c.l.s4 1966171168
  %v1188 = vunpack.c.0.s8 %v1187
  %v1189 = vlaneseq
  %v1190 = vshrl.u32 %v1189, 7
  %v1191 = vsub.s32 %v1188, %v1190
  %v1192 = vrot.slane %v1184, %v1191
  %v1194 = vunpack.c.l.s4 1966171168
  %v1195 = vunpack.c.0.s8 %v1194
  %v1196 = vlaneseq
  %v1197 = vshrl.u32 %v1196, 7
  %v1198 = vsub.s32 %v1195, %v1197
  %v1199 = vrot.slane %v1192, %v1198
  %v1200 = vunpack.i.l.s16 %v1199
  %v1201 = vunpack.i.h.s16 %v1199
  %v1202 = vpack.i.b16 %v1200, %v1200
  %v1203 = vlaneseq
  %v1204 = vshrl.u32 %v1203, 7
  %v1205 = vsub.s32 0, %v1204
  %v1206 = vrot.slane %v1202, %v1205
  %1207 = vrot.lane.b32.xlu0 %v1206, 64
  %v1208 = vpop.permute.xlu0 %1207
  %v1210 = vsel %vm280, %v1208, 0
  %1212 = vmatprep.subr.bf16.mxu0 0
  %1213 = vmatpush1.bf16.xpose.msra.mxu0 %v669
  %1214 = vmatprep.subr.bf16.mxu0 0
  %1215 = vmatpush1.bf16.xpose.msra.mxu0 0
  %1216 = vmatprep.subr.bf16.mxu0 0
  %1217 = vmatpush1.bf16.xpose.msra.mxu0 0
  %1218 = vmatprep.subr.bf16.mxu0 0
  %1219 = vmatpush1.bf16.xpose.msra.mxu0 0
  %1220 = vmatprep.subr.bf16.mxu0 0
  %1221 = vmatpush1.bf16.xpose.msra.mxu0 0
  %1222 = vmatprep.subr.bf16.mxu0 0
  %1223 = vmatpush1.bf16.xpose.msra.mxu0 0
  %1224 = vmatprep.subr.bf16.mxu0 0
  %1225 = vmatpush1.bf16.xpose.msra.mxu0 0
  %1226 = vmatprep.subr.bf16.mxu0 0
  %1227 = vmatpush1.bf16.xpose.msra.mxu0 0
  %1228 = vmatprep.subr.bf16.mxu0 0
  %1229 = vmatpush1.bf16.xpose.msra.mxu0 0
  %1230 = vmatprep.subr.bf16.mxu0 0
  %1231 = vmatpush1.bf16.xpose.msra.mxu0 0
  %1232 = vmatprep.subr.bf16.mxu0 0
  %1233 = vmatpush1.bf16.xpose.msra.mxu0 0
  %1234 = vmatprep.subr.bf16.mxu0 0
  %1235 = vmatpush1.bf16.xpose.msra.mxu0 0
  %1236 = vmatprep.subr.bf16.mxu0 0
  %1237 = vmatpush1.bf16.xpose.msra.mxu0 0
  %1238 = vmatprep.subr.bf16.mxu0 0
  %1239 = vmatpush1.bf16.xpose.msra.mxu0 0
  %1240 = vmatprep.subr.bf16.mxu0 0
  %1241 = vmatpush1.bf16.xpose.msra.mxu0 0
  %1242 = vmatprep.subr.bf16.mxu0 0
  %1243 = vmatpush1.bf16.xpose.msra.mxu0 0
  %1244 = vmatprep.mubr.bf16.mxu0 0
  %1245 = vmatmul.mubr.bf16.gmra.mrb[0].mxu0 %v1210
  %v1246 = vpop.f32.mrb[0].mxu0
  %v1247 = vadd.f32 0.0, %v1246
  %v1248 = vpop.f32.mrb[0].mxu0
  %v1249 = vpop.f32.mrb[0].mxu0
  %v1250 = vpop.f32.mrb[0].mxu0
  %1251 = vdwg.mxu0
  %v1252 = vpack.i.b16 %v1201, %v1201
  %v1253 = vlaneseq
  %v1254 = vshrl.u32 %v1253, 7
  %v1255 = vsub.s32 0, %v1254
  %v1256 = vrot.slane %v1252, %v1255
  %1257 = vrot.lane.b32.xlu0 %v1256, 64
  %v1258 = vpop.permute.xlu0 %1257
  %v1260 = vsel %vm280, %v1258, 0
  %1262 = vmatprep.subr.bf16.mxu0 0
  %1263 = vmatpush1.bf16.xpose.msra.mxu0 %v746
  %1264 = vmatprep.subr.bf16.mxu0 0
  %1265 = vmatpush1.bf16.xpose.msra.mxu0 0
  %1266 = vmatprep.subr.bf16.mxu0 0
  %1267 = vmatpush1.bf16.xpose.msra.mxu0 0
  %1268 = vmatprep.subr.bf16.mxu0 0
  %1269 = vmatpush1.bf16.xpose.msra.mxu0 0
  %1270 = vmatprep.subr.bf16.mxu0 0
  %1271 = vmatpush1.bf16.xpose.msra.mxu0 0
  %1272 = vmatprep.subr.bf16.mxu0 0
  %1273 = vmatpush1.bf16.xpose.msra.mxu0 0
  %1274 = vmatprep.subr.bf16.mxu0 0
  %1275 = vmatpush1.bf16.xpose.msra.mxu0 0
  %1276 = vmatprep.subr.bf16.mxu0 0
  %1277 = vmatpush1.bf16.xpose.msra.mxu0 0
  %1278 = vmatprep.subr.bf16.mxu0 0
  %1279 = vmatpush1.bf16.xpose.msra.mxu0 0
  %1280 = vmatprep.subr.bf16.mxu0 0
  %1281 = vmatpush1.bf16.xpose.msra.mxu0 0
  %1282 = vmatprep.subr.bf16.mxu0 0
  %1283 = vmatpush1.bf16.xpose.msra.mxu0 0
  %1284 = vmatprep.subr.bf16.mxu0 0
  %1285 = vmatpush1.bf16.xpose.msra.mxu0 0
  %1286 = vmatprep.subr.bf16.mxu0 0
  %1287 = vmatpush1.bf16.xpose.msra.mxu0 0
  %1288 = vmatprep.subr.bf16.mxu0 0
  %1289 = vmatpush1.bf16.xpose.msra.mxu0 0
  %1290 = vmatprep.subr.bf16.mxu0 0
  %1291 = vmatpush1.bf16.xpose.msra.mxu0 0
  %1292 = vmatprep.subr.bf16.mxu0 0
  %1293 = vmatpush1.bf16.xpose.msra.mxu0 0
  %1294 = vmatprep.mubr.bf16.mxu0 0
  %1295 = vmatmul.mubr.bf16.gmra.mrb[0].mxu0 %v1260
  %v1296 = vpop.f32.mrb[0].mxu0
  %v1297 = vadd.f32 0.0, %v1296
  %v1298 = vpop.f32.mrb[0].mxu0
  %v1299 = vpop.f32.mrb[0].mxu0
  %v1300 = vpop.f32.mrb[0].mxu0
  %1301 = vdwg.mxu0
  %v1302 = vsel %vm788, %v1247, -inf
  %1303 = vmax.xlane.f32.xlu0 %v1302
  %v1304 = vpop.xlane.xlu0 %1303
  %v1305 = vsel %vm788, %v1297, -inf
  %1306 = vmax.xlane.f32.xlu0 %v1305
  %v1307 = vpop.xlane.xlu0 %1306
  %v1308 = vsub.f32 %v1247, %v1304
  %v1309 = vsub.f32 %v1297, %v1307
  %v1310 = vmul.f32 %v1308, 1.442695
  %v1311 = vpow.pop %v1310
  %v1312 = vmul.f32 %v1309, 1.442695
  %v1313 = vpow.pop %v1312
  %v1314 = vsel %vm788, %v1311, 0.0
  %1315 = vadd.xlane.f32.xlu0 %v1314
  %v1316 = vpop.xlane.xlu0 %1315
  %v1317 = vsel %vm788, %v1313, 0.0
  %1318 = vadd.xlane.f32.xlu0 %v1317
  %v1319 = vpop.xlane.xlu0 %1318
  %v1320 = vrcp.pop %v1316
  %v1321 = vmul.f32 %v1311, %v1320
  %v1322 = vrcp.pop %v1319
  %v1323 = vmul.f32 %v1313, %v1322
  %v1324 = vpack.c.bf16 %v1321, %v1321
  %v1325 = vpack.c.bf16 %v1323, %v1323
  %v1327 = vsel %vm813, %v1324, 0
  %1329 = vmatprep.subr.bf16.mxu0 0
  %1330 = vmatpush1.bf16.msra.mxu0 %v818
  %1331 = vmatprep.subr.bf16.mxu0 0
  %1332 = vmatpush1.bf16.msra.mxu0 0
  %1333 = vmatprep.subr.bf16.mxu0 0
  %1334 = vmatpush1.bf16.msra.mxu0 0
  %1335 = vmatprep.subr.bf16.mxu0 0
  %1336 = vmatpush1.bf16.msra.mxu0 0
  %1337 = vmatprep.subr.bf16.mxu0 0
  %1338 = vmatpush1.bf16.msra.mxu0 0
  %1339 = vmatprep.subr.bf16.mxu0 0
  %1340 = vmatpush1.bf16.msra.mxu0 0
  %1341 = vmatprep.subr.bf16.mxu0 0
  %1342 = vmatpush1.bf16.msra.mxu0 0
  %1343 = vmatprep.subr.bf16.mxu0 0
  %1344 = vmatpush1.bf16.msra.mxu0 0
  %1345 = vmatprep.subr.bf16.mxu0 0
  %1346 = vmatpush1.bf16.msra.mxu0 0
  %1347 = vmatprep.subr.bf16.mxu0 0
  %1348 = vmatpush1.bf16.msra.mxu0 0
  %1349 = vmatprep.subr.bf16.mxu0 0
  %1350 = vmatpush1.bf16.msra.mxu0 0
  %1351 = vmatprep.subr.bf16.mxu0 0
  %1352 = vmatpush1.bf16.msra.mxu0 0
  %1353 = vmatprep.subr.bf16.mxu0 0
  %1354 = vmatpush1.bf16.msra.mxu0 0
  %1355 = vmatprep.subr.bf16.mxu0 0
  %1356 = vmatpush1.bf16.msra.mxu0 0
  %1357 = vmatprep.subr.bf16.mxu0 0
  %1358 = vmatpush1.bf16.msra.mxu0 0
  %1359 = vmatprep.subr.bf16.mxu0 0
  %1360 = vmatpush1.bf16.msra.mxu0 0
  %1361 = vmatprep.mubr.bf16.mxu0 0
  %1362 = vmatmul.mubr.bf16.gmra.mrb[0].mxu0 %v1327
  %v1363 = vpop.f32.mrb[0].mxu0
  %v1364 = vadd.f32 0.0, %v1363
  %v1365 = vpop.f32.mrb[0].mxu0
  %v1366 = vpop.f32.mrb[0].mxu0
  %v1367 = vpop.f32.mrb[0].mxu0
  %1368 = vdwg.mxu0
  %v1370 = vsel %vm813, %v1325, 0
  %1372 = vmatprep.subr.bf16.mxu0 0
  %1373 = vmatpush1.bf16.msra.mxu0 %v863
  %1374 = vmatprep.subr.bf16.mxu0 0
  %1375 = vmatpush1.bf16.msra.mxu0 0
  %1376 = vmatprep.subr.bf16.mxu0 0
  %1377 = vmatpush1.bf16.msra.mxu0 0
  %1378 = vmatprep.subr.bf16.mxu0 0
  %1379 = vmatpush1.bf16.msra.mxu0 0
  %1380 = vmatprep.subr.bf16.mxu0 0
  %1381 = vmatpush1.bf16.msra.mxu0 0
  %1382 = vmatprep.subr.bf16.mxu0 0
  %1383 = vmatpush1.bf16.msra.mxu0 0
  %1384 = vmatprep.subr.bf16.mxu0 0
  %1385 = vmatpush1.bf16.msra.mxu0 0
  %1386 = vmatprep.subr.bf16.mxu0 0
  %1387 = vmatpush1.bf16.msra.mxu0 0
  %1388 = vmatprep.subr.bf16.mxu0 0
  %1389 = vmatpush1.bf16.msra.mxu0 0
  %1390 = vmatprep.subr.bf16.mxu0 0
  %1391 = vmatpush1.bf16.msra.mxu0 0
  %1392 = vmatprep.subr.bf16.mxu0 0
  %1393 = vmatpush1.bf16.msra.mxu0 0
  %1394 = vmatprep.subr.bf16.mxu0 0
  %1395 = vmatpush1.bf16.msra.mxu0 0
  %1396 = vmatprep.subr.bf16.mxu0 0
  %1397 = vmatpush1.bf16.msra.mxu0 0
  %1398 = vmatprep.subr.bf16.mxu0 0
  %1399 = vmatpush1.bf16.msra.mxu0 0
  %1400 = vmatprep.subr.bf16.mxu0 0
  %1401 = vmatpush1.bf16.msra.mxu0 0
  %1402 = vmatprep.subr.bf16.mxu0 0
  %1403 = vmatpush1.bf16.msra.mxu0 0
  %1404 = vmatprep.mubr.bf16.mxu0 0
  %1405 = vmatmul.mubr.bf16.gmra.mrb[0].mxu0 %v1370
  %v1406 = vpop.f32.mrb[0].mxu0
  %v1407 = vadd.f32 0.0, %v1406
  %v1408 = vpop.f32.mrb[0].mxu0
  %v1409 = vpop.f32.mrb[0].mxu0
  %v1410 = vpop.f32.mrb[0].mxu0
  %1411 = vdwg.mxu0
  %v1414 = vrot.slane %v1407, 7
  %v1415 = vsel %vm908, %v1414, %v1364
  %1417 = vst.msk [vmem:[#allocation3] sm:$0x3] %vm324, %v1415
  %s1418 = scalar_lea.vmem %s10, 2
  %v1419 = vld [vmem:[%s1418] sm:$0x3]
  %v1421 = vrot.slane %v1419, 1
  %v1424 = vmul.f32 %v1364, %v1419
  %v1425 = vmul.f32 %v1407, %v1421
  %v1426 = vpack.c.bf16 %v1424, %v1424
  %v1427 = vpack.c.bf16 %v1425, %v1425
  %v1431 = vunpack.c.l.s4 1966171168
  %v1432 = vunpack.c.0.s8 %v1431
  %v1433 = vlaneseq
  %v1434 = vshrl.u32 %v1433, 7
  %v1435 = vsub.s32 %v1432, %v1434
  %v1436 = vrot.slane %v1426, %v1435
  %v1438 = vunpack.c.l.s4 1966171168
  %v1439 = vunpack.c.0.s8 %v1438
  %v1440 = vlaneseq
  %v1441 = vshrl.u32 %v1440, 7
  %v1442 = vsub.s32 %v1439, %v1441
  %v1443 = vrot.slane %v1436, %v1442
  %v1445 = vunpack.c.l.s4 1966171168
  %v1446 = vunpack.c.0.s8 %v1445
  %v1447 = vlaneseq
  %v1448 = vshrl.u32 %v1447, 7
  %v1449 = vsub.s32 %v1446, %v1448
  %v1450 = vrot.slane %v1427, %v1449
  %v1452 = vunpack.c.l.s4 1966171168
  %v1453 = vunpack.c.0.s8 %v1452
  %v1454 = vlaneseq
  %v1455 = vshrl.u32 %v1454, 7
  %v1456 = vsub.s32 %v1453, %v1455
  %v1457 = vrot.slane %v1450, %v1456
  %v1459 = vunpack.c.l.s4 1935823168
  %v1460 = vunpack.c.0.s8 %v1459
  %v1461 = vlaneseq
  %v1462 = vshrl.u32 %v1461, 7
  %v1463 = vsub.s32 %v1460, %v1462
  %v1464 = vrot.slane %v1443, %v1463
  %v1466 = vunpack.c.l.s4 1935823168
  %v1467 = vunpack.c.0.s8 %v1466
  %v1468 = vlaneseq
  %v1469 = vshrl.u32 %v1468, 7
  %v1470 = vsub.s32 %v1467, %v1469
  %v1471 = vrot.slane %v1464, %v1470
  %v1473 = vunpack.c.l.s4 1935823168
  %v1474 = vunpack.c.0.s8 %v1473
  %v1475 = vlaneseq
  %v1476 = vshrl.u32 %v1475, 7
  %v1477 = vsub.s32 %v1474, %v1476
  %v1478 = vrot.slane %v1457, %v1477
  %v1480 = vunpack.c.l.s4 1935823168
  %v1481 = vunpack.c.0.s8 %v1480
  %v1482 = vlaneseq
  %v1483 = vshrl.u32 %v1482, 7
  %v1484 = vsub.s32 %v1481, %v1483
  %v1485 = vrot.slane %v1478, %v1484
  %v1486 = vunpack.c.l.b16 %v1471
  %v1487 = vunpack.c.l.b16 %v1485
  %v1488 = vrot.slane %v1487, 7
  %v1489 = vsel %vm908, %v1488, %v1486
  %v1490 = vpack.c.b16 %v1489, %v1489
  %v1492 = vunpack.c.l.s4 1966171168
  %v1493 = vunpack.c.0.s8 %v1492
  %v1494 = vlaneseq
  %v1495 = vshrl.u32 %v1494, 7
  %v1496 = vsub.s32 %v1493, %v1495
  %v1497 = vrot.slane %v1490, %v1496
  %v1499 = vunpack.c.l.s4 1966171168
  %v1500 = vunpack.c.0.s8 %v1499
  %v1501 = vlaneseq
  %v1502 = vshrl.u32 %v1501, 7
  %v1503 = vsub.s32 %v1500, %v1502
  %v1504 = vrot.slane %v1497, %v1503
  %s1506 = scalar_lea.vmem %s12, 1
  %1507 = vst.msk [vmem:[%s1506] sm:$0x1] %vm999, %v1504
  %s1508 = scalar_lea.vmem %s11, 2
  %v1509 = vld [vmem:[%s1508] sm:$0x3]
  %v1512 = vunpack.c.l.s4 1983009808
  %v1513 = vunpack.c.0.s8 %v1512
  %v1514 = vlaneseq
  %v1515 = vshrl.u32 %v1514, 7
  %v1516 = vsub.s32 %v1513, %v1515
  %v1517 = vrot.slane %v1509, %v1516
  %1518 = vrot.lane.b32.xlu0 %v1517, 64
  %v1519 = vpop.permute.xlu0 %1518
  %v1521 = vmul.f32 %v1171, %v1519
  %v1522 = vpack.c.bf16 %v1521, %v1521
  %v1525 = vunpack.c.l.s4 1966171168
  %v1526 = vunpack.c.0.s8 %v1525
  %v1527 = vlaneseq
  %v1528 = vshrl.u32 %v1527, 7
  %v1529 = vsub.s32 %v1526, %v1528
  %v1530 = vrot.slane %v1522, %v1529
  %v1532 = vunpack.c.l.s4 1966171168
  %v1533 = vunpack.c.0.s8 %v1532
  %v1534 = vlaneseq
  %v1535 = vshrl.u32 %v1534, 7
  %v1536 = vsub.s32 %v1533, %v1535
  %v1537 = vrot.slane %v1530, %v1536
  %1538 = vrot.lane.b32.xlu0 %v1537, 64
  %v1539 = vpop.permute.xlu0 %1538
  %s1541 = scalar_lea.vmem %s13, 1
  %1542 = vst.msk [vmem:[%s1541] sm:$0x1] %vm999, %v1539
  %v1543 = vld [vmem:[#allocation2] sm:$0x3]
  %v1544 = vld [vmem:[#allocation3] sm:$0x3]
  %s1545 = scalar_lea.vmem [#allocation4], 8
  %v1546 = vld [vmem:[%s1545] sm:$0xf]
  %v1547 = vpack.c.bf16 %v1544, %v1544
  %v1549 = vsel %vm280, %v1547, 0
  %1551 = vmatprep.subr.bf16.mxu0 %v405
  %1552 = vmatpush1.bf16.msra.mxu0 %v404
  %1553 = vmatprep.subr.bf16.mxu0 %v407
  %1554 = vmatpush1.bf16.msra.mxu0 %v406
  %1555 = vmatprep.subr.bf16.mxu0 %v409
  %1556 = vmatpush1.bf16.msra.mxu0 %v408
  %1557 = vmatprep.subr.bf16.mxu0 %v411
  %1558 = vmatpush1.bf16.msra.mxu0 %v410
  %1559 = vmatprep.subr.bf16.mxu0 0
  %1560 = vmatpush1.bf16.msra.mxu0 0
  %1561 = vmatprep.subr.bf16.mxu0 0
  %1562 = vmatpush1.bf16.msra.mxu0 0
  %1563 = vmatprep.subr.bf16.mxu0 0
  %1564 = vmatpush1.bf16.msra.mxu0 0
  %1565 = vmatprep.subr.bf16.mxu0 0
  %1566 = vmatpush1.bf16.msra.mxu0 0
  %1567 = vmatprep.subr.bf16.mxu0 0
  %1568 = vmatpush1.bf16.msra.mxu0 0
  %1569 = vmatprep.subr.bf16.mxu0 0
  %1570 = vmatpush1.bf16.msra.mxu0 0
  %1571 = vmatprep.subr.bf16.mxu0 0
  %1572 = vmatpush1.bf16.msra.mxu0 0
  %1573 = vmatprep.subr.bf16.mxu0 0
  %1574 = vmatpush1.bf16.msra.mxu0 0
  %1575 = vmatprep.subr.bf16.mxu0 0
  %1576 = vmatpush1.bf16.msra.mxu0 0
  %1577 = vmatprep.subr.bf16.mxu0 0
  %1578 = vmatpush1.bf16.msra.mxu0 0
  %1579 = vmatprep.subr.bf16.mxu0 0
  %1580 = vmatpush1.bf16.msra.mxu0 0
  %1581 = vmatprep.subr.bf16.mxu0 0
  %1582 = vmatpush1.bf16.msra.mxu0 0
  %1583 = vmatprep.mubr.bf16.mxu0 0
  %1584 = vmatmul.mubr.bf16.gmra.mrb[0].mxu0 %v1549
  %v1585 = vpop.f32.mrb[0].mxu0
  %v1586 = vadd.f32 0.0, %v1585
  %v1587 = vpop.f32.mrb[0].mxu0
  %v1588 = vadd.f32 0.0, %v1587
  %v1589 = vpop.f32.mrb[0].mxu0
  %v1590 = vpop.f32.mrb[0].mxu0
  %1591 = vdwg.mxu0
  %v1594 = vcombine.low %v1586, %v1588
  %v1596 = vunpack.c.l.s4 1983009808
  %v1597 = vunpack.c.0.s8 %v1596
  %v1598 = vlaneseq
  %v1599 = vshrl.u32 %v1598, 7
  %v1600 = vsub.s32 %v1597, %v1599
  %v1601 = vrot.slane %v1594, %v1600
  %v1603 = vadd.f32 %v1546, %v1601
  %v1604 = vpack.c.bf16 %v1543, %v1543
  %v1606 = vsel %vm280, %v1604, 0
  %1608 = vmatprep.subr.bf16.mxu0 %v513
  %1609 = vmatpush1.bf16.msra.mxu0 %v512
  %1610 = vmatprep.subr.bf16.mxu0 %v515
  %1611 = vmatpush1.bf16.msra.mxu0 %v514
  %1612 = vmatprep.subr.bf16.mxu0 %v517
  %1613 = vmatpush1.bf16.msra.mxu0 %v516
  %1614 = vmatprep.subr.bf16.mxu0 %v519
  %1615 = vmatpush1.bf16.msra.mxu0 %v518
  %1616 = vmatprep.subr.bf16.mxu0 0
  %1617 = vmatpush1.bf16.msra.mxu0 0
  %1618 = vmatprep.subr.bf16.mxu0 0
  %1619 = vmatpush1.bf16.msra.mxu0 0
  %1620 = vmatprep.subr.bf16.mxu0 0
  %1621 = vmatpush1.bf16.msra.mxu0 0
  %1622 = vmatprep.subr.bf16.mxu0 0
  %1623 = vmatpush1.bf16.msra.mxu0 0
  %1624 = vmatprep.subr.bf16.mxu0 0
  %1625 = vmatpush1.bf16.msra.mxu0 0
  %1626 = vmatprep.subr.bf16.mxu0 0
  %1627 = vmatpush1.bf16.msra.mxu0 0
  %1628 = vmatprep.subr.bf16.mxu0 0
  %1629 = vmatpush1.bf16.msra.mxu0 0
  %1630 = vmatprep.subr.bf16.mxu0 0
  %1631 = vmatpush1.bf16.msra.mxu0 0
  %1632 = vmatprep.subr.bf16.mxu0 0
  %1633 = vmatpush1.bf16.msra.mxu0 0
  %1634 = vmatprep.subr.bf16.mxu0 0
  %1635 = vmatpush1.bf16.msra.mxu0 0
  %1636 = vmatprep.subr.bf16.mxu0 0
  %1637 = vmatpush1.bf16.msra.mxu0 0
  %1638 = vmatprep.subr.bf16.mxu0 0
  %1639 = vmatpush1.bf16.msra.mxu0 0
  %1640 = vmatprep.mubr.bf16.mxu0 0
  %1641 = vmatmul.mubr.bf16.gmra.mrb[0].mxu0 %v1606
  %v1642 = vpop.f32.mrb[0].mxu0
  %v1643 = vadd.f32 %v481, %v1642
  %v1644 = vpop.f32.mrb[0].mxu0
  %v1645 = vadd.f32 %v485, %v1644
  %v1646 = vpop.f32.mrb[0].mxu0
  %v1647 = vpop.f32.mrb[0].mxu0
  %1648 = vdwg.mxu0
  %v1649 = vadd.f32 %v1603, %v1643
  %v1650 = vxor.u32 %v1649, 2147483648
  %v1651 = vmul.f32 %v1650, 1.442695
  %v1652 = vpow.pop %v1651
  %v1653 = vadd.f32 %v1652, 1.0
  %v1654 = vrcp.pop %v1653
  %v1655 = vmul.f32 1.0, %v1654
  %v1656 = vmul.f32 %v1655, %v1645
  %v1658 = vrot.slane %v1603, 2
  %v1660 = vadd.f32 %v1658, %v1656
  %v1661 = vtanh.pop %v1660
  %v1662 = vsub.f32 1.0, %v1655
  %1664 = vrot.lane.b32.xlu0 %v1661, 64
  %v1665 = vpop.permute.xlu0 %1664
  %v1667 = vmul.f32 %v1662, %v1665
  %v1670 = vunpack.c.l.s4 1983009808
  %v1671 = vunpack.c.0.s8 %v1670
  %v1672 = vlaneseq
  %v1673 = vshrl.u32 %v1672, 7
  %v1674 = vsub.s32 %v1671, %v1673
  %v1675 = vrot.slane %v1543, %v1674
  %1676 = vrot.lane.b32.xlu0 %v1675, 64
  %v1677 = vpop.permute.xlu0 %1676
  %v1679 = vmul.f32 %v1655, %v1677
  %v1680 = vadd.f32 %v1667, %v1679
  %v1683 = vunpack.c.l.s4 1983009808
  %v1684 = vunpack.c.0.s8 %v1683
  %v1685 = vlaneseq
  %v1686 = vshrl.u32 %v1685, 7
  %v1687 = vsub.s32 %v1684, %v1686
  %v1688 = vrot.slane %v1680, %v1687
  %1689 = vrot.lane.b32.xlu0 %v1688, 64
  %v1690 = vpop.permute.xlu0 %1689
  %1692 = vst.msk [vmem:[#allocation2] sm:$0x3] %vm324, %v1690
  %v1693 = vpack.c.bf16 %v1680, %v1680
  %v1696 = vunpack.c.l.s4 1966171168
  %v1697 = vunpack.c.0.s8 %v1696
  %v1698 = vlaneseq
  %v1699 = vshrl.u32 %v1698, 7
  %v1700 = vsub.s32 %v1697, %v1699
  %v1701 = vrot.slane %v1693, %v1700
  %v1703 = vunpack.c.l.s4 1966171168
  %v1704 = vunpack.c.0.s8 %v1703
  %v1705 = vlaneseq
  %v1706 = vshrl.u32 %v1705, 7
  %v1707 = vsub.s32 %v1704, %v1706
  %v1708 = vrot.slane %v1701, %v1707
  %v1709 = vunpack.i.l.s16 %v1708
  %v1710 = vunpack.i.h.s16 %v1708
  %v1711 = vpack.i.b16 %v1709, %v1709
  %v1712 = vlaneseq
  %v1713 = vshrl.u32 %v1712, 7
  %v1714 = vsub.s32 0, %v1713
  %v1715 = vrot.slane %v1711, %v1714
  %1716 = vrot.lane.b32.xlu0 %v1715, 64
  %v1717 = vpop.permute.xlu0 %1716
  %v1719 = vsel %vm280, %v1717, 0
  %1721 = vmatprep.subr.bf16.mxu0 0
  %1722 = vmatpush1.bf16.xpose.msra.mxu0 %v669
  %1723 = vmatprep.subr.bf16.mxu0 0
  %1724 = vmatpush1.bf16.xpose.msra.mxu0 0
  %1725 = vmatprep.subr.bf16.mxu0 0
  %1726 = vmatpush1.bf16.xpose.msra.mxu0 0
  %1727 = vmatprep.subr.bf16.mxu0 0
  %1728 = vmatpush1.bf16.xpose.msra.mxu0 0
  %1729 = vmatprep.subr.bf16.mxu0 0
  %1730 = vmatpush1.bf16.xpose.msra.mxu0 0
  %1731 = vmatprep.subr.bf16.mxu0 0
  %1732 = vmatpush1.bf16.xpose.msra.mxu0 0
  %1733 = vmatprep.subr.bf16.mxu0 0
  %1734 = vmatpush1.bf16.xpose.msra.mxu0 0
  %1735 = vmatprep.subr.bf16.mxu0 0
  %1736 = vmatpush1.bf16.xpose.msra.mxu0 0
  %1737 = vmatprep.subr.bf16.mxu0 0
  %1738 = vmatpush1.bf16.xpose.msra.mxu0 0
  %1739 = vmatprep.subr.bf16.mxu0 0
  %1740 = vmatpush1.bf16.xpose.msra.mxu0 0
  %1741 = vmatprep.subr.bf16.mxu0 0
  %1742 = vmatpush1.bf16.xpose.msra.mxu0 0
  %1743 = vmatprep.subr.bf16.mxu0 0
  %1744 = vmatpush1.bf16.xpose.msra.mxu0 0
  %1745 = vmatprep.subr.bf16.mxu0 0
  %1746 = vmatpush1.bf16.xpose.msra.mxu0 0
  %1747 = vmatprep.subr.bf16.mxu0 0
  %1748 = vmatpush1.bf16.xpose.msra.mxu0 0
  %1749 = vmatprep.subr.bf16.mxu0 0
  %1750 = vmatpush1.bf16.xpose.msra.mxu0 0
  %1751 = vmatprep.subr.bf16.mxu0 0
  %1752 = vmatpush1.bf16.xpose.msra.mxu0 0
  %1753 = vmatprep.mubr.bf16.mxu0 0
  %1754 = vmatmul.mubr.bf16.gmra.mrb[0].mxu0 %v1719
  %v1755 = vpop.f32.mrb[0].mxu0
  %v1756 = vadd.f32 0.0, %v1755
  %v1757 = vpop.f32.mrb[0].mxu0
  %v1758 = vpop.f32.mrb[0].mxu0
  %v1759 = vpop.f32.mrb[0].mxu0
  %1760 = vdwg.mxu0
  %v1761 = vpack.i.b16 %v1710, %v1710
  %v1762 = vlaneseq
  %v1763 = vshrl.u32 %v1762, 7
  %v1764 = vsub.s32 0, %v1763
  %v1765 = vrot.slane %v1761, %v1764
  %1766 = vrot.lane.b32.xlu0 %v1765, 64
  %v1767 = vpop.permute.xlu0 %1766
  %v1769 = vsel %vm280, %v1767, 0
  %1771 = vmatprep.subr.bf16.mxu0 0
  %1772 = vmatpush1.bf16.xpose.msra.mxu0 %v746
  %1773 = vmatprep.subr.bf16.mxu0 0
  %1774 = vmatpush1.bf16.xpose.msra.mxu0 0
  %1775 = vmatprep.subr.bf16.mxu0 0
  %1776 = vmatpush1.bf16.xpose.msra.mxu0 0
  %1777 = vmatprep.subr.bf16.mxu0 0
  %1778 = vmatpush1.bf16.xpose.msra.mxu0 0
  %1779 = vmatprep.subr.bf16.mxu0 0
  %1780 = vmatpush1.bf16.xpose.msra.mxu0 0
  %1781 = vmatprep.subr.bf16.mxu0 0
  %1782 = vmatpush1.bf16.xpose.msra.mxu0 0
  %1783 = vmatprep.subr.bf16.mxu0 0
  %1784 = vmatpush1.bf16.xpose.msra.mxu0 0
  %1785 = vmatprep.subr.bf16.mxu0 0
  %1786 = vmatpush1.bf16.xpose.msra.mxu0 0
  %1787 = vmatprep.subr.bf16.mxu0 0
  %1788 = vmatpush1.bf16.xpose.msra.mxu0 0
  %1789 = vmatprep.subr.bf16.mxu0 0
  %1790 = vmatpush1.bf16.xpose.msra.mxu0 0
  %1791 = vmatprep.subr.bf16.mxu0 0
  %1792 = vmatpush1.bf16.xpose.msra.mxu0 0
  %1793 = vmatprep.subr.bf16.mxu0 0
  %1794 = vmatpush1.bf16.xpose.msra.mxu0 0
  %1795 = vmatprep.subr.bf16.mxu0 0
  %1796 = vmatpush1.bf16.xpose.msra.mxu0 0
  %1797 = vmatprep.subr.bf16.mxu0 0
  %1798 = vmatpush1.bf16.xpose.msra.mxu0 0
  %1799 = vmatprep.subr.bf16.mxu0 0
  %1800 = vmatpush1.bf16.xpose.msra.mxu0 0
  %1801 = vmatprep.subr.bf16.mxu0 0
  %1802 = vmatpush1.bf16.xpose.msra.mxu0 0
  %1803 = vmatprep.mubr.bf16.mxu0 0
  %1804 = vmatmul.mubr.bf16.gmra.mrb[0].mxu0 %v1769
  %v1805 = vpop.f32.mrb[0].mxu0
  %v1806 = vadd.f32 0.0, %v1805
  %v1807 = vpop.f32.mrb[0].mxu0
  %v1808 = vpop.f32.mrb[0].mxu0
  %v1809 = vpop.f32.mrb[0].mxu0
  %1810 = vdwg.mxu0
  %v1811 = vsel %vm788, %v1756, -inf
  %1812 = vmax.xlane.f32.xlu0 %v1811
  %v1813 = vpop.xlane.xlu0 %1812
  %v1814 = vsel %vm788, %v1806, -inf
  %1815 = vmax.xlane.f32.xlu0 %v1814
  %v1816 = vpop.xlane.xlu0 %1815
  %v1817 = vsub.f32 %v1756, %v1813
  %v1818 = vsub.f32 %v1806, %v1816
  %v1819 = vmul.f32 %v1817, 1.442695
  %v1820 = vpow.pop %v1819
  %v1821 = vmul.f32 %v1818, 1.442695
  %v1822 = vpow.pop %v1821
  %v1823 = vsel %vm788, %v1820, 0.0
  %1824 = vadd.xlane.f32.xlu0 %v1823
  %v1825 = vpop.xlane.xlu0 %1824
  %v1826 = vsel %vm788, %v1822, 0.0
  %1827 = vadd.xlane.f32.xlu0 %v1826
  %v1828 = vpop.xlane.xlu0 %1827
  %v1829 = vrcp.pop %v1825
  %v1830 = vmul.f32 %v1820, %v1829
  %v1831 = vrcp.pop %v1828
  %v1832 = vmul.f32 %v1822, %v1831
  %v1833 = vpack.c.bf16 %v1830, %v1830
  %v1834 = vpack.c.bf16 %v1832, %v1832
  %v1836 = vsel %vm813, %v1833, 0
  %1838 = vmatprep.subr.bf16.mxu0 0
  %1839 = vmatpush1.bf16.msra.mxu0 %v818
  %1840 = vmatprep.subr.bf16.mxu0 0
  %1841 = vmatpush1.bf16.msra.mxu0 0
  %1842 = vmatprep.subr.bf16.mxu0 0
  %1843 = vmatpush1.bf16.msra.mxu0 0
  %1844 = vmatprep.subr.bf16.mxu0 0
  %1845 = vmatpush1.bf16.msra.mxu0 0
  %1846 = vmatprep.subr.bf16.mxu0 0
  %1847 = vmatpush1.bf16.msra.mxu0 0
  %1848 = vmatprep.subr.bf16.mxu0 0
  %1849 = vmatpush1.bf16.msra.mxu0 0
  %1850 = vmatprep.subr.bf16.mxu0 0
  %1851 = vmatpush1.bf16.msra.mxu0 0
  %1852 = vmatprep.subr.bf16.mxu0 0
  %1853 = vmatpush1.bf16.msra.mxu0 0
  %1854 = vmatprep.subr.bf16.mxu0 0
  %1855 = vmatpush1.bf16.msra.mxu0 0
  %1856 = vmatprep.subr.bf16.mxu0 0
  %1857 = vmatpush1.bf16.msra.mxu0 0
  %1858 = vmatprep.subr.bf16.mxu0 0
  %1859 = vmatpush1.bf16.msra.mxu0 0
  %1860 = vmatprep.subr.bf16.mxu0 0
  %1861 = vmatpush1.bf16.msra.mxu0 0
  %1862 = vmatprep.subr.bf16.mxu0 0
  %1863 = vmatpush1.bf16.msra.mxu0 0
  %1864 = vmatprep.subr.bf16.mxu0 0
  %1865 = vmatpush1.bf16.msra.mxu0 0
  %1866 = vmatprep.subr.bf16.mxu0 0
  %1867 = vmatpush1.bf16.msra.mxu0 0
  %1868 = vmatprep.subr.bf16.mxu0 0
  %1869 = vmatpush1.bf16.msra.mxu0 0
  %1870 = vmatprep.mubr.bf16.mxu0 0
  %1871 = vmatmul.mubr.bf16.gmra.mrb[0].mxu0 %v1836
  %v1872 = vpop.f32.mrb[0].mxu0
  %v1873 = vadd.f32 0.0, %v1872
  %v1874 = vpop.f32.mrb[0].mxu0
  %v1875 = vpop.f32.mrb[0].mxu0
  %v1876 = vpop.f32.mrb[0].mxu0
  %1877 = vdwg.mxu0
  %v1879 = vsel %vm813, %v1834, 0
  %1881 = vmatprep.subr.bf16.mxu0 0
  %1882 = vmatpush1.bf16.msra.mxu0 %v863
  %1883 = vmatprep.subr.bf16.mxu0 0
  %1884 = vmatpush1.bf16.msra.mxu0 0
  %1885 = vmatprep.subr.bf16.mxu0 0
  %1886 = vmatpush1.bf16.msra.mxu0 0
  %1887 = vmatprep.subr.bf16.mxu0 0
  %1888 = vmatpush1.bf16.msra.mxu0 0
  %1889 = vmatprep.subr.bf16.mxu0 0
  %1890 = vmatpush1.bf16.msra.mxu0 0
  %1891 = vmatprep.subr.bf16.mxu0 0
  %1892 = vmatpush1.bf16.msra.mxu0 0
  %1893 = vmatprep.subr.bf16.mxu0 0
  %1894 = vmatpush1.bf16.msra.mxu0 0
  %1895 = vmatprep.subr.bf16.mxu0 0
  %1896 = vmatpush1.bf16.msra.mxu0 0
  %1897 = vmatprep.subr.bf16.mxu0 0
  %1898 = vmatpush1.bf16.msra.mxu0 0
  %1899 = vmatprep.subr.bf16.mxu0 0
  %1900 = vmatpush1.bf16.msra.mxu0 0
  %1901 = vmatprep.subr.bf16.mxu0 0
  %1902 = vmatpush1.bf16.msra.mxu0 0
  %1903 = vmatprep.subr.bf16.mxu0 0
  %1904 = vmatpush1.bf16.msra.mxu0 0
  %1905 = vmatprep.subr.bf16.mxu0 0
  %1906 = vmatpush1.bf16.msra.mxu0 0
  %1907 = vmatprep.subr.bf16.mxu0 0
  %1908 = vmatpush1.bf16.msra.mxu0 0
  %1909 = vmatprep.subr.bf16.mxu0 0
  %1910 = vmatpush1.bf16.msra.mxu0 0
  %1911 = vmatprep.subr.bf16.mxu0 0
  %1912 = vmatpush1.bf16.msra.mxu0 0
  %1913 = vmatprep.mubr.bf16.mxu0 0
  %1914 = vmatmul.mubr.bf16.gmra.mrb[0].mxu0 %v1879
  %v1915 = vpop.f32.mrb[0].mxu0
  %v1916 = vadd.f32 0.0, %v1915
  %v1917 = vpop.f32.mrb[0].mxu0
  %v1918 = vpop.f32.mrb[0].mxu0
  %v1919 = vpop.f32.mrb[0].mxu0
  %1920 = vdwg.mxu0
  %v1923 = vrot.slane %v1916, 7
  %v1924 = vsel %vm908, %v1923, %v1873
  %1926 = vst.msk [vmem:[#allocation3] sm:$0x3] %vm324, %v1924
  %s1927 = scalar_lea.vmem %s10, 4
  %v1928 = vld [vmem:[%s1927] sm:$0x3]
  %v1930 = vrot.slane %v1928, 1
  %v1933 = vmul.f32 %v1873, %v1928
  %v1934 = vmul.f32 %v1916, %v1930
  %v1935 = vpack.c.bf16 %v1933, %v1933
  %v1936 = vpack.c.bf16 %v1934, %v1934
  %v1940 = vunpack.c.l.s4 1966171168
  %v1941 = vunpack.c.0.s8 %v1940
  %v1942 = vlaneseq
  %v1943 = vshrl.u32 %v1942, 7
  %v1944 = vsub.s32 %v1941, %v1943
  %v1945 = vrot.slane %v1935, %v1944
  %v1947 = vunpack.c.l.s4 1966171168
  %v1948 = vunpack.c.0.s8 %v1947
  %v1949 = vlaneseq
  %v1950 = vshrl.u32 %v1949, 7
  %v1951 = vsub.s32 %v1948, %v1950
  %v1952 = vrot.slane %v1945, %v1951
  %v1954 = vunpack.c.l.s4 1966171168
  %v1955 = vunpack.c.0.s8 %v1954
  %v1956 = vlaneseq
  %v1957 = vshrl.u32 %v1956, 7
  %v1958 = vsub.s32 %v1955, %v1957
  %v1959 = vrot.slane %v1936, %v1958
  %v1961 = vunpack.c.l.s4 1966171168
  %v1962 = vunpack.c.0.s8 %v1961
  %v1963 = vlaneseq
  %v1964 = vshrl.u32 %v1963, 7
  %v1965 = vsub.s32 %v1962, %v1964
  %v1966 = vrot.slane %v1959, %v1965
  %v1968 = vunpack.c.l.s4 1935823168
  %v1969 = vunpack.c.0.s8 %v1968
  %v1970 = vlaneseq
  %v1971 = vshrl.u32 %v1970, 7
  %v1972 = vsub.s32 %v1969, %v1971
  %v1973 = vrot.slane %v1952, %v1972
  %v1975 = vunpack.c.l.s4 1935823168
  %v1976 = vunpack.c.0.s8 %v1975
  %v1977 = vlaneseq
  %v1978 = vshrl.u32 %v1977, 7
  %v1979 = vsub.s32 %v1976, %v1978
  %v1980 = vrot.slane %v1973, %v1979
  %v1982 = vunpack.c.l.s4 1935823168
  %v1983 = vunpack.c.0.s8 %v1982
  %v1984 = vlaneseq
  %v1985 = vshrl.u32 %v1984, 7
  %v1986 = vsub.s32 %v1983, %v1985
  %v1987 = vrot.slane %v1966, %v1986
  %v1989 = vunpack.c.l.s4 1935823168
  %v1990 = vunpack.c.0.s8 %v1989
  %v1991 = vlaneseq
  %v1992 = vshrl.u32 %v1991, 7
  %v1993 = vsub.s32 %v1990, %v1992
  %v1994 = vrot.slane %v1987, %v1993
  %v1995 = vunpack.c.l.b16 %v1980
  %v1996 = vunpack.c.l.b16 %v1994
  %v1997 = vrot.slane %v1996, 7
  %v1998 = vsel %vm908, %v1997, %v1995
  %v1999 = vpack.c.b16 %v1998, %v1998
  %v2001 = vunpack.c.l.s4 1966171168
  %v2002 = vunpack.c.0.s8 %v2001
  %v2003 = vlaneseq
  %v2004 = vshrl.u32 %v2003, 7
  %v2005 = vsub.s32 %v2002, %v2004
  %v2006 = vrot.slane %v1999, %v2005
  %v2008 = vunpack.c.l.s4 1966171168
  %v2009 = vunpack.c.0.s8 %v2008
  %v2010 = vlaneseq
  %v2011 = vshrl.u32 %v2010, 7
  %v2012 = vsub.s32 %v2009, %v2011
  %v2013 = vrot.slane %v2006, %v2012
  %s2015 = scalar_lea.vmem %s12, 2
  %2016 = vst.msk [vmem:[%s2015] sm:$0x1] %vm999, %v2013
  %s2017 = scalar_lea.vmem %s11, 4
  %v2018 = vld [vmem:[%s2017] sm:$0x3]
  %v2021 = vunpack.c.l.s4 1983009808
  %v2022 = vunpack.c.0.s8 %v2021
  %v2023 = vlaneseq
  %v2024 = vshrl.u32 %v2023, 7
  %v2025 = vsub.s32 %v2022, %v2024
  %v2026 = vrot.slane %v2018, %v2025
  %2027 = vrot.lane.b32.xlu0 %v2026, 64
  %v2028 = vpop.permute.xlu0 %2027
  %v2030 = vmul.f32 %v1680, %v2028
  %v2031 = vpack.c.bf16 %v2030, %v2030
  %v2034 = vunpack.c.l.s4 1966171168
  %v2035 = vunpack.c.0.s8 %v2034
  %v2036 = vlaneseq
  %v2037 = vshrl.u32 %v2036, 7
  %v2038 = vsub.s32 %v2035, %v2037
  %v2039 = vrot.slane %v2031, %v2038
  %v2041 = vunpack.c.l.s4 1966171168
  %v2042 = vunpack.c.0.s8 %v2041
  %v2043 = vlaneseq
  %v2044 = vshrl.u32 %v2043, 7
  %v2045 = vsub.s32 %v2042, %v2044
  %v2046 = vrot.slane %v2039, %v2045
  %2047 = vrot.lane.b32.xlu0 %v2046, 64
  %v2048 = vpop.permute.xlu0 %2047
  %s2050 = scalar_lea.vmem %s13, 2
  %2051 = vst.msk [vmem:[%s2050] sm:$0x1] %vm999, %v2048
  %v2052 = vld [vmem:[#allocation2] sm:$0x3]
  %v2053 = vld [vmem:[#allocation3] sm:$0x3]
  %s2054 = scalar_lea.vmem [#allocation4], 12
  %v2055 = vld [vmem:[%s2054] sm:$0xf]
  %v2056 = vpack.c.bf16 %v2053, %v2053
  %v2058 = vsel %vm280, %v2056, 0
  %2060 = vmatprep.subr.bf16.mxu0 %v405
  %2061 = vmatpush1.bf16.msra.mxu0 %v404
  %2062 = vmatprep.subr.bf16.mxu0 %v407
  %2063 = vmatpush1.bf16.msra.mxu0 %v406
  %2064 = vmatprep.subr.bf16.mxu0 %v409
  %2065 = vmatpush1.bf16.msra.mxu0 %v408
  %2066 = vmatprep.subr.bf16.mxu0 %v411
  %2067 = vmatpush1.bf16.msra.mxu0 %v410
  %2068 = vmatprep.subr.bf16.mxu0 0
  %2069 = vmatpush1.bf16.msra.mxu0 0
  %2070 = vmatprep.subr.bf16.mxu0 0
  %2071 = vmatpush1.bf16.msra.mxu0 0
  %2072 = vmatprep.subr.bf16.mxu0 0
  %2073 = vmatpush1.bf16.msra.mxu0 0
  %2074 = vmatprep.subr.bf16.mxu0 0
  %2075 = vmatpush1.bf16.msra.mxu0 0
  %2076 = vmatprep.subr.bf16.mxu0 0
  %2077 = vmatpush1.bf16.msra.mxu0 0
  %2078 = vmatprep.subr.bf16.mxu0 0
  %2079 = vmatpush1.bf16.msra.mxu0 0
  %2080 = vmatprep.subr.bf16.mxu0 0
  %2081 = vmatpush1.bf16.msra.mxu0 0
  %2082 = vmatprep.subr.bf16.mxu0 0
  %2083 = vmatpush1.bf16.msra.mxu0 0
  %2084 = vmatprep.subr.bf16.mxu0 0
  %2085 = vmatpush1.bf16.msra.mxu0 0
  %2086 = vmatprep.subr.bf16.mxu0 0
  %2087 = vmatpush1.bf16.msra.mxu0 0
  %2088 = vmatprep.subr.bf16.mxu0 0
  %2089 = vmatpush1.bf16.msra.mxu0 0
  %2090 = vmatprep.subr.bf16.mxu0 0
  %2091 = vmatpush1.bf16.msra.mxu0 0
  %2092 = vmatprep.mubr.bf16.mxu0 0
  %2093 = vmatmul.mubr.bf16.gmra.mrb[0].mxu0 %v2058
  %v2094 = vpop.f32.mrb[0].mxu0
  %v2095 = vadd.f32 0.0, %v2094
  %v2096 = vpop.f32.mrb[0].mxu0
  %v2097 = vadd.f32 0.0, %v2096
  %v2098 = vpop.f32.mrb[0].mxu0
  %v2099 = vpop.f32.mrb[0].mxu0
  %2100 = vdwg.mxu0
  %v2103 = vcombine.low %v2095, %v2097
  %v2105 = vunpack.c.l.s4 1983009808
  %v2106 = vunpack.c.0.s8 %v2105
  %v2107 = vlaneseq
  %v2108 = vshrl.u32 %v2107, 7
  %v2109 = vsub.s32 %v2106, %v2108
  %v2110 = vrot.slane %v2103, %v2109
  %v2112 = vadd.f32 %v2055, %v2110
  %v2113 = vpack.c.bf16 %v2052, %v2052
  %v2115 = vsel %vm280, %v2113, 0
  %2117 = vmatprep.subr.bf16.mxu0 %v513
  %2118 = vmatpush1.bf16.msra.mxu0 %v512
  %2119 = vmatprep.subr.bf16.mxu0 %v515
  %2120 = vmatpush1.bf16.msra.mxu0 %v514
  %2121 = vmatprep.subr.bf16.mxu0 %v517
  %2122 = vmatpush1.bf16.msra.mxu0 %v516
  %2123 = vmatprep.subr.bf16.mxu0 %v519
  %2124 = vmatpush1.bf16.msra.mxu0 %v518
  %2125 = vmatprep.subr.bf16.mxu0 0
  %2126 = vmatpush1.bf16.msra.mxu0 0
  %2127 = vmatprep.subr.bf16.mxu0 0
  %2128 = vmatpush1.bf16.msra.mxu0 0
  %2129 = vmatprep.subr.bf16.mxu0 0
  %2130 = vmatpush1.bf16.msra.mxu0 0
  %2131 = vmatprep.subr.bf16.mxu0 0
  %2132 = vmatpush1.bf16.msra.mxu0 0
  %2133 = vmatprep.subr.bf16.mxu0 0
  %2134 = vmatpush1.bf16.msra.mxu0 0
  %2135 = vmatprep.subr.bf16.mxu0 0
  %2136 = vmatpush1.bf16.msra.mxu0 0
  %2137 = vmatprep.subr.bf16.mxu0 0
  %2138 = vmatpush1.bf16.msra.mxu0 0
  %2139 = vmatprep.subr.bf16.mxu0 0
  %2140 = vmatpush1.bf16.msra.mxu0 0
  %2141 = vmatprep.subr.bf16.mxu0 0
  %2142 = vmatpush1.bf16.msra.mxu0 0
  %2143 = vmatprep.subr.bf16.mxu0 0
  %2144 = vmatpush1.bf16.msra.mxu0 0
  %2145 = vmatprep.subr.bf16.mxu0 0
  %2146 = vmatpush1.bf16.msra.mxu0 0
  %2147 = vmatprep.subr.bf16.mxu0 0
  %2148 = vmatpush1.bf16.msra.mxu0 0
  %2149 = vmatprep.mubr.bf16.mxu0 0
  %2150 = vmatmul.mubr.bf16.gmra.mrb[0].mxu0 %v2115
  %v2151 = vpop.f32.mrb[0].mxu0
  %v2152 = vadd.f32 %v481, %v2151
  %v2153 = vpop.f32.mrb[0].mxu0
  %v2154 = vadd.f32 %v485, %v2153
  %v2155 = vpop.f32.mrb[0].mxu0
  %v2156 = vpop.f32.mrb[0].mxu0
  %2157 = vdwg.mxu0
  %v2158 = vadd.f32 %v2112, %v2152
  %v2159 = vxor.u32 %v2158, 2147483648
  %v2160 = vmul.f32 %v2159, 1.442695
  %v2161 = vpow.pop %v2160
  %v2162 = vadd.f32 %v2161, 1.0
  %v2163 = vrcp.pop %v2162
  %v2164 = vmul.f32 1.0, %v2163
  %v2165 = vmul.f32 %v2164, %v2154
  %v2167 = vrot.slane %v2112, 2
  %v2169 = vadd.f32 %v2167, %v2165
  %v2170 = vtanh.pop %v2169
  %v2171 = vsub.f32 1.0, %v2164
  %2173 = vrot.lane.b32.xlu0 %v2170, 64
  %v2174 = vpop.permute.xlu0 %2173
  %v2176 = vmul.f32 %v2171, %v2174
  %v2179 = vunpack.c.l.s4 1983009808
  %v2180 = vunpack.c.0.s8 %v2179
  %v2181 = vlaneseq
  %v2182 = vshrl.u32 %v2181, 7
  %v2183 = vsub.s32 %v2180, %v2182
  %v2184 = vrot.slane %v2052, %v2183
  %2185 = vrot.lane.b32.xlu0 %v2184, 64
  %v2186 = vpop.permute.xlu0 %2185
  %v2188 = vmul.f32 %v2164, %v2186
  %v2189 = vadd.f32 %v2176, %v2188
  %v2192 = vunpack.c.l.s4 1983009808
  %v2193 = vunpack.c.0.s8 %v2192
  %v2194 = vlaneseq
  %v2195 = vshrl.u32 %v2194, 7
  %v2196 = vsub.s32 %v2193, %v2195
  %v2197 = vrot.slane %v2189, %v2196
  %2198 = vrot.lane.b32.xlu0 %v2197, 64
  %v2199 = vpop.permute.xlu0 %2198
  %2201 = vst.msk [vmem:[#allocation2] sm:$0x3] %vm324, %v2199
  %v2202 = vpack.c.bf16 %v2189, %v2189
  %v2205 = vunpack.c.l.s4 1966171168
  %v2206 = vunpack.c.0.s8 %v2205
  %v2207 = vlaneseq
  %v2208 = vshrl.u32 %v2207, 7
  %v2209 = vsub.s32 %v2206, %v2208
  %v2210 = vrot.slane %v2202, %v2209
  %v2212 = vunpack.c.l.s4 1966171168
  %v2213 = vunpack.c.0.s8 %v2212
  %v2214 = vlaneseq
  %v2215 = vshrl.u32 %v2214, 7
  %v2216 = vsub.s32 %v2213, %v2215
  %v2217 = vrot.slane %v2210, %v2216
  %v2218 = vunpack.i.l.s16 %v2217
  %v2219 = vunpack.i.h.s16 %v2217
  %v2220 = vpack.i.b16 %v2218, %v2218
  %v2221 = vlaneseq
  %v2222 = vshrl.u32 %v2221, 7
  %v2223 = vsub.s32 0, %v2222
  %v2224 = vrot.slane %v2220, %v2223
  %2225 = vrot.lane.b32.xlu0 %v2224, 64
  %v2226 = vpop.permute.xlu0 %2225
  %v2228 = vsel %vm280, %v2226, 0
  %2230 = vmatprep.subr.bf16.mxu0 0
  %2231 = vmatpush1.bf16.xpose.msra.mxu0 %v669
  %2232 = vmatprep.subr.bf16.mxu0 0
  %2233 = vmatpush1.bf16.xpose.msra.mxu0 0
  %2234 = vmatprep.subr.bf16.mxu0 0
  %2235 = vmatpush1.bf16.xpose.msra.mxu0 0
  %2236 = vmatprep.subr.bf16.mxu0 0
  %2237 = vmatpush1.bf16.xpose.msra.mxu0 0
  %2238 = vmatprep.subr.bf16.mxu0 0
  %2239 = vmatpush1.bf16.xpose.msra.mxu0 0
  %2240 = vmatprep.subr.bf16.mxu0 0
  %2241 = vmatpush1.bf16.xpose.msra.mxu0 0
  %2242 = vmatprep.subr.bf16.mxu0 0
  %2243 = vmatpush1.bf16.xpose.msra.mxu0 0
  %2244 = vmatprep.subr.bf16.mxu0 0
  %2245 = vmatpush1.bf16.xpose.msra.mxu0 0
  %2246 = vmatprep.subr.bf16.mxu0 0
  %2247 = vmatpush1.bf16.xpose.msra.mxu0 0
  %2248 = vmatprep.subr.bf16.mxu0 0
  %2249 = vmatpush1.bf16.xpose.msra.mxu0 0
  %2250 = vmatprep.subr.bf16.mxu0 0
  %2251 = vmatpush1.bf16.xpose.msra.mxu0 0
  %2252 = vmatprep.subr.bf16.mxu0 0
  %2253 = vmatpush1.bf16.xpose.msra.mxu0 0
  %2254 = vmatprep.subr.bf16.mxu0 0
  %2255 = vmatpush1.bf16.xpose.msra.mxu0 0
  %2256 = vmatprep.subr.bf16.mxu0 0
  %2257 = vmatpush1.bf16.xpose.msra.mxu0 0
  %2258 = vmatprep.subr.bf16.mxu0 0
  %2259 = vmatpush1.bf16.xpose.msra.mxu0 0
  %2260 = vmatprep.subr.bf16.mxu0 0
  %2261 = vmatpush1.bf16.xpose.msra.mxu0 0
  %2262 = vmatprep.mubr.bf16.mxu0 0
  %2263 = vmatmul.mubr.bf16.gmra.mrb[0].mxu0 %v2228
  %v2264 = vpop.f32.mrb[0].mxu0
  %v2265 = vadd.f32 0.0, %v2264
  %v2266 = vpop.f32.mrb[0].mxu0
  %v2267 = vpop.f32.mrb[0].mxu0
  %v2268 = vpop.f32.mrb[0].mxu0
  %2269 = vdwg.mxu0
  %v2270 = vpack.i.b16 %v2219, %v2219
  %v2271 = vlaneseq
  %v2272 = vshrl.u32 %v2271, 7
  %v2273 = vsub.s32 0, %v2272
  %v2274 = vrot.slane %v2270, %v2273
  %2275 = vrot.lane.b32.xlu0 %v2274, 64
  %v2276 = vpop.permute.xlu0 %2275
  %v2278 = vsel %vm280, %v2276, 0
  %2280 = vmatprep.subr.bf16.mxu0 0
  %2281 = vmatpush1.bf16.xpose.msra.mxu0 %v746
  %2282 = vmatprep.subr.bf16.mxu0 0
  %2283 = vmatpush1.bf16.xpose.msra.mxu0 0
  %2284 = vmatprep.subr.bf16.mxu0 0
  %2285 = vmatpush1.bf16.xpose.msra.mxu0 0
  %2286 = vmatprep.subr.bf16.mxu0 0
  %2287 = vmatpush1.bf16.xpose.msra.mxu0 0
  %2288 = vmatprep.subr.bf16.mxu0 0
  %2289 = vmatpush1.bf16.xpose.msra.mxu0 0
  %2290 = vmatprep.subr.bf16.mxu0 0
  %2291 = vmatpush1.bf16.xpose.msra.mxu0 0
  %2292 = vmatprep.subr.bf16.mxu0 0
  %2293 = vmatpush1.bf16.xpose.msra.mxu0 0
  %2294 = vmatprep.subr.bf16.mxu0 0
  %2295 = vmatpush1.bf16.xpose.msra.mxu0 0
  %2296 = vmatprep.subr.bf16.mxu0 0
  %2297 = vmatpush1.bf16.xpose.msra.mxu0 0
  %2298 = vmatprep.subr.bf16.mxu0 0
  %2299 = vmatpush1.bf16.xpose.msra.mxu0 0
  %2300 = vmatprep.subr.bf16.mxu0 0
  %2301 = vmatpush1.bf16.xpose.msra.mxu0 0
  %2302 = vmatprep.subr.bf16.mxu0 0
  %2303 = vmatpush1.bf16.xpose.msra.mxu0 0
  %2304 = vmatprep.subr.bf16.mxu0 0
  %2305 = vmatpush1.bf16.xpose.msra.mxu0 0
  %2306 = vmatprep.subr.bf16.mxu0 0
  %2307 = vmatpush1.bf16.xpose.msra.mxu0 0
  %2308 = vmatprep.subr.bf16.mxu0 0
  %2309 = vmatpush1.bf16.xpose.msra.mxu0 0
  %2310 = vmatprep.subr.bf16.mxu0 0
  %2311 = vmatpush1.bf16.xpose.msra.mxu0 0
  %2312 = vmatprep.mubr.bf16.mxu0 0
  %2313 = vmatmul.mubr.bf16.gmra.mrb[0].mxu0 %v2278
  %v2314 = vpop.f32.mrb[0].mxu0
  %v2315 = vadd.f32 0.0, %v2314
  %v2316 = vpop.f32.mrb[0].mxu0
  %v2317 = vpop.f32.mrb[0].mxu0
  %v2318 = vpop.f32.mrb[0].mxu0
  %2319 = vdwg.mxu0
  %v2320 = vsel %vm788, %v2265, -inf
  %2321 = vmax.xlane.f32.xlu0 %v2320
  %v2322 = vpop.xlane.xlu0 %2321
  %v2323 = vsel %vm788, %v2315, -inf
  %2324 = vmax.xlane.f32.xlu0 %v2323
  %v2325 = vpop.xlane.xlu0 %2324
  %v2326 = vsub.f32 %v2265, %v2322
  %v2327 = vsub.f32 %v2315, %v2325
  %v2328 = vmul.f32 %v2326, 1.442695
  %v2329 = vpow.pop %v2328
  %v2330 = vmul.f32 %v2327, 1.442695
  %v2331 = vpow.pop %v2330
  %v2332 = vsel %vm788, %v2329, 0.0
  %2333 = vadd.xlane.f32.xlu0 %v2332
  %v2334 = vpop.xlane.xlu0 %2333
  %v2335 = vsel %vm788, %v2331, 0.0
  %2336 = vadd.xlane.f32.xlu0 %v2335
  %v2337 = vpop.xlane.xlu0 %2336
  %v2338 = vrcp.pop %v2334
  %v2339 = vmul.f32 %v2329, %v2338
  %v2340 = vrcp.pop %v2337
  %v2341 = vmul.f32 %v2331, %v2340
  %v2342 = vpack.c.bf16 %v2339, %v2339
  %v2343 = vpack.c.bf16 %v2341, %v2341
  %v2345 = vsel %vm813, %v2342, 0
  %2347 = vmatprep.subr.bf16.mxu0 0
  %2348 = vmatpush1.bf16.msra.mxu0 %v818
  %2349 = vmatprep.subr.bf16.mxu0 0
  %2350 = vmatpush1.bf16.msra.mxu0 0
  %2351 = vmatprep.subr.bf16.mxu0 0
  %2352 = vmatpush1.bf16.msra.mxu0 0
  %2353 = vmatprep.subr.bf16.mxu0 0
  %2354 = vmatpush1.bf16.msra.mxu0 0
  %2355 = vmatprep.subr.bf16.mxu0 0
  %2356 = vmatpush1.bf16.msra.mxu0 0
  %2357 = vmatprep.subr.bf16.mxu0 0
  %2358 = vmatpush1.bf16.msra.mxu0 0
  %2359 = vmatprep.subr.bf16.mxu0 0
  %2360 = vmatpush1.bf16.msra.mxu0 0
  %2361 = vmatprep.subr.bf16.mxu0 0
  %2362 = vmatpush1.bf16.msra.mxu0 0
  %2363 = vmatprep.subr.bf16.mxu0 0
  %2364 = vmatpush1.bf16.msra.mxu0 0
  %2365 = vmatprep.subr.bf16.mxu0 0
  %2366 = vmatpush1.bf16.msra.mxu0 0
  %2367 = vmatprep.subr.bf16.mxu0 0
  %2368 = vmatpush1.bf16.msra.mxu0 0
  %2369 = vmatprep.subr.bf16.mxu0 0
  %2370 = vmatpush1.bf16.msra.mxu0 0
  %2371 = vmatprep.subr.bf16.mxu0 0
  %2372 = vmatpush1.bf16.msra.mxu0 0
  %2373 = vmatprep.subr.bf16.mxu0 0
  %2374 = vmatpush1.bf16.msra.mxu0 0
  %2375 = vmatprep.subr.bf16.mxu0 0
  %2376 = vmatpush1.bf16.msra.mxu0 0
  %2377 = vmatprep.subr.bf16.mxu0 0
  %2378 = vmatpush1.bf16.msra.mxu0 0
  %2379 = vmatprep.mubr.bf16.mxu0 0
  %2380 = vmatmul.mubr.bf16.gmra.mrb[0].mxu0 %v2345
  %v2381 = vpop.f32.mrb[0].mxu0
  %v2382 = vadd.f32 0.0, %v2381
  %v2383 = vpop.f32.mrb[0].mxu0
  %v2384 = vpop.f32.mrb[0].mxu0
  %v2385 = vpop.f32.mrb[0].mxu0
  %2386 = vdwg.mxu0
  %v2388 = vsel %vm813, %v2343, 0
  %2390 = vmatprep.subr.bf16.mxu0 0
  %2391 = vmatpush1.bf16.msra.mxu0 %v863
  %2392 = vmatprep.subr.bf16.mxu0 0
  %2393 = vmatpush1.bf16.msra.mxu0 0
  %2394 = vmatprep.subr.bf16.mxu0 0
  %2395 = vmatpush1.bf16.msra.mxu0 0
  %2396 = vmatprep.subr.bf16.mxu0 0
  %2397 = vmatpush1.bf16.msra.mxu0 0
  %2398 = vmatprep.subr.bf16.mxu0 0
  %2399 = vmatpush1.bf16.msra.mxu0 0
  %2400 = vmatprep.subr.bf16.mxu0 0
  %2401 = vmatpush1.bf16.msra.mxu0 0
  %2402 = vmatprep.subr.bf16.mxu0 0
  %2403 = vmatpush1.bf16.msra.mxu0 0
  %2404 = vmatprep.subr.bf16.mxu0 0
  %2405 = vmatpush1.bf16.msra.mxu0 0
  %2406 = vmatprep.subr.bf16.mxu0 0
  %2407 = vmatpush1.bf16.msra.mxu0 0
  %2408 = vmatprep.subr.bf16.mxu0 0
  %2409 = vmatpush1.bf16.msra.mxu0 0
  %2410 = vmatprep.subr.bf16.mxu0 0
  %2411 = vmatpush1.bf16.msra.mxu0 0
  %2412 = vmatprep.subr.bf16.mxu0 0
  %2413 = vmatpush1.bf16.msra.mxu0 0
  %2414 = vmatprep.subr.bf16.mxu0 0
  %2415 = vmatpush1.bf16.msra.mxu0 0
  %2416 = vmatprep.subr.bf16.mxu0 0
  %2417 = vmatpush1.bf16.msra.mxu0 0
  %2418 = vmatprep.subr.bf16.mxu0 0
  %2419 = vmatpush1.bf16.msra.mxu0 0
  %2420 = vmatprep.subr.bf16.mxu0 0
  %2421 = vmatpush1.bf16.msra.mxu0 0
  %2422 = vmatprep.mubr.bf16.mxu0 0
  %2423 = vmatmul.mubr.bf16.gmra.mrb[0].mxu0 %v2388
  %v2424 = vpop.f32.mrb[0].mxu0
  %v2425 = vadd.f32 0.0, %v2424
  %v2426 = vpop.f32.mrb[0].mxu0
  %v2427 = vpop.f32.mrb[0].mxu0
  %v2428 = vpop.f32.mrb[0].mxu0
  %2429 = vdwg.mxu0
  %v2432 = vrot.slane %v2425, 7
  %v2433 = vsel %vm908, %v2432, %v2382
  %2435 = vst.msk [vmem:[#allocation3] sm:$0x3] %vm324, %v2433
  %s2436 = scalar_lea.vmem %s10, 6
  %v2437 = vld [vmem:[%s2436] sm:$0x3]
  %v2439 = vrot.slane %v2437, 1
  %v2442 = vmul.f32 %v2382, %v2437
  %v2443 = vmul.f32 %v2425, %v2439
  %v2444 = vpack.c.bf16 %v2442, %v2442
  %v2445 = vpack.c.bf16 %v2443, %v2443
  %v2449 = vunpack.c.l.s4 1966171168
  %v2450 = vunpack.c.0.s8 %v2449
  %v2451 = vlaneseq
  %v2452 = vshrl.u32 %v2451, 7
  %v2453 = vsub.s32 %v2450, %v2452
  %v2454 = vrot.slane %v2444, %v2453
  %v2456 = vunpack.c.l.s4 1966171168
  %v2457 = vunpack.c.0.s8 %v2456
  %v2458 = vlaneseq
  %v2459 = vshrl.u32 %v2458, 7
  %v2460 = vsub.s32 %v2457, %v2459
  %v2461 = vrot.slane %v2454, %v2460
  %v2463 = vunpack.c.l.s4 1966171168
  %v2464 = vunpack.c.0.s8 %v2463
  %v2465 = vlaneseq
  %v2466 = vshrl.u32 %v2465, 7
  %v2467 = vsub.s32 %v2464, %v2466
  %v2468 = vrot.slane %v2445, %v2467
  %v2470 = vunpack.c.l.s4 1966171168
  %v2471 = vunpack.c.0.s8 %v2470
  %v2472 = vlaneseq
  %v2473 = vshrl.u32 %v2472, 7
  %v2474 = vsub.s32 %v2471, %v2473
  %v2475 = vrot.slane %v2468, %v2474
  %v2477 = vunpack.c.l.s4 1935823168
  %v2478 = vunpack.c.0.s8 %v2477
  %v2479 = vlaneseq
  %v2480 = vshrl.u32 %v2479, 7
  %v2481 = vsub.s32 %v2478, %v2480
  %v2482 = vrot.slane %v2461, %v2481
  %v2484 = vunpack.c.l.s4 1935823168
  %v2485 = vunpack.c.0.s8 %v2484
  %v2486 = vlaneseq
  %v2487 = vshrl.u32 %v2486, 7
  %v2488 = vsub.s32 %v2485, %v2487
  %v2489 = vrot.slane %v2482, %v2488
  %v2491 = vunpack.c.l.s4 1935823168
  %v2492 = vunpack.c.0.s8 %v2491
  %v2493 = vlaneseq
  %v2494 = vshrl.u32 %v2493, 7
  %v2495 = vsub.s32 %v2492, %v2494
  %v2496 = vrot.slane %v2475, %v2495
  %v2498 = vunpack.c.l.s4 1935823168
  %v2499 = vunpack.c.0.s8 %v2498
  %v2500 = vlaneseq
  %v2501 = vshrl.u32 %v2500, 7
  %v2502 = vsub.s32 %v2499, %v2501
  %v2503 = vrot.slane %v2496, %v2502
  %v2504 = vunpack.c.l.b16 %v2489
  %v2505 = vunpack.c.l.b16 %v2503
  %v2506 = vrot.slane %v2505, 7
  %v2507 = vsel %vm908, %v2506, %v2504
  %v2508 = vpack.c.b16 %v2507, %v2507
  %v2510 = vunpack.c.l.s4 1966171168
  %v2511 = vunpack.c.0.s8 %v2510
  %v2512 = vlaneseq
  %v2513 = vshrl.u32 %v2512, 7
  %v2514 = vsub.s32 %v2511, %v2513
  %v2515 = vrot.slane %v2508, %v2514
  %v2517 = vunpack.c.l.s4 1966171168
  %v2518 = vunpack.c.0.s8 %v2517
  %v2519 = vlaneseq
  %v2520 = vshrl.u32 %v2519, 7
  %v2521 = vsub.s32 %v2518, %v2520
  %v2522 = vrot.slane %v2515, %v2521
  %s2524 = scalar_lea.vmem %s12, 3
  %2525 = vst.msk [vmem:[%s2524] sm:$0x1] %vm999, %v2522
  %s2526 = scalar_lea.vmem %s11, 6
  %v2527 = vld [vmem:[%s2526] sm:$0x3]
  %v2530 = vunpack.c.l.s4 1983009808
  %v2531 = vunpack.c.0.s8 %v2530
  %v2532 = vlaneseq
  %v2533 = vshrl.u32 %v2532, 7
  %v2534 = vsub.s32 %v2531, %v2533
  %v2535 = vrot.slane %v2527, %v2534
  %2536 = vrot.lane.b32.xlu0 %v2535, 64
  %v2537 = vpop.permute.xlu0 %2536
  %v2539 = vmul.f32 %v2189, %v2537
  %v2540 = vpack.c.bf16 %v2539, %v2539
  %v2543 = vunpack.c.l.s4 1966171168
  %v2544 = vunpack.c.0.s8 %v2543
  %v2545 = vlaneseq
  %v2546 = vshrl.u32 %v2545, 7
  %v2547 = vsub.s32 %v2544, %v2546
  %v2548 = vrot.slane %v2540, %v2547
  %v2550 = vunpack.c.l.s4 1966171168
  %v2551 = vunpack.c.0.s8 %v2550
  %v2552 = vlaneseq
  %v2553 = vshrl.u32 %v2552, 7
  %v2554 = vsub.s32 %v2551, %v2553
  %v2555 = vrot.slane %v2548, %v2554
  %2556 = vrot.lane.b32.xlu0 %v2555, 64
  %v2557 = vpop.permute.xlu0 %2556
  %s2559 = scalar_lea.vmem %s13, 3
  %2560 = vst.msk [vmem:[%s2559] sm:$0x1] %vm999, %v2557
  %v2561 = vld [vmem:[#allocation2] sm:$0x3]
  %v2562 = vld [vmem:[#allocation3] sm:$0x3]
  %s2563 = scalar_lea.vmem [#allocation4], 16
  %v2564 = vld [vmem:[%s2563] sm:$0xf]
  %v2565 = vpack.c.bf16 %v2562, %v2562
  %v2567 = vsel %vm280, %v2565, 0
  %2569 = vmatprep.subr.bf16.mxu0 %v405
  %2570 = vmatpush1.bf16.msra.mxu0 %v404
  %2571 = vmatprep.subr.bf16.mxu0 %v407
  %2572 = vmatpush1.bf16.msra.mxu0 %v406
  %2573 = vmatprep.subr.bf16.mxu0 %v409
  %2574 = vmatpush1.bf16.msra.mxu0 %v408
  %2575 = vmatprep.subr.bf16.mxu0 %v411
  %2576 = vmatpush1.bf16.msra.mxu0 %v410
  %2577 = vmatprep.subr.bf16.mxu0 0
  %2578 = vmatpush1.bf16.msra.mxu0 0
  %2579 = vmatprep.subr.bf16.mxu0 0
  %2580 = vmatpush1.bf16.msra.mxu0 0
  %2581 = vmatprep.subr.bf16.mxu0 0
  %2582 = vmatpush1.bf16.msra.mxu0 0
  %2583 = vmatprep.subr.bf16.mxu0 0
  %2584 = vmatpush1.bf16.msra.mxu0 0
  %2585 = vmatprep.subr.bf16.mxu0 0
  %2586 = vmatpush1.bf16.msra.mxu0 0
  %2587 = vmatprep.subr.bf16.mxu0 0
  %2588 = vmatpush1.bf16.msra.mxu0 0
  %2589 = vmatprep.subr.bf16.mxu0 0
  %2590 = vmatpush1.bf16.msra.mxu0 0
  %2591 = vmatprep.subr.bf16.mxu0 0
  %2592 = vmatpush1.bf16.msra.mxu0 0
  %2593 = vmatprep.subr.bf16.mxu0 0
  %2594 = vmatpush1.bf16.msra.mxu0 0
  %2595 = vmatprep.subr.bf16.mxu0 0
  %2596 = vmatpush1.bf16.msra.mxu0 0
  %2597 = vmatprep.subr.bf16.mxu0 0
  %2598 = vmatpush1.bf16.msra.mxu0 0
  %2599 = vmatprep.subr.bf16.mxu0 0
  %2600 = vmatpush1.bf16.msra.mxu0 0
  %2601 = vmatprep.mubr.bf16.mxu0 0
  %2602 = vmatmul.mubr.bf16.gmra.mrb[0].mxu0 %v2567
  %v2603 = vpop.f32.mrb[0].mxu0
  %v2604 = vadd.f32 0.0, %v2603
  %v2605 = vpop.f32.mrb[0].mxu0
  %v2606 = vadd.f32 0.0, %v2605
  %v2607 = vpop.f32.mrb[0].mxu0
  %v2608 = vpop.f32.mrb[0].mxu0
  %2609 = vdwg.mxu0
  %v2612 = vcombine.low %v2604, %v2606
  %v2614 = vunpack.c.l.s4 1983009808
  %v2615 = vunpack.c.0.s8 %v2614
  %v2616 = vlaneseq
  %v2617 = vshrl.u32 %v2616, 7
  %v2618 = vsub.s32 %v2615, %v2617
  %v2619 = vrot.slane %v2612, %v2618
  %v2621 = vadd.f32 %v2564, %v2619
  %v2622 = vpack.c.bf16 %v2561, %v2561
  %v2624 = vsel %vm280, %v2622, 0
  %2626 = vmatprep.subr.bf16.mxu0 %v513
  %2627 = vmatpush1.bf16.msra.mxu0 %v512
  %2628 = vmatprep.subr.bf16.mxu0 %v515
  %2629 = vmatpush1.bf16.msra.mxu0 %v514
  %2630 = vmatprep.subr.bf16.mxu0 %v517
  %2631 = vmatpush1.bf16.msra.mxu0 %v516
  %2632 = vmatprep.subr.bf16.mxu0 %v519
  %2633 = vmatpush1.bf16.msra.mxu0 %v518
  %2634 = vmatprep.subr.bf16.mxu0 0
  %2635 = vmatpush1.bf16.msra.mxu0 0
  %2636 = vmatprep.subr.bf16.mxu0 0
  %2637 = vmatpush1.bf16.msra.mxu0 0
  %2638 = vmatprep.subr.bf16.mxu0 0
  %2639 = vmatpush1.bf16.msra.mxu0 0
  %2640 = vmatprep.subr.bf16.mxu0 0
  %2641 = vmatpush1.bf16.msra.mxu0 0
  %2642 = vmatprep.subr.bf16.mxu0 0
  %2643 = vmatpush1.bf16.msra.mxu0 0
  %2644 = vmatprep.subr.bf16.mxu0 0
  %2645 = vmatpush1.bf16.msra.mxu0 0
  %2646 = vmatprep.subr.bf16.mxu0 0
  %2647 = vmatpush1.bf16.msra.mxu0 0
  %2648 = vmatprep.subr.bf16.mxu0 0
  %2649 = vmatpush1.bf16.msra.mxu0 0
  %2650 = vmatprep.subr.bf16.mxu0 0
  %2651 = vmatpush1.bf16.msra.mxu0 0
  %2652 = vmatprep.subr.bf16.mxu0 0
  %2653 = vmatpush1.bf16.msra.mxu0 0
  %2654 = vmatprep.subr.bf16.mxu0 0
  %2655 = vmatpush1.bf16.msra.mxu0 0
  %2656 = vmatprep.subr.bf16.mxu0 0
  %2657 = vmatpush1.bf16.msra.mxu0 0
  %2658 = vmatprep.mubr.bf16.mxu0 0
  %2659 = vmatmul.mubr.bf16.gmra.mrb[0].mxu0 %v2624
  %v2660 = vpop.f32.mrb[0].mxu0
  %v2661 = vadd.f32 %v481, %v2660
  %v2662 = vpop.f32.mrb[0].mxu0
  %v2663 = vadd.f32 %v485, %v2662
  %v2664 = vpop.f32.mrb[0].mxu0
  %v2665 = vpop.f32.mrb[0].mxu0
  %2666 = vdwg.mxu0
  %v2667 = vadd.f32 %v2621, %v2661
  %v2668 = vxor.u32 %v2667, 2147483648
  %v2669 = vmul.f32 %v2668, 1.442695
  %v2670 = vpow.pop %v2669
  %v2671 = vadd.f32 %v2670, 1.0
  %v2672 = vrcp.pop %v2671
  %v2673 = vmul.f32 1.0, %v2672
  %v2674 = vmul.f32 %v2673, %v2663
  %v2676 = vrot.slane %v2621, 2
  %v2678 = vadd.f32 %v2676, %v2674
  %v2679 = vtanh.pop %v2678
  %v2680 = vsub.f32 1.0, %v2673
  %2682 = vrot.lane.b32.xlu0 %v2679, 64
  %v2683 = vpop.permute.xlu0 %2682
  %v2685 = vmul.f32 %v2680, %v2683
  %v2688 = vunpack.c.l.s4 1983009808
  %v2689 = vunpack.c.0.s8 %v2688
  %v2690 = vlaneseq
  %v2691 = vshrl.u32 %v2690, 7
  %v2692 = vsub.s32 %v2689, %v2691
  %v2693 = vrot.slane %v2561, %v2692
  %2694 = vrot.lane.b32.xlu0 %v2693, 64
  %v2695 = vpop.permute.xlu0 %2694
  %v2697 = vmul.f32 %v2673, %v2695
  %v2698 = vadd.f32 %v2685, %v2697
  %v2701 = vunpack.c.l.s4 1983009808
  %v2702 = vunpack.c.0.s8 %v2701
  %v2703 = vlaneseq
  %v2704 = vshrl.u32 %v2703, 7
  %v2705 = vsub.s32 %v2702, %v2704
  %v2706 = vrot.slane %v2698, %v2705
  %2707 = vrot.lane.b32.xlu0 %v2706, 64
  %v2708 = vpop.permute.xlu0 %2707
  %2710 = vst.msk [vmem:[#allocation2] sm:$0x3] %vm324, %v2708
  %v2711 = vpack.c.bf16 %v2698, %v2698
  %v2714 = vunpack.c.l.s4 1966171168
  %v2715 = vunpack.c.0.s8 %v2714
  %v2716 = vlaneseq
  %v2717 = vshrl.u32 %v2716, 7
  %v2718 = vsub.s32 %v2715, %v2717
  %v2719 = vrot.slane %v2711, %v2718
  %v2721 = vunpack.c.l.s4 1966171168
  %v2722 = vunpack.c.0.s8 %v2721
  %v2723 = vlaneseq
  %v2724 = vshrl.u32 %v2723, 7
  %v2725 = vsub.s32 %v2722, %v2724
  %v2726 = vrot.slane %v2719, %v2725
  %v2727 = vunpack.i.l.s16 %v2726
  %v2728 = vunpack.i.h.s16 %v2726
  %v2729 = vpack.i.b16 %v2727, %v2727
  %v2730 = vlaneseq
  %v2731 = vshrl.u32 %v2730, 7
  %v2732 = vsub.s32 0, %v2731
  %v2733 = vrot.slane %v2729, %v2732
  %2734 = vrot.lane.b32.xlu0 %v2733, 64
  %v2735 = vpop.permute.xlu0 %2734
  %v2737 = vsel %vm280, %v2735, 0
  %2739 = vmatprep.subr.bf16.mxu0 0
  %2740 = vmatpush1.bf16.xpose.msra.mxu0 %v669
  %2741 = vmatprep.subr.bf16.mxu0 0
  %2742 = vmatpush1.bf16.xpose.msra.mxu0 0
  %2743 = vmatprep.subr.bf16.mxu0 0
  %2744 = vmatpush1.bf16.xpose.msra.mxu0 0
  %2745 = vmatprep.subr.bf16.mxu0 0
  %2746 = vmatpush1.bf16.xpose.msra.mxu0 0
  %2747 = vmatprep.subr.bf16.mxu0 0
  %2748 = vmatpush1.bf16.xpose.msra.mxu0 0
  %2749 = vmatprep.subr.bf16.mxu0 0
  %2750 = vmatpush1.bf16.xpose.msra.mxu0 0
  %2751 = vmatprep.subr.bf16.mxu0 0
  %2752 = vmatpush1.bf16.xpose.msra.mxu0 0
  %2753 = vmatprep.subr.bf16.mxu0 0
  %2754 = vmatpush1.bf16.xpose.msra.mxu0 0
  %2755 = vmatprep.subr.bf16.mxu0 0
  %2756 = vmatpush1.bf16.xpose.msra.mxu0 0
  %2757 = vmatprep.subr.bf16.mxu0 0
  %2758 = vmatpush1.bf16.xpose.msra.mxu0 0
  %2759 = vmatprep.subr.bf16.mxu0 0
  %2760 = vmatpush1.bf16.xpose.msra.mxu0 0
  %2761 = vmatprep.subr.bf16.mxu0 0
  %2762 = vmatpush1.bf16.xpose.msra.mxu0 0
  %2763 = vmatprep.subr.bf16.mxu0 0
  %2764 = vmatpush1.bf16.xpose.msra.mxu0 0
  %2765 = vmatprep.subr.bf16.mxu0 0
  %2766 = vmatpush1.bf16.xpose.msra.mxu0 0
  %2767 = vmatprep.subr.bf16.mxu0 0
  %2768 = vmatpush1.bf16.xpose.msra.mxu0 0
  %2769 = vmatprep.subr.bf16.mxu0 0
  %2770 = vmatpush1.bf16.xpose.msra.mxu0 0
  %2771 = vmatprep.mubr.bf16.mxu0 0
  %2772 = vmatmul.mubr.bf16.gmra.mrb[0].mxu0 %v2737
  %v2773 = vpop.f32.mrb[0].mxu0
  %v2774 = vadd.f32 0.0, %v2773
  %v2775 = vpop.f32.mrb[0].mxu0
  %v2776 = vpop.f32.mrb[0].mxu0
  %v2777 = vpop.f32.mrb[0].mxu0
  %2778 = vdwg.mxu0
  %v2779 = vpack.i.b16 %v2728, %v2728
  %v2780 = vlaneseq
  %v2781 = vshrl.u32 %v2780, 7
  %v2782 = vsub.s32 0, %v2781
  %v2783 = vrot.slane %v2779, %v2782
  %2784 = vrot.lane.b32.xlu0 %v2783, 64
  %v2785 = vpop.permute.xlu0 %2784
  %v2787 = vsel %vm280, %v2785, 0
  %2789 = vmatprep.subr.bf16.mxu0 0
  %2790 = vmatpush1.bf16.xpose.msra.mxu0 %v746
  %2791 = vmatprep.subr.bf16.mxu0 0
  %2792 = vmatpush1.bf16.xpose.msra.mxu0 0
  %2793 = vmatprep.subr.bf16.mxu0 0
  %2794 = vmatpush1.bf16.xpose.msra.mxu0 0
  %2795 = vmatprep.subr.bf16.mxu0 0
  %2796 = vmatpush1.bf16.xpose.msra.mxu0 0
  %2797 = vmatprep.subr.bf16.mxu0 0
  %2798 = vmatpush1.bf16.xpose.msra.mxu0 0
  %2799 = vmatprep.subr.bf16.mxu0 0
  %2800 = vmatpush1.bf16.xpose.msra.mxu0 0
  %2801 = vmatprep.subr.bf16.mxu0 0
  %2802 = vmatpush1.bf16.xpose.msra.mxu0 0
  %2803 = vmatprep.subr.bf16.mxu0 0
  %2804 = vmatpush1.bf16.xpose.msra.mxu0 0
  %2805 = vmatprep.subr.bf16.mxu0 0
  %2806 = vmatpush1.bf16.xpose.msra.mxu0 0
  %2807 = vmatprep.subr.bf16.mxu0 0
  %2808 = vmatpush1.bf16.xpose.msra.mxu0 0
  %2809 = vmatprep.subr.bf16.mxu0 0
  %2810 = vmatpush1.bf16.xpose.msra.mxu0 0
  %2811 = vmatprep.subr.bf16.mxu0 0
  %2812 = vmatpush1.bf16.xpose.msra.mxu0 0
  %2813 = vmatprep.subr.bf16.mxu0 0
  %2814 = vmatpush1.bf16.xpose.msra.mxu0 0
  %2815 = vmatprep.subr.bf16.mxu0 0
  %2816 = vmatpush1.bf16.xpose.msra.mxu0 0
  %2817 = vmatprep.subr.bf16.mxu0 0
  %2818 = vmatpush1.bf16.xpose.msra.mxu0 0
  %2819 = vmatprep.subr.bf16.mxu0 0
  %2820 = vmatpush1.bf16.xpose.msra.mxu0 0
  %2821 = vmatprep.mubr.bf16.mxu0 0
  %2822 = vmatmul.mubr.bf16.gmra.mrb[0].mxu0 %v2787
  %v2823 = vpop.f32.mrb[0].mxu0
  %v2824 = vadd.f32 0.0, %v2823
  %v2825 = vpop.f32.mrb[0].mxu0
  %v2826 = vpop.f32.mrb[0].mxu0
  %v2827 = vpop.f32.mrb[0].mxu0
  %2828 = vdwg.mxu0
  %v2829 = vsel %vm788, %v2774, -inf
  %2830 = vmax.xlane.f32.xlu0 %v2829
  %v2831 = vpop.xlane.xlu0 %2830
  %v2832 = vsel %vm788, %v2824, -inf
  %2833 = vmax.xlane.f32.xlu0 %v2832
  %v2834 = vpop.xlane.xlu0 %2833
  %v2835 = vsub.f32 %v2774, %v2831
  %v2836 = vsub.f32 %v2824, %v2834
  %v2837 = vmul.f32 %v2835, 1.442695
  %v2838 = vpow.pop %v2837
  %v2839 = vmul.f32 %v2836, 1.442695
  %v2840 = vpow.pop %v2839
  %v2841 = vsel %vm788, %v2838, 0.0
  %2842 = vadd.xlane.f32.xlu0 %v2841
  %v2843 = vpop.xlane.xlu0 %2842
  %v2844 = vsel %vm788, %v2840, 0.0
  %2845 = vadd.xlane.f32.xlu0 %v2844
  %v2846 = vpop.xlane.xlu0 %2845
  %v2847 = vrcp.pop %v2843
  %v2848 = vmul.f32 %v2838, %v2847
  %v2849 = vrcp.pop %v2846
  %v2850 = vmul.f32 %v2840, %v2849
  %v2851 = vpack.c.bf16 %v2848, %v2848
  %v2852 = vpack.c.bf16 %v2850, %v2850
  %v2854 = vsel %vm813, %v2851, 0
  %2856 = vmatprep.subr.bf16.mxu0 0
  %2857 = vmatpush1.bf16.msra.mxu0 %v818
  %2858 = vmatprep.subr.bf16.mxu0 0
  %2859 = vmatpush1.bf16.msra.mxu0 0
  %2860 = vmatprep.subr.bf16.mxu0 0
  %2861 = vmatpush1.bf16.msra.mxu0 0
  %2862 = vmatprep.subr.bf16.mxu0 0
  %2863 = vmatpush1.bf16.msra.mxu0 0
  %2864 = vmatprep.subr.bf16.mxu0 0
  %2865 = vmatpush1.bf16.msra.mxu0 0
  %2866 = vmatprep.subr.bf16.mxu0 0
  %2867 = vmatpush1.bf16.msra.mxu0 0
  %2868 = vmatprep.subr.bf16.mxu0 0
  %2869 = vmatpush1.bf16.msra.mxu0 0
  %2870 = vmatprep.subr.bf16.mxu0 0
  %2871 = vmatpush1.bf16.msra.mxu0 0
  %2872 = vmatprep.subr.bf16.mxu0 0
  %2873 = vmatpush1.bf16.msra.mxu0 0
  %2874 = vmatprep.subr.bf16.mxu0 0
  %2875 = vmatpush1.bf16.msra.mxu0 0
  %2876 = vmatprep.subr.bf16.mxu0 0
  %2877 = vmatpush1.bf16.msra.mxu0 0
  %2878 = vmatprep.subr.bf16.mxu0 0
  %2879 = vmatpush1.bf16.msra.mxu0 0
  %2880 = vmatprep.subr.bf16.mxu0 0
  %2881 = vmatpush1.bf16.msra.mxu0 0
  %2882 = vmatprep.subr.bf16.mxu0 0
  %2883 = vmatpush1.bf16.msra.mxu0 0
  %2884 = vmatprep.subr.bf16.mxu0 0
  %2885 = vmatpush1.bf16.msra.mxu0 0
  %2886 = vmatprep.subr.bf16.mxu0 0
  %2887 = vmatpush1.bf16.msra.mxu0 0
  %2888 = vmatprep.mubr.bf16.mxu0 0
  %2889 = vmatmul.mubr.bf16.gmra.mrb[0].mxu0 %v2854
  %v2890 = vpop.f32.mrb[0].mxu0
  %v2891 = vadd.f32 0.0, %v2890
  %v2892 = vpop.f32.mrb[0].mxu0
  %v2893 = vpop.f32.mrb[0].mxu0
  %v2894 = vpop.f32.mrb[0].mxu0
  %2895 = vdwg.mxu0
  %v2897 = vsel %vm813, %v2852, 0
  %2899 = vmatprep.subr.bf16.mxu0 0
  %2900 = vmatpush1.bf16.msra.mxu0 %v863
  %2901 = vmatprep.subr.bf16.mxu0 0
  %2902 = vmatpush1.bf16.msra.mxu0 0
  %2903 = vmatprep.subr.bf16.mxu0 0
  %2904 = vmatpush1.bf16.msra.mxu0 0
  %2905 = vmatprep.subr.bf16.mxu0 0
  %2906 = vmatpush1.bf16.msra.mxu0 0
  %2907 = vmatprep.subr.bf16.mxu0 0
  %2908 = vmatpush1.bf16.msra.mxu0 0
  %2909 = vmatprep.subr.bf16.mxu0 0
  %2910 = vmatpush1.bf16.msra.mxu0 0
  %2911 = vmatprep.subr.bf16.mxu0 0
  %2912 = vmatpush1.bf16.msra.mxu0 0
  %2913 = vmatprep.subr.bf16.mxu0 0
  %2914 = vmatpush1.bf16.msra.mxu0 0
  %2915 = vmatprep.subr.bf16.mxu0 0
  %2916 = vmatpush1.bf16.msra.mxu0 0
  %2917 = vmatprep.subr.bf16.mxu0 0
  %2918 = vmatpush1.bf16.msra.mxu0 0
  %2919 = vmatprep.subr.bf16.mxu0 0
  %2920 = vmatpush1.bf16.msra.mxu0 0
  %2921 = vmatprep.subr.bf16.mxu0 0
  %2922 = vmatpush1.bf16.msra.mxu0 0
  %2923 = vmatprep.subr.bf16.mxu0 0
  %2924 = vmatpush1.bf16.msra.mxu0 0
  %2925 = vmatprep.subr.bf16.mxu0 0
  %2926 = vmatpush1.bf16.msra.mxu0 0
  %2927 = vmatprep.subr.bf16.mxu0 0
  %2928 = vmatpush1.bf16.msra.mxu0 0
  %2929 = vmatprep.subr.bf16.mxu0 0
  %2930 = vmatpush1.bf16.msra.mxu0 0
  %2931 = vmatprep.mubr.bf16.mxu0 0
  %2932 = vmatmul.mubr.bf16.gmra.mrb[0].mxu0 %v2897
  %v2933 = vpop.f32.mrb[0].mxu0
  %v2934 = vadd.f32 0.0, %v2933
  %v2935 = vpop.f32.mrb[0].mxu0
  %v2936 = vpop.f32.mrb[0].mxu0
  %v2937 = vpop.f32.mrb[0].mxu0
  %2938 = vdwg.mxu0
  %v2941 = vrot.slane %v2934, 7
  %v2942 = vsel %vm908, %v2941, %v2891
  %2944 = vst.msk [vmem:[#allocation3] sm:$0x3] %vm324, %v2942
  %s2945 = scalar_lea.vmem %s10, 8
  %v2946 = vld [vmem:[%s2945] sm:$0x3]
  %v2948 = vrot.slane %v2946, 1
  %v2951 = vmul.f32 %v2891, %v2946
  %v2952 = vmul.f32 %v2934, %v2948
  %v2953 = vpack.c.bf16 %v2951, %v2951
  %v2954 = vpack.c.bf16 %v2952, %v2952
  %v2958 = vunpack.c.l.s4 1966171168
  %v2959 = vunpack.c.0.s8 %v2958
  %v2960 = vlaneseq
  %v2961 = vshrl.u32 %v2960, 7
  %v2962 = vsub.s32 %v2959, %v2961
  %v2963 = vrot.slane %v2953, %v2962
  %v2965 = vunpack.c.l.s4 1966171168
  %v2966 = vunpack.c.0.s8 %v2965
  %v2967 = vlaneseq
  %v2968 = vshrl.u32 %v2967, 7
  %v2969 = vsub.s32 %v2966, %v2968
  %v2970 = vrot.slane %v2963, %v2969
  %v2972 = vunpack.c.l.s4 1966171168
  %v2973 = vunpack.c.0.s8 %v2972
  %v2974 = vlaneseq
  %v2975 = vshrl.u32 %v2974, 7
  %v2976 = vsub.s32 %v2973, %v2975
  %v2977 = vrot.slane %v2954, %v2976
  %v2979 = vunpack.c.l.s4 1966171168
  %v2980 = vunpack.c.0.s8 %v2979
  %v2981 = vlaneseq
  %v2982 = vshrl.u32 %v2981, 7
  %v2983 = vsub.s32 %v2980, %v2982
  %v2984 = vrot.slane %v2977, %v2983
  %v2986 = vunpack.c.l.s4 1935823168
  %v2987 = vunpack.c.0.s8 %v2986
  %v2988 = vlaneseq
  %v2989 = vshrl.u32 %v2988, 7
  %v2990 = vsub.s32 %v2987, %v2989
  %v2991 = vrot.slane %v2970, %v2990
  %v2993 = vunpack.c.l.s4 1935823168
  %v2994 = vunpack.c.0.s8 %v2993
  %v2995 = vlaneseq
  %v2996 = vshrl.u32 %v2995, 7
  %v2997 = vsub.s32 %v2994, %v2996
  %v2998 = vrot.slane %v2991, %v2997
  %v3000 = vunpack.c.l.s4 1935823168
  %v3001 = vunpack.c.0.s8 %v3000
  %v3002 = vlaneseq
  %v3003 = vshrl.u32 %v3002, 7
  %v3004 = vsub.s32 %v3001, %v3003
  %v3005 = vrot.slane %v2984, %v3004
  %v3007 = vunpack.c.l.s4 1935823168
  %v3008 = vunpack.c.0.s8 %v3007
  %v3009 = vlaneseq
  %v3010 = vshrl.u32 %v3009, 7
  %v3011 = vsub.s32 %v3008, %v3010
  %v3012 = vrot.slane %v3005, %v3011
  %v3013 = vunpack.c.l.b16 %v2998
  %v3014 = vunpack.c.l.b16 %v3012
  %v3015 = vrot.slane %v3014, 7
  %v3016 = vsel %vm908, %v3015, %v3013
  %v3017 = vpack.c.b16 %v3016, %v3016
  %v3019 = vunpack.c.l.s4 1966171168
  %v3020 = vunpack.c.0.s8 %v3019
  %v3021 = vlaneseq
  %v3022 = vshrl.u32 %v3021, 7
  %v3023 = vsub.s32 %v3020, %v3022
  %v3024 = vrot.slane %v3017, %v3023
  %v3026 = vunpack.c.l.s4 1966171168
  %v3027 = vunpack.c.0.s8 %v3026
  %v3028 = vlaneseq
  %v3029 = vshrl.u32 %v3028, 7
  %v3030 = vsub.s32 %v3027, %v3029
  %v3031 = vrot.slane %v3024, %v3030
  %s3033 = scalar_lea.vmem %s12, 4
  %3034 = vst.msk [vmem:[%s3033] sm:$0x1] %vm999, %v3031
  %s3035 = scalar_lea.vmem %s11, 8
  %v3036 = vld [vmem:[%s3035] sm:$0x3]
  %v3039 = vunpack.c.l.s4 1983009808
  %v3040 = vunpack.c.0.s8 %v3039
  %v3041 = vlaneseq
  %v3042 = vshrl.u32 %v3041, 7
  %v3043 = vsub.s32 %v3040, %v3042
  %v3044 = vrot.slane %v3036, %v3043
  %3045 = vrot.lane.b32.xlu0 %v3044, 64
  %v3046 = vpop.permute.xlu0 %3045
  %v3048 = vmul.f32 %v2698, %v3046
  %v3049 = vpack.c.bf16 %v3048, %v3048
  %v3052 = vunpack.c.l.s4 1966171168
  %v3053 = vunpack.c.0.s8 %v3052
  %v3054 = vlaneseq
  %v3055 = vshrl.u32 %v3054, 7
  %v3056 = vsub.s32 %v3053, %v3055
  %v3057 = vrot.slane %v3049, %v3056
  %v3059 = vunpack.c.l.s4 1966171168
  %v3060 = vunpack.c.0.s8 %v3059
  %v3061 = vlaneseq
  %v3062 = vshrl.u32 %v3061, 7
  %v3063 = vsub.s32 %v3060, %v3062
  %v3064 = vrot.slane %v3057, %v3063
  %3065 = vrot.lane.b32.xlu0 %v3064, 64
  %v3066 = vpop.permute.xlu0 %3065
  %s3068 = scalar_lea.vmem %s13, 4
  %3069 = vst.msk [vmem:[%s3068] sm:$0x1] %vm999, %v3066
  %v3070 = vld [vmem:[#allocation2] sm:$0x3]
  %v3071 = vld [vmem:[#allocation3] sm:$0x3]
  %s3072 = scalar_lea.vmem [#allocation4], 20
  %v3073 = vld [vmem:[%s3072] sm:$0xf]
  %v3074 = vpack.c.bf16 %v3071, %v3071
  %v3076 = vsel %vm280, %v3074, 0
  %3078 = vmatprep.subr.bf16.mxu0 %v405
  %3079 = vmatpush1.bf16.msra.mxu0 %v404
  %3080 = vmatprep.subr.bf16.mxu0 %v407
  %3081 = vmatpush1.bf16.msra.mxu0 %v406
  %3082 = vmatprep.subr.bf16.mxu0 %v409
  %3083 = vmatpush1.bf16.msra.mxu0 %v408
  %3084 = vmatprep.subr.bf16.mxu0 %v411
  %3085 = vmatpush1.bf16.msra.mxu0 %v410
  %3086 = vmatprep.subr.bf16.mxu0 0
  %3087 = vmatpush1.bf16.msra.mxu0 0
  %3088 = vmatprep.subr.bf16.mxu0 0
  %3089 = vmatpush1.bf16.msra.mxu0 0
  %3090 = vmatprep.subr.bf16.mxu0 0
  %3091 = vmatpush1.bf16.msra.mxu0 0
  %3092 = vmatprep.subr.bf16.mxu0 0
  %3093 = vmatpush1.bf16.msra.mxu0 0
  %3094 = vmatprep.subr.bf16.mxu0 0
  %3095 = vmatpush1.bf16.msra.mxu0 0
  %3096 = vmatprep.subr.bf16.mxu0 0
  %3097 = vmatpush1.bf16.msra.mxu0 0
  %3098 = vmatprep.subr.bf16.mxu0 0
  %3099 = vmatpush1.bf16.msra.mxu0 0
  %3100 = vmatprep.subr.bf16.mxu0 0
  %3101 = vmatpush1.bf16.msra.mxu0 0
  %3102 = vmatprep.subr.bf16.mxu0 0
  %3103 = vmatpush1.bf16.msra.mxu0 0
  %3104 = vmatprep.subr.bf16.mxu0 0
  %3105 = vmatpush1.bf16.msra.mxu0 0
  %3106 = vmatprep.subr.bf16.mxu0 0
  %3107 = vmatpush1.bf16.msra.mxu0 0
  %3108 = vmatprep.subr.bf16.mxu0 0
  %3109 = vmatpush1.bf16.msra.mxu0 0
  %3110 = vmatprep.mubr.bf16.mxu0 0
  %3111 = vmatmul.mubr.bf16.gmra.mrb[0].mxu0 %v3076
  %v3112 = vpop.f32.mrb[0].mxu0
  %v3113 = vadd.f32 0.0, %v3112
  %v3114 = vpop.f32.mrb[0].mxu0
  %v3115 = vadd.f32 0.0, %v3114
  %v3116 = vpop.f32.mrb[0].mxu0
  %v3117 = vpop.f32.mrb[0].mxu0
  %3118 = vdwg.mxu0
  %v3121 = vcombine.low %v3113, %v3115
  %v3123 = vunpack.c.l.s4 1983009808
  %v3124 = vunpack.c.0.s8 %v3123
  %v3125 = vlaneseq
  %v3126 = vshrl.u32 %v3125, 7
  %v3127 = vsub.s32 %v3124, %v3126
  %v3128 = vrot.slane %v3121, %v3127
  %v3130 = vadd.f32 %v3073, %v3128
  %v3131 = vpack.c.bf16 %v3070, %v3070
  %v3133 = vsel %vm280, %v3131, 0
  %3135 = vmatprep.subr.bf16.mxu0 %v513
  %3136 = vmatpush1.bf16.msra.mxu0 %v512
  %3137 = vmatprep.subr.bf16.mxu0 %v515
  %3138 = vmatpush1.bf16.msra.mxu0 %v514
  %3139 = vmatprep.subr.bf16.mxu0 %v517
  %3140 = vmatpush1.bf16.msra.mxu0 %v516
  %3141 = vmatprep.subr.bf16.mxu0 %v519
  %3142 = vmatpush1.bf16.msra.mxu0 %v518
  %3143 = vmatprep.subr.bf16.mxu0 0
  %3144 = vmatpush1.bf16.msra.mxu0 0
  %3145 = vmatprep.subr.bf16.mxu0 0
  %3146 = vmatpush1.bf16.msra.mxu0 0
  %3147 = vmatprep.subr.bf16.mxu0 0
  %3148 = vmatpush1.bf16.msra.mxu0 0
  %3149 = vmatprep.subr.bf16.mxu0 0
  %3150 = vmatpush1.bf16.msra.mxu0 0
  %3151 = vmatprep.subr.bf16.mxu0 0
  %3152 = vmatpush1.bf16.msra.mxu0 0
  %3153 = vmatprep.subr.bf16.mxu0 0
  %3154 = vmatpush1.bf16.msra.mxu0 0
  %3155 = vmatprep.subr.bf16.mxu0 0
  %3156 = vmatpush1.bf16.msra.mxu0 0
  %3157 = vmatprep.subr.bf16.mxu0 0
  %3158 = vmatpush1.bf16.msra.mxu0 0
  %3159 = vmatprep.subr.bf16.mxu0 0
  %3160 = vmatpush1.bf16.msra.mxu0 0
  %3161 = vmatprep.subr.bf16.mxu0 0
  %3162 = vmatpush1.bf16.msra.mxu0 0
  %3163 = vmatprep.subr.bf16.mxu0 0
  %3164 = vmatpush1.bf16.msra.mxu0 0
  %3165 = vmatprep.subr.bf16.mxu0 0
  %3166 = vmatpush1.bf16.msra.mxu0 0
  %3167 = vmatprep.mubr.bf16.mxu0 0
  %3168 = vmatmul.mubr.bf16.gmra.mrb[0].mxu0 %v3133
  %v3169 = vpop.f32.mrb[0].mxu0
  %v3170 = vadd.f32 %v481, %v3169
  %v3171 = vpop.f32.mrb[0].mxu0
  %v3172 = vadd.f32 %v485, %v3171
  %v3173 = vpop.f32.mrb[0].mxu0
  %v3174 = vpop.f32.mrb[0].mxu0
  %3175 = vdwg.mxu0
  %v3176 = vadd.f32 %v3130, %v3170
  %v3177 = vxor.u32 %v3176, 2147483648
  %v3178 = vmul.f32 %v3177, 1.442695
  %v3179 = vpow.pop %v3178
  %v3180 = vadd.f32 %v3179, 1.0
  %v3181 = vrcp.pop %v3180
  %v3182 = vmul.f32 1.0, %v3181
  %v3183 = vmul.f32 %v3182, %v3172
  %v3185 = vrot.slane %v3130, 2
  %v3187 = vadd.f32 %v3185, %v3183
  %v3188 = vtanh.pop %v3187
  %v3189 = vsub.f32 1.0, %v3182
  %3191 = vrot.lane.b32.xlu0 %v3188, 64
  %v3192 = vpop.permute.xlu0 %3191
  %v3194 = vmul.f32 %v3189, %v3192
  %v3197 = vunpack.c.l.s4 1983009808
  %v3198 = vunpack.c.0.s8 %v3197
  %v3199 = vlaneseq
  %v3200 = vshrl.u32 %v3199, 7
  %v3201 = vsub.s32 %v3198, %v3200
  %v3202 = vrot.slane %v3070, %v3201
  %3203 = vrot.lane.b32.xlu0 %v3202, 64
  %v3204 = vpop.permute.xlu0 %3203
  %v3206 = vmul.f32 %v3182, %v3204
  %v3207 = vadd.f32 %v3194, %v3206
  %v3210 = vunpack.c.l.s4 1983009808
  %v3211 = vunpack.c.0.s8 %v3210
  %v3212 = vlaneseq
  %v3213 = vshrl.u32 %v3212, 7
  %v3214 = vsub.s32 %v3211, %v3213
  %v3215 = vrot.slane %v3207, %v3214
  %3216 = vrot.lane.b32.xlu0 %v3215, 64
  %v3217 = vpop.permute.xlu0 %3216
  %3219 = vst.msk [vmem:[#allocation2] sm:$0x3] %vm324, %v3217
  %v3220 = vpack.c.bf16 %v3207, %v3207
  %v3223 = vunpack.c.l.s4 1966171168
  %v3224 = vunpack.c.0.s8 %v3223
  %v3225 = vlaneseq
  %v3226 = vshrl.u32 %v3225, 7
  %v3227 = vsub.s32 %v3224, %v3226
  %v3228 = vrot.slane %v3220, %v3227
  %v3230 = vunpack.c.l.s4 1966171168
  %v3231 = vunpack.c.0.s8 %v3230
  %v3232 = vlaneseq
  %v3233 = vshrl.u32 %v3232, 7
  %v3234 = vsub.s32 %v3231, %v3233
  %v3235 = vrot.slane %v3228, %v3234
  %v3236 = vunpack.i.l.s16 %v3235
  %v3237 = vunpack.i.h.s16 %v3235
  %v3238 = vpack.i.b16 %v3236, %v3236
  %v3239 = vlaneseq
  %v3240 = vshrl.u32 %v3239, 7
  %v3241 = vsub.s32 0, %v3240
  %v3242 = vrot.slane %v3238, %v3241
  %3243 = vrot.lane.b32.xlu0 %v3242, 64
  %v3244 = vpop.permute.xlu0 %3243
  %v3246 = vsel %vm280, %v3244, 0
  %3248 = vmatprep.subr.bf16.mxu0 0
  %3249 = vmatpush1.bf16.xpose.msra.mxu0 %v669
  %3250 = vmatprep.subr.bf16.mxu0 0
  %3251 = vmatpush1.bf16.xpose.msra.mxu0 0
  %3252 = vmatprep.subr.bf16.mxu0 0
  %3253 = vmatpush1.bf16.xpose.msra.mxu0 0
  %3254 = vmatprep.subr.bf16.mxu0 0
  %3255 = vmatpush1.bf16.xpose.msra.mxu0 0
  %3256 = vmatprep.subr.bf16.mxu0 0
  %3257 = vmatpush1.bf16.xpose.msra.mxu0 0
  %3258 = vmatprep.subr.bf16.mxu0 0
  %3259 = vmatpush1.bf16.xpose.msra.mxu0 0
  %3260 = vmatprep.subr.bf16.mxu0 0
  %3261 = vmatpush1.bf16.xpose.msra.mxu0 0
  %3262 = vmatprep.subr.bf16.mxu0 0
  %3263 = vmatpush1.bf16.xpose.msra.mxu0 0
  %3264 = vmatprep.subr.bf16.mxu0 0
  %3265 = vmatpush1.bf16.xpose.msra.mxu0 0
  %3266 = vmatprep.subr.bf16.mxu0 0
  %3267 = vmatpush1.bf16.xpose.msra.mxu0 0
  %3268 = vmatprep.subr.bf16.mxu0 0
  %3269 = vmatpush1.bf16.xpose.msra.mxu0 0
  %3270 = vmatprep.subr.bf16.mxu0 0
  %3271 = vmatpush1.bf16.xpose.msra.mxu0 0
  %3272 = vmatprep.subr.bf16.mxu0 0
  %3273 = vmatpush1.bf16.xpose.msra.mxu0 0
  %3274 = vmatprep.subr.bf16.mxu0 0
  %3275 = vmatpush1.bf16.xpose.msra.mxu0 0
  %3276 = vmatprep.subr.bf16.mxu0 0
  %3277 = vmatpush1.bf16.xpose.msra.mxu0 0
  %3278 = vmatprep.subr.bf16.mxu0 0
  %3279 = vmatpush1.bf16.xpose.msra.mxu0 0
  %3280 = vmatprep.mubr.bf16.mxu0 0
  %3281 = vmatmul.mubr.bf16.gmra.mrb[0].mxu0 %v3246
  %v3282 = vpop.f32.mrb[0].mxu0
  %v3283 = vadd.f32 0.0, %v3282
  %v3284 = vpop.f32.mrb[0].mxu0
  %v3285 = vpop.f32.mrb[0].mxu0
  %v3286 = vpop.f32.mrb[0].mxu0
  %3287 = vdwg.mxu0
  %v3288 = vpack.i.b16 %v3237, %v3237
  %v3289 = vlaneseq
  %v3290 = vshrl.u32 %v3289, 7
  %v3291 = vsub.s32 0, %v3290
  %v3292 = vrot.slane %v3288, %v3291
  %3293 = vrot.lane.b32.xlu0 %v3292, 64
  %v3294 = vpop.permute.xlu0 %3293
  %v3296 = vsel %vm280, %v3294, 0
  %3298 = vmatprep.subr.bf16.mxu0 0
  %3299 = vmatpush1.bf16.xpose.msra.mxu0 %v746
  %3300 = vmatprep.subr.bf16.mxu0 0
  %3301 = vmatpush1.bf16.xpose.msra.mxu0 0
  %3302 = vmatprep.subr.bf16.mxu0 0
  %3303 = vmatpush1.bf16.xpose.msra.mxu0 0
  %3304 = vmatprep.subr.bf16.mxu0 0
  %3305 = vmatpush1.bf16.xpose.msra.mxu0 0
  %3306 = vmatprep.subr.bf16.mxu0 0
  %3307 = vmatpush1.bf16.xpose.msra.mxu0 0
  %3308 = vmatprep.subr.bf16.mxu0 0
  %3309 = vmatpush1.bf16.xpose.msra.mxu0 0
  %3310 = vmatprep.subr.bf16.mxu0 0
  %3311 = vmatpush1.bf16.xpose.msra.mxu0 0
  %3312 = vmatprep.subr.bf16.mxu0 0
  %3313 = vmatpush1.bf16.xpose.msra.mxu0 0
  %3314 = vmatprep.subr.bf16.mxu0 0
  %3315 = vmatpush1.bf16.xpose.msra.mxu0 0
  %3316 = vmatprep.subr.bf16.mxu0 0
  %3317 = vmatpush1.bf16.xpose.msra.mxu0 0
  %3318 = vmatprep.subr.bf16.mxu0 0
  %3319 = vmatpush1.bf16.xpose.msra.mxu0 0
  %3320 = vmatprep.subr.bf16.mxu0 0
  %3321 = vmatpush1.bf16.xpose.msra.mxu0 0
  %3322 = vmatprep.subr.bf16.mxu0 0
  %3323 = vmatpush1.bf16.xpose.msra.mxu0 0
  %3324 = vmatprep.subr.bf16.mxu0 0
  %3325 = vmatpush1.bf16.xpose.msra.mxu0 0
  %3326 = vmatprep.subr.bf16.mxu0 0
  %3327 = vmatpush1.bf16.xpose.msra.mxu0 0
  %3328 = vmatprep.subr.bf16.mxu0 0
  %3329 = vmatpush1.bf16.xpose.msra.mxu0 0
  %3330 = vmatprep.mubr.bf16.mxu0 0
  %3331 = vmatmul.mubr.bf16.gmra.mrb[0].mxu0 %v3296
  %v3332 = vpop.f32.mrb[0].mxu0
  %v3333 = vadd.f32 0.0, %v3332
  %v3334 = vpop.f32.mrb[0].mxu0
  %v3335 = vpop.f32.mrb[0].mxu0
  %v3336 = vpop.f32.mrb[0].mxu0
  %3337 = vdwg.mxu0
  %v3338 = vsel %vm788, %v3283, -inf
  %3339 = vmax.xlane.f32.xlu0 %v3338
  %v3340 = vpop.xlane.xlu0 %3339
  %v3341 = vsel %vm788, %v3333, -inf
  %3342 = vmax.xlane.f32.xlu0 %v3341
  %v3343 = vpop.xlane.xlu0 %3342
  %v3344 = vsub.f32 %v3283, %v3340
  %v3345 = vsub.f32 %v3333, %v3343
  %v3346 = vmul.f32 %v3344, 1.442695
  %v3347 = vpow.pop %v3346
  %v3348 = vmul.f32 %v3345, 1.442695
  %v3349 = vpow.pop %v3348
  %v3350 = vsel %vm788, %v3347, 0.0
  %3351 = vadd.xlane.f32.xlu0 %v3350
  %v3352 = vpop.xlane.xlu0 %3351
  %v3353 = vsel %vm788, %v3349, 0.0
  %3354 = vadd.xlane.f32.xlu0 %v3353
  %v3355 = vpop.xlane.xlu0 %3354
  %v3356 = vrcp.pop %v3352
  %v3357 = vmul.f32 %v3347, %v3356
  %v3358 = vrcp.pop %v3355
  %v3359 = vmul.f32 %v3349, %v3358
  %v3360 = vpack.c.bf16 %v3357, %v3357
  %v3361 = vpack.c.bf16 %v3359, %v3359
  %v3363 = vsel %vm813, %v3360, 0
  %3365 = vmatprep.subr.bf16.mxu0 0
  %3366 = vmatpush1.bf16.msra.mxu0 %v818
  %3367 = vmatprep.subr.bf16.mxu0 0
  %3368 = vmatpush1.bf16.msra.mxu0 0
  %3369 = vmatprep.subr.bf16.mxu0 0
  %3370 = vmatpush1.bf16.msra.mxu0 0
  %3371 = vmatprep.subr.bf16.mxu0 0
  %3372 = vmatpush1.bf16.msra.mxu0 0
  %3373 = vmatprep.subr.bf16.mxu0 0
  %3374 = vmatpush1.bf16.msra.mxu0 0
  %3375 = vmatprep.subr.bf16.mxu0 0
  %3376 = vmatpush1.bf16.msra.mxu0 0
  %3377 = vmatprep.subr.bf16.mxu0 0
  %3378 = vmatpush1.bf16.msra.mxu0 0
  %3379 = vmatprep.subr.bf16.mxu0 0
  %3380 = vmatpush1.bf16.msra.mxu0 0
  %3381 = vmatprep.subr.bf16.mxu0 0
  %3382 = vmatpush1.bf16.msra.mxu0 0
  %3383 = vmatprep.subr.bf16.mxu0 0
  %3384 = vmatpush1.bf16.msra.mxu0 0
  %3385 = vmatprep.subr.bf16.mxu0 0
  %3386 = vmatpush1.bf16.msra.mxu0 0
  %3387 = vmatprep.subr.bf16.mxu0 0
  %3388 = vmatpush1.bf16.msra.mxu0 0
  %3389 = vmatprep.subr.bf16.mxu0 0
  %3390 = vmatpush1.bf16.msra.mxu0 0
  %3391 = vmatprep.subr.bf16.mxu0 0
  %3392 = vmatpush1.bf16.msra.mxu0 0
  %3393 = vmatprep.subr.bf16.mxu0 0
  %3394 = vmatpush1.bf16.msra.mxu0 0
  %3395 = vmatprep.subr.bf16.mxu0 0
  %3396 = vmatpush1.bf16.msra.mxu0 0
  %3397 = vmatprep.mubr.bf16.mxu0 0
  %3398 = vmatmul.mubr.bf16.gmra.mrb[0].mxu0 %v3363
  %v3399 = vpop.f32.mrb[0].mxu0
  %v3400 = vadd.f32 0.0, %v3399
  %v3401 = vpop.f32.mrb[0].mxu0
  %v3402 = vpop.f32.mrb[0].mxu0
  %v3403 = vpop.f32.mrb[0].mxu0
  %3404 = vdwg.mxu0
  %v3406 = vsel %vm813, %v3361, 0
  %3408 = vmatprep.subr.bf16.mxu0 0
  %3409 = vmatpush1.bf16.msra.mxu0 %v863
  %3410 = vmatprep.subr.bf16.mxu0 0
  %3411 = vmatpush1.bf16.msra.mxu0 0
  %3412 = vmatprep.subr.bf16.mxu0 0
  %3413 = vmatpush1.bf16.msra.mxu0 0
  %3414 = vmatprep.subr.bf16.mxu0 0
  %3415 = vmatpush1.bf16.msra.mxu0 0
  %3416 = vmatprep.subr.bf16.mxu0 0
  %3417 = vmatpush1.bf16.msra.mxu0 0
  %3418 = vmatprep.subr.bf16.mxu0 0
  %3419 = vmatpush1.bf16.msra.mxu0 0
  %3420 = vmatprep.subr.bf16.mxu0 0
  %3421 = vmatpush1.bf16.msra.mxu0 0
  %3422 = vmatprep.subr.bf16.mxu0 0
  %3423 = vmatpush1.bf16.msra.mxu0 0
  %3424 = vmatprep.subr.bf16.mxu0 0
  %3425 = vmatpush1.bf16.msra.mxu0 0
  %3426 = vmatprep.subr.bf16.mxu0 0
  %3427 = vmatpush1.bf16.msra.mxu0 0
  %3428 = vmatprep.subr.bf16.mxu0 0
  %3429 = vmatpush1.bf16.msra.mxu0 0
  %3430 = vmatprep.subr.bf16.mxu0 0
  %3431 = vmatpush1.bf16.msra.mxu0 0
  %3432 = vmatprep.subr.bf16.mxu0 0
  %3433 = vmatpush1.bf16.msra.mxu0 0
  %3434 = vmatprep.subr.bf16.mxu0 0
  %3435 = vmatpush1.bf16.msra.mxu0 0
  %3436 = vmatprep.subr.bf16.mxu0 0
  %3437 = vmatpush1.bf16.msra.mxu0 0
  %3438 = vmatprep.subr.bf16.mxu0 0
  %3439 = vmatpush1.bf16.msra.mxu0 0
  %3440 = vmatprep.mubr.bf16.mxu0 0
  %3441 = vmatmul.mubr.bf16.gmra.mrb[0].mxu0 %v3406
  %v3442 = vpop.f32.mrb[0].mxu0
  %v3443 = vadd.f32 0.0, %v3442
  %v3444 = vpop.f32.mrb[0].mxu0
  %v3445 = vpop.f32.mrb[0].mxu0
  %v3446 = vpop.f32.mrb[0].mxu0
  %3447 = vdwg.mxu0
  %v3450 = vrot.slane %v3443, 7
  %v3451 = vsel %vm908, %v3450, %v3400
  %3453 = vst.msk [vmem:[#allocation3] sm:$0x3] %vm324, %v3451
  %s3454 = scalar_lea.vmem %s10, 10
  %v3455 = vld [vmem:[%s3454] sm:$0x3]
  %v3457 = vrot.slane %v3455, 1
  %v3460 = vmul.f32 %v3400, %v3455
  %v3461 = vmul.f32 %v3443, %v3457
  %v3462 = vpack.c.bf16 %v3460, %v3460
  %v3463 = vpack.c.bf16 %v3461, %v3461
  %v3467 = vunpack.c.l.s4 1966171168
  %v3468 = vunpack.c.0.s8 %v3467
  %v3469 = vlaneseq
  %v3470 = vshrl.u32 %v3469, 7
  %v3471 = vsub.s32 %v3468, %v3470
  %v3472 = vrot.slane %v3462, %v3471
  %v3474 = vunpack.c.l.s4 1966171168
  %v3475 = vunpack.c.0.s8 %v3474
  %v3476 = vlaneseq
  %v3477 = vshrl.u32 %v3476, 7
  %v3478 = vsub.s32 %v3475, %v3477
  %v3479 = vrot.slane %v3472, %v3478
  %v3481 = vunpack.c.l.s4 1966171168
  %v3482 = vunpack.c.0.s8 %v3481
  %v3483 = vlaneseq
  %v3484 = vshrl.u32 %v3483, 7
  %v3485 = vsub.s32 %v3482, %v3484
  %v3486 = vrot.slane %v3463, %v3485
  %v3488 = vunpack.c.l.s4 1966171168
  %v3489 = vunpack.c.0.s8 %v3488
  %v3490 = vlaneseq
  %v3491 = vshrl.u32 %v3490, 7
  %v3492 = vsub.s32 %v3489, %v3491
  %v3493 = vrot.slane %v3486, %v3492
  %v3495 = vunpack.c.l.s4 1935823168
  %v3496 = vunpack.c.0.s8 %v3495
  %v3497 = vlaneseq
  %v3498 = vshrl.u32 %v3497, 7
  %v3499 = vsub.s32 %v3496, %v3498
  %v3500 = vrot.slane %v3479, %v3499
  %v3502 = vunpack.c.l.s4 1935823168
  %v3503 = vunpack.c.0.s8 %v3502
  %v3504 = vlaneseq
  %v3505 = vshrl.u32 %v3504, 7
  %v3506 = vsub.s32 %v3503, %v3505
  %v3507 = vrot.slane %v3500, %v3506
  %v3509 = vunpack.c.l.s4 1935823168
  %v3510 = vunpack.c.0.s8 %v3509
  %v3511 = vlaneseq
  %v3512 = vshrl.u32 %v3511, 7
  %v3513 = vsub.s32 %v3510, %v3512
  %v3514 = vrot.slane %v3493, %v3513
  %v3516 = vunpack.c.l.s4 1935823168
  %v3517 = vunpack.c.0.s8 %v3516
  %v3518 = vlaneseq
  %v3519 = vshrl.u32 %v3518, 7
  %v3520 = vsub.s32 %v3517, %v3519
  %v3521 = vrot.slane %v3514, %v3520
  %v3522 = vunpack.c.l.b16 %v3507
  %v3523 = vunpack.c.l.b16 %v3521
  %v3524 = vrot.slane %v3523, 7
  %v3525 = vsel %vm908, %v3524, %v3522
  %v3526 = vpack.c.b16 %v3525, %v3525
  %v3528 = vunpack.c.l.s4 1966171168
  %v3529 = vunpack.c.0.s8 %v3528
  %v3530 = vlaneseq
  %v3531 = vshrl.u32 %v3530, 7
  %v3532 = vsub.s32 %v3529, %v3531
  %v3533 = vrot.slane %v3526, %v3532
  %v3535 = vunpack.c.l.s4 1966171168
  %v3536 = vunpack.c.0.s8 %v3535
  %v3537 = vlaneseq
  %v3538 = vshrl.u32 %v3537, 7
  %v3539 = vsub.s32 %v3536, %v3538
  %v3540 = vrot.slane %v3533, %v3539
  %s3542 = scalar_lea.vmem %s12, 5
  %3543 = vst.msk [vmem:[%s3542] sm:$0x1] %vm999, %v3540
  %s3544 = scalar_lea.vmem %s11, 10
  %v3545 = vld [vmem:[%s3544] sm:$0x3]
  %v3548 = vunpack.c.l.s4 1983009808
  %v3549 = vunpack.c.0.s8 %v3548
  %v3550 = vlaneseq
  %v3551 = vshrl.u32 %v3550, 7
  %v3552 = vsub.s32 %v3549, %v3551
  %v3553 = vrot.slane %v3545, %v3552
  %3554 = vrot.lane.b32.xlu0 %v3553, 64
  %v3555 = vpop.permute.xlu0 %3554
  %v3557 = vmul.f32 %v3207, %v3555
  %v3558 = vpack.c.bf16 %v3557, %v3557
  %v3561 = vunpack.c.l.s4 1966171168
  %v3562 = vunpack.c.0.s8 %v3561
  %v3563 = vlaneseq
  %v3564 = vshrl.u32 %v3563, 7
  %v3565 = vsub.s32 %v3562, %v3564
  %v3566 = vrot.slane %v3558, %v3565
  %v3568 = vunpack.c.l.s4 1966171168
  %v3569 = vunpack.c.0.s8 %v3568
  %v3570 = vlaneseq
  %v3571 = vshrl.u32 %v3570, 7
  %v3572 = vsub.s32 %v3569, %v3571
  %v3573 = vrot.slane %v3566, %v3572
  %3574 = vrot.lane.b32.xlu0 %v3573, 64
  %v3575 = vpop.permute.xlu0 %3574
  %s3577 = scalar_lea.vmem %s13, 5
  %3578 = vst.msk [vmem:[%s3577] sm:$0x1] %vm999, %v3575
  %v3579 = vld [vmem:[#allocation2] sm:$0x3]
  %v3580 = vld [vmem:[#allocation3] sm:$0x3]
  %s3581 = scalar_lea.vmem [#allocation4], 24
  %v3582 = vld [vmem:[%s3581] sm:$0xf]
  %v3583 = vpack.c.bf16 %v3580, %v3580
  %v3585 = vsel %vm280, %v3583, 0
  %3587 = vmatprep.subr.bf16.mxu0 %v405
  %3588 = vmatpush1.bf16.msra.mxu0 %v404
  %3589 = vmatprep.subr.bf16.mxu0 %v407
  %3590 = vmatpush1.bf16.msra.mxu0 %v406
  %3591 = vmatprep.subr.bf16.mxu0 %v409
  %3592 = vmatpush1.bf16.msra.mxu0 %v408
  %3593 = vmatprep.subr.bf16.mxu0 %v411
  %3594 = vmatpush1.bf16.msra.mxu0 %v410
  %3595 = vmatprep.subr.bf16.mxu0 0
  %3596 = vmatpush1.bf16.msra.mxu0 0
  %3597 = vmatprep.subr.bf16.mxu0 0
  %3598 = vmatpush1.bf16.msra.mxu0 0
  %3599 = vmatprep.subr.bf16.mxu0 0
  %3600 = vmatpush1.bf16.msra.mxu0 0
  %3601 = vmatprep.subr.bf16.mxu0 0
  %3602 = vmatpush1.bf16.msra.mxu0 0
  %3603 = vmatprep.subr.bf16.mxu0 0
  %3604 = vmatpush1.bf16.msra.mxu0 0
  %3605 = vmatprep.subr.bf16.mxu0 0
  %3606 = vmatpush1.bf16.msra.mxu0 0
  %3607 = vmatprep.subr.bf16.mxu0 0
  %3608 = vmatpush1.bf16.msra.mxu0 0
  %3609 = vmatprep.subr.bf16.mxu0 0
  %3610 = vmatpush1.bf16.msra.mxu0 0
  %3611 = vmatprep.subr.bf16.mxu0 0
  %3612 = vmatpush1.bf16.msra.mxu0 0
  %3613 = vmatprep.subr.bf16.mxu0 0
  %3614 = vmatpush1.bf16.msra.mxu0 0
  %3615 = vmatprep.subr.bf16.mxu0 0
  %3616 = vmatpush1.bf16.msra.mxu0 0
  %3617 = vmatprep.subr.bf16.mxu0 0
  %3618 = vmatpush1.bf16.msra.mxu0 0
  %3619 = vmatprep.mubr.bf16.mxu0 0
  %3620 = vmatmul.mubr.bf16.gmra.mrb[0].mxu0 %v3585
  %v3621 = vpop.f32.mrb[0].mxu0
  %v3622 = vadd.f32 0.0, %v3621
  %v3623 = vpop.f32.mrb[0].mxu0
  %v3624 = vadd.f32 0.0, %v3623
  %v3625 = vpop.f32.mrb[0].mxu0
  %v3626 = vpop.f32.mrb[0].mxu0
  %3627 = vdwg.mxu0
  %v3630 = vcombine.low %v3622, %v3624
  %v3632 = vunpack.c.l.s4 1983009808
  %v3633 = vunpack.c.0.s8 %v3632
  %v3634 = vlaneseq
  %v3635 = vshrl.u32 %v3634, 7
  %v3636 = vsub.s32 %v3633, %v3635
  %v3637 = vrot.slane %v3630, %v3636
  %v3639 = vadd.f32 %v3582, %v3637
  %v3640 = vpack.c.bf16 %v3579, %v3579
  %v3642 = vsel %vm280, %v3640, 0
  %3644 = vmatprep.subr.bf16.mxu0 %v513
  %3645 = vmatpush1.bf16.msra.mxu0 %v512
  %3646 = vmatprep.subr.bf16.mxu0 %v515
  %3647 = vmatpush1.bf16.msra.mxu0 %v514
  %3648 = vmatprep.subr.bf16.mxu0 %v517
  %3649 = vmatpush1.bf16.msra.mxu0 %v516
  %3650 = vmatprep.subr.bf16.mxu0 %v519
  %3651 = vmatpush1.bf16.msra.mxu0 %v518
  %3652 = vmatprep.subr.bf16.mxu0 0
  %3653 = vmatpush1.bf16.msra.mxu0 0
  %3654 = vmatprep.subr.bf16.mxu0 0
  %3655 = vmatpush1.bf16.msra.mxu0 0
  %3656 = vmatprep.subr.bf16.mxu0 0
  %3657 = vmatpush1.bf16.msra.mxu0 0
  %3658 = vmatprep.subr.bf16.mxu0 0
  %3659 = vmatpush1.bf16.msra.mxu0 0
  %3660 = vmatprep.subr.bf16.mxu0 0
  %3661 = vmatpush1.bf16.msra.mxu0 0
  %3662 = vmatprep.subr.bf16.mxu0 0
  %3663 = vmatpush1.bf16.msra.mxu0 0
  %3664 = vmatprep.subr.bf16.mxu0 0
  %3665 = vmatpush1.bf16.msra.mxu0 0
  %3666 = vmatprep.subr.bf16.mxu0 0
  %3667 = vmatpush1.bf16.msra.mxu0 0
  %3668 = vmatprep.subr.bf16.mxu0 0
  %3669 = vmatpush1.bf16.msra.mxu0 0
  %3670 = vmatprep.subr.bf16.mxu0 0
  %3671 = vmatpush1.bf16.msra.mxu0 0
  %3672 = vmatprep.subr.bf16.mxu0 0
  %3673 = vmatpush1.bf16.msra.mxu0 0
  %3674 = vmatprep.subr.bf16.mxu0 0
  %3675 = vmatpush1.bf16.msra.mxu0 0
  %3676 = vmatprep.mubr.bf16.mxu0 0
  %3677 = vmatmul.mubr.bf16.gmra.mrb[0].mxu0 %v3642
  %v3678 = vpop.f32.mrb[0].mxu0
  %v3679 = vadd.f32 %v481, %v3678
  %v3680 = vpop.f32.mrb[0].mxu0
  %v3681 = vadd.f32 %v485, %v3680
  %v3682 = vpop.f32.mrb[0].mxu0
  %v3683 = vpop.f32.mrb[0].mxu0
  %3684 = vdwg.mxu0
  %v3685 = vadd.f32 %v3639, %v3679
  %v3686 = vxor.u32 %v3685, 2147483648
  %v3687 = vmul.f32 %v3686, 1.442695
  %v3688 = vpow.pop %v3687
  %v3689 = vadd.f32 %v3688, 1.0
  %v3690 = vrcp.pop %v3689
  %v3691 = vmul.f32 1.0, %v3690
  %v3692 = vmul.f32 %v3691, %v3681
  %v3694 = vrot.slane %v3639, 2
  %v3696 = vadd.f32 %v3694, %v3692
  %v3697 = vtanh.pop %v3696
  %v3698 = vsub.f32 1.0, %v3691
  %3700 = vrot.lane.b32.xlu0 %v3697, 64
  %v3701 = vpop.permute.xlu0 %3700
  %v3703 = vmul.f32 %v3698, %v3701
  %v3706 = vunpack.c.l.s4 1983009808
  %v3707 = vunpack.c.0.s8 %v3706
  %v3708 = vlaneseq
  %v3709 = vshrl.u32 %v3708, 7
  %v3710 = vsub.s32 %v3707, %v3709
  %v3711 = vrot.slane %v3579, %v3710
  %3712 = vrot.lane.b32.xlu0 %v3711, 64
  %v3713 = vpop.permute.xlu0 %3712
  %v3715 = vmul.f32 %v3691, %v3713
  %v3716 = vadd.f32 %v3703, %v3715
  %v3719 = vunpack.c.l.s4 1983009808
  %v3720 = vunpack.c.0.s8 %v3719
  %v3721 = vlaneseq
  %v3722 = vshrl.u32 %v3721, 7
  %v3723 = vsub.s32 %v3720, %v3722
  %v3724 = vrot.slane %v3716, %v3723
  %3725 = vrot.lane.b32.xlu0 %v3724, 64
  %v3726 = vpop.permute.xlu0 %3725
  %3728 = vst.msk [vmem:[#allocation2] sm:$0x3] %vm324, %v3726
  %v3729 = vpack.c.bf16 %v3716, %v3716
  %v3732 = vunpack.c.l.s4 1966171168
  %v3733 = vunpack.c.0.s8 %v3732
  %v3734 = vlaneseq
  %v3735 = vshrl.u32 %v3734, 7
  %v3736 = vsub.s32 %v3733, %v3735
  %v3737 = vrot.slane %v3729, %v3736
  %v3739 = vunpack.c.l.s4 1966171168
  %v3740 = vunpack.c.0.s8 %v3739
  %v3741 = vlaneseq
  %v3742 = vshrl.u32 %v3741, 7
  %v3743 = vsub.s32 %v3740, %v3742
  %v3744 = vrot.slane %v3737, %v3743
  %v3745 = vunpack.i.l.s16 %v3744
  %v3746 = vunpack.i.h.s16 %v3744
  %v3747 = vpack.i.b16 %v3745, %v3745
  %v3748 = vlaneseq
  %v3749 = vshrl.u32 %v3748, 7
  %v3750 = vsub.s32 0, %v3749
  %v3751 = vrot.slane %v3747, %v3750
  %3752 = vrot.lane.b32.xlu0 %v3751, 64
  %v3753 = vpop.permute.xlu0 %3752
  %v3755 = vsel %vm280, %v3753, 0
  %3757 = vmatprep.subr.bf16.mxu0 0
  %3758 = vmatpush1.bf16.xpose.msra.mxu0 %v669
  %3759 = vmatprep.subr.bf16.mxu0 0
  %3760 = vmatpush1.bf16.xpose.msra.mxu0 0
  %3761 = vmatprep.subr.bf16.mxu0 0
  %3762 = vmatpush1.bf16.xpose.msra.mxu0 0
  %3763 = vmatprep.subr.bf16.mxu0 0
  %3764 = vmatpush1.bf16.xpose.msra.mxu0 0
  %3765 = vmatprep.subr.bf16.mxu0 0
  %3766 = vmatpush1.bf16.xpose.msra.mxu0 0
  %3767 = vmatprep.subr.bf16.mxu0 0
  %3768 = vmatpush1.bf16.xpose.msra.mxu0 0
  %3769 = vmatprep.subr.bf16.mxu0 0
  %3770 = vmatpush1.bf16.xpose.msra.mxu0 0
  %3771 = vmatprep.subr.bf16.mxu0 0
  %3772 = vmatpush1.bf16.xpose.msra.mxu0 0
  %3773 = vmatprep.subr.bf16.mxu0 0
  %3774 = vmatpush1.bf16.xpose.msra.mxu0 0
  %3775 = vmatprep.subr.bf16.mxu0 0
  %3776 = vmatpush1.bf16.xpose.msra.mxu0 0
  %3777 = vmatprep.subr.bf16.mxu0 0
  %3778 = vmatpush1.bf16.xpose.msra.mxu0 0
  %3779 = vmatprep.subr.bf16.mxu0 0
  %3780 = vmatpush1.bf16.xpose.msra.mxu0 0
  %3781 = vmatprep.subr.bf16.mxu0 0
  %3782 = vmatpush1.bf16.xpose.msra.mxu0 0
  %3783 = vmatprep.subr.bf16.mxu0 0
  %3784 = vmatpush1.bf16.xpose.msra.mxu0 0
  %3785 = vmatprep.subr.bf16.mxu0 0
  %3786 = vmatpush1.bf16.xpose.msra.mxu0 0
  %3787 = vmatprep.subr.bf16.mxu0 0
  %3788 = vmatpush1.bf16.xpose.msra.mxu0 0
  %3789 = vmatprep.mubr.bf16.mxu0 0
  %3790 = vmatmul.mubr.bf16.gmra.mrb[0].mxu0 %v3755
  %v3791 = vpop.f32.mrb[0].mxu0
  %v3792 = vadd.f32 0.0, %v3791
  %v3793 = vpop.f32.mrb[0].mxu0
  %v3794 = vpop.f32.mrb[0].mxu0
  %v3795 = vpop.f32.mrb[0].mxu0
  %3796 = vdwg.mxu0
  %v3797 = vpack.i.b16 %v3746, %v3746
  %v3798 = vlaneseq
  %v3799 = vshrl.u32 %v3798, 7
  %v3800 = vsub.s32 0, %v3799
  %v3801 = vrot.slane %v3797, %v3800
  %3802 = vrot.lane.b32.xlu0 %v3801, 64
  %v3803 = vpop.permute.xlu0 %3802
  %v3805 = vsel %vm280, %v3803, 0
  %3807 = vmatprep.subr.bf16.mxu0 0
  %3808 = vmatpush1.bf16.xpose.msra.mxu0 %v746
  %3809 = vmatprep.subr.bf16.mxu0 0
  %3810 = vmatpush1.bf16.xpose.msra.mxu0 0
  %3811 = vmatprep.subr.bf16.mxu0 0
  %3812 = vmatpush1.bf16.xpose.msra.mxu0 0
  %3813 = vmatprep.subr.bf16.mxu0 0
  %3814 = vmatpush1.bf16.xpose.msra.mxu0 0
  %3815 = vmatprep.subr.bf16.mxu0 0
  %3816 = vmatpush1.bf16.xpose.msra.mxu0 0
  %3817 = vmatprep.subr.bf16.mxu0 0
  %3818 = vmatpush1.bf16.xpose.msra.mxu0 0
  %3819 = vmatprep.subr.bf16.mxu0 0
  %3820 = vmatpush1.bf16.xpose.msra.mxu0 0
  %3821 = vmatprep.subr.bf16.mxu0 0
  %3822 = vmatpush1.bf16.xpose.msra.mxu0 0
  %3823 = vmatprep.subr.bf16.mxu0 0
  %3824 = vmatpush1.bf16.xpose.msra.mxu0 0
  %3825 = vmatprep.subr.bf16.mxu0 0
  %3826 = vmatpush1.bf16.xpose.msra.mxu0 0
  %3827 = vmatprep.subr.bf16.mxu0 0
  %3828 = vmatpush1.bf16.xpose.msra.mxu0 0
  %3829 = vmatprep.subr.bf16.mxu0 0
  %3830 = vmatpush1.bf16.xpose.msra.mxu0 0
  %3831 = vmatprep.subr.bf16.mxu0 0
  %3832 = vmatpush1.bf16.xpose.msra.mxu0 0
  %3833 = vmatprep.subr.bf16.mxu0 0
  %3834 = vmatpush1.bf16.xpose.msra.mxu0 0
  %3835 = vmatprep.subr.bf16.mxu0 0
  %3836 = vmatpush1.bf16.xpose.msra.mxu0 0
  %3837 = vmatprep.subr.bf16.mxu0 0
  %3838 = vmatpush1.bf16.xpose.msra.mxu0 0
  %3839 = vmatprep.mubr.bf16.mxu0 0
  %3840 = vmatmul.mubr.bf16.gmra.mrb[0].mxu0 %v3805
  %v3841 = vpop.f32.mrb[0].mxu0
  %v3842 = vadd.f32 0.0, %v3841
  %v3843 = vpop.f32.mrb[0].mxu0
  %v3844 = vpop.f32.mrb[0].mxu0
  %v3845 = vpop.f32.mrb[0].mxu0
  %3846 = vdwg.mxu0
  %v3847 = vsel %vm788, %v3792, -inf
  %3848 = vmax.xlane.f32.xlu0 %v3847
  %v3849 = vpop.xlane.xlu0 %3848
  %v3850 = vsel %vm788, %v3842, -inf
  %3851 = vmax.xlane.f32.xlu0 %v3850
  %v3852 = vpop.xlane.xlu0 %3851
  %v3853 = vsub.f32 %v3792, %v3849
  %v3854 = vsub.f32 %v3842, %v3852
  %v3855 = vmul.f32 %v3853, 1.442695
  %v3856 = vpow.pop %v3855
  %v3857 = vmul.f32 %v3854, 1.442695
  %v3858 = vpow.pop %v3857
  %v3859 = vsel %vm788, %v3856, 0.0
  %3860 = vadd.xlane.f32.xlu0 %v3859
  %v3861 = vpop.xlane.xlu0 %3860
  %v3862 = vsel %vm788, %v3858, 0.0
  %3863 = vadd.xlane.f32.xlu0 %v3862
  %v3864 = vpop.xlane.xlu0 %3863
  %v3865 = vrcp.pop %v3861
  %v3866 = vmul.f32 %v3856, %v3865
  %v3867 = vrcp.pop %v3864
  %v3868 = vmul.f32 %v3858, %v3867
  %v3869 = vpack.c.bf16 %v3866, %v3866
  %v3870 = vpack.c.bf16 %v3868, %v3868
  %v3872 = vsel %vm813, %v3869, 0
  %3874 = vmatprep.subr.bf16.mxu0 0
  %3875 = vmatpush1.bf16.msra.mxu0 %v818
  %3876 = vmatprep.subr.bf16.mxu0 0
  %3877 = vmatpush1.bf16.msra.mxu0 0
  %3878 = vmatprep.subr.bf16.mxu0 0
  %3879 = vmatpush1.bf16.msra.mxu0 0
  %3880 = vmatprep.subr.bf16.mxu0 0
  %3881 = vmatpush1.bf16.msra.mxu0 0
  %3882 = vmatprep.subr.bf16.mxu0 0
  %3883 = vmatpush1.bf16.msra.mxu0 0
  %3884 = vmatprep.subr.bf16.mxu0 0
  %3885 = vmatpush1.bf16.msra.mxu0 0
  %3886 = vmatprep.subr.bf16.mxu0 0
  %3887 = vmatpush1.bf16.msra.mxu0 0
  %3888 = vmatprep.subr.bf16.mxu0 0
  %3889 = vmatpush1.bf16.msra.mxu0 0
  %3890 = vmatprep.subr.bf16.mxu0 0
  %3891 = vmatpush1.bf16.msra.mxu0 0
  %3892 = vmatprep.subr.bf16.mxu0 0
  %3893 = vmatpush1.bf16.msra.mxu0 0
  %3894 = vmatprep.subr.bf16.mxu0 0
  %3895 = vmatpush1.bf16.msra.mxu0 0
  %3896 = vmatprep.subr.bf16.mxu0 0
  %3897 = vmatpush1.bf16.msra.mxu0 0
  %3898 = vmatprep.subr.bf16.mxu0 0
  %3899 = vmatpush1.bf16.msra.mxu0 0
  %3900 = vmatprep.subr.bf16.mxu0 0
  %3901 = vmatpush1.bf16.msra.mxu0 0
  %3902 = vmatprep.subr.bf16.mxu0 0
  %3903 = vmatpush1.bf16.msra.mxu0 0
  %3904 = vmatprep.subr.bf16.mxu0 0
  %3905 = vmatpush1.bf16.msra.mxu0 0
  %3906 = vmatprep.mubr.bf16.mxu0 0
  %3907 = vmatmul.mubr.bf16.gmra.mrb[0].mxu0 %v3872
  %v3908 = vpop.f32.mrb[0].mxu0
  %v3909 = vadd.f32 0.0, %v3908
  %v3910 = vpop.f32.mrb[0].mxu0
  %v3911 = vpop.f32.mrb[0].mxu0
  %v3912 = vpop.f32.mrb[0].mxu0
  %3913 = vdwg.mxu0
  %v3915 = vsel %vm813, %v3870, 0
  %3917 = vmatprep.subr.bf16.mxu0 0
  %3918 = vmatpush1.bf16.msra.mxu0 %v863
  %3919 = vmatprep.subr.bf16.mxu0 0
  %3920 = vmatpush1.bf16.msra.mxu0 0
  %3921 = vmatprep.subr.bf16.mxu0 0
  %3922 = vmatpush1.bf16.msra.mxu0 0
  %3923 = vmatprep.subr.bf16.mxu0 0
  %3924 = vmatpush1.bf16.msra.mxu0 0
  %3925 = vmatprep.subr.bf16.mxu0 0
  %3926 = vmatpush1.bf16.msra.mxu0 0
  %3927 = vmatprep.subr.bf16.mxu0 0
  %3928 = vmatpush1.bf16.msra.mxu0 0
  %3929 = vmatprep.subr.bf16.mxu0 0
  %3930 = vmatpush1.bf16.msra.mxu0 0
  %3931 = vmatprep.subr.bf16.mxu0 0
  %3932 = vmatpush1.bf16.msra.mxu0 0
  %3933 = vmatprep.subr.bf16.mxu0 0
  %3934 = vmatpush1.bf16.msra.mxu0 0
  %3935 = vmatprep.subr.bf16.mxu0 0
  %3936 = vmatpush1.bf16.msra.mxu0 0
  %3937 = vmatprep.subr.bf16.mxu0 0
  %3938 = vmatpush1.bf16.msra.mxu0 0
  %3939 = vmatprep.subr.bf16.mxu0 0
  %3940 = vmatpush1.bf16.msra.mxu0 0
  %3941 = vmatprep.subr.bf16.mxu0 0
  %3942 = vmatpush1.bf16.msra.mxu0 0
  %3943 = vmatprep.subr.bf16.mxu0 0
  %3944 = vmatpush1.bf16.msra.mxu0 0
  %3945 = vmatprep.subr.bf16.mxu0 0
  %3946 = vmatpush1.bf16.msra.mxu0 0
  %3947 = vmatprep.subr.bf16.mxu0 0
  %3948 = vmatpush1.bf16.msra.mxu0 0
  %3949 = vmatprep.mubr.bf16.mxu0 0
  %3950 = vmatmul.mubr.bf16.gmra.mrb[0].mxu0 %v3915
  %v3951 = vpop.f32.mrb[0].mxu0
  %v3952 = vadd.f32 0.0, %v3951
  %v3953 = vpop.f32.mrb[0].mxu0
  %v3954 = vpop.f32.mrb[0].mxu0
  %v3955 = vpop.f32.mrb[0].mxu0
  %3956 = vdwg.mxu0
  %v3959 = vrot.slane %v3952, 7
  %v3960 = vsel %vm908, %v3959, %v3909
  %3962 = vst.msk [vmem:[#allocation3] sm:$0x3] %vm324, %v3960
  %s3963 = scalar_lea.vmem %s10, 12
  %v3964 = vld [vmem:[%s3963] sm:$0x3]
  %v3966 = vrot.slane %v3964, 1
  %v3969 = vmul.f32 %v3909, %v3964
  %v3970 = vmul.f32 %v3952, %v3966
  %v3971 = vpack.c.bf16 %v3969, %v3969
  %v3972 = vpack.c.bf16 %v3970, %v3970
  %v3976 = vunpack.c.l.s4 1966171168
  %v3977 = vunpack.c.0.s8 %v3976
  %v3978 = vlaneseq
  %v3979 = vshrl.u32 %v3978, 7
  %v3980 = vsub.s32 %v3977, %v3979
  %v3981 = vrot.slane %v3971, %v3980
  %v3983 = vunpack.c.l.s4 1966171168
  %v3984 = vunpack.c.0.s8 %v3983
  %v3985 = vlaneseq
  %v3986 = vshrl.u32 %v3985, 7
  %v3987 = vsub.s32 %v3984, %v3986
  %v3988 = vrot.slane %v3981, %v3987
  %v3990 = vunpack.c.l.s4 1966171168
  %v3991 = vunpack.c.0.s8 %v3990
  %v3992 = vlaneseq
  %v3993 = vshrl.u32 %v3992, 7
  %v3994 = vsub.s32 %v3991, %v3993
  %v3995 = vrot.slane %v3972, %v3994
  %v3997 = vunpack.c.l.s4 1966171168
  %v3998 = vunpack.c.0.s8 %v3997
  %v3999 = vlaneseq
  %v4000 = vshrl.u32 %v3999, 7
  %v4001 = vsub.s32 %v3998, %v4000
  %v4002 = vrot.slane %v3995, %v4001
  %v4004 = vunpack.c.l.s4 1935823168
  %v4005 = vunpack.c.0.s8 %v4004
  %v4006 = vlaneseq
  %v4007 = vshrl.u32 %v4006, 7
  %v4008 = vsub.s32 %v4005, %v4007
  %v4009 = vrot.slane %v3988, %v4008
  %v4011 = vunpack.c.l.s4 1935823168
  %v4012 = vunpack.c.0.s8 %v4011
  %v4013 = vlaneseq
  %v4014 = vshrl.u32 %v4013, 7
  %v4015 = vsub.s32 %v4012, %v4014
  %v4016 = vrot.slane %v4009, %v4015
  %v4018 = vunpack.c.l.s4 1935823168
  %v4019 = vunpack.c.0.s8 %v4018
  %v4020 = vlaneseq
  %v4021 = vshrl.u32 %v4020, 7
  %v4022 = vsub.s32 %v4019, %v4021
  %v4023 = vrot.slane %v4002, %v4022
  %v4025 = vunpack.c.l.s4 1935823168
  %v4026 = vunpack.c.0.s8 %v4025
  %v4027 = vlaneseq
  %v4028 = vshrl.u32 %v4027, 7
  %v4029 = vsub.s32 %v4026, %v4028
  %v4030 = vrot.slane %v4023, %v4029
  %v4031 = vunpack.c.l.b16 %v4016
  %v4032 = vunpack.c.l.b16 %v4030
  %v4033 = vrot.slane %v4032, 7
  %v4034 = vsel %vm908, %v4033, %v4031
  %v4035 = vpack.c.b16 %v4034, %v4034
  %v4037 = vunpack.c.l.s4 1966171168
  %v4038 = vunpack.c.0.s8 %v4037
  %v4039 = vlaneseq
  %v4040 = vshrl.u32 %v4039, 7
  %v4041 = vsub.s32 %v4038, %v4040
  %v4042 = vrot.slane %v4035, %v4041
  %v4044 = vunpack.c.l.s4 1966171168
  %v4045 = vunpack.c.0.s8 %v4044
  %v4046 = vlaneseq
  %v4047 = vshrl.u32 %v4046, 7
  %v4048 = vsub.s32 %v4045, %v4047
  %v4049 = vrot.slane %v4042, %v4048
  %s4051 = scalar_lea.vmem %s12, 6
  %4052 = vst.msk [vmem:[%s4051] sm:$0x1] %vm999, %v4049
  %s4053 = scalar_lea.vmem %s11, 12
  %v4054 = vld [vmem:[%s4053] sm:$0x3]
  %v4057 = vunpack.c.l.s4 1983009808
  %v4058 = vunpack.c.0.s8 %v4057
  %v4059 = vlaneseq
  %v4060 = vshrl.u32 %v4059, 7
  %v4061 = vsub.s32 %v4058, %v4060
  %v4062 = vrot.slane %v4054, %v4061
  %4063 = vrot.lane.b32.xlu0 %v4062, 64
  %v4064 = vpop.permute.xlu0 %4063
  %v4066 = vmul.f32 %v3716, %v4064
  %v4067 = vpack.c.bf16 %v4066, %v4066
  %v4070 = vunpack.c.l.s4 1966171168
  %v4071 = vunpack.c.0.s8 %v4070
  %v4072 = vlaneseq
  %v4073 = vshrl.u32 %v4072, 7
  %v4074 = vsub.s32 %v4071, %v4073
  %v4075 = vrot.slane %v4067, %v4074
  %v4077 = vunpack.c.l.s4 1966171168
  %v4078 = vunpack.c.0.s8 %v4077
  %v4079 = vlaneseq
  %v4080 = vshrl.u32 %v4079, 7
  %v4081 = vsub.s32 %v4078, %v4080
  %v4082 = vrot.slane %v4075, %v4081
  %4083 = vrot.lane.b32.xlu0 %v4082, 64
  %v4084 = vpop.permute.xlu0 %4083
  %s4086 = scalar_lea.vmem %s13, 6
  %4087 = vst.msk [vmem:[%s4086] sm:$0x1] %vm999, %v4084
  %v4088 = vld [vmem:[#allocation2] sm:$0x3]
  %v4089 = vld [vmem:[#allocation3] sm:$0x3]
  %s4090 = scalar_lea.vmem [#allocation4], 28
  %v4091 = vld [vmem:[%s4090] sm:$0xf]
  %v4092 = vpack.c.bf16 %v4089, %v4089
  %v4094 = vsel %vm280, %v4092, 0
  %4096 = vmatprep.subr.bf16.mxu0 %v405
  %4097 = vmatpush1.bf16.msra.mxu0 %v404
  %4098 = vmatprep.subr.bf16.mxu0 %v407
  %4099 = vmatpush1.bf16.msra.mxu0 %v406
  %4100 = vmatprep.subr.bf16.mxu0 %v409
  %4101 = vmatpush1.bf16.msra.mxu0 %v408
  %4102 = vmatprep.subr.bf16.mxu0 %v411
  %4103 = vmatpush1.bf16.msra.mxu0 %v410
  %4104 = vmatprep.subr.bf16.mxu0 0
  %4105 = vmatpush1.bf16.msra.mxu0 0
  %4106 = vmatprep.subr.bf16.mxu0 0
  %4107 = vmatpush1.bf16.msra.mxu0 0
  %4108 = vmatprep.subr.bf16.mxu0 0
  %4109 = vmatpush1.bf16.msra.mxu0 0
  %4110 = vmatprep.subr.bf16.mxu0 0
  %4111 = vmatpush1.bf16.msra.mxu0 0
  %4112 = vmatprep.subr.bf16.mxu0 0
  %4113 = vmatpush1.bf16.msra.mxu0 0
  %4114 = vmatprep.subr.bf16.mxu0 0
  %4115 = vmatpush1.bf16.msra.mxu0 0
  %4116 = vmatprep.subr.bf16.mxu0 0
  %4117 = vmatpush1.bf16.msra.mxu0 0
  %4118 = vmatprep.subr.bf16.mxu0 0
  %4119 = vmatpush1.bf16.msra.mxu0 0
  %4120 = vmatprep.subr.bf16.mxu0 0
  %4121 = vmatpush1.bf16.msra.mxu0 0
  %4122 = vmatprep.subr.bf16.mxu0 0
  %4123 = vmatpush1.bf16.msra.mxu0 0
  %4124 = vmatprep.subr.bf16.mxu0 0
  %4125 = vmatpush1.bf16.msra.mxu0 0
  %4126 = vmatprep.subr.bf16.mxu0 0
  %4127 = vmatpush1.bf16.msra.mxu0 0
  %4128 = vmatprep.mubr.bf16.mxu0 0
  %4129 = vmatmul.mubr.bf16.gmra.mrb[0].mxu0 %v4094
  %v4130 = vpop.f32.mrb[0].mxu0
  %v4131 = vadd.f32 0.0, %v4130
  %v4132 = vpop.f32.mrb[0].mxu0
  %v4133 = vadd.f32 0.0, %v4132
  %v4134 = vpop.f32.mrb[0].mxu0
  %v4135 = vpop.f32.mrb[0].mxu0
  %4136 = vdwg.mxu0
  %v4139 = vcombine.low %v4131, %v4133
  %v4141 = vunpack.c.l.s4 1983009808
  %v4142 = vunpack.c.0.s8 %v4141
  %v4143 = vlaneseq
  %v4144 = vshrl.u32 %v4143, 7
  %v4145 = vsub.s32 %v4142, %v4144
  %v4146 = vrot.slane %v4139, %v4145
  %v4148 = vadd.f32 %v4091, %v4146
  %v4149 = vpack.c.bf16 %v4088, %v4088
  %v4151 = vsel %vm280, %v4149, 0
  %4153 = vmatprep.subr.bf16.mxu0 %v513
  %4154 = vmatpush1.bf16.msra.mxu0 %v512
  %4155 = vmatprep.subr.bf16.mxu0 %v515
  %4156 = vmatpush1.bf16.msra.mxu0 %v514
  %4157 = vmatprep.subr.bf16.mxu0 %v517
  %4158 = vmatpush1.bf16.msra.mxu0 %v516
  %4159 = vmatprep.subr.bf16.mxu0 %v519
  %4160 = vmatpush1.bf16.msra.mxu0 %v518
  %4161 = vmatprep.subr.bf16.mxu0 0
  %4162 = vmatpush1.bf16.msra.mxu0 0
  %4163 = vmatprep.subr.bf16.mxu0 0
  %4164 = vmatpush1.bf16.msra.mxu0 0
  %4165 = vmatprep.subr.bf16.mxu0 0
  %4166 = vmatpush1.bf16.msra.mxu0 0
  %4167 = vmatprep.subr.bf16.mxu0 0
  %4168 = vmatpush1.bf16.msra.mxu0 0
  %4169 = vmatprep.subr.bf16.mxu0 0
  %4170 = vmatpush1.bf16.msra.mxu0 0
  %4171 = vmatprep.subr.bf16.mxu0 0
  %4172 = vmatpush1.bf16.msra.mxu0 0
  %4173 = vmatprep.subr.bf16.mxu0 0
  %4174 = vmatpush1.bf16.msra.mxu0 0
  %4175 = vmatprep.subr.bf16.mxu0 0
  %4176 = vmatpush1.bf16.msra.mxu0 0
  %4177 = vmatprep.subr.bf16.mxu0 0
  %4178 = vmatpush1.bf16.msra.mxu0 0
  %4179 = vmatprep.subr.bf16.mxu0 0
  %4180 = vmatpush1.bf16.msra.mxu0 0
  %4181 = vmatprep.subr.bf16.mxu0 0
  %4182 = vmatpush1.bf16.msra.mxu0 0
  %4183 = vmatprep.subr.bf16.mxu0 0
  %4184 = vmatpush1.bf16.msra.mxu0 0
  %4185 = vmatprep.mubr.bf16.mxu0 0
  %4186 = vmatmul.mubr.bf16.gmra.mrb[0].mxu0 %v4151
  %v4187 = vpop.f32.mrb[0].mxu0
  %v4188 = vadd.f32 %v481, %v4187
  %v4189 = vpop.f32.mrb[0].mxu0
  %v4190 = vadd.f32 %v485, %v4189
  %v4191 = vpop.f32.mrb[0].mxu0
  %v4192 = vpop.f32.mrb[0].mxu0
  %4193 = vdwg.mxu0
  %v4194 = vadd.f32 %v4148, %v4188
  %v4195 = vxor.u32 %v4194, 2147483648
  %v4196 = vmul.f32 %v4195, 1.442695
  %v4197 = vpow.pop %v4196
  %v4198 = vadd.f32 %v4197, 1.0
  %v4199 = vrcp.pop %v4198
  %v4200 = vmul.f32 1.0, %v4199
  %v4201 = vmul.f32 %v4200, %v4190
  %v4203 = vrot.slane %v4148, 2
  %v4205 = vadd.f32 %v4203, %v4201
  %v4206 = vtanh.pop %v4205
  %v4207 = vsub.f32 1.0, %v4200
  %4209 = vrot.lane.b32.xlu0 %v4206, 64
  %v4210 = vpop.permute.xlu0 %4209
  %v4212 = vmul.f32 %v4207, %v4210
  %v4215 = vunpack.c.l.s4 1983009808
  %v4216 = vunpack.c.0.s8 %v4215
  %v4217 = vlaneseq
  %v4218 = vshrl.u32 %v4217, 7
  %v4219 = vsub.s32 %v4216, %v4218
  %v4220 = vrot.slane %v4088, %v4219
  %4221 = vrot.lane.b32.xlu0 %v4220, 64
  %v4222 = vpop.permute.xlu0 %4221
  %v4224 = vmul.f32 %v4200, %v4222
  %v4225 = vadd.f32 %v4212, %v4224
  %v4228 = vunpack.c.l.s4 1983009808
  %v4229 = vunpack.c.0.s8 %v4228
  %v4230 = vlaneseq
  %v4231 = vshrl.u32 %v4230, 7
  %v4232 = vsub.s32 %v4229, %v4231
  %v4233 = vrot.slane %v4225, %v4232
  %4234 = vrot.lane.b32.xlu0 %v4233, 64
  %v4235 = vpop.permute.xlu0 %4234
  %4237 = vst.msk [vmem:[#allocation2] sm:$0x3] %vm324, %v4235
  %v4238 = vpack.c.bf16 %v4225, %v4225
  %v4241 = vunpack.c.l.s4 1966171168
  %v4242 = vunpack.c.0.s8 %v4241
  %v4243 = vlaneseq
  %v4244 = vshrl.u32 %v4243, 7
  %v4245 = vsub.s32 %v4242, %v4244
  %v4246 = vrot.slane %v4238, %v4245
  %v4248 = vunpack.c.l.s4 1966171168
  %v4249 = vunpack.c.0.s8 %v4248
  %v4250 = vlaneseq
  %v4251 = vshrl.u32 %v4250, 7
  %v4252 = vsub.s32 %v4249, %v4251
  %v4253 = vrot.slane %v4246, %v4252
  %v4254 = vunpack.i.l.s16 %v4253
  %v4255 = vunpack.i.h.s16 %v4253
  %v4256 = vpack.i.b16 %v4254, %v4254
  %v4257 = vlaneseq
  %v4258 = vshrl.u32 %v4257, 7
  %v4259 = vsub.s32 0, %v4258
  %v4260 = vrot.slane %v4256, %v4259
  %4261 = vrot.lane.b32.xlu0 %v4260, 64
  %v4262 = vpop.permute.xlu0 %4261
  %v4264 = vsel %vm280, %v4262, 0
  %4266 = vmatprep.subr.bf16.mxu0 0
  %4267 = vmatpush1.bf16.xpose.msra.mxu0 %v669
  %4268 = vmatprep.subr.bf16.mxu0 0
  %4269 = vmatpush1.bf16.xpose.msra.mxu0 0
  %4270 = vmatprep.subr.bf16.mxu0 0
  %4271 = vmatpush1.bf16.xpose.msra.mxu0 0
  %4272 = vmatprep.subr.bf16.mxu0 0
  %4273 = vmatpush1.bf16.xpose.msra.mxu0 0
  %4274 = vmatprep.subr.bf16.mxu0 0
  %4275 = vmatpush1.bf16.xpose.msra.mxu0 0
  %4276 = vmatprep.subr.bf16.mxu0 0
  %4277 = vmatpush1.bf16.xpose.msra.mxu0 0
  %4278 = vmatprep.subr.bf16.mxu0 0
  %4279 = vmatpush1.bf16.xpose.msra.mxu0 0
  %4280 = vmatprep.subr.bf16.mxu0 0
  %4281 = vmatpush1.bf16.xpose.msra.mxu0 0
  %4282 = vmatprep.subr.bf16.mxu0 0
  %4283 = vmatpush1.bf16.xpose.msra.mxu0 0
  %4284 = vmatprep.subr.bf16.mxu0 0
  %4285 = vmatpush1.bf16.xpose.msra.mxu0 0
  %4286 = vmatprep.subr.bf16.mxu0 0
  %4287 = vmatpush1.bf16.xpose.msra.mxu0 0
  %4288 = vmatprep.subr.bf16.mxu0 0
  %4289 = vmatpush1.bf16.xpose.msra.mxu0 0
  %4290 = vmatprep.subr.bf16.mxu0 0
  %4291 = vmatpush1.bf16.xpose.msra.mxu0 0
  %4292 = vmatprep.subr.bf16.mxu0 0
  %4293 = vmatpush1.bf16.xpose.msra.mxu0 0
  %4294 = vmatprep.subr.bf16.mxu0 0
  %4295 = vmatpush1.bf16.xpose.msra.mxu0 0
  %4296 = vmatprep.subr.bf16.mxu0 0
  %4297 = vmatpush1.bf16.xpose.msra.mxu0 0
  %4298 = vmatprep.mubr.bf16.mxu0 0
  %4299 = vmatmul.mubr.bf16.gmra.mrb[0].mxu0 %v4264
  %v4300 = vpop.f32.mrb[0].mxu0
  %v4301 = vadd.f32 0.0, %v4300
  %v4302 = vpop.f32.mrb[0].mxu0
  %v4303 = vpop.f32.mrb[0].mxu0
  %v4304 = vpop.f32.mrb[0].mxu0
  %4305 = vdwg.mxu0
  %v4306 = vpack.i.b16 %v4255, %v4255
  %v4307 = vlaneseq
  %v4308 = vshrl.u32 %v4307, 7
  %v4309 = vsub.s32 0, %v4308
  %v4310 = vrot.slane %v4306, %v4309
  %4311 = vrot.lane.b32.xlu0 %v4310, 64
  %v4312 = vpop.permute.xlu0 %4311
  %v4314 = vsel %vm280, %v4312, 0
  %4316 = vmatprep.subr.bf16.mxu0 0
  %4317 = vmatpush1.bf16.xpose.msra.mxu0 %v746
  %4318 = vmatprep.subr.bf16.mxu0 0
  %4319 = vmatpush1.bf16.xpose.msra.mxu0 0
  %4320 = vmatprep.subr.bf16.mxu0 0
  %4321 = vmatpush1.bf16.xpose.msra.mxu0 0
  %4322 = vmatprep.subr.bf16.mxu0 0
  %4323 = vmatpush1.bf16.xpose.msra.mxu0 0
  %4324 = vmatprep.subr.bf16.mxu0 0
  %4325 = vmatpush1.bf16.xpose.msra.mxu0 0
  %4326 = vmatprep.subr.bf16.mxu0 0
  %4327 = vmatpush1.bf16.xpose.msra.mxu0 0
  %4328 = vmatprep.subr.bf16.mxu0 0
  %4329 = vmatpush1.bf16.xpose.msra.mxu0 0
  %4330 = vmatprep.subr.bf16.mxu0 0
  %4331 = vmatpush1.bf16.xpose.msra.mxu0 0
  %4332 = vmatprep.subr.bf16.mxu0 0
  %4333 = vmatpush1.bf16.xpose.msra.mxu0 0
  %4334 = vmatprep.subr.bf16.mxu0 0
  %4335 = vmatpush1.bf16.xpose.msra.mxu0 0
  %4336 = vmatprep.subr.bf16.mxu0 0
  %4337 = vmatpush1.bf16.xpose.msra.mxu0 0
  %4338 = vmatprep.subr.bf16.mxu0 0
  %4339 = vmatpush1.bf16.xpose.msra.mxu0 0
  %4340 = vmatprep.subr.bf16.mxu0 0
  %4341 = vmatpush1.bf16.xpose.msra.mxu0 0
  %4342 = vmatprep.subr.bf16.mxu0 0
  %4343 = vmatpush1.bf16.xpose.msra.mxu0 0
  %4344 = vmatprep.subr.bf16.mxu0 0
  %4345 = vmatpush1.bf16.xpose.msra.mxu0 0
  %4346 = vmatprep.subr.bf16.mxu0 0
  %4347 = vmatpush1.bf16.xpose.msra.mxu0 0
  %4348 = vmatprep.mubr.bf16.mxu0 0
  %4349 = vmatmul.mubr.bf16.gmra.mrb[0].mxu0 %v4314
  %v4350 = vpop.f32.mrb[0].mxu0
  %v4351 = vadd.f32 0.0, %v4350
  %v4352 = vpop.f32.mrb[0].mxu0
  %v4353 = vpop.f32.mrb[0].mxu0
  %v4354 = vpop.f32.mrb[0].mxu0
  %4355 = vdwg.mxu0
  %v4356 = vsel %vm788, %v4301, -inf
  %4357 = vmax.xlane.f32.xlu0 %v4356
  %v4358 = vpop.xlane.xlu0 %4357
  %v4359 = vsel %vm788, %v4351, -inf
  %4360 = vmax.xlane.f32.xlu0 %v4359
  %v4361 = vpop.xlane.xlu0 %4360
  %v4362 = vsub.f32 %v4301, %v4358
  %v4363 = vsub.f32 %v4351, %v4361
  %v4364 = vmul.f32 %v4362, 1.442695
  %v4365 = vpow.pop %v4364
  %v4366 = vmul.f32 %v4363, 1.442695
  %v4367 = vpow.pop %v4366
  %v4368 = vsel %vm788, %v4365, 0.0
  %4369 = vadd.xlane.f32.xlu0 %v4368
  %v4370 = vpop.xlane.xlu0 %4369
  %v4371 = vsel %vm788, %v4367, 0.0
  %4372 = vadd.xlane.f32.xlu0 %v4371
  %v4373 = vpop.xlane.xlu0 %4372
  %v4374 = vrcp.pop %v4370
  %v4375 = vmul.f32 %v4365, %v4374
  %v4376 = vrcp.pop %v4373
  %v4377 = vmul.f32 %v4367, %v4376
  %v4378 = vpack.c.bf16 %v4375, %v4375
  %v4379 = vpack.c.bf16 %v4377, %v4377
  %v4381 = vsel %vm813, %v4378, 0
  %4383 = vmatprep.subr.bf16.mxu0 0
  %4384 = vmatpush1.bf16.msra.mxu0 %v818
  %4385 = vmatprep.subr.bf16.mxu0 0
  %4386 = vmatpush1.bf16.msra.mxu0 0
  %4387 = vmatprep.subr.bf16.mxu0 0
  %4388 = vmatpush1.bf16.msra.mxu0 0
  %4389 = vmatprep.subr.bf16.mxu0 0
  %4390 = vmatpush1.bf16.msra.mxu0 0
  %4391 = vmatprep.subr.bf16.mxu0 0
  %4392 = vmatpush1.bf16.msra.mxu0 0
  %4393 = vmatprep.subr.bf16.mxu0 0
  %4394 = vmatpush1.bf16.msra.mxu0 0
  %4395 = vmatprep.subr.bf16.mxu0 0
  %4396 = vmatpush1.bf16.msra.mxu0 0
  %4397 = vmatprep.subr.bf16.mxu0 0
  %4398 = vmatpush1.bf16.msra.mxu0 0
  %4399 = vmatprep.subr.bf16.mxu0 0
  %4400 = vmatpush1.bf16.msra.mxu0 0
  %4401 = vmatprep.subr.bf16.mxu0 0
  %4402 = vmatpush1.bf16.msra.mxu0 0
  %4403 = vmatprep.subr.bf16.mxu0 0
  %4404 = vmatpush1.bf16.msra.mxu0 0
  %4405 = vmatprep.subr.bf16.mxu0 0
  %4406 = vmatpush1.bf16.msra.mxu0 0
  %4407 = vmatprep.subr.bf16.mxu0 0
  %4408 = vmatpush1.bf16.msra.mxu0 0
  %4409 = vmatprep.subr.bf16.mxu0 0
  %4410 = vmatpush1.bf16.msra.mxu0 0
  %4411 = vmatprep.subr.bf16.mxu0 0
  %4412 = vmatpush1.bf16.msra.mxu0 0
  %4413 = vmatprep.subr.bf16.mxu0 0
  %4414 = vmatpush1.bf16.msra.mxu0 0
  %4415 = vmatprep.mubr.bf16.mxu0 0
  %4416 = vmatmul.mubr.bf16.gmra.mrb[0].mxu0 %v4381
  %v4417 = vpop.f32.mrb[0].mxu0
  %v4418 = vadd.f32 0.0, %v4417
  %v4419 = vpop.f32.mrb[0].mxu0
  %v4420 = vpop.f32.mrb[0].mxu0
  %v4421 = vpop.f32.mrb[0].mxu0
  %4422 = vdwg.mxu0
  %v4424 = vsel %vm813, %v4379, 0
  %4426 = vmatprep.subr.bf16.mxu0 0
  %4427 = vmatpush1.bf16.msra.mxu0 %v863
  %4428 = vmatprep.subr.bf16.mxu0 0
  %4429 = vmatpush1.bf16.msra.mxu0 0
  %4430 = vmatprep.subr.bf16.mxu0 0
  %4431 = vmatpush1.bf16.msra.mxu0 0
  %4432 = vmatprep.subr.bf16.mxu0 0
  %4433 = vmatpush1.bf16.msra.mxu0 0
  %4434 = vmatprep.subr.bf16.mxu0 0
  %4435 = vmatpush1.bf16.msra.mxu0 0
  %4436 = vmatprep.subr.bf16.mxu0 0
  %4437 = vmatpush1.bf16.msra.mxu0 0
  %4438 = vmatprep.subr.bf16.mxu0 0
  %4439 = vmatpush1.bf16.msra.mxu0 0
  %4440 = vmatprep.subr.bf16.mxu0 0
  %4441 = vmatpush1.bf16.msra.mxu0 0
  %4442 = vmatprep.subr.bf16.mxu0 0
  %4443 = vmatpush1.bf16.msra.mxu0 0
  %4444 = vmatprep.subr.bf16.mxu0 0
  %4445 = vmatpush1.bf16.msra.mxu0 0
  %4446 = vmatprep.subr.bf16.mxu0 0
  %4447 = vmatpush1.bf16.msra.mxu0 0
  %4448 = vmatprep.subr.bf16.mxu0 0
  %4449 = vmatpush1.bf16.msra.mxu0 0
  %4450 = vmatprep.subr.bf16.mxu0 0
  %4451 = vmatpush1.bf16.msra.mxu0 0
  %4452 = vmatprep.subr.bf16.mxu0 0
  %4453 = vmatpush1.bf16.msra.mxu0 0
  %4454 = vmatprep.subr.bf16.mxu0 0
  %4455 = vmatpush1.bf16.msra.mxu0 0
  %4456 = vmatprep.subr.bf16.mxu0 0
  %4457 = vmatpush1.bf16.msra.mxu0 0
  %4458 = vmatprep.mubr.bf16.mxu0 0
  %4459 = vmatmul.mubr.bf16.gmra.mrb[0].mxu0 %v4424
  %v4460 = vpop.f32.mrb[0].mxu0
  %v4461 = vadd.f32 0.0, %v4460
  %v4462 = vpop.f32.mrb[0].mxu0
  %v4463 = vpop.f32.mrb[0].mxu0
  %v4464 = vpop.f32.mrb[0].mxu0
  %4465 = vdwg.mxu0
  %v4468 = vrot.slane %v4461, 7
  %v4469 = vsel %vm908, %v4468, %v4418
  %4471 = vst.msk [vmem:[#allocation3] sm:$0x3] %vm324, %v4469
  %s4472 = scalar_lea.vmem %s10, 14
  %v4473 = vld [vmem:[%s4472] sm:$0x3]
  %v4475 = vrot.slane %v4473, 1
  %v4478 = vmul.f32 %v4418, %v4473
  %v4479 = vmul.f32 %v4461, %v4475
  %v4480 = vpack.c.bf16 %v4478, %v4478
  %v4481 = vpack.c.bf16 %v4479, %v4479
  %v4485 = vunpack.c.l.s4 1966171168
  %v4486 = vunpack.c.0.s8 %v4485
  %v4487 = vlaneseq
  %v4488 = vshrl.u32 %v4487, 7
  %v4489 = vsub.s32 %v4486, %v4488
  %v4490 = vrot.slane %v4480, %v4489
  %v4492 = vunpack.c.l.s4 1966171168
  %v4493 = vunpack.c.0.s8 %v4492
  %v4494 = vlaneseq
  %v4495 = vshrl.u32 %v4494, 7
  %v4496 = vsub.s32 %v4493, %v4495
  %v4497 = vrot.slane %v4490, %v4496
  %v4499 = vunpack.c.l.s4 1966171168
  %v4500 = vunpack.c.0.s8 %v4499
  %v4501 = vlaneseq
  %v4502 = vshrl.u32 %v4501, 7
  %v4503 = vsub.s32 %v4500, %v4502
  %v4504 = vrot.slane %v4481, %v4503
  %v4506 = vunpack.c.l.s4 1966171168
  %v4507 = vunpack.c.0.s8 %v4506
  %v4508 = vlaneseq
  %v4509 = vshrl.u32 %v4508, 7
  %v4510 = vsub.s32 %v4507, %v4509
  %v4511 = vrot.slane %v4504, %v4510
  %v4513 = vunpack.c.l.s4 1935823168
  %v4514 = vunpack.c.0.s8 %v4513
  %v4515 = vlaneseq
  %v4516 = vshrl.u32 %v4515, 7
  %v4517 = vsub.s32 %v4514, %v4516
  %v4518 = vrot.slane %v4497, %v4517
  %v4520 = vunpack.c.l.s4 1935823168
  %v4521 = vunpack.c.0.s8 %v4520
  %v4522 = vlaneseq
  %v4523 = vshrl.u32 %v4522, 7
  %v4524 = vsub.s32 %v4521, %v4523
  %v4525 = vrot.slane %v4518, %v4524
  %v4527 = vunpack.c.l.s4 1935823168
  %v4528 = vunpack.c.0.s8 %v4527
  %v4529 = vlaneseq
  %v4530 = vshrl.u32 %v4529, 7
  %v4531 = vsub.s32 %v4528, %v4530
  %v4532 = vrot.slane %v4511, %v4531
  %v4534 = vunpack.c.l.s4 1935823168
  %v4535 = vunpack.c.0.s8 %v4534
  %v4536 = vlaneseq
  %v4537 = vshrl.u32 %v4536, 7
  %v4538 = vsub.s32 %v4535, %v4537
  %v4539 = vrot.slane %v4532, %v4538
  %v4540 = vunpack.c.l.b16 %v4525
  %v4541 = vunpack.c.l.b16 %v4539
  %v4542 = vrot.slane %v4541, 7
  %v4543 = vsel %vm908, %v4542, %v4540
  %v4544 = vpack.c.b16 %v4543, %v4543
  %v4546 = vunpack.c.l.s4 1966171168
  %v4547 = vunpack.c.0.s8 %v4546
  %v4548 = vlaneseq
  %v4549 = vshrl.u32 %v4548, 7
  %v4550 = vsub.s32 %v4547, %v4549
  %v4551 = vrot.slane %v4544, %v4550
  %v4553 = vunpack.c.l.s4 1966171168
  %v4554 = vunpack.c.0.s8 %v4553
  %v4555 = vlaneseq
  %v4556 = vshrl.u32 %v4555, 7
  %v4557 = vsub.s32 %v4554, %v4556
  %v4558 = vrot.slane %v4551, %v4557
  %s4560 = scalar_lea.vmem %s12, 7
  %4561 = vst.msk [vmem:[%s4560] sm:$0x1] %vm999, %v4558
  %s4562 = scalar_lea.vmem %s11, 14
  %v4563 = vld [vmem:[%s4562] sm:$0x3]
  %v4566 = vunpack.c.l.s4 1983009808
  %v4567 = vunpack.c.0.s8 %v4566
  %v4568 = vlaneseq
  %v4569 = vshrl.u32 %v4568, 7
  %v4570 = vsub.s32 %v4567, %v4569
  %v4571 = vrot.slane %v4563, %v4570
  %4572 = vrot.lane.b32.xlu0 %v4571, 64
  %v4573 = vpop.permute.xlu0 %4572
  %v4575 = vmul.f32 %v4225, %v4573
  %v4576 = vpack.c.bf16 %v4575, %v4575
  %v4579 = vunpack.c.l.s4 1966171168
  %v4580 = vunpack.c.0.s8 %v4579
  %v4581 = vlaneseq
  %v4582 = vshrl.u32 %v4581, 7
  %v4583 = vsub.s32 %v4580, %v4582
  %v4584 = vrot.slane %v4576, %v4583
  %v4586 = vunpack.c.l.s4 1966171168
  %v4587 = vunpack.c.0.s8 %v4586
  %v4588 = vlaneseq
  %v4589 = vshrl.u32 %v4588, 7
  %v4590 = vsub.s32 %v4587, %v4589
  %v4591 = vrot.slane %v4584, %v4590
  %4592 = vrot.lane.b32.xlu0 %v4591, 64
  %v4593 = vpop.permute.xlu0 %4592
  %s4595 = scalar_lea.vmem %s13, 7
  %4596 = vst.msk [vmem:[%s4595] sm:$0x1] %vm999, %v4593
  // Predicated region
  $region50: #{nmt_forward.4} parent=0 // pred_check
    _
  $region51: #{nmt_forward.4} parent=0 // pred_check_branch
    %4598 = sbr.rel (0) target = $region53
  $region52: #{nmt_forward.4} parent=0 // pred_region
    _
  $region53: #{nmt_forward.4} parent=0 // pred_fallthru
    _
  // Predicated region
  $region54: #{nmt_forward.4} parent=0 // pred_check
    _
  $region55: #{nmt_forward.4} parent=0 // pred_check_branch
    %4600 = sbr.rel (0) target = $region57
  $region56: #{nmt_forward.4} parent=0 // pred_region
    _
  $region57: #{nmt_forward.4} parent=0 // pred_fallthru
    _
  // Predicated region
  $region58: #{nmt_forward.4} parent=0 // pred_check
    _
  $region59: #{nmt_forward.4} parent=0 // pred_check_branch
    %4602 = sbr.rel (0) target = $region61
  $region60: #{nmt_forward.4} parent=0 // pred_region
    _
  $region61: #{nmt_forward.4} parent=0 // pred_fallthru
    _
  // Predicated region
  $region62: #{nmt_forward.4} parent=0 // pred_check
    _
  $region63: #{nmt_forward.4} parent=0 // pred_check_branch
    %4604 = sbr.rel (0) target = $region65
  $region64: #{nmt_forward.4} parent=0 // pred_region
    _
  $region65: #{nmt_forward.4} parent=0 // pred_fallthru
    _

</llo_original>
